<compile_context>
chip_gen: v7x
topology: tpu7x:2x2x1
jax: 0.10.0
libtpu: 0.0.40
codegen_flags: <defaults>
</compile_context>

<pallas_src>
import math

import jax
import jax.numpy as jnp
from jax import lax
from jax.experimental import pallas as pl
from jax.experimental.pallas import tpu as pltpu


def _round_up(x, m):
    return ((x + m - 1) // m) * m


def _pick_tile(n, cands=(1024, 512, 256, 128, 64, 32, 16, 8)):
    for c in cands:
        if n % c == 0:
            return c
    return n


# ----------------------------------------------------------------------------
# Fused 3x3 "same" convolution, NHWC, channels-last.
# Grid = (B, H); each step reads 3 halo rows of the spatially padded input via
# three row-offset BlockSpecs (no im2col materialization in HBM) and writes one
# lane-dense output row.
# ----------------------------------------------------------------------------

def conv3x3_nhwc(x, w, b, *, relu, pad_cout_to=None):
    """x: (B,H,W,Cin) f32.  w: (3,3,Cin,Cout).  b: (Cout,).  Returns
    (B,H,W,Cout_p) f32 where Cout_p is Cout optionally padded (caller slices)."""
    B, H, W, Cin = x.shape
    Cout = w.shape[-1]
    Cin_p = _round_up(Cin, 8)                       # K alignment for the MXU taps
    Cout_p = _round_up(Cout, pad_cout_to) if pad_cout_to else Cout
    Wp = W + 2

    # Halo + channel pad once, activations in bf16 for the MXU / DMA.
    xp = jnp.pad(x, ((0, 0), (1, 1), (1, 1), (0, Cin_p - Cin))).astype(jnp.bfloat16)
    wp = jnp.pad(w, ((0, 0), (0, 0), (0, Cin_p - Cin), (0, Cout_p - Cout)))
    wp = wp.reshape(9, Cin_p, Cout_p).astype(jnp.bfloat16)
    bp = jnp.pad(b, (0, Cout_p - Cout)).reshape(1, Cout_p).astype(jnp.float32)

    def kernel(x0_ref, x1_ref, x2_ref, w_ref, b_ref, o_ref):
        rows = (x0_ref[0, 0], x1_ref[0, 0], x2_ref[0, 0])    # each (Wp, Cin_p) bf16
        acc = jnp.zeros((W, Cout_p), jnp.float32)
        for dy in range(3):
            xr = rows[dy]
            for dx in range(3):
                tap = xr[dx:dx + W, :]                        # (W, Cin_p) bf16
                acc = acc + jnp.dot(tap, w_ref[dy * 3 + dx],
                                    preferred_element_type=jnp.float32)
        acc = acc + b_ref[...]
        if relu:
            acc = jnp.maximum(acc, 0.0)
        o_ref[0, 0] = acc.astype(o_ref.dtype)

    def row_spec(dy):
        return pl.BlockSpec((1, 1, Wp, Cin_p), lambda bi, h: (bi, h + dy, 0, 0))

    return pl.pallas_call(
        kernel,
        out_shape=jax.ShapeDtypeStruct((B, H, W, Cout_p), jnp.float32),
        grid=(B, H),
        in_specs=[row_spec(0), row_spec(1), row_spec(2),
                  pl.BlockSpec((9, Cin_p, Cout_p), lambda bi, h: (0, 0, 0)),
                  pl.BlockSpec((1, Cout_p), lambda bi, h: (0, 0))],
        out_specs=pl.BlockSpec((1, 1, W, Cout_p), lambda bi, h: (bi, h, 0, 0)),
        compiler_params=pltpu.CompilerParams(
            dimension_semantics=("parallel", "parallel")),
    )(xp, xp, xp, wp, bp)


# ----------------------------------------------------------------------------
# Graph-conv encoder: per batch element, embed tokens, softmax adjacency from
# token similarity (dot_general, no explicit transpose), aggregate, ReLU.
# ----------------------------------------------------------------------------

def gc_encoder(tokens, w_emb, b_emb, w_gc, b_gc):
    """tokens: (B, N, Cin) f32 -> (B, N, D) f32."""
    B, N, Cin = tokens.shape
    D = w_emb.shape[1]
    Cin_p = _round_up(Cin, 8)
    inv_sqrt_d = 1.0 / math.sqrt(float(D))

    tok = jnp.pad(tokens, ((0, 0), (0, 0), (0, Cin_p - Cin))).astype(jnp.bfloat16)
    we = jnp.pad(w_emb, ((0, Cin_p - Cin), (0, 0))).astype(jnp.bfloat16)
    be = b_emb.reshape(1, D).astype(jnp.float32)
    wg = w_gc.astype(jnp.bfloat16)
    bg = b_gc.reshape(1, D).astype(jnp.float32)

    # TODO(synk): for large token counts (N*N f32 approaching VMEM, e.g. 64x64
    # images on v7x) switch to an online-softmax loop over KV token blocks.
    def kernel(x_ref, we_ref, be_ref, wg_ref, bg_ref, o_ref):
        xb = x_ref[0]                                                     # (N, Cin_p)
        xe = jnp.dot(xb, we_ref[...], preferred_element_type=jnp.float32) + be_ref[...]
        xeb = xe.astype(jnp.bfloat16)
        s = lax.dot_general(xeb, xeb, (((1,), (1,)), ((), ())),
                            preferred_element_type=jnp.float32) * inv_sqrt_d
        s = s - jnp.max(s, axis=-1, keepdims=True)
        p = jnp.exp(s)
        a = p * pl.reciprocal(jnp.sum(p, axis=-1, keepdims=True), approx=True)
        h = jnp.dot(xeb, wg_ref[...], preferred_element_type=jnp.float32) + bg_ref[...]
        out = jnp.dot(a.astype(jnp.bfloat16), h.astype(jnp.bfloat16),
                      preferred_element_type=jnp.float32)
        o_ref[0] = jnp.maximum(out, 0.0).astype(o_ref.dtype)

    return pl.pallas_call(
        kernel,
        out_shape=jax.ShapeDtypeStruct((B, N, D), jnp.float32),
        grid=(B,),
        in_specs=[pl.BlockSpec((1, N, Cin_p), lambda bi: (bi, 0, 0)),
                  pl.BlockSpec((Cin_p, D), lambda bi: (0, 0)),
                  pl.BlockSpec((1, D), lambda bi: (0, 0)),
                  pl.BlockSpec((D, D), lambda bi: (0, 0)),
                  pl.BlockSpec((1, D), lambda bi: (0, 0))],
        out_specs=pl.BlockSpec((1, N, D), lambda bi: (bi, 0, 0)),
        compiler_params=pltpu.CompilerParams(dimension_semantics=("parallel",)),
    )(tok, we, be, wg, bg)


# ----------------------------------------------------------------------------
# Feature modulation with the "fm + modulated" encoder-add fused in:
#   out = fm + (fm*(1+gamma)+beta) = fm*(2+gamma)+beta
# gamma||beta come from a single (C, 2C) fused MXU matmul; M is tiled.
# ----------------------------------------------------------------------------

def feature_modulation_add(fm_flat, fg_flat, w_gb, b_gb):
    M, C = fm_flat.shape
    tm = _pick_tile(M)
    grid = (M // tm,)

    def kernel(fm_ref, fg_ref, w_ref, b_ref, o_ref):
        gb = jnp.dot(fg_ref[...].astype(jnp.bfloat16), w_ref[...],
                     preferred_element_type=jnp.float32) + b_ref[...]     # (tm, 2C)
        gamma = gb[:, :C]
        beta = gb[:, C:]
        o_ref[...] = (fm_ref[...] * (2.0 + gamma) + beta).astype(o_ref.dtype)

    return pl.pallas_call(
        kernel,
        out_shape=jax.ShapeDtypeStruct((M, C), jnp.float32),
        grid=grid,
        in_specs=[pl.BlockSpec((tm, C), lambda i: (i, 0)),
                  pl.BlockSpec((tm, C), lambda i: (i, 0)),
                  pl.BlockSpec((C, 2 * C), lambda i: (0, 0)),
                  pl.BlockSpec((1, 2 * C), lambda i: (0, 0))],
        out_specs=pl.BlockSpec((tm, C), lambda i: (i, 0)),
        compiler_params=pltpu.CompilerParams(dimension_semantics=("parallel",)),
    )(fm_flat, fg_flat, w_gb, b_gb)


# ----------------------------------------------------------------------------
# Glue (channels-last pooling / upsampling) in plain JAX
# ----------------------------------------------------------------------------

def avg_pool_nhwc(x, k):
    B, H, W, C = x.shape
    return x.reshape(B, H // k, k, W // k, k, C).mean(axis=(2, 4))


def upsample_nearest_nhwc(x, k):
    return jnp.repeat(jnp.repeat(x, k, axis=1), k, axis=2)


# ----------------------------------------------------------------------------
# Model
# ----------------------------------------------------------------------------

def init_params(key):
    ks = jax.random.split(key, 10)

    def nrm(k, shape, scale=0.05):
        return scale * jax.random.normal(k, shape, jnp.float32)

    return {
        # MEncoder: Conv2d(3 -> 64, 3x3) + ReLU
        "m_w": nrm(ks[0], (3, 3, 3, 64)),
        "m_b": nrm(ks[1], (64,)),
        # GCEncoder: token embed (3 -> 64), graph-conv weight (64 -> 64)
        "gc_w_emb": nrm(ks[2], (3, 64)),
        "gc_b_emb": nrm(ks[3], (64,)),
        "gc_w": nrm(ks[4], (64, 64)),
        "gc_b": nrm(ks[5], (64,)),
        # FeatureModulation: two 1x1 convs (64 -> 64) producing gamma / beta
        "fm_wg": nrm(ks[6], (64, 64)),
        "fm_bg": nrm(ks[7], (64,)) * 0.0,
        "fm_wb": nrm(ks[6], (64, 64)) * 0.5,
        "fm_bb": nrm(ks[7], (64,)) * 0.0,
        # FusionDecoder: Conv2d(192 -> 3, 3x3) + residual
        "f_w": nrm(ks[8], (3, 3, 192, 3)),
        "f_b": nrm(ks[9], (3,)),
    }


def shadow_removal_forward(params, original_image, shadowless_image):
    # NCHW -> NHWC once at the boundary; channels-last everywhere inside.
    orig = jnp.transpose(original_image, (0, 2, 3, 1))
    shad = jnp.transpose(shadowless_image, (0, 2, 3, 1))
    B = orig.shape[0]

    orig_scales = [orig, avg_pool_nhwc(orig, 2), avg_pool_nhwc(orig, 4)]
    shad_scales = [shad, avg_pool_nhwc(shad, 2), avg_pool_nhwc(shad, 4)]

    # Fused gamma||beta weights for the modulation kernel.
    w_gb = jnp.concatenate([params["fm_wg"], params["fm_wb"]], axis=1).astype(jnp.bfloat16)
    b_gb = jnp.concatenate([params["fm_bg"], params["fm_bb"]]).reshape(1, -1).astype(jnp.float32)

    fused_feats = []
    for si, (os_, ss_) in enumerate(zip(orig_scales, shad_scales)):
        _, Hs, Ws, _ = os_.shape

        # M-encoder branch (original image): fused 3x3 conv + ReLU.
        fm = conv3x3_nhwc(os_, params["m_w"], params["m_b"], relu=True)      # (B,Hs,Ws,64)

        # GC-encoder branch (shadowless image): spatial tokens (B, Hs*Ws, 3).
        # TODO(synk): the reference flatten chain `permute(0,2,3,1).flatten(2).permute(0,2,1)`
        # is shape-incompatible with the subsequent .view(B,64,H,W); the intended
        # spatial-token flattening (B, H*W, C) is used, as in the previous version.
        tokens = ss_.reshape(B, Hs * Ws, 3)
        fg_tok = gc_encoder(tokens, params["gc_w_emb"], params["gc_b_emb"],
                            params["gc_w"], params["gc_b"])                  # (B,N,64)

        # Reference `.view(B,64,H,W)`: raw reinterpretation of the contiguous
        # (B, H*W, 64) result; then bring it channels-last for modulation.
        fg = jnp.transpose(fg_tok.reshape(B, 64, Hs, Ws), (0, 2, 3, 1))      # (B,Hs,Ws,64)

        # Feature modulation (encoder-add fused): f = fm + (fm*(1+g)+b).
        f = feature_modulation_add(fm.reshape(B * Hs * Ws, 64),
                                   fg.reshape(B * Hs * Ws, 64),
                                   w_gb, b_gb).reshape(B, Hs, Ws, 64)
        if si > 0:
            f = upsample_nearest_nhwc(f, 2 ** si)
        fused_feats.append(f)

    fused = jnp.concatenate(fused_feats, axis=-1)                            # (B,H,W,192)

    # Fusion decoder: 3x3 conv with Cout zero-padded to 128 (lane-dense stores),
    # slice the 3 RGB channels and add the full-resolution residual outside.
    dec = conv3x3_nhwc(fused, params["f_w"], params["f_b"], relu=False, pad_cout_to=128)
    out = dec[..., :3] + orig
    return jnp.transpose(out, (0, 3, 1, 2))


if __name__ == "__main__":
    key = jax.random.PRNGKey(0)
    k_in1, k_in2, k_par = jax.random.split(key, 3)

    B, H, W = 2, 16, 16
    original_image = jax.random.normal(k_in1, (B, 3, H, W), jnp.float32)
    shadowless_image = jax.random.normal(k_in2, (B, 3, H, W), jnp.float32)

    params = init_params(k_par)

    fwd = jax.jit(shadow_removal_forward)
    out = jax.block_until_ready(fwd(params, original_image, shadowless_image))

    assert out.shape == (B, 3, H, W), out.shape
    assert out.dtype == jnp.float32
    assert bool(jnp.all(jnp.isfinite(out)))
    print("KERNEL_OK")
</pallas_src>

<mosaic_0001>
module attributes {stable_mosaic.version = 11 : i64} {
  func.func @kernel(%arg0: i32, %arg1: memref<1x64x8xbf16, #tpu.memory_space<vmem>>, %arg2: memref<8x64xbf16, #tpu.memory_space<vmem>>, %arg3: memref<1x64xf32, #tpu.memory_space<vmem>>, %arg4: memref<64x64xbf16, #tpu.memory_space<vmem>>, %arg5: memref<1x64xf32, #tpu.memory_space<vmem>>, %arg6: memref<1x64x64xf32, #tpu.memory_space<vmem>>) attributes {dimension_semantics = [#tpu.dimension_semantics<parallel>], iteration_bounds = array<i64: 2>, scalar_prefetch = 0 : i64, scratch_operands = 0 : i64, tpu.core_type = #tpu.core_type<tc>, window_params = [{transform_indices = @transform_0, window_bounds = array<i64: 1, 64, 8>}, {pipeline_mode = #tpu.pipeline_mode<synchronous>, transform_indices = @transform_1, window_bounds = array<i64: 8, 64>}, {pipeline_mode = #tpu.pipeline_mode<synchronous>, transform_indices = @transform_2, window_bounds = array<i64: 1, 64>}, {pipeline_mode = #tpu.pipeline_mode<synchronous>, transform_indices = @transform_3, window_bounds = array<i64: 64, 64>}, {pipeline_mode = #tpu.pipeline_mode<synchronous>, transform_indices = @transform_4, window_bounds = array<i64: 1, 64>}, {transform_indices = @transform_5, window_bounds = array<i64: 1, 64, 64>}]} {
    %c0 = arith.constant 0 : index
    %c0_0 = arith.constant 0 : index
    %c0_1 = arith.constant 0 : index
    %0 = vector.load %arg1[%c0, %c0_0, %c0_1] : memref<1x64x8xbf16, #tpu.memory_space<vmem>>, vector<1x64x8xbf16>
    %1 = vector.shape_cast %0 : vector<1x64x8xbf16> to vector<64x8xbf16>
    %c0_2 = arith.constant 0 : index
    %c0_3 = arith.constant 0 : index
    %2 = vector.load %arg2[%c0_2, %c0_3] : memref<8x64xbf16, #tpu.memory_space<vmem>>, vector<8x64xbf16>
    %cst = arith.constant dense<0.000000e+00> : vector<64x64xf32>
    %3 = tpu.matmul %1, %2, %cst {dimension_numbers = #tpu.dot_dimension_numbers<[1], [0], [0], [1], [0, 0, 1, 1], [], []>} : vector<64x8xbf16>, vector<8x64xbf16>, vector<64x64xf32> -> vector<64x64xf32>
    %c0_4 = arith.constant 0 : index
    %c0_5 = arith.constant 0 : index
    %4 = vector.load %arg3[%c0_4, %c0_5] : memref<1x64xf32, #tpu.memory_space<vmem>>, vector<1x64xf32>
    %5 = vector.broadcast %4 : vector<1x64xf32> to vector<64x64xf32>
    %6 = arith.addf %3, %5 : vector<64x64xf32>
    %7 = arith.truncf %6 : vector<64x64xf32> to vector<64x64xbf16>
    %cst_6 = arith.constant dense<0.000000e+00> : vector<64x64xf32>
    %8 = tpu.matmul %7, %7, %cst_6 {dimension_numbers = #tpu.dot_dimension_numbers<[1], [1], [0], [0], [0, 0, 1, 0], [], []>} : vector<64x64xbf16>, vector<64x64xbf16>, vector<64x64xf32> -> vector<64x64xf32>
    %cst_7 = arith.constant 1.250000e-01 : f32
    %9 = vector.broadcast %cst_7 : f32 to vector<64x64xf32>
    %10 = arith.mulf %8, %9 : vector<64x64xf32>
    %cst_8 = arith.constant dense<0xFF800000> : vector<64xf32>
    %11 = vector.multi_reduction <maximumf>, %10, %cst_8 [1] : vector<64x64xf32> to vector<64xf32>
    %12 = vector.shape_cast %11 : vector<64xf32> to vector<64x1xf32>
    %13 = vector.broadcast %12 : vector<64x1xf32> to vector<64x64xf32>
    %14 = arith.subf %10, %13 : vector<64x64xf32>
    %15 = math.exp %14 : vector<64x64xf32>
    %cst_9 = arith.constant dense<0.000000e+00> : vector<64xf32>
    %16 = vector.multi_reduction <add>, %15, %cst_9 [1] : vector<64x64xf32> to vector<64xf32>
    %17 = vector.shape_cast %16 : vector<64xf32> to vector<64x1xf32>
    %18 = tpu.reciprocal %17 {approx = true} : vector<64x1xf32> -> vector<64x1xf32>
    %19 = vector.broadcast %18 : vector<64x1xf32> to vector<64x64xf32>
    %20 = arith.mulf %15, %19 : vector<64x64xf32>
    %c0_10 = arith.constant 0 : index
    %c0_11 = arith.constant 0 : index
    %21 = vector.load %arg4[%c0_10, %c0_11] : memref<64x64xbf16, #tpu.memory_space<vmem>>, vector<64x64xbf16>
    %cst_12 = arith.constant dense<0.000000e+00> : vector<64x64xf32>
    %22 = tpu.matmul %7, %21, %cst_12 {dimension_numbers = #tpu.dot_dimension_numbers<[1], [0], [0], [1], [0, 0, 1, 1], [], []>} : vector<64x64xbf16>, vector<64x64xbf16>, vector<64x64xf32> -> vector<64x64xf32>
    %c0_13 = arith.constant 0 : index
    %c0_14 = arith.constant 0 : index
    %23 = vector.load %arg5[%c0_13, %c0_14] : memref<1x64xf32, #tpu.memory_space<vmem>>, vector<1x64xf32>
    %24 = vector.broadcast %23 : vector<1x64xf32> to vector<64x64xf32>
    %25 = arith.addf %22, %24 : vector<64x64xf32>
    %26 = arith.truncf %20 : vector<64x64xf32> to vector<64x64xbf16>
    %27 = arith.truncf %25 : vector<64x64xf32> to vector<64x64xbf16>
    %cst_15 = arith.constant dense<0.000000e+00> : vector<64x64xf32>
    %28 = tpu.matmul %26, %27, %cst_15 {dimension_numbers = #tpu.dot_dimension_numbers<[1], [0], [0], [1], [0, 0, 1, 1], [], []>} : vector<64x64xbf16>, vector<64x64xbf16>, vector<64x64xf32> -> vector<64x64xf32>
    %cst_16 = arith.constant 0.000000e+00 : f32
    %29 = vector.broadcast %cst_16 : f32 to vector<64x64xf32>
    %30 = arith.maximumf %28, %29 : vector<64x64xf32>
    %c0_17 = arith.constant 0 : index
    %c0_18 = arith.constant 0 : index
    %c0_19 = arith.constant 0 : index
    %31 = vector.load %arg6[%c0_17, %c0_18, %c0_19] : memref<1x64x64xf32, #tpu.memory_space<vmem>>, vector<1x64x64xf32>
    %32 = vector.shape_cast %31 : vector<1x64x64xf32> to vector<64x64xf32>
    %33 = vector.shape_cast %30 : vector<64x64xf32> to vector<1x64x64xf32>
    tpu.vector_store %arg6[%c0_17, %c0_18, %c0_19], %33 {strides = array<i32>} : memref<1x64x64xf32, #tpu.memory_space<vmem>>, vector<1x64x64xf32>,
    return
  }
  func.func @transform_0(%arg0: i32) -> (i32, i32, i32) {
    %c0_i32 = arith.constant 0 : i32
    %c0_i32_0 = arith.constant 0 : i32
    %c0_i32_1 = arith.constant 0 : i32
    return %arg0, %c0_i32, %c0_i32_0 : i32, i32, i32
  }
  func.func @transform_1(%arg0: i32) -> (i32, i32) {
    %c0_i32 = arith.constant 0 : i32
    %c0_i32_0 = arith.constant 0 : i32
    %c0_i32_1 = arith.constant 0 : i32
    return %c0_i32, %c0_i32_0 : i32, i32
  }
  func.func @transform_2(%arg0: i32) -> (i32, i32) {
    %c0_i32 = arith.constant 0 : i32
    %c0_i32_0 = arith.constant 0 : i32
    %c0_i32_1 = arith.constant 0 : i32
    return %c0_i32, %c0_i32_0 : i32, i32
  }
  func.func @transform_3(%arg0: i32) -> (i32, i32) {
    %c0_i32 = arith.constant 0 : i32
    %c0_i32_0 = arith.constant 0 : i32
    %c0_i32_1 = arith.constant 0 : i32
    return %c0_i32, %c0_i32_0 : i32, i32
  }
  func.func @transform_4(%arg0: i32) -> (i32, i32) {
    %c0_i32 = arith.constant 0 : i32
    %c0_i32_0 = arith.constant 0 : i32
    %c0_i32_1 = arith.constant 0 : i32
    return %c0_i32, %c0_i32_0 : i32, i32
  }
  func.func @transform_5(%arg0: i32) -> (i32, i32, i32) {
    %c0_i32 = arith.constant 0 : i32
    %c0_i32_0 = arith.constant 0 : i32
    %c0_i32_1 = arith.constant 0 : i32
    return %arg0, %c0_i32, %c0_i32_0 : i32, i32, i32
  }
}

module attributes {stable_mosaic.version = 11 : i64} {
  func.func @kernel(%arg0: i32, %arg1: i32, %arg2: memref<1x1x10x8xbf16, #tpu.memory_space<vmem>>, %arg3: memref<1x1x10x8xbf16, #tpu.memory_space<vmem>>, %arg4: memref<1x1x10x8xbf16, #tpu.memory_space<vmem>>, %arg5: memref<9x8x64xbf16, #tpu.memory_space<vmem>>, %arg6: memref<1x64xf32, #tpu.memory_space<vmem>>, %arg7: memref<1x1x8x64xf32, #tpu.memory_space<vmem>>) attributes {dimension_semantics = [#tpu.dimension_semantics<parallel>, #tpu.dimension_semantics<parallel>], iteration_bounds = array<i64: 2, 8>, scalar_prefetch = 0 : i64, scratch_operands = 0 : i64, tpu.core_type = #tpu.core_type<tc>, window_params = [{transform_indices = @transform_0, window_bounds = array<i64: 1, 1, 10, 8>}, {transform_indices = @transform_1, window_bounds = array<i64: 1, 1, 10, 8>}, {transform_indices = @transform_2, window_bounds = array<i64: 1, 1, 10, 8>}, {pipeline_mode = #tpu.pipeline_mode<synchronous>, transform_indices = @transform_3, window_bounds = array<i64: 9, 8, 64>}, {pipeline_mode = #tpu.pipeline_mode<synchronous>, transform_indices = @transform_4, window_bounds = array<i64: 1, 64>}, {transform_indices = @transform_5, window_bounds = array<i64: 1, 1, 8, 64>}]} {
    %c0 = arith.constant 0 : index
    %c0_0 = arith.constant 0 : index
    %c0_1 = arith.constant 0 : index
    %c0_2 = arith.constant 0 : index
    %0 = vector.load %arg2[%c0, %c0_0, %c0_1, %c0_2] : memref<1x1x10x8xbf16, #tpu.memory_space<vmem>>, vector<1x1x10x8xbf16>
    %1 = vector.shape_cast %0 : vector<1x1x10x8xbf16> to vector<10x8xbf16>
    %c0_3 = arith.constant 0 : index
    %c0_4 = arith.constant 0 : index
    %c0_5 = arith.constant 0 : index
    %c0_6 = arith.constant 0 : index
    %2 = vector.load %arg3[%c0_3, %c0_4, %c0_5, %c0_6] : memref<1x1x10x8xbf16, #tpu.memory_space<vmem>>, vector<1x1x10x8xbf16>
    %3 = vector.shape_cast %2 : vector<1x1x10x8xbf16> to vector<10x8xbf16>
    %c0_7 = arith.constant 0 : index
    %c0_8 = arith.constant 0 : index
    %c0_9 = arith.constant 0 : index
    %c0_10 = arith.constant 0 : index
    %4 = vector.load %arg4[%c0_7, %c0_8, %c0_9, %c0_10] : memref<1x1x10x8xbf16, #tpu.memory_space<vmem>>, vector<1x1x10x8xbf16>
    %5 = vector.shape_cast %4 : vector<1x1x10x8xbf16> to vector<10x8xbf16>
    %cst = arith.constant 0.000000e+00 : f32
    %6 = vector.broadcast %cst : f32 to vector<8x64xf32>
    %7 = vector.extract_strided_slice %1 {offsets = [0, 0], sizes = [8, 8], strides = [1, 1]} : vector<10x8xbf16> to vector<8x8xbf16>
    %c0_11 = arith.constant 0 : index
    %c0_12 = arith.constant 0 : index
    %c0_13 = arith.constant 0 : index
    %8 = vector.load %arg5[%c0_11, %c0_12, %c0_13] : memref<9x8x64xbf16, #tpu.memory_space<vmem>>, vector<1x8x64xbf16>
    %9 = vector.shape_cast %8 : vector<1x8x64xbf16> to vector<8x64xbf16>
    %cst_14 = arith.constant dense<0.000000e+00> : vector<8x64xf32>
    %10 = tpu.matmul %7, %9, %cst_14 {dimension_numbers = #tpu.dot_dimension_numbers<[1], [0], [0], [1], [0, 0, 1, 1], [], []>} : vector<8x8xbf16>, vector<8x64xbf16>, vector<8x64xf32> -> vector<8x64xf32>
    %11 = arith.addf %6, %10 : vector<8x64xf32>
    %12 = vector.extract_strided_slice %1 {offsets = [1, 0], sizes = [8, 8], strides = [1, 1]} : vector<10x8xbf16> to vector<8x8xbf16>
    %c1 = arith.constant 1 : index
    %c0_15 = arith.constant 0 : index
    %c0_16 = arith.constant 0 : index
    %13 = vector.load %arg5[%c1, %c0_15, %c0_16] : memref<9x8x64xbf16, #tpu.memory_space<vmem>>, vector<1x8x64xbf16>
    %14 = vector.shape_cast %13 : vector<1x8x64xbf16> to vector<8x64xbf16>
    %cst_17 = arith.constant dense<0.000000e+00> : vector<8x64xf32>
    %15 = tpu.matmul %12, %14, %cst_17 {dimension_numbers = #tpu.dot_dimension_numbers<[1], [0], [0], [1], [0, 0, 1, 1], [], []>} : vector<8x8xbf16>, vector<8x64xbf16>, vector<8x64xf32> -> vector<8x64xf32>
    %16 = arith.addf %11, %15 : vector<8x64xf32>
    %17 = vector.extract_strided_slice %1 {offsets = [2, 0], sizes = [8, 8], strides = [1, 1]} : vector<10x8xbf16> to vector<8x8xbf16>
    %c2 = arith.constant 2 : index
    %c0_18 = arith.constant 0 : index
    %c0_19 = arith.constant 0 : index
    %18 = vector.load %arg5[%c2, %c0_18, %c0_19] : memref<9x8x64xbf16, #tpu.memory_space<vmem>>, vector<1x8x64xbf16>
    %19 = vector.shape_cast %18 : vector<1x8x64xbf16> to vector<8x64xbf16>
    %cst_20 = arith.constant dense<0.000000e+00> : vector<8x64xf32>
    %20 = tpu.matmul %17, %19, %cst_20 {dimension_numbers = #tpu.dot_dimension_numbers<[1], [0], [0], [1], [0, 0, 1, 1], [], []>} : vector<8x8xbf16>, vector<8x64xbf16>, vector<8x64xf32> -> vector<8x64xf32>
    %21 = arith.addf %16, %20 : vector<8x64xf32>
    %22 = vector.extract_strided_slice %3 {offsets = [0, 0], sizes = [8, 8], strides = [1, 1]} : vector<10x8xbf16> to vector<8x8xbf16>
    %c3 = arith.constant 3 : index
    %c0_21 = arith.constant 0 : index
    %c0_22 = arith.constant 0 : index
    %23 = vector.load %arg5[%c3, %c0_21, %c0_22] : memref<9x8x64xbf16, #tpu.memory_space<vmem>>, vector<1x8x64xbf16>
    %24 = vector.shape_cast %23 : vector<1x8x64xbf16> to vector<8x64xbf16>
    %cst_23 = arith.constant dense<0.000000e+00> : vector<8x64xf32>
    %25 = tpu.matmul %22, %24, %cst_23 {dimension_numbers = #tpu.dot_dimension_numbers<[1], [0], [0], [1], [0, 0, 1, 1], [], []>} : vector<8x8xbf16>, vector<8x64xbf16>, vector<8x64xf32> -> vector<8x64xf32>
    %26 = arith.addf %21, %25 : vector<8x64xf32>
    %27 = vector.extract_strided_slice %3 {offsets = [1, 0], sizes = [8, 8], strides = [1, 1]} : vector<10x8xbf16> to vector<8x8xbf16>
    %c4 = arith.constant 4 : index
    %c0_24 = arith.constant 0 : index
    %c0_25 = arith.constant 0 : index
    %28 = vector.load %arg5[%c4, %c0_24, %c0_25] : memref<9x8x64xbf16, #tpu.memory_space<vmem>>, vector<1x8x64xbf16>
    %29 = vector.shape_cast %28 : vector<1x8x64xbf16> to vector<8x64xbf16>
    %cst_26 = arith.constant dense<0.000000e+00> : vector<8x64xf32>
    %30 = tpu.matmul %27, %29, %cst_26 {dimension_numbers = #tpu.dot_dimension_numbers<[1], [0], [0], [1], [0, 0, 1, 1], [], []>} : vector<8x8xbf16>, vector<8x64xbf16>, vector<8x64xf32> -> vector<8x64xf32>
    %31 = arith.addf %26, %30 : vector<8x64xf32>
    %32 = vector.extract_strided_slice %3 {offsets = [2, 0], sizes = [8, 8], strides = [1, 1]} : vector<10x8xbf16> to vector<8x8xbf16>
    %c5 = arith.constant 5 : index
    %c0_27 = arith.constant 0 : index
    %c0_28 = arith.constant 0 : index
    %33 = vector.load %arg5[%c5, %c0_27, %c0_28] : memref<9x8x64xbf16, #tpu.memory_space<vmem>>, vector<1x8x64xbf16>
    %34 = vector.shape_cast %33 : vector<1x8x64xbf16> to vector<8x64xbf16>
    %cst_29 = arith.constant dense<0.000000e+00> : vector<8x64xf32>
    %35 = tpu.matmul %32, %34, %cst_29 {dimension_numbers = #tpu.dot_dimension_numbers<[1], [0], [0], [1], [0, 0, 1, 1], [], []>} : vector<8x8xbf16>, vector<8x64xbf16>, vector<8x64xf32> -> vector<8x64xf32>
    %36 = arith.addf %31, %35 : vector<8x64xf32>
    %37 = vector.extract_strided_slice %5 {offsets = [0, 0], sizes = [8, 8], strides = [1, 1]} : vector<10x8xbf16> to vector<8x8xbf16>
    %c6 = arith.constant 6 : index
    %c0_30 = arith.constant 0 : index
    %c0_31 = arith.constant 0 : index
    %38 = vector.load %arg5[%c6, %c0_30, %c0_31] : memref<9x8x64xbf16, #tpu.memory_space<vmem>>, vector<1x8x64xbf16>
    %39 = vector.shape_cast %38 : vector<1x8x64xbf16> to vector<8x64xbf16>
    %cst_32 = arith.constant dense<0.000000e+00> : vector<8x64xf32>
    %40 = tpu.matmul %37, %39, %cst_32 {dimension_numbers = #tpu.dot_dimension_numbers<[1], [0], [0], [1], [0, 0, 1, 1], [], []>} : vector<8x8xbf16>, vector<8x64xbf16>, vector<8x64xf32> -> vector<8x64xf32>
    %41 = arith.addf %36, %40 : vector<8x64xf32>
    %42 = vector.extract_strided_slice %5 {offsets = [1, 0], sizes = [8, 8], strides = [1, 1]} : vector<10x8xbf16> to vector<8x8xbf16>
    %c7 = arith.constant 7 : index
    %c0_33 = arith.constant 0 : index
    %c0_34 = arith.constant 0 : index
    %43 = vector.load %arg5[%c7, %c0_33, %c0_34] : memref<9x8x64xbf16, #tpu.memory_space<vmem>>, vector<1x8x64xbf16>
    %44 = vector.shape_cast %43 : vector<1x8x64xbf16> to vector<8x64xbf16>
    %cst_35 = arith.constant dense<0.000000e+00> : vector<8x64xf32>
    %45 = tpu.matmul %42, %44, %cst_35 {dimension_numbers = #tpu.dot_dimension_numbers<[1], [0], [0], [1], [0, 0, 1, 1], [], []>} : vector<8x8xbf16>, vector<8x64xbf16>, vector<8x64xf32> -> vector<8x64xf32>
    %46 = arith.addf %41, %45 : vector<8x64xf32>
    %47 = vector.extract_strided_slice %5 {offsets = [2, 0], sizes = [8, 8], strides = [1, 1]} : vector<10x8xbf16> to vector<8x8xbf16>
    %c8 = arith.constant 8 : index
    %c0_36 = arith.constant 0 : index
    %c0_37 = arith.constant 0 : index
    %48 = vector.load %arg5[%c8, %c0_36, %c0_37] : memref<9x8x64xbf16, #tpu.memory_space<vmem>>, vector<1x8x64xbf16>
    %49 = vector.shape_cast %48 : vector<1x8x64xbf16> to vector<8x64xbf16>
    %cst_38 = arith.constant dense<0.000000e+00> : vector<8x64xf32>
    %50 = tpu.matmul %47, %49, %cst_38 {dimension_numbers = #tpu.dot_dimension_numbers<[1], [0], [0], [1], [0, 0, 1, 1], [], []>} : vector<8x8xbf16>, vector<8x64xbf16>, vector<8x64xf32> -> vector<8x64xf32>
    %51 = arith.addf %46, %50 : vector<8x64xf32>
    %c0_39 = arith.constant 0 : index
    %c0_40 = arith.constant 0 : index
    %52 = vector.load %arg6[%c0_39, %c0_40] : memref<1x64xf32, #tpu.memory_space<vmem>>, vector<1x64xf32>
    %53 = vector.broadcast %52 : vector<1x64xf32> to vector<8x64xf32>
    %54 = arith.addf %51, %53 : vector<8x64xf32>
    %cst_41 = arith.constant 0.000000e+00 : f32
    %55 = vector.broadcast %cst_41 : f32 to vector<8x64xf32>
    %56 = arith.maximumf %54, %55 : vector<8x64xf32>
    %c0_42 = arith.constant 0 : index
    %c0_43 = arith.constant 0 : index
    %c0_44 = arith.constant 0 : index
    %c0_45 = arith.constant 0 : index
    %57 = vector.load %arg7[%c0_42, %c0_43, %c0_44, %c0_45] : memref<1x1x8x64xf32, #tpu.memory_space<vmem>>, vector<1x1x8x64xf32>
    %58 = vector.shape_cast %57 : vector<1x1x8x64xf32> to vector<8x64xf32>
    %59 = vector.shape_cast %56 : vector<8x64xf32> to vector<1x1x8x64xf32>
    tpu.vector_store %arg7[%c0_42, %c0_43, %c0_44, %c0_45], %59 {strides = array<i32>} : memref<1x1x8x64xf32, #tpu.memory_space<vmem>>, vector<1x1x8x64xf32>,
    return
  }
  func.func @transform_0(%arg0: i32, %arg1: i32) -> (i32, i32, i32, i32) {
    %c0_i32 = arith.constant 0 : i32
    %0 = arith.addi %arg1, %c0_i32 : i32
    %c0_i32_0 = arith.constant 0 : i32
    %c0_i32_1 = arith.constant 0 : i32
    %c0_i32_2 = arith.constant 0 : i32
    return %arg0, %0, %c0_i32_0, %c0_i32_1 : i32, i32, i32, i32
  }
  func.func @transform_1(%arg0: i32, %arg1: i32) -> (i32, i32, i32, i32) {
    %c1_i32 = arith.constant 1 : i32
    %0 = arith.addi %arg1, %c1_i32 : i32
    %c0_i32 = arith.constant 0 : i32
    %c0_i32_0 = arith.constant 0 : i32
    %c0_i32_1 = arith.constant 0 : i32
    return %arg0, %0, %c0_i32, %c0_i32_0 : i32, i32, i32, i32
  }
  func.func @transform_2(%arg0: i32, %arg1: i32) -> (i32, i32, i32, i32) {
    %c2_i32 = arith.constant 2 : i32
    %0 = arith.addi %arg1, %c2_i32 : i32
    %c0_i32 = arith.constant 0 : i32
    %c0_i32_0 = arith.constant 0 : i32
    %c0_i32_1 = arith.constant 0 : i32
    return %arg0, %0, %c0_i32, %c0_i32_0 : i32, i32, i32, i32
  }
  func.func @transform_3(%arg0: i32, %arg1: i32) -> (i32, i32, i32) {
    %c0_i32 = arith.constant 0 : i32
    %c0_i32_0 = arith.constant 0 : i32
    %c0_i32_1 = arith.constant 0 : i32
    %c0_i32_2 = arith.constant 0 : i32
    return %c0_i32, %c0_i32_0, %c0_i32_1 : i32, i32, i32
  }
  func.func @transform_4(%arg0: i32, %arg1: i32) -> (i32, i32) {
    %c0_i32 = arith.constant 0 : i32
    %c0_i32_0 = arith.constant 0 : i32
    %c0_i32_1 = arith.constant 0 : i32
    return %c0_i32, %c0_i32_0 : i32, i32
  }
  func.func @transform_5(%arg0: i32, %arg1: i32) -> (i32, i32, i32, i32) {
    %c0_i32 = arith.constant 0 : i32
    %c0_i32_0 = arith.constant 0 : i32
    %c0_i32_1 = arith.constant 0 : i32
    return %arg0, %arg1, %c0_i32, %c0_i32_0 : i32, i32, i32, i32
  }
}

module attributes {stable_mosaic.version = 11 : i64} {
  func.func @kernel(%arg0: i32, %arg1: memref<128x64xf32, #tpu.memory_space<vmem>>, %arg2: memref<128x64xf32, #tpu.memory_space<vmem>>, %arg3: memref<64x128xbf16, #tpu.memory_space<vmem>>, %arg4: memref<1x128xf32, #tpu.memory_space<vmem>>, %arg5: memref<128x64xf32, #tpu.memory_space<vmem>>) attributes {dimension_semantics = [#tpu.dimension_semantics<parallel>], iteration_bounds = array<i64: 1>, scalar_prefetch = 0 : i64, scratch_operands = 0 : i64, tpu.core_type = #tpu.core_type<tc>, window_params = [{transform_indices = @transform_0, window_bounds = array<i64: 128, 64>}, {transform_indices = @transform_1, window_bounds = array<i64: 128, 64>}, {pipeline_mode = #tpu.pipeline_mode<synchronous>, transform_indices = @transform_2, window_bounds = array<i64: 64, 128>}, {pipeline_mode = #tpu.pipeline_mode<synchronous>, transform_indices = @transform_3, window_bounds = array<i64: 1, 128>}, {transform_indices = @transform_4, window_bounds = array<i64: 128, 64>}]} {
    %c0 = arith.constant 0 : index
    %c0_0 = arith.constant 0 : index
    %0 = vector.load %arg2[%c0, %c0_0] : memref<128x64xf32, #tpu.memory_space<vmem>>, vector<128x64xf32>
    %1 = arith.truncf %0 : vector<128x64xf32> to vector<128x64xbf16>
    %c0_1 = arith.constant 0 : index
    %c0_2 = arith.constant 0 : index
    %2 = vector.load %arg3[%c0_1, %c0_2] : memref<64x128xbf16, #tpu.memory_space<vmem>>, vector<64x128xbf16>
    %cst = arith.constant dense<0.000000e+00> : vector<128x128xf32>
    %3 = tpu.matmul %1, %2, %cst {dimension_numbers = #tpu.dot_dimension_numbers<[1], [0], [0], [1], [0, 0, 1, 1], [], []>} : vector<128x64xbf16>, vector<64x128xbf16>, vector<128x128xf32> -> vector<128x128xf32>
    %c0_3 = arith.constant 0 : index
    %c0_4 = arith.constant 0 : index
    %4 = vector.load %arg4[%c0_3, %c0_4] : memref<1x128xf32, #tpu.memory_space<vmem>>, vector<1x128xf32>
    %5 = vector.broadcast %4 : vector<1x128xf32> to vector<128x128xf32>
    %6 = arith.addf %3, %5 : vector<128x128xf32>
    %7 = vector.extract_strided_slice %6 {offsets = [0, 0], sizes = [128, 64], strides = [1, 1]} : vector<128x128xf32> to vector<128x64xf32>
    %8 = vector.extract_strided_slice %6 {offsets = [0, 64], sizes = [128, 64], strides = [1, 1]} : vector<128x128xf32> to vector<128x64xf32>
    %c0_5 = arith.constant 0 : index
    %c0_6 = arith.constant 0 : index
    %9 = vector.load %arg1[%c0_5, %c0_6] : memref<128x64xf32, #tpu.memory_space<vmem>>, vector<128x64xf32>
    %cst_7 = arith.constant 2.000000e+00 : f32
    %10 = vector.broadcast %cst_7 : f32 to vector<128x64xf32>
    %11 = arith.addf %10, %7 : vector<128x64xf32>
    %12 = arith.mulf %9, %11 : vector<128x64xf32>
    %13 = arith.addf %12, %8 : vector<128x64xf32>
    %c0_8 = arith.constant 0 : index
    %c0_9 = arith.constant 0 : index
    %14 = vector.load %arg5[%c0_8, %c0_9] : memref<128x64xf32, #tpu.memory_space<vmem>>, vector<128x64xf32>
    tpu.vector_store %arg5[%c0_8, %c0_9], %13 {strides = array<i32>} : memref<128x64xf32, #tpu.memory_space<vmem>>, vector<128x64xf32>,
    return
  }
  func.func @transform_0(%arg0: i32) -> (i32, i32) {
    %c0_i32 = arith.constant 0 : i32
    %c0_i32_0 = arith.constant 0 : i32
    return %arg0, %c0_i32 : i32, i32
  }
  func.func @transform_1(%arg0: i32) -> (i32, i32) {
    %c0_i32 = arith.constant 0 : i32
    %c0_i32_0 = arith.constant 0 : i32
    return %arg0, %c0_i32 : i32, i32
  }
  func.func @transform_2(%arg0: i32) -> (i32, i32) {
    %c0_i32 = arith.constant 0 : i32
    %c0_i32_0 = arith.constant 0 : i32
    %c0_i32_1 = arith.constant 0 : i32
    return %c0_i32, %c0_i32_0 : i32, i32
  }
  func.func @transform_3(%arg0: i32) -> (i32, i32) {
    %c0_i32 = arith.constant 0 : i32
    %c0_i32_0 = arith.constant 0 : i32
    %c0_i32_1 = arith.constant 0 : i32
    return %c0_i32, %c0_i32_0 : i32, i32
  }
  func.func @transform_4(%arg0: i32) -> (i32, i32) {
    %c0_i32 = arith.constant 0 : i32
    %c0_i32_0 = arith.constant 0 : i32
    return %arg0, %c0_i32 : i32, i32
  }
}

module attributes {stable_mosaic.version = 11 : i64} {
  func.func @kernel(%arg0: i32, %arg1: memref<1x16x8xbf16, #tpu.memory_space<vmem>>, %arg2: memref<8x64xbf16, #tpu.memory_space<vmem>>, %arg3: memref<1x64xf32, #tpu.memory_space<vmem>>, %arg4: memref<64x64xbf16, #tpu.memory_space<vmem>>, %arg5: memref<1x64xf32, #tpu.memory_space<vmem>>, %arg6: memref<1x16x64xf32, #tpu.memory_space<vmem>>) attributes {dimension_semantics = [#tpu.dimension_semantics<parallel>], iteration_bounds = array<i64: 2>, scalar_prefetch = 0 : i64, scratch_operands = 0 : i64, tpu.core_type = #tpu.core_type<tc>, window_params = [{transform_indices = @transform_0, window_bounds = array<i64: 1, 16, 8>}, {pipeline_mode = #tpu.pipeline_mode<synchronous>, transform_indices = @transform_1, window_bounds = array<i64: 8, 64>}, {pipeline_mode = #tpu.pipeline_mode<synchronous>, transform_indices = @transform_2, window_bounds = array<i64: 1, 64>}, {pipeline_mode = #tpu.pipeline_mode<synchronous>, transform_indices = @transform_3, window_bounds = array<i64: 64, 64>}, {pipeline_mode = #tpu.pipeline_mode<synchronous>, transform_indices = @transform_4, window_bounds = array<i64: 1, 64>}, {transform_indices = @transform_5, window_bounds = array<i64: 1, 16, 64>}]} {
    %c0 = arith.constant 0 : index
    %c0_0 = arith.constant 0 : index
    %c0_1 = arith.constant 0 : index
    %0 = vector.load %arg1[%c0, %c0_0, %c0_1] : memref<1x16x8xbf16, #tpu.memory_space<vmem>>, vector<1x16x8xbf16>
    %1 = vector.shape_cast %0 : vector<1x16x8xbf16> to vector<16x8xbf16>
    %c0_2 = arith.constant 0 : index
    %c0_3 = arith.constant 0 : index
    %2 = vector.load %arg2[%c0_2, %c0_3] : memref<8x64xbf16, #tpu.memory_space<vmem>>, vector<8x64xbf16>
    %cst = arith.constant dense<0.000000e+00> : vector<16x64xf32>
    %3 = tpu.matmul %1, %2, %cst {dimension_numbers = #tpu.dot_dimension_numbers<[1], [0], [0], [1], [0, 0, 1, 1], [], []>} : vector<16x8xbf16>, vector<8x64xbf16>, vector<16x64xf32> -> vector<16x64xf32>
    %c0_4 = arith.constant 0 : index
    %c0_5 = arith.constant 0 : index
    %4 = vector.load %arg3[%c0_4, %c0_5] : memref<1x64xf32, #tpu.memory_space<vmem>>, vector<1x64xf32>
    %5 = vector.broadcast %4 : vector<1x64xf32> to vector<16x64xf32>
    %6 = arith.addf %3, %5 : vector<16x64xf32>
    %7 = arith.truncf %6 : vector<16x64xf32> to vector<16x64xbf16>
    %cst_6 = arith.constant dense<0.000000e+00> : vector<16x16xf32>
    %8 = tpu.matmul %7, %7, %cst_6 {dimension_numbers = #tpu.dot_dimension_numbers<[1], [1], [0], [0], [0, 0, 1, 0], [], []>} : vector<16x64xbf16>, vector<16x64xbf16>, vector<16x16xf32> -> vector<16x16xf32>
    %cst_7 = arith.constant 1.250000e-01 : f32
    %9 = vector.broadcast %cst_7 : f32 to vector<16x16xf32>
    %10 = arith.mulf %8, %9 : vector<16x16xf32>
    %cst_8 = arith.constant dense<0xFF800000> : vector<16xf32>
    %11 = vector.multi_reduction <maximumf>, %10, %cst_8 [1] : vector<16x16xf32> to vector<16xf32>
    %12 = vector.shape_cast %11 : vector<16xf32> to vector<16x1xf32>
    %13 = vector.broadcast %12 : vector<16x1xf32> to vector<16x16xf32>
    %14 = arith.subf %10, %13 : vector<16x16xf32>
    %15 = math.exp %14 : vector<16x16xf32>
    %cst_9 = arith.constant dense<0.000000e+00> : vector<16xf32>
    %16 = vector.multi_reduction <add>, %15, %cst_9 [1] : vector<16x16xf32> to vector<16xf32>
    %17 = vector.shape_cast %16 : vector<16xf32> to vector<16x1xf32>
    %18 = tpu.reciprocal %17 {approx = true} : vector<16x1xf32> -> vector<16x1xf32>
    %19 = vector.broadcast %18 : vector<16x1xf32> to vector<16x16xf32>
    %20 = arith.mulf %15, %19 : vector<16x16xf32>
    %c0_10 = arith.constant 0 : index
    %c0_11 = arith.constant 0 : index
    %21 = vector.load %arg4[%c0_10, %c0_11] : memref<64x64xbf16, #tpu.memory_space<vmem>>, vector<64x64xbf16>
    %cst_12 = arith.constant dense<0.000000e+00> : vector<16x64xf32>
    %22 = tpu.matmul %7, %21, %cst_12 {dimension_numbers = #tpu.dot_dimension_numbers<[1], [0], [0], [1], [0, 0, 1, 1], [], []>} : vector<16x64xbf16>, vector<64x64xbf16>, vector<16x64xf32> -> vector<16x64xf32>
    %c0_13 = arith.constant 0 : index
    %c0_14 = arith.constant 0 : index
    %23 = vector.load %arg5[%c0_13, %c0_14] : memref<1x64xf32, #tpu.memory_space<vmem>>, vector<1x64xf32>
    %24 = vector.broadcast %23 : vector<1x64xf32> to vector<16x64xf32>
    %25 = arith.addf %22, %24 : vector<16x64xf32>
    %26 = arith.truncf %20 : vector<16x16xf32> to vector<16x16xbf16>
    %27 = arith.truncf %25 : vector<16x64xf32> to vector<16x64xbf16>
    %cst_15 = arith.constant dense<0.000000e+00> : vector<16x64xf32>
    %28 = tpu.matmul %26, %27, %cst_15 {dimension_numbers = #tpu.dot_dimension_numbers<[1], [0], [0], [1], [0, 0, 1, 1], [], []>} : vector<16x16xbf16>, vector<16x64xbf16>, vector<16x64xf32> -> vector<16x64xf32>
    %cst_16 = arith.constant 0.000000e+00 : f32
    %29 = vector.broadcast %cst_16 : f32 to vector<16x64xf32>
    %30 = arith.maximumf %28, %29 : vector<16x64xf32>
    %c0_17 = arith.constant 0 : index
    %c0_18 = arith.constant 0 : index
    %c0_19 = arith.constant 0 : index
    %31 = vector.load %arg6[%c0_17, %c0_18, %c0_19] : memref<1x16x64xf32, #tpu.memory_space<vmem>>, vector<1x16x64xf32>
    %32 = vector.shape_cast %31 : vector<1x16x64xf32> to vector<16x64xf32>
    %33 = vector.shape_cast %30 : vector<16x64xf32> to vector<1x16x64xf32>
    tpu.vector_store %arg6[%c0_17, %c0_18, %c0_19], %33 {strides = array<i32>} : memref<1x16x64xf32, #tpu.memory_space<vmem>>, vector<1x16x64xf32>,
    return
  }
  func.func @transform_0(%arg0: i32) -> (i32, i32, i32) {
    %c0_i32 = arith.constant 0 : i32
    %c0_i32_0 = arith.constant 0 : i32
    %c0_i32_1 = arith.constant 0 : i32
    return %arg0, %c0_i32, %c0_i32_0 : i32, i32, i32
  }
  func.func @transform_1(%arg0: i32) -> (i32, i32) {
    %c0_i32 = arith.constant 0 : i32
    %c0_i32_0 = arith.constant 0 : i32
    %c0_i32_1 = arith.constant 0 : i32
    return %c0_i32, %c0_i32_0 : i32, i32
  }
  func.func @transform_2(%arg0: i32) -> (i32, i32) {
    %c0_i32 = arith.constant 0 : i32
    %c0_i32_0 = arith.constant 0 : i32
    %c0_i32_1 = arith.constant 0 : i32
    return %c0_i32, %c0_i32_0 : i32, i32
  }
  func.func @transform_3(%arg0: i32) -> (i32, i32) {
    %c0_i32 = arith.constant 0 : i32
    %c0_i32_0 = arith.constant 0 : i32
    %c0_i32_1 = arith.constant 0 : i32
    return %c0_i32, %c0_i32_0 : i32, i32
  }
  func.func @transform_4(%arg0: i32) -> (i32, i32) {
    %c0_i32 = arith.constant 0 : i32
    %c0_i32_0 = arith.constant 0 : i32
    %c0_i32_1 = arith.constant 0 : i32
    return %c0_i32, %c0_i32_0 : i32, i32
  }
  func.func @transform_5(%arg0: i32) -> (i32, i32, i32) {
    %c0_i32 = arith.constant 0 : i32
    %c0_i32_0 = arith.constant 0 : i32
    %c0_i32_1 = arith.constant 0 : i32
    return %arg0, %c0_i32, %c0_i32_0 : i32, i32, i32
  }
}

module attributes {stable_mosaic.version = 11 : i64} {
  func.func @kernel(%arg0: i32, %arg1: i32, %arg2: memref<1x1x6x8xbf16, #tpu.memory_space<vmem>>, %arg3: memref<1x1x6x8xbf16, #tpu.memory_space<vmem>>, %arg4: memref<1x1x6x8xbf16, #tpu.memory_space<vmem>>, %arg5: memref<9x8x64xbf16, #tpu.memory_space<vmem>>, %arg6: memref<1x64xf32, #tpu.memory_space<vmem>>, %arg7: memref<1x1x4x64xf32, #tpu.memory_space<vmem>>) attributes {dimension_semantics = [#tpu.dimension_semantics<parallel>, #tpu.dimension_semantics<parallel>], iteration_bounds = array<i64: 2, 4>, scalar_prefetch = 0 : i64, scratch_operands = 0 : i64, tpu.core_type = #tpu.core_type<tc>, window_params = [{transform_indices = @transform_0, window_bounds = array<i64: 1, 1, 6, 8>}, {transform_indices = @transform_1, window_bounds = array<i64: 1, 1, 6, 8>}, {transform_indices = @transform_2, window_bounds = array<i64: 1, 1, 6, 8>}, {pipeline_mode = #tpu.pipeline_mode<synchronous>, transform_indices = @transform_3, window_bounds = array<i64: 9, 8, 64>}, {pipeline_mode = #tpu.pipeline_mode<synchronous>, transform_indices = @transform_4, window_bounds = array<i64: 1, 64>}, {transform_indices = @transform_5, window_bounds = array<i64: 1, 1, 4, 64>}]} {
    %c0 = arith.constant 0 : index
    %c0_0 = arith.constant 0 : index
    %c0_1 = arith.constant 0 : index
    %c0_2 = arith.constant 0 : index
    %0 = vector.load %arg2[%c0, %c0_0, %c0_1, %c0_2] : memref<1x1x6x8xbf16, #tpu.memory_space<vmem>>, vector<1x1x6x8xbf16>
    %1 = vector.shape_cast %0 : vector<1x1x6x8xbf16> to vector<6x8xbf16>
    %c0_3 = arith.constant 0 : index
    %c0_4 = arith.constant 0 : index
    %c0_5 = arith.constant 0 : index
    %c0_6 = arith.constant 0 : index
    %2 = vector.load %arg3[%c0_3, %c0_4, %c0_5, %c0_6] : memref<1x1x6x8xbf16, #tpu.memory_space<vmem>>, vector<1x1x6x8xbf16>
    %3 = vector.shape_cast %2 : vector<1x1x6x8xbf16> to vector<6x8xbf16>
    %c0_7 = arith.constant 0 : index
    %c0_8 = arith.constant 0 : index
    %c0_9 = arith.constant 0 : index
    %c0_10 = arith.constant 0 : index
    %4 = vector.load %arg4[%c0_7, %c0_8, %c0_9, %c0_10] : memref<1x1x6x8xbf16, #tpu.memory_space<vmem>>, vector<1x1x6x8xbf16>
    %5 = vector.shape_cast %4 : vector<1x1x6x8xbf16> to vector<6x8xbf16>
    %cst = arith.constant 0.000000e+00 : f32
    %6 = vector.broadcast %cst : f32 to vector<4x64xf32>
    %7 = vector.extract_strided_slice %1 {offsets = [0, 0], sizes = [4, 8], strides = [1, 1]} : vector<6x8xbf16> to vector<4x8xbf16>
    %c0_11 = arith.constant 0 : index
    %c0_12 = arith.constant 0 : index
    %c0_13 = arith.constant 0 : index
    %8 = vector.load %arg5[%c0_11, %c0_12, %c0_13] : memref<9x8x64xbf16, #tpu.memory_space<vmem>>, vector<1x8x64xbf16>
    %9 = vector.shape_cast %8 : vector<1x8x64xbf16> to vector<8x64xbf16>
    %cst_14 = arith.constant dense<0.000000e+00> : vector<4x64xf32>
    %10 = tpu.matmul %7, %9, %cst_14 {dimension_numbers = #tpu.dot_dimension_numbers<[1], [0], [0], [1], [0, 0, 1, 1], [], []>} : vector<4x8xbf16>, vector<8x64xbf16>, vector<4x64xf32> -> vector<4x64xf32>
    %11 = arith.addf %6, %10 : vector<4x64xf32>
    %12 = vector.extract_strided_slice %1 {offsets = [1, 0], sizes = [4, 8], strides = [1, 1]} : vector<6x8xbf16> to vector<4x8xbf16>
    %c1 = arith.constant 1 : index
    %c0_15 = arith.constant 0 : index
    %c0_16 = arith.constant 0 : index
    %13 = vector.load %arg5[%c1, %c0_15, %c0_16] : memref<9x8x64xbf16, #tpu.memory_space<vmem>>, vector<1x8x64xbf16>
    %14 = vector.shape_cast %13 : vector<1x8x64xbf16> to vector<8x64xbf16>
    %cst_17 = arith.constant dense<0.000000e+00> : vector<4x64xf32>
    %15 = tpu.matmul %12, %14, %cst_17 {dimension_numbers = #tpu.dot_dimension_numbers<[1], [0], [0], [1], [0, 0, 1, 1], [], []>} : vector<4x8xbf16>, vector<8x64xbf16>, vector<4x64xf32> -> vector<4x64xf32>
    %16 = arith.addf %11, %15 : vector<4x64xf32>
    %17 = vector.extract_strided_slice %1 {offsets = [2, 0], sizes = [4, 8], strides = [1, 1]} : vector<6x8xbf16> to vector<4x8xbf16>
    %c2 = arith.constant 2 : index
    %c0_18 = arith.constant 0 : index
    %c0_19 = arith.constant 0 : index
    %18 = vector.load %arg5[%c2, %c0_18, %c0_19] : memref<9x8x64xbf16, #tpu.memory_space<vmem>>, vector<1x8x64xbf16>
    %19 = vector.shape_cast %18 : vector<1x8x64xbf16> to vector<8x64xbf16>
    %cst_20 = arith.constant dense<0.000000e+00> : vector<4x64xf32>
    %20 = tpu.matmul %17, %19, %cst_20 {dimension_numbers = #tpu.dot_dimension_numbers<[1], [0], [0], [1], [0, 0, 1, 1], [], []>} : vector<4x8xbf16>, vector<8x64xbf16>, vector<4x64xf32> -> vector<4x64xf32>
    %21 = arith.addf %16, %20 : vector<4x64xf32>
    %22 = vector.extract_strided_slice %3 {offsets = [0, 0], sizes = [4, 8], strides = [1, 1]} : vector<6x8xbf16> to vector<4x8xbf16>
    %c3 = arith.constant 3 : index
    %c0_21 = arith.constant 0 : index
    %c0_22 = arith.constant 0 : index
    %23 = vector.load %arg5[%c3, %c0_21, %c0_22] : memref<9x8x64xbf16, #tpu.memory_space<vmem>>, vector<1x8x64xbf16>
    %24 = vector.shape_cast %23 : vector<1x8x64xbf16> to vector<8x64xbf16>
    %cst_23 = arith.constant dense<0.000000e+00> : vector<4x64xf32>
    %25 = tpu.matmul %22, %24, %cst_23 {dimension_numbers = #tpu.dot_dimension_numbers<[1], [0], [0], [1], [0, 0, 1, 1], [], []>} : vector<4x8xbf16>, vector<8x64xbf16>, vector<4x64xf32> -> vector<4x64xf32>
    %26 = arith.addf %21, %25 : vector<4x64xf32>
    %27 = vector.extract_strided_slice %3 {offsets = [1, 0], sizes = [4, 8], strides = [1, 1]} : vector<6x8xbf16> to vector<4x8xbf16>
    %c4 = arith.constant 4 : index
    %c0_24 = arith.constant 0 : index
    %c0_25 = arith.constant 0 : index
    %28 = vector.load %arg5[%c4, %c0_24, %c0_25] : memref<9x8x64xbf16, #tpu.memory_space<vmem>>, vector<1x8x64xbf16>
    %29 = vector.shape_cast %28 : vector<1x8x64xbf16> to vector<8x64xbf16>
    %cst_26 = arith.constant dense<0.000000e+00> : vector<4x64xf32>
    %30 = tpu.matmul %27, %29, %cst_26 {dimension_numbers = #tpu.dot_dimension_numbers<[1], [0], [0], [1], [0, 0, 1, 1], [], []>} : vector<4x8xbf16>, vector<8x64xbf16>, vector<4x64xf32> -> vector<4x64xf32>
    %31 = arith.addf %26, %30 : vector<4x64xf32>
    %32 = vector.extract_strided_slice %3 {offsets = [2, 0], sizes = [4, 8], strides = [1, 1]} : vector<6x8xbf16> to vector<4x8xbf16>
    %c5 = arith.constant 5 : index
    %c0_27 = arith.constant 0 : index
    %c0_28 = arith.constant 0 : index
    %33 = vector.load %arg5[%c5, %c0_27, %c0_28] : memref<9x8x64xbf16, #tpu.memory_space<vmem>>, vector<1x8x64xbf16>
    %34 = vector.shape_cast %33 : vector<1x8x64xbf16> to vector<8x64xbf16>
    %cst_29 = arith.constant dense<0.000000e+00> : vector<4x64xf32>
    %35 = tpu.matmul %32, %34, %cst_29 {dimension_numbers = #tpu.dot_dimension_numbers<[1], [0], [0], [1], [0, 0, 1, 1], [], []>} : vector<4x8xbf16>, vector<8x64xbf16>, vector<4x64xf32> -> vector<4x64xf32>
    %36 = arith.addf %31, %35 : vector<4x64xf32>
    %37 = vector.extract_strided_slice %5 {offsets = [0, 0], sizes = [4, 8], strides = [1, 1]} : vector<6x8xbf16> to vector<4x8xbf16>
    %c6 = arith.constant 6 : index
    %c0_30 = arith.constant 0 : index
    %c0_31 = arith.constant 0 : index
    %38 = vector.load %arg5[%c6, %c0_30, %c0_31] : memref<9x8x64xbf16, #tpu.memory_space<vmem>>, vector<1x8x64xbf16>
    %39 = vector.shape_cast %38 : vector<1x8x64xbf16> to vector<8x64xbf16>
    %cst_32 = arith.constant dense<0.000000e+00> : vector<4x64xf32>
    %40 = tpu.matmul %37, %39, %cst_32 {dimension_numbers = #tpu.dot_dimension_numbers<[1], [0], [0], [1], [0, 0, 1, 1], [], []>} : vector<4x8xbf16>, vector<8x64xbf16>, vector<4x64xf32> -> vector<4x64xf32>
    %41 = arith.addf %36, %40 : vector<4x64xf32>
    %42 = vector.extract_strided_slice %5 {offsets = [1, 0], sizes = [4, 8], strides = [1, 1]} : vector<6x8xbf16> to vector<4x8xbf16>
    %c7 = arith.constant 7 : index
    %c0_33 = arith.constant 0 : index
    %c0_34 = arith.constant 0 : index
    %43 = vector.load %arg5[%c7, %c0_33, %c0_34] : memref<9x8x64xbf16, #tpu.memory_space<vmem>>, vector<1x8x64xbf16>
    %44 = vector.shape_cast %43 : vector<1x8x64xbf16> to vector<8x64xbf16>
    %cst_35 = arith.constant dense<0.000000e+00> : vector<4x64xf32>
    %45 = tpu.matmul %42, %44, %cst_35 {dimension_numbers = #tpu.dot_dimension_numbers<[1], [0], [0], [1], [0, 0, 1, 1], [], []>} : vector<4x8xbf16>, vector<8x64xbf16>, vector<4x64xf32> -> vector<4x64xf32>
    %46 = arith.addf %41, %45 : vector<4x64xf32>
    %47 = vector.extract_strided_slice %5 {offsets = [2, 0], sizes = [4, 8], strides = [1, 1]} : vector<6x8xbf16> to vector<4x8xbf16>
    %c8 = arith.constant 8 : index
    %c0_36 = arith.constant 0 : index
    %c0_37 = arith.constant 0 : index
    %48 = vector.load %arg5[%c8, %c0_36, %c0_37] : memref<9x8x64xbf16, #tpu.memory_space<vmem>>, vector<1x8x64xbf16>
    %49 = vector.shape_cast %48 : vector<1x8x64xbf16> to vector<8x64xbf16>
    %cst_38 = arith.constant dense<0.000000e+00> : vector<4x64xf32>
    %50 = tpu.matmul %47, %49, %cst_38 {dimension_numbers = #tpu.dot_dimension_numbers<[1], [0], [0], [1], [0, 0, 1, 1], [], []>} : vector<4x8xbf16>, vector<8x64xbf16>, vector<4x64xf32> -> vector<4x64xf32>
    %51 = arith.addf %46, %50 : vector<4x64xf32>
    %c0_39 = arith.constant 0 : index
    %c0_40 = arith.constant 0 : index
    %52 = vector.load %arg6[%c0_39, %c0_40] : memref<1x64xf32, #tpu.memory_space<vmem>>, vector<1x64xf32>
    %53 = vector.broadcast %52 : vector<1x64xf32> to vector<4x64xf32>
    %54 = arith.addf %51, %53 : vector<4x64xf32>
    %cst_41 = arith.constant 0.000000e+00 : f32
    %55 = vector.broadcast %cst_41 : f32 to vector<4x64xf32>
    %56 = arith.maximumf %54, %55 : vector<4x64xf32>
    %c0_42 = arith.constant 0 : index
    %c0_43 = arith.constant 0 : index
    %c0_44 = arith.constant 0 : index
    %c0_45 = arith.constant 0 : index
    %57 = vector.load %arg7[%c0_42, %c0_43, %c0_44, %c0_45] : memref<1x1x4x64xf32, #tpu.memory_space<vmem>>, vector<1x1x4x64xf32>
    %58 = vector.shape_cast %57 : vector<1x1x4x64xf32> to vector<4x64xf32>
    %59 = vector.shape_cast %56 : vector<4x64xf32> to vector<1x1x4x64xf32>
    tpu.vector_store %arg7[%c0_42, %c0_43, %c0_44, %c0_45], %59 {strides = array<i32>} : memref<1x1x4x64xf32, #tpu.memory_space<vmem>>, vector<1x1x4x64xf32>,
    return
  }
  func.func @transform_0(%arg0: i32, %arg1: i32) -> (i32, i32, i32, i32) {
    %c0_i32 = arith.constant 0 : i32
    %0 = arith.addi %arg1, %c0_i32 : i32
    %c0_i32_0 = arith.constant 0 : i32
    %c0_i32_1 = arith.constant 0 : i32
    %c0_i32_2 = arith.constant 0 : i32
    return %arg0, %0, %c0_i32_0, %c0_i32_1 : i32, i32, i32, i32
  }
  func.func @transform_1(%arg0: i32, %arg1: i32) -> (i32, i32, i32, i32) {
    %c1_i32 = arith.constant 1 : i32
    %0 = arith.addi %arg1, %c1_i32 : i32
    %c0_i32 = arith.constant 0 : i32
    %c0_i32_0 = arith.constant 0 : i32
    %c0_i32_1 = arith.constant 0 : i32
    return %arg0, %0, %c0_i32, %c0_i32_0 : i32, i32, i32, i32
  }
  func.func @transform_2(%arg0: i32, %arg1: i32) -> (i32, i32, i32, i32) {
    %c2_i32 = arith.constant 2 : i32
    %0 = arith.addi %arg1, %c2_i32 : i32
    %c0_i32 = arith.constant 0 : i32
    %c0_i32_0 = arith.constant 0 : i32
    %c0_i32_1 = arith.constant 0 : i32
    return %arg0, %0, %c0_i32, %c0_i32_0 : i32, i32, i32, i32
  }
  func.func @transform_3(%arg0: i32, %arg1: i32) -> (i32, i32, i32) {
    %c0_i32 = arith.constant 0 : i32
    %c0_i32_0 = arith.constant 0 : i32
    %c0_i32_1 = arith.constant 0 : i32
    %c0_i32_2 = arith.constant 0 : i32
    return %c0_i32, %c0_i32_0, %c0_i32_1 : i32, i32, i32
  }
  func.func @transform_4(%arg0: i32, %arg1: i32) -> (i32, i32) {
    %c0_i32 = arith.constant 0 : i32
    %c0_i32_0 = arith.constant 0 : i32
    %c0_i32_1 = arith.constant 0 : i32
    return %c0_i32, %c0_i32_0 : i32, i32
  }
  func.func @transform_5(%arg0: i32, %arg1: i32) -> (i32, i32, i32, i32) {
    %c0_i32 = arith.constant 0 : i32
    %c0_i32_0 = arith.constant 0 : i32
    %c0_i32_1 = arith.constant 0 : i32
    return %arg0, %arg1, %c0_i32, %c0_i32_0 : i32, i32, i32, i32
  }
}

module attributes {stable_mosaic.version = 11 : i64} {
  func.func @kernel(%arg0: i32, %arg1: memref<32x64xf32, #tpu.memory_space<vmem>>, %arg2: memref<32x64xf32, #tpu.memory_space<vmem>>, %arg3: memref<64x128xbf16, #tpu.memory_space<vmem>>, %arg4: memref<1x128xf32, #tpu.memory_space<vmem>>, %arg5: memref<32x64xf32, #tpu.memory_space<vmem>>) attributes {dimension_semantics = [#tpu.dimension_semantics<parallel>], iteration_bounds = array<i64: 1>, scalar_prefetch = 0 : i64, scratch_operands = 0 : i64, tpu.core_type = #tpu.core_type<tc>, window_params = [{transform_indices = @transform_0, window_bounds = array<i64: 32, 64>}, {transform_indices = @transform_1, window_bounds = array<i64: 32, 64>}, {pipeline_mode = #tpu.pipeline_mode<synchronous>, transform_indices = @transform_2, window_bounds = array<i64: 64, 128>}, {pipeline_mode = #tpu.pipeline_mode<synchronous>, transform_indices = @transform_3, window_bounds = array<i64: 1, 128>}, {transform_indices = @transform_4, window_bounds = array<i64: 32, 64>}]} {
    %c0 = arith.constant 0 : index
    %c0_0 = arith.constant 0 : index
    %0 = vector.load %arg2[%c0, %c0_0] : memref<32x64xf32, #tpu.memory_space<vmem>>, vector<32x64xf32>
    %1 = arith.truncf %0 : vector<32x64xf32> to vector<32x64xbf16>
    %c0_1 = arith.constant 0 : index
    %c0_2 = arith.constant 0 : index
    %2 = vector.load %arg3[%c0_1, %c0_2] : memref<64x128xbf16, #tpu.memory_space<vmem>>, vector<64x128xbf16>
    %cst = arith.constant dense<0.000000e+00> : vector<32x128xf32>
    %3 = tpu.matmul %1, %2, %cst {dimension_numbers = #tpu.dot_dimension_numbers<[1], [0], [0], [1], [0, 0, 1, 1], [], []>} : vector<32x64xbf16>, vector<64x128xbf16>, vector<32x128xf32> -> vector<32x128xf32>
    %c0_3 = arith.constant 0 : index
    %c0_4 = arith.constant 0 : index
    %4 = vector.load %arg4[%c0_3, %c0_4] : memref<1x128xf32, #tpu.memory_space<vmem>>, vector<1x128xf32>
    %5 = vector.broadcast %4 : vector<1x128xf32> to vector<32x128xf32>
    %6 = arith.addf %3, %5 : vector<32x128xf32>
    %7 = vector.extract_strided_slice %6 {offsets = [0, 0], sizes = [32, 64], strides = [1, 1]} : vector<32x128xf32> to vector<32x64xf32>
    %8 = vector.extract_strided_slice %6 {offsets = [0, 64], sizes = [32, 64], strides = [1, 1]} : vector<32x128xf32> to vector<32x64xf32>
    %c0_5 = arith.constant 0 : index
    %c0_6 = arith.constant 0 : index
    %9 = vector.load %arg1[%c0_5, %c0_6] : memref<32x64xf32, #tpu.memory_space<vmem>>, vector<32x64xf32>
    %cst_7 = arith.constant 2.000000e+00 : f32
    %10 = vector.broadcast %cst_7 : f32 to vector<32x64xf32>
    %11 = arith.addf %10, %7 : vector<32x64xf32>
    %12 = arith.mulf %9, %11 : vector<32x64xf32>
    %13 = arith.addf %12, %8 : vector<32x64xf32>
    %c0_8 = arith.constant 0 : index
    %c0_9 = arith.constant 0 : index
    %14 = vector.load %arg5[%c0_8, %c0_9] : memref<32x64xf32, #tpu.memory_space<vmem>>, vector<32x64xf32>
    tpu.vector_store %arg5[%c0_8, %c0_9], %13 {strides = array<i32>} : memref<32x64xf32, #tpu.memory_space<vmem>>, vector<32x64xf32>,
    return
  }
  func.func @transform_0(%arg0: i32) -> (i32, i32) {
    %c0_i32 = arith.constant 0 : i32
    %c0_i32_0 = arith.constant 0 : i32
    return %arg0, %c0_i32 : i32, i32
  }
  func.func @transform_1(%arg0: i32) -> (i32, i32) {
    %c0_i32 = arith.constant 0 : i32
    %c0_i32_0 = arith.constant 0 : i32
    return %arg0, %c0_i32 : i32, i32
  }
  func.func @transform_2(%arg0: i32) -> (i32, i32) {
    %c0_i32 = arith.constant 0 : i32
    %c0_i32_0 = arith.constant 0 : i32
    %c0_i32_1 = arith.constant 0 : i32
    return %c0_i32, %c0_i32_0 : i32, i32
  }
  func.func @transform_3(%arg0: i32) -> (i32, i32) {
    %c0_i32 = arith.constant 0 : i32
    %c0_i32_0 = arith.constant 0 : i32
    %c0_i32_1 = arith.constant 0 : i32
    return %c0_i32, %c0_i32_0 : i32, i32
  }
  func.func @transform_4(%arg0: i32) -> (i32, i32) {
    %c0_i32 = arith.constant 0 : i32
    %c0_i32_0 = arith.constant 0 : i32
    return %arg0, %c0_i32 : i32, i32
  }
}

module attributes {stable_mosaic.version = 11 : i64} {
  func.func @kernel(%arg0: i32, %arg1: memref<1x256x8xbf16, #tpu.memory_space<vmem>>, %arg2: memref<8x64xbf16, #tpu.memory_space<vmem>>, %arg3: memref<1x64xf32, #tpu.memory_space<vmem>>, %arg4: memref<64x64xbf16, #tpu.memory_space<vmem>>, %arg5: memref<1x64xf32, #tpu.memory_space<vmem>>, %arg6: memref<1x256x64xf32, #tpu.memory_space<vmem>>) attributes {dimension_semantics = [#tpu.dimension_semantics<parallel>], iteration_bounds = array<i64: 2>, scalar_prefetch = 0 : i64, scratch_operands = 0 : i64, tpu.core_type = #tpu.core_type<tc>, window_params = [{transform_indices = @transform_0, window_bounds = array<i64: 1, 256, 8>}, {pipeline_mode = #tpu.pipeline_mode<synchronous>, transform_indices = @transform_1, window_bounds = array<i64: 8, 64>}, {pipeline_mode = #tpu.pipeline_mode<synchronous>, transform_indices = @transform_2, window_bounds = array<i64: 1, 64>}, {pipeline_mode = #tpu.pipeline_mode<synchronous>, transform_indices = @transform_3, window_bounds = array<i64: 64, 64>}, {pipeline_mode = #tpu.pipeline_mode<synchronous>, transform_indices = @transform_4, window_bounds = array<i64: 1, 64>}, {transform_indices = @transform_5, window_bounds = array<i64: 1, 256, 64>}]} {
    %c0 = arith.constant 0 : index
    %c0_0 = arith.constant 0 : index
    %c0_1 = arith.constant 0 : index
    %0 = vector.load %arg1[%c0, %c0_0, %c0_1] : memref<1x256x8xbf16, #tpu.memory_space<vmem>>, vector<1x256x8xbf16>
    %1 = vector.shape_cast %0 : vector<1x256x8xbf16> to vector<256x8xbf16>
    %c0_2 = arith.constant 0 : index
    %c0_3 = arith.constant 0 : index
    %2 = vector.load %arg2[%c0_2, %c0_3] : memref<8x64xbf16, #tpu.memory_space<vmem>>, vector<8x64xbf16>
    %cst = arith.constant dense<0.000000e+00> : vector<256x64xf32>
    %3 = tpu.matmul %1, %2, %cst {dimension_numbers = #tpu.dot_dimension_numbers<[1], [0], [0], [1], [0, 0, 1, 1], [], []>} : vector<256x8xbf16>, vector<8x64xbf16>, vector<256x64xf32> -> vector<256x64xf32>
    %c0_4 = arith.constant 0 : index
    %c0_5 = arith.constant 0 : index
    %4 = vector.load %arg3[%c0_4, %c0_5] : memref<1x64xf32, #tpu.memory_space<vmem>>, vector<1x64xf32>
    %5 = vector.broadcast %4 : vector<1x64xf32> to vector<256x64xf32>
    %6 = arith.addf %3, %5 : vector<256x64xf32>
    %7 = arith.truncf %6 : vector<256x64xf32> to vector<256x64xbf16>
    %cst_6 = arith.constant dense<0.000000e+00> : vector<256x256xf32>
    %8 = tpu.matmul %7, %7, %cst_6 {dimension_numbers = #tpu.dot_dimension_numbers<[1], [1], [0], [0], [0, 0, 1, 0], [], []>} : vector<256x64xbf16>, vector<256x64xbf16>, vector<256x256xf32> -> vector<256x256xf32>
    %cst_7 = arith.constant 1.250000e-01 : f32
    %9 = vector.broadcast %cst_7 : f32 to vector<256x256xf32>
    %10 = arith.mulf %8, %9 : vector<256x256xf32>
    %cst_8 = arith.constant dense<0xFF800000> : vector<256xf32>
    %11 = vector.multi_reduction <maximumf>, %10, %cst_8 [1] : vector<256x256xf32> to vector<256xf32>
    %12 = vector.shape_cast %11 : vector<256xf32> to vector<256x1xf32>
    %13 = vector.broadcast %12 : vector<256x1xf32> to vector<256x256xf32>
    %14 = arith.subf %10, %13 : vector<256x256xf32>
    %15 = math.exp %14 : vector<256x256xf32>
    %cst_9 = arith.constant dense<0.000000e+00> : vector<256xf32>
    %16 = vector.multi_reduction <add>, %15, %cst_9 [1] : vector<256x256xf32> to vector<256xf32>
    %17 = vector.shape_cast %16 : vector<256xf32> to vector<256x1xf32>
    %18 = tpu.reciprocal %17 {approx = true} : vector<256x1xf32> -> vector<256x1xf32>
    %19 = vector.broadcast %18 : vector<256x1xf32> to vector<256x256xf32>
    %20 = arith.mulf %15, %19 : vector<256x256xf32>
    %c0_10 = arith.constant 0 : index
    %c0_11 = arith.constant 0 : index
    %21 = vector.load %arg4[%c0_10, %c0_11] : memref<64x64xbf16, #tpu.memory_space<vmem>>, vector<64x64xbf16>
    %cst_12 = arith.constant dense<0.000000e+00> : vector<256x64xf32>
    %22 = tpu.matmul %7, %21, %cst_12 {dimension_numbers = #tpu.dot_dimension_numbers<[1], [0], [0], [1], [0, 0, 1, 1], [], []>} : vector<256x64xbf16>, vector<64x64xbf16>, vector<256x64xf32> -> vector<256x64xf32>
    %c0_13 = arith.constant 0 : index
    %c0_14 = arith.constant 0 : index
    %23 = vector.load %arg5[%c0_13, %c0_14] : memref<1x64xf32, #tpu.memory_space<vmem>>, vector<1x64xf32>
    %24 = vector.broadcast %23 : vector<1x64xf32> to vector<256x64xf32>
    %25 = arith.addf %22, %24 : vector<256x64xf32>
    %26 = arith.truncf %20 : vector<256x256xf32> to vector<256x256xbf16>
    %27 = arith.truncf %25 : vector<256x64xf32> to vector<256x64xbf16>
    %cst_15 = arith.constant dense<0.000000e+00> : vector<256x64xf32>
    %28 = tpu.matmul %26, %27, %cst_15 {dimension_numbers = #tpu.dot_dimension_numbers<[1], [0], [0], [1], [0, 0, 1, 1], [], []>} : vector<256x256xbf16>, vector<256x64xbf16>, vector<256x64xf32> -> vector<256x64xf32>
    %cst_16 = arith.constant 0.000000e+00 : f32
    %29 = vector.broadcast %cst_16 : f32 to vector<256x64xf32>
    %30 = arith.maximumf %28, %29 : vector<256x64xf32>
    %c0_17 = arith.constant 0 : index
    %c0_18 = arith.constant 0 : index
    %c0_19 = arith.constant 0 : index
    %31 = vector.load %arg6[%c0_17, %c0_18, %c0_19] : memref<1x256x64xf32, #tpu.memory_space<vmem>>, vector<1x256x64xf32>
    %32 = vector.shape_cast %31 : vector<1x256x64xf32> to vector<256x64xf32>
    %33 = vector.shape_cast %30 : vector<256x64xf32> to vector<1x256x64xf32>
    tpu.vector_store %arg6[%c0_17, %c0_18, %c0_19], %33 {strides = array<i32>} : memref<1x256x64xf32, #tpu.memory_space<vmem>>, vector<1x256x64xf32>,
    return
  }
  func.func @transform_0(%arg0: i32) -> (i32, i32, i32) {
    %c0_i32 = arith.constant 0 : i32
    %c0_i32_0 = arith.constant 0 : i32
    %c0_i32_1 = arith.constant 0 : i32
    return %arg0, %c0_i32, %c0_i32_0 : i32, i32, i32
  }
  func.func @transform_1(%arg0: i32) -> (i32, i32) {
    %c0_i32 = arith.constant 0 : i32
    %c0_i32_0 = arith.constant 0 : i32
    %c0_i32_1 = arith.constant 0 : i32
    return %c0_i32, %c0_i32_0 : i32, i32
  }
  func.func @transform_2(%arg0: i32) -> (i32, i32) {
    %c0_i32 = arith.constant 0 : i32
    %c0_i32_0 = arith.constant 0 : i32
    %c0_i32_1 = arith.constant 0 : i32
    return %c0_i32, %c0_i32_0 : i32, i32
  }
  func.func @transform_3(%arg0: i32) -> (i32, i32) {
    %c0_i32 = arith.constant 0 : i32
    %c0_i32_0 = arith.constant 0 : i32
    %c0_i32_1 = arith.constant 0 : i32
    return %c0_i32, %c0_i32_0 : i32, i32
  }
  func.func @transform_4(%arg0: i32) -> (i32, i32) {
    %c0_i32 = arith.constant 0 : i32
    %c0_i32_0 = arith.constant 0 : i32
    %c0_i32_1 = arith.constant 0 : i32
    return %c0_i32, %c0_i32_0 : i32, i32
  }
  func.func @transform_5(%arg0: i32) -> (i32, i32, i32) {
    %c0_i32 = arith.constant 0 : i32
    %c0_i32_0 = arith.constant 0 : i32
    %c0_i32_1 = arith.constant 0 : i32
    return %arg0, %c0_i32, %c0_i32_0 : i32, i32, i32
  }
}

module attributes {stable_mosaic.version = 11 : i64} {
  func.func @kernel(%arg0: i32, %arg1: i32, %arg2: memref<1x1x18x8xbf16, #tpu.memory_space<vmem>>, %arg3: memref<1x1x18x8xbf16, #tpu.memory_space<vmem>>, %arg4: memref<1x1x18x8xbf16, #tpu.memory_space<vmem>>, %arg5: memref<9x8x64xbf16, #tpu.memory_space<vmem>>, %arg6: memref<1x64xf32, #tpu.memory_space<vmem>>, %arg7: memref<1x1x16x64xf32, #tpu.memory_space<vmem>>) attributes {dimension_semantics = [#tpu.dimension_semantics<parallel>, #tpu.dimension_semantics<parallel>], iteration_bounds = array<i64: 2, 16>, scalar_prefetch = 0 : i64, scratch_operands = 0 : i64, tpu.core_type = #tpu.core_type<tc>, window_params = [{transform_indices = @transform_0, window_bounds = array<i64: 1, 1, 18, 8>}, {transform_indices = @transform_1, window_bounds = array<i64: 1, 1, 18, 8>}, {transform_indices = @transform_2, window_bounds = array<i64: 1, 1, 18, 8>}, {pipeline_mode = #tpu.pipeline_mode<synchronous>, transform_indices = @transform_3, window_bounds = array<i64: 9, 8, 64>}, {pipeline_mode = #tpu.pipeline_mode<synchronous>, transform_indices = @transform_4, window_bounds = array<i64: 1, 64>}, {transform_indices = @transform_5, window_bounds = array<i64: 1, 1, 16, 64>}]} {
    %c0 = arith.constant 0 : index
    %c0_0 = arith.constant 0 : index
    %c0_1 = arith.constant 0 : index
    %c0_2 = arith.constant 0 : index
    %0 = vector.load %arg2[%c0, %c0_0, %c0_1, %c0_2] : memref<1x1x18x8xbf16, #tpu.memory_space<vmem>>, vector<1x1x18x8xbf16>
    %1 = vector.shape_cast %0 : vector<1x1x18x8xbf16> to vector<18x8xbf16>
    %c0_3 = arith.constant 0 : index
    %c0_4 = arith.constant 0 : index
    %c0_5 = arith.constant 0 : index
    %c0_6 = arith.constant 0 : index
    %2 = vector.load %arg3[%c0_3, %c0_4, %c0_5, %c0_6] : memref<1x1x18x8xbf16, #tpu.memory_space<vmem>>, vector<1x1x18x8xbf16>
    %3 = vector.shape_cast %2 : vector<1x1x18x8xbf16> to vector<18x8xbf16>
    %c0_7 = arith.constant 0 : index
    %c0_8 = arith.constant 0 : index
    %c0_9 = arith.constant 0 : index
    %c0_10 = arith.constant 0 : index
    %4 = vector.load %arg4[%c0_7, %c0_8, %c0_9, %c0_10] : memref<1x1x18x8xbf16, #tpu.memory_space<vmem>>, vector<1x1x18x8xbf16>
    %5 = vector.shape_cast %4 : vector<1x1x18x8xbf16> to vector<18x8xbf16>
    %cst = arith.constant 0.000000e+00 : f32
    %6 = vector.broadcast %cst : f32 to vector<16x64xf32>
    %7 = vector.extract_strided_slice %1 {offsets = [0, 0], sizes = [16, 8], strides = [1, 1]} : vector<18x8xbf16> to vector<16x8xbf16>
    %c0_11 = arith.constant 0 : index
    %c0_12 = arith.constant 0 : index
    %c0_13 = arith.constant 0 : index
    %8 = vector.load %arg5[%c0_11, %c0_12, %c0_13] : memref<9x8x64xbf16, #tpu.memory_space<vmem>>, vector<1x8x64xbf16>
    %9 = vector.shape_cast %8 : vector<1x8x64xbf16> to vector<8x64xbf16>
    %cst_14 = arith.constant dense<0.000000e+00> : vector<16x64xf32>
    %10 = tpu.matmul %7, %9, %cst_14 {dimension_numbers = #tpu.dot_dimension_numbers<[1], [0], [0], [1], [0, 0, 1, 1], [], []>} : vector<16x8xbf16>, vector<8x64xbf16>, vector<16x64xf32> -> vector<16x64xf32>
    %11 = arith.addf %6, %10 : vector<16x64xf32>
    %12 = vector.extract_strided_slice %1 {offsets = [1, 0], sizes = [16, 8], strides = [1, 1]} : vector<18x8xbf16> to vector<16x8xbf16>
    %c1 = arith.constant 1 : index
    %c0_15 = arith.constant 0 : index
    %c0_16 = arith.constant 0 : index
    %13 = vector.load %arg5[%c1, %c0_15, %c0_16] : memref<9x8x64xbf16, #tpu.memory_space<vmem>>, vector<1x8x64xbf16>
    %14 = vector.shape_cast %13 : vector<1x8x64xbf16> to vector<8x64xbf16>
    %cst_17 = arith.constant dense<0.000000e+00> : vector<16x64xf32>
    %15 = tpu.matmul %12, %14, %cst_17 {dimension_numbers = #tpu.dot_dimension_numbers<[1], [0], [0], [1], [0, 0, 1, 1], [], []>} : vector<16x8xbf16>, vector<8x64xbf16>, vector<16x64xf32> -> vector<16x64xf32>
    %16 = arith.addf %11, %15 : vector<16x64xf32>
    %17 = vector.extract_strided_slice %1 {offsets = [2, 0], sizes = [16, 8], strides = [1, 1]} : vector<18x8xbf16> to vector<16x8xbf16>
    %c2 = arith.constant 2 : index
    %c0_18 = arith.constant 0 : index
    %c0_19 = arith.constant 0 : index
    %18 = vector.load %arg5[%c2, %c0_18, %c0_19] : memref<9x8x64xbf16, #tpu.memory_space<vmem>>, vector<1x8x64xbf16>
    %19 = vector.shape_cast %18 : vector<1x8x64xbf16> to vector<8x64xbf16>
    %cst_20 = arith.constant dense<0.000000e+00> : vector<16x64xf32>
    %20 = tpu.matmul %17, %19, %cst_20 {dimension_numbers = #tpu.dot_dimension_numbers<[1], [0], [0], [1], [0, 0, 1, 1], [], []>} : vector<16x8xbf16>, vector<8x64xbf16>, vector<16x64xf32> -> vector<16x64xf32>
    %21 = arith.addf %16, %20 : vector<16x64xf32>
    %22 = vector.extract_strided_slice %3 {offsets = [0, 0], sizes = [16, 8], strides = [1, 1]} : vector<18x8xbf16> to vector<16x8xbf16>
    %c3 = arith.constant 3 : index
    %c0_21 = arith.constant 0 : index
    %c0_22 = arith.constant 0 : index
    %23 = vector.load %arg5[%c3, %c0_21, %c0_22] : memref<9x8x64xbf16, #tpu.memory_space<vmem>>, vector<1x8x64xbf16>
    %24 = vector.shape_cast %23 : vector<1x8x64xbf16> to vector<8x64xbf16>
    %cst_23 = arith.constant dense<0.000000e+00> : vector<16x64xf32>
    %25 = tpu.matmul %22, %24, %cst_23 {dimension_numbers = #tpu.dot_dimension_numbers<[1], [0], [0], [1], [0, 0, 1, 1], [], []>} : vector<16x8xbf16>, vector<8x64xbf16>, vector<16x64xf32> -> vector<16x64xf32>
    %26 = arith.addf %21, %25 : vector<16x64xf32>
    %27 = vector.extract_strided_slice %3 {offsets = [1, 0], sizes = [16, 8], strides = [1, 1]} : vector<18x8xbf16> to vector<16x8xbf16>
    %c4 = arith.constant 4 : index
    %c0_24 = arith.constant 0 : index
    %c0_25 = arith.constant 0 : index
    %28 = vector.load %arg5[%c4, %c0_24, %c0_25] : memref<9x8x64xbf16, #tpu.memory_space<vmem>>, vector<1x8x64xbf16>
    %29 = vector.shape_cast %28 : vector<1x8x64xbf16> to vector<8x64xbf16>
    %cst_26 = arith.constant dense<0.000000e+00> : vector<16x64xf32>
    %30 = tpu.matmul %27, %29, %cst_26 {dimension_numbers = #tpu.dot_dimension_numbers<[1], [0], [0], [1], [0, 0, 1, 1], [], []>} : vector<16x8xbf16>, vector<8x64xbf16>, vector<16x64xf32> -> vector<16x64xf32>
    %31 = arith.addf %26, %30 : vector<16x64xf32>
    %32 = vector.extract_strided_slice %3 {offsets = [2, 0], sizes = [16, 8], strides = [1, 1]} : vector<18x8xbf16> to vector<16x8xbf16>
    %c5 = arith.constant 5 : index
    %c0_27 = arith.constant 0 : index
    %c0_28 = arith.constant 0 : index
    %33 = vector.load %arg5[%c5, %c0_27, %c0_28] : memref<9x8x64xbf16, #tpu.memory_space<vmem>>, vector<1x8x64xbf16>
    %34 = vector.shape_cast %33 : vector<1x8x64xbf16> to vector<8x64xbf16>
    %cst_29 = arith.constant dense<0.000000e+00> : vector<16x64xf32>
    %35 = tpu.matmul %32, %34, %cst_29 {dimension_numbers = #tpu.dot_dimension_numbers<[1], [0], [0], [1], [0, 0, 1, 1], [], []>} : vector<16x8xbf16>, vector<8x64xbf16>, vector<16x64xf32> -> vector<16x64xf32>
    %36 = arith.addf %31, %35 : vector<16x64xf32>
    %37 = vector.extract_strided_slice %5 {offsets = [0, 0], sizes = [16, 8], strides = [1, 1]} : vector<18x8xbf16> to vector<16x8xbf16>
    %c6 = arith.constant 6 : index
    %c0_30 = arith.constant 0 : index
    %c0_31 = arith.constant 0 : index
    %38 = vector.load %arg5[%c6, %c0_30, %c0_31] : memref<9x8x64xbf16, #tpu.memory_space<vmem>>, vector<1x8x64xbf16>
    %39 = vector.shape_cast %38 : vector<1x8x64xbf16> to vector<8x64xbf16>
    %cst_32 = arith.constant dense<0.000000e+00> : vector<16x64xf32>
    %40 = tpu.matmul %37, %39, %cst_32 {dimension_numbers = #tpu.dot_dimension_numbers<[1], [0], [0], [1], [0, 0, 1, 1], [], []>} : vector<16x8xbf16>, vector<8x64xbf16>, vector<16x64xf32> -> vector<16x64xf32>
    %41 = arith.addf %36, %40 : vector<16x64xf32>
    %42 = vector.extract_strided_slice %5 {offsets = [1, 0], sizes = [16, 8], strides = [1, 1]} : vector<18x8xbf16> to vector<16x8xbf16>
    %c7 = arith.constant 7 : index
    %c0_33 = arith.constant 0 : index
    %c0_34 = arith.constant 0 : index
    %43 = vector.load %arg5[%c7, %c0_33, %c0_34] : memref<9x8x64xbf16, #tpu.memory_space<vmem>>, vector<1x8x64xbf16>
    %44 = vector.shape_cast %43 : vector<1x8x64xbf16> to vector<8x64xbf16>
    %cst_35 = arith.constant dense<0.000000e+00> : vector<16x64xf32>
    %45 = tpu.matmul %42, %44, %cst_35 {dimension_numbers = #tpu.dot_dimension_numbers<[1], [0], [0], [1], [0, 0, 1, 1], [], []>} : vector<16x8xbf16>, vector<8x64xbf16>, vector<16x64xf32> -> vector<16x64xf32>
    %46 = arith.addf %41, %45 : vector<16x64xf32>
    %47 = vector.extract_strided_slice %5 {offsets = [2, 0], sizes = [16, 8], strides = [1, 1]} : vector<18x8xbf16> to vector<16x8xbf16>
    %c8 = arith.constant 8 : index
    %c0_36 = arith.constant 0 : index
    %c0_37 = arith.constant 0 : index
    %48 = vector.load %arg5[%c8, %c0_36, %c0_37] : memref<9x8x64xbf16, #tpu.memory_space<vmem>>, vector<1x8x64xbf16>
    %49 = vector.shape_cast %48 : vector<1x8x64xbf16> to vector<8x64xbf16>
    %cst_38 = arith.constant dense<0.000000e+00> : vector<16x64xf32>
    %50 = tpu.matmul %47, %49, %cst_38 {dimension_numbers = #tpu.dot_dimension_numbers<[1], [0], [0], [1], [0, 0, 1, 1], [], []>} : vector<16x8xbf16>, vector<8x64xbf16>, vector<16x64xf32> -> vector<16x64xf32>
    %51 = arith.addf %46, %50 : vector<16x64xf32>
    %c0_39 = arith.constant 0 : index
    %c0_40 = arith.constant 0 : index
    %52 = vector.load %arg6[%c0_39, %c0_40] : memref<1x64xf32, #tpu.memory_space<vmem>>, vector<1x64xf32>
    %53 = vector.broadcast %52 : vector<1x64xf32> to vector<16x64xf32>
    %54 = arith.addf %51, %53 : vector<16x64xf32>
    %cst_41 = arith.constant 0.000000e+00 : f32
    %55 = vector.broadcast %cst_41 : f32 to vector<16x64xf32>
    %56 = arith.maximumf %54, %55 : vector<16x64xf32>
    %c0_42 = arith.constant 0 : index
    %c0_43 = arith.constant 0 : index
    %c0_44 = arith.constant 0 : index
    %c0_45 = arith.constant 0 : index
    %57 = vector.load %arg7[%c0_42, %c0_43, %c0_44, %c0_45] : memref<1x1x16x64xf32, #tpu.memory_space<vmem>>, vector<1x1x16x64xf32>
    %58 = vector.shape_cast %57 : vector<1x1x16x64xf32> to vector<16x64xf32>
    %59 = vector.shape_cast %56 : vector<16x64xf32> to vector<1x1x16x64xf32>
    tpu.vector_store %arg7[%c0_42, %c0_43, %c0_44, %c0_45], %59 {strides = array<i32>} : memref<1x1x16x64xf32, #tpu.memory_space<vmem>>, vector<1x1x16x64xf32>,
    return
  }
  func.func @transform_0(%arg0: i32, %arg1: i32) -> (i32, i32, i32, i32) {
    %c0_i32 = arith.constant 0 : i32
    %0 = arith.addi %arg1, %c0_i32 : i32
    %c0_i32_0 = arith.constant 0 : i32
    %c0_i32_1 = arith.constant 0 : i32
    %c0_i32_2 = arith.constant 0 : i32
    return %arg0, %0, %c0_i32_0, %c0_i32_1 : i32, i32, i32, i32
  }
  func.func @transform_1(%arg0: i32, %arg1: i32) -> (i32, i32, i32, i32) {
    %c1_i32 = arith.constant 1 : i32
    %0 = arith.addi %arg1, %c1_i32 : i32
    %c0_i32 = arith.constant 0 : i32
    %c0_i32_0 = arith.constant 0 : i32
    %c0_i32_1 = arith.constant 0 : i32
    return %arg0, %0, %c0_i32, %c0_i32_0 : i32, i32, i32, i32
  }
  func.func @transform_2(%arg0: i32, %arg1: i32) -> (i32, i32, i32, i32) {
    %c2_i32 = arith.constant 2 : i32
    %0 = arith.addi %arg1, %c2_i32 : i32
    %c0_i32 = arith.constant 0 : i32
    %c0_i32_0 = arith.constant 0 : i32
    %c0_i32_1 = arith.constant 0 : i32
    return %arg0, %0, %c0_i32, %c0_i32_0 : i32, i32, i32, i32
  }
  func.func @transform_3(%arg0: i32, %arg1: i32) -> (i32, i32, i32) {
    %c0_i32 = arith.constant 0 : i32
    %c0_i32_0 = arith.constant 0 : i32
    %c0_i32_1 = arith.constant 0 : i32
    %c0_i32_2 = arith.constant 0 : i32
    return %c0_i32, %c0_i32_0, %c0_i32_1 : i32, i32, i32
  }
  func.func @transform_4(%arg0: i32, %arg1: i32) -> (i32, i32) {
    %c0_i32 = arith.constant 0 : i32
    %c0_i32_0 = arith.constant 0 : i32
    %c0_i32_1 = arith.constant 0 : i32
    return %c0_i32, %c0_i32_0 : i32, i32
  }
  func.func @transform_5(%arg0: i32, %arg1: i32) -> (i32, i32, i32, i32) {
    %c0_i32 = arith.constant 0 : i32
    %c0_i32_0 = arith.constant 0 : i32
    %c0_i32_1 = arith.constant 0 : i32
    return %arg0, %arg1, %c0_i32, %c0_i32_0 : i32, i32, i32, i32
  }
}

module attributes {stable_mosaic.version = 11 : i64} {
  func.func @kernel(%arg0: i32, %arg1: memref<512x64xf32, #tpu.memory_space<vmem>>, %arg2: memref<512x64xf32, #tpu.memory_space<vmem>>, %arg3: memref<64x128xbf16, #tpu.memory_space<vmem>>, %arg4: memref<1x128xf32, #tpu.memory_space<vmem>>, %arg5: memref<512x64xf32, #tpu.memory_space<vmem>>) attributes {dimension_semantics = [#tpu.dimension_semantics<parallel>], iteration_bounds = array<i64: 1>, scalar_prefetch = 0 : i64, scratch_operands = 0 : i64, tpu.core_type = #tpu.core_type<tc>, window_params = [{transform_indices = @transform_0, window_bounds = array<i64: 512, 64>}, {transform_indices = @transform_1, window_bounds = array<i64: 512, 64>}, {pipeline_mode = #tpu.pipeline_mode<synchronous>, transform_indices = @transform_2, window_bounds = array<i64: 64, 128>}, {pipeline_mode = #tpu.pipeline_mode<synchronous>, transform_indices = @transform_3, window_bounds = array<i64: 1, 128>}, {transform_indices = @transform_4, window_bounds = array<i64: 512, 64>}]} {
    %c0 = arith.constant 0 : index
    %c0_0 = arith.constant 0 : index
    %0 = vector.load %arg2[%c0, %c0_0] : memref<512x64xf32, #tpu.memory_space<vmem>>, vector<512x64xf32>
    %1 = arith.truncf %0 : vector<512x64xf32> to vector<512x64xbf16>
    %c0_1 = arith.constant 0 : index
    %c0_2 = arith.constant 0 : index
    %2 = vector.load %arg3[%c0_1, %c0_2] : memref<64x128xbf16, #tpu.memory_space<vmem>>, vector<64x128xbf16>
    %cst = arith.constant dense<0.000000e+00> : vector<512x128xf32>
    %3 = tpu.matmul %1, %2, %cst {dimension_numbers = #tpu.dot_dimension_numbers<[1], [0], [0], [1], [0, 0, 1, 1], [], []>} : vector<512x64xbf16>, vector<64x128xbf16>, vector<512x128xf32> -> vector<512x128xf32>
    %c0_3 = arith.constant 0 : index
    %c0_4 = arith.constant 0 : index
    %4 = vector.load %arg4[%c0_3, %c0_4] : memref<1x128xf32, #tpu.memory_space<vmem>>, vector<1x128xf32>
    %5 = vector.broadcast %4 : vector<1x128xf32> to vector<512x128xf32>
    %6 = arith.addf %3, %5 : vector<512x128xf32>
    %7 = vector.extract_strided_slice %6 {offsets = [0, 0], sizes = [512, 64], strides = [1, 1]} : vector<512x128xf32> to vector<512x64xf32>
    %8 = vector.extract_strided_slice %6 {offsets = [0, 64], sizes = [512, 64], strides = [1, 1]} : vector<512x128xf32> to vector<512x64xf32>
    %c0_5 = arith.constant 0 : index
    %c0_6 = arith.constant 0 : index
    %9 = vector.load %arg1[%c0_5, %c0_6] : memref<512x64xf32, #tpu.memory_space<vmem>>, vector<512x64xf32>
    %cst_7 = arith.constant 2.000000e+00 : f32
    %10 = vector.broadcast %cst_7 : f32 to vector<512x64xf32>
    %11 = arith.addf %10, %7 : vector<512x64xf32>
    %12 = arith.mulf %9, %11 : vector<512x64xf32>
    %13 = arith.addf %12, %8 : vector<512x64xf32>
    %c0_8 = arith.constant 0 : index
    %c0_9 = arith.constant 0 : index
    %14 = vector.load %arg5[%c0_8, %c0_9] : memref<512x64xf32, #tpu.memory_space<vmem>>, vector<512x64xf32>
    tpu.vector_store %arg5[%c0_8, %c0_9], %13 {strides = array<i32>} : memref<512x64xf32, #tpu.memory_space<vmem>>, vector<512x64xf32>,
    return
  }
  func.func @transform_0(%arg0: i32) -> (i32, i32) {
    %c0_i32 = arith.constant 0 : i32
    %c0_i32_0 = arith.constant 0 : i32
    return %arg0, %c0_i32 : i32, i32
  }
  func.func @transform_1(%arg0: i32) -> (i32, i32) {
    %c0_i32 = arith.constant 0 : i32
    %c0_i32_0 = arith.constant 0 : i32
    return %arg0, %c0_i32 : i32, i32
  }
  func.func @transform_2(%arg0: i32) -> (i32, i32) {
    %c0_i32 = arith.constant 0 : i32
    %c0_i32_0 = arith.constant 0 : i32
    %c0_i32_1 = arith.constant 0 : i32
    return %c0_i32, %c0_i32_0 : i32, i32
  }
  func.func @transform_3(%arg0: i32) -> (i32, i32) {
    %c0_i32 = arith.constant 0 : i32
    %c0_i32_0 = arith.constant 0 : i32
    %c0_i32_1 = arith.constant 0 : i32
    return %c0_i32, %c0_i32_0 : i32, i32
  }
  func.func @transform_4(%arg0: i32) -> (i32, i32) {
    %c0_i32 = arith.constant 0 : i32
    %c0_i32_0 = arith.constant 0 : i32
    return %arg0, %c0_i32 : i32, i32
  }
}

module attributes {stable_mosaic.version = 11 : i64} {
  func.func @kernel(%arg0: i32, %arg1: i32, %arg2: memref<1x1x18x192xbf16, #tpu.memory_space<vmem>>, %arg3: memref<1x1x18x192xbf16, #tpu.memory_space<vmem>>, %arg4: memref<1x1x18x192xbf16, #tpu.memory_space<vmem>>, %arg5: memref<9x192x128xbf16, #tpu.memory_space<vmem>>, %arg6: memref<1x128xf32, #tpu.memory_space<vmem>>, %arg7: memref<1x1x16x128xf32, #tpu.memory_space<vmem>>) attributes {dimension_semantics = [#tpu.dimension_semantics<parallel>, #tpu.dimension_semantics<parallel>], iteration_bounds = array<i64: 2, 16>, scalar_prefetch = 0 : i64, scratch_operands = 0 : i64, tpu.core_type = #tpu.core_type<tc>, window_params = [{transform_indices = @transform_0, window_bounds = array<i64: 1, 1, 18, 192>}, {transform_indices = @transform_1, window_bounds = array<i64: 1, 1, 18, 192>}, {transform_indices = @transform_2, window_bounds = array<i64: 1, 1, 18, 192>}, {pipeline_mode = #tpu.pipeline_mode<synchronous>, transform_indices = @transform_3, window_bounds = array<i64: 9, 192, 128>}, {pipeline_mode = #tpu.pipeline_mode<synchronous>, transform_indices = @transform_4, window_bounds = array<i64: 1, 128>}, {transform_indices = @transform_5, window_bounds = array<i64: 1, 1, 16, 128>}]} {
    %c0 = arith.constant 0 : index
    %c0_0 = arith.constant 0 : index
    %c0_1 = arith.constant 0 : index
    %c0_2 = arith.constant 0 : index
    %0 = vector.load %arg2[%c0, %c0_0, %c0_1, %c0_2] : memref<1x1x18x192xbf16, #tpu.memory_space<vmem>>, vector<1x1x18x192xbf16>
    %1 = vector.shape_cast %0 : vector<1x1x18x192xbf16> to vector<18x192xbf16>
    %c0_3 = arith.constant 0 : index
    %c0_4 = arith.constant 0 : index
    %c0_5 = arith.constant 0 : index
    %c0_6 = arith.constant 0 : index
    %2 = vector.load %arg3[%c0_3, %c0_4, %c0_5, %c0_6] : memref<1x1x18x192xbf16, #tpu.memory_space<vmem>>, vector<1x1x18x192xbf16>
    %3 = vector.shape_cast %2 : vector<1x1x18x192xbf16> to vector<18x192xbf16>
    %c0_7 = arith.constant 0 : index
    %c0_8 = arith.constant 0 : index
    %c0_9 = arith.constant 0 : index
    %c0_10 = arith.constant 0 : index
    %4 = vector.load %arg4[%c0_7, %c0_8, %c0_9, %c0_10] : memref<1x1x18x192xbf16, #tpu.memory_space<vmem>>, vector<1x1x18x192xbf16>
    %5 = vector.shape_cast %4 : vector<1x1x18x192xbf16> to vector<18x192xbf16>
    %cst = arith.constant 0.000000e+00 : f32
    %6 = vector.broadcast %cst : f32 to vector<16x128xf32>
    %7 = vector.extract_strided_slice %1 {offsets = [0, 0], sizes = [16, 192], strides = [1, 1]} : vector<18x192xbf16> to vector<16x192xbf16>
    %c0_11 = arith.constant 0 : index
    %c0_12 = arith.constant 0 : index
    %c0_13 = arith.constant 0 : index
    %8 = vector.load %arg5[%c0_11, %c0_12, %c0_13] : memref<9x192x128xbf16, #tpu.memory_space<vmem>>, vector<1x192x128xbf16>
    %9 = vector.shape_cast %8 : vector<1x192x128xbf16> to vector<192x128xbf16>
    %cst_14 = arith.constant dense<0.000000e+00> : vector<16x128xf32>
    %10 = tpu.matmul %7, %9, %cst_14 {dimension_numbers = #tpu.dot_dimension_numbers<[1], [0], [0], [1], [0, 0, 1, 1], [], []>} : vector<16x192xbf16>, vector<192x128xbf16>, vector<16x128xf32> -> vector<16x128xf32>
    %11 = arith.addf %6, %10 : vector<16x128xf32>
    %12 = vector.extract_strided_slice %1 {offsets = [1, 0], sizes = [16, 192], strides = [1, 1]} : vector<18x192xbf16> to vector<16x192xbf16>
    %c1 = arith.constant 1 : index
    %c0_15 = arith.constant 0 : index
    %c0_16 = arith.constant 0 : index
    %13 = vector.load %arg5[%c1, %c0_15, %c0_16] : memref<9x192x128xbf16, #tpu.memory_space<vmem>>, vector<1x192x128xbf16>
    %14 = vector.shape_cast %13 : vector<1x192x128xbf16> to vector<192x128xbf16>
    %cst_17 = arith.constant dense<0.000000e+00> : vector<16x128xf32>
    %15 = tpu.matmul %12, %14, %cst_17 {dimension_numbers = #tpu.dot_dimension_numbers<[1], [0], [0], [1], [0, 0, 1, 1], [], []>} : vector<16x192xbf16>, vector<192x128xbf16>, vector<16x128xf32> -> vector<16x128xf32>
    %16 = arith.addf %11, %15 : vector<16x128xf32>
    %17 = vector.extract_strided_slice %1 {offsets = [2, 0], sizes = [16, 192], strides = [1, 1]} : vector<18x192xbf16> to vector<16x192xbf16>
    %c2 = arith.constant 2 : index
    %c0_18 = arith.constant 0 : index
    %c0_19 = arith.constant 0 : index
    %18 = vector.load %arg5[%c2, %c0_18, %c0_19] : memref<9x192x128xbf16, #tpu.memory_space<vmem>>, vector<1x192x128xbf16>
    %19 = vector.shape_cast %18 : vector<1x192x128xbf16> to vector<192x128xbf16>
    %cst_20 = arith.constant dense<0.000000e+00> : vector<16x128xf32>
    %20 = tpu.matmul %17, %19, %cst_20 {dimension_numbers = #tpu.dot_dimension_numbers<[1], [0], [0], [1], [0, 0, 1, 1], [], []>} : vector<16x192xbf16>, vector<192x128xbf16>, vector<16x128xf32> -> vector<16x128xf32>
    %21 = arith.addf %16, %20 : vector<16x128xf32>
    %22 = vector.extract_strided_slice %3 {offsets = [0, 0], sizes = [16, 192], strides = [1, 1]} : vector<18x192xbf16> to vector<16x192xbf16>
    %c3 = arith.constant 3 : index
    %c0_21 = arith.constant 0 : index
    %c0_22 = arith.constant 0 : index
    %23 = vector.load %arg5[%c3, %c0_21, %c0_22] : memref<9x192x128xbf16, #tpu.memory_space<vmem>>, vector<1x192x128xbf16>
    %24 = vector.shape_cast %23 : vector<1x192x128xbf16> to vector<192x128xbf16>
    %cst_23 = arith.constant dense<0.000000e+00> : vector<16x128xf32>
    %25 = tpu.matmul %22, %24, %cst_23 {dimension_numbers = #tpu.dot_dimension_numbers<[1], [0], [0], [1], [0, 0, 1, 1], [], []>} : vector<16x192xbf16>, vector<192x128xbf16>, vector<16x128xf32> -> vector<16x128xf32>
    %26 = arith.addf %21, %25 : vector<16x128xf32>
    %27 = vector.extract_strided_slice %3 {offsets = [1, 0], sizes = [16, 192], strides = [1, 1]} : vector<18x192xbf16> to vector<16x192xbf16>
    %c4 = arith.constant 4 : index
    %c0_24 = arith.constant 0 : index
    %c0_25 = arith.constant 0 : index
    %28 = vector.load %arg5[%c4, %c0_24, %c0_25] : memref<9x192x128xbf16, #tpu.memory_space<vmem>>, vector<1x192x128xbf16>
    %29 = vector.shape_cast %28 : vector<1x192x128xbf16> to vector<192x128xbf16>
    %cst_26 = arith.constant dense<0.000000e+00> : vector<16x128xf32>
    %30 = tpu.matmul %27, %29, %cst_26 {dimension_numbers = #tpu.dot_dimension_numbers<[1], [0], [0], [1], [0, 0, 1, 1], [], []>} : vector<16x192xbf16>, vector<192x128xbf16>, vector<16x128xf32> -> vector<16x128xf32>
    %31 = arith.addf %26, %30 : vector<16x128xf32>
    %32 = vector.extract_strided_slice %3 {offsets = [2, 0], sizes = [16, 192], strides = [1, 1]} : vector<18x192xbf16> to vector<16x192xbf16>
    %c5 = arith.constant 5 : index
    %c0_27 = arith.constant 0 : index
    %c0_28 = arith.constant 0 : index
    %33 = vector.load %arg5[%c5, %c0_27, %c0_28] : memref<9x192x128xbf16, #tpu.memory_space<vmem>>, vector<1x192x128xbf16>
    %34 = vector.shape_cast %33 : vector<1x192x128xbf16> to vector<192x128xbf16>
    %cst_29 = arith.constant dense<0.000000e+00> : vector<16x128xf32>
    %35 = tpu.matmul %32, %34, %cst_29 {dimension_numbers = #tpu.dot_dimension_numbers<[1], [0], [0], [1], [0, 0, 1, 1], [], []>} : vector<16x192xbf16>, vector<192x128xbf16>, vector<16x128xf32> -> vector<16x128xf32>
    %36 = arith.addf %31, %35 : vector<16x128xf32>
    %37 = vector.extract_strided_slice %5 {offsets = [0, 0], sizes = [16, 192], strides = [1, 1]} : vector<18x192xbf16> to vector<16x192xbf16>
    %c6 = arith.constant 6 : index
    %c0_30 = arith.constant 0 : index
    %c0_31 = arith.constant 0 : index
    %38 = vector.load %arg5[%c6, %c0_30, %c0_31] : memref<9x192x128xbf16, #tpu.memory_space<vmem>>, vector<1x192x128xbf16>
    %39 = vector.shape_cast %38 : vector<1x192x128xbf16> to vector<192x128xbf16>
    %cst_32 = arith.constant dense<0.000000e+00> : vector<16x128xf32>
    %40 = tpu.matmul %37, %39, %cst_32 {dimension_numbers = #tpu.dot_dimension_numbers<[1], [0], [0], [1], [0, 0, 1, 1], [], []>} : vector<16x192xbf16>, vector<192x128xbf16>, vector<16x128xf32> -> vector<16x128xf32>
    %41 = arith.addf %36, %40 : vector<16x128xf32>
    %42 = vector.extract_strided_slice %5 {offsets = [1, 0], sizes = [16, 192], strides = [1, 1]} : vector<18x192xbf16> to vector<16x192xbf16>
    %c7 = arith.constant 7 : index
    %c0_33 = arith.constant 0 : index
    %c0_34 = arith.constant 0 : index
    %43 = vector.load %arg5[%c7, %c0_33, %c0_34] : memref<9x192x128xbf16, #tpu.memory_space<vmem>>, vector<1x192x128xbf16>
    %44 = vector.shape_cast %43 : vector<1x192x128xbf16> to vector<192x128xbf16>
    %cst_35 = arith.constant dense<0.000000e+00> : vector<16x128xf32>
    %45 = tpu.matmul %42, %44, %cst_35 {dimension_numbers = #tpu.dot_dimension_numbers<[1], [0], [0], [1], [0, 0, 1, 1], [], []>} : vector<16x192xbf16>, vector<192x128xbf16>, vector<16x128xf32> -> vector<16x128xf32>
    %46 = arith.addf %41, %45 : vector<16x128xf32>
    %47 = vector.extract_strided_slice %5 {offsets = [2, 0], sizes = [16, 192], strides = [1, 1]} : vector<18x192xbf16> to vector<16x192xbf16>
    %c8 = arith.constant 8 : index
    %c0_36 = arith.constant 0 : index
    %c0_37 = arith.constant 0 : index
    %48 = vector.load %arg5[%c8, %c0_36, %c0_37] : memref<9x192x128xbf16, #tpu.memory_space<vmem>>, vector<1x192x128xbf16>
    %49 = vector.shape_cast %48 : vector<1x192x128xbf16> to vector<192x128xbf16>
    %cst_38 = arith.constant dense<0.000000e+00> : vector<16x128xf32>
    %50 = tpu.matmul %47, %49, %cst_38 {dimension_numbers = #tpu.dot_dimension_numbers<[1], [0], [0], [1], [0, 0, 1, 1], [], []>} : vector<16x192xbf16>, vector<192x128xbf16>, vector<16x128xf32> -> vector<16x128xf32>
    %51 = arith.addf %46, %50 : vector<16x128xf32>
    %c0_39 = arith.constant 0 : index
    %c0_40 = arith.constant 0 : index
    %52 = vector.load %arg6[%c0_39, %c0_40] : memref<1x128xf32, #tpu.memory_space<vmem>>, vector<1x128xf32>
    %53 = vector.broadcast %52 : vector<1x128xf32> to vector<16x128xf32>
    %54 = arith.addf %51, %53 : vector<16x128xf32>
    %c0_41 = arith.constant 0 : index
    %c0_42 = arith.constant 0 : index
    %c0_43 = arith.constant 0 : index
    %c0_44 = arith.constant 0 : index
    %55 = vector.load %arg7[%c0_41, %c0_42, %c0_43, %c0_44] : memref<1x1x16x128xf32, #tpu.memory_space<vmem>>, vector<1x1x16x128xf32>
    %56 = vector.shape_cast %55 : vector<1x1x16x128xf32> to vector<16x128xf32>
    %57 = vector.shape_cast %54 : vector<16x128xf32> to vector<1x1x16x128xf32>
    tpu.vector_store %arg7[%c0_41, %c0_42, %c0_43, %c0_44], %57 {strides = array<i32>} : memref<1x1x16x128xf32, #tpu.memory_space<vmem>>, vector<1x1x16x128xf32>,
    return
  }
  func.func @transform_0(%arg0: i32, %arg1: i32) -> (i32, i32, i32, i32) {
    %c0_i32 = arith.constant 0 : i32
    %0 = arith.addi %arg1, %c0_i32 : i32
    %c0_i32_0 = arith.constant 0 : i32
    %c0_i32_1 = arith.constant 0 : i32
    %c0_i32_2 = arith.constant 0 : i32
    return %arg0, %0, %c0_i32_0, %c0_i32_1 : i32, i32, i32, i32
  }
  func.func @transform_1(%arg0: i32, %arg1: i32) -> (i32, i32, i32, i32) {
    %c1_i32 = arith.constant 1 : i32
    %0 = arith.addi %arg1, %c1_i32 : i32
    %c0_i32 = arith.constant 0 : i32
    %c0_i32_0 = arith.constant 0 : i32
    %c0_i32_1 = arith.constant 0 : i32
    return %arg0, %0, %c0_i32, %c0_i32_0 : i32, i32, i32, i32
  }
  func.func @transform_2(%arg0: i32, %arg1: i32) -> (i32, i32, i32, i32) {
    %c2_i32 = arith.constant 2 : i32
    %0 = arith.addi %arg1, %c2_i32 : i32
    %c0_i32 = arith.constant 0 : i32
    %c0_i32_0 = arith.constant 0 : i32
    %c0_i32_1 = arith.constant 0 : i32
    return %arg0, %0, %c0_i32, %c0_i32_0 : i32, i32, i32, i32
  }
  func.func @transform_3(%arg0: i32, %arg1: i32) -> (i32, i32, i32) {
    %c0_i32 = arith.constant 0 : i32
    %c0_i32_0 = arith.constant 0 : i32
    %c0_i32_1 = arith.constant 0 : i32
    %c0_i32_2 = arith.constant 0 : i32
    return %c0_i32, %c0_i32_0, %c0_i32_1 : i32, i32, i32
  }
  func.func @transform_4(%arg0: i32, %arg1: i32) -> (i32, i32) {
    %c0_i32 = arith.constant 0 : i32
    %c0_i32_0 = arith.constant 0 : i32
    %c0_i32_1 = arith.constant 0 : i32
    return %c0_i32, %c0_i32_0 : i32, i32
  }
  func.func @transform_5(%arg0: i32, %arg1: i32) -> (i32, i32, i32, i32) {
    %c0_i32 = arith.constant 0 : i32
    %c0_i32_0 = arith.constant 0 : i32
    %c0_i32_1 = arith.constant 0 : i32
    return %arg0, %arg1, %c0_i32, %c0_i32_0 : i32, i32, i32, i32
  }
}

</mosaic_0001>

<llo_original>
// kernel: shadow_removal_forward.14
$region0: #{shadow_removal_forward.14}
  #allocation0 [shape = 'u32[]', space=smem, size = 0x4, offset = 0x4, fixed_abs, tag = 'smem constant byte address 0x4 - core index']
  #allocation1 [shape = 'u32[144,128]{1,0:T(1,128)}', space=vmem, size = 0x12000, scoped, tag = 'internal scratch']
  %s0 = inlined_call_operand.vmem [shape: bf16[2,64,8], index: 0, kind: input, shape index: {}]
  %s1 = inlined_call_operand.vmem [shape: bf16[8,64], index: 1, kind: input, shape index: {}]
  %s2 = inlined_call_operand.vmem [shape: f32[1,64], index: 2, kind: input, shape index: {}]
  %s3 = inlined_call_operand.vmem [shape: bf16[64,64], index: 3, kind: input, shape index: {}]
  %s4 = inlined_call_operand.vmem [shape: f32[1,64], index: 4, kind: input, shape index: {}]
  %s5 = inlined_call_operand.vmem [shape: f32[2,64,64], index: 5, kind: output, shape index: {}]
  %s6 = sld [smem:[#allocation0]]
  $region53: #{shadow_removal_forward.14} parent=0
    _
  %s8 = ssub.s32 1, %s6
  %s9 = scalar_select 0, %s8, %s6
  loop: start=0, step=1, limit=4
  $region2: #{shadow_removal_forward.14} parent=0 // loop_pre_header
    _
  $region3: #{shadow_removal_forward.14} parent=0 // loop_header
    %s11 = sphi 0, %s15
    %p12 = scmp.ge.s32.totalorder %s11, 4
    %s21 = sphi 0, %s23
    %s24 = sphi 0, %s21
    %s25 = sphi 0, %s24
    %s41 = sphi 0, %s25
    %s45 = sphi 0, %s45
    %s47 = sphi 0, %s45
    %s48 = sphi 0, %s47
    %s62 = sphi 0, %s48
    %s66 = sphi 0, %s66
    %s68 = sphi 0, %s66
    %s69 = sphi 0, %s68
    %s83 = sphi 0, %s69
    %s87 = sphi 0, %s87
    %s89 = sphi 0, %s87
    %s90 = sphi 0, %s89
    %s104 = sphi 0, %s90
    %s108 = sphi 0, %s108
    %s110 = sphi 0, %s108
    %s111 = sphi 0, %s110
    %s125 = sphi 0, %s111
    %s131 = sphi 0, %s133
    %s134 = sphi 0, %s131
    %s135 = sphi 0, %s134
    %s151 = sphi 0, %s135
  $region4: #{shadow_removal_forward.14} parent=0 // loop_header_branch
    %14 = sbr.rel (%p12) target = $region8
  $region5: #{shadow_removal_forward.14} parent=0 // loop_body
    %s16 = ssub.s32 %s11, 1
    %s17 = ssub.s32 %s11, 2
    %s18 = sadd.s32 %s11, 1
    %s19 = ssub.s32 %s11, %s18
    %p20 = scmp.eq.s32.totalorder %s19, 0
    %s22 = sadd.s32 %s21, 1
    %s23 = scalar_select %p20, %s21, %s22
    %p26 = pneg %p20
    %p27 = scmp.eq.s32.totalorder %s11, 1
    %p28 = por %p26, %p27
    %p29 = scmp.ne.s32.totalorder %s21, %s24
    %p30 = scmp.eq.s32.totalorder %s11, 0
    %p31 = por %p29, %p30
    %p32 = scmp.ne.s32.totalorder %s21, %s24
    %p33 = scmp.eq.s32.totalorder %s16, 1
    %p34 = por %p32, %p33
    %p35 = scmp.ne.s32.totalorder %s24, %s25
    %p36 = scmp.eq.s32.totalorder %s16, 0
    %p37 = por %p35, %p36
    %p38 = scmp.ne.s32.totalorder %s24, %s25
    %p39 = scmp.eq.s32.totalorder %s17, 1
    %p40 = por %p38, %p39
    %p42 = scmp.ne.s32.totalorder %s25, %s41
    %p43 = scmp.eq.s32.totalorder %s17, 0
    %p44 = por %p42, %p43
    %s46 = sadd.s32 %s45, 1
    %p49 = scmp.eq.s32.totalorder %s11, 1
    %p50 = scmp.ne.s32.totalorder %s45, %s47
    %p51 = scmp.eq.s32.totalorder %s11, 0
    %p52 = por %p50, %p51
    %p53 = scmp.ne.s32.totalorder %s45, %s47
    %p54 = scmp.eq.s32.totalorder %s16, 1
    %p55 = por %p53, %p54
    %p56 = scmp.ne.s32.totalorder %s47, %s48
    %p57 = scmp.eq.s32.totalorder %s16, 0
    %p58 = por %p56, %p57
    %p59 = scmp.ne.s32.totalorder %s47, %s48
    %p60 = scmp.eq.s32.totalorder %s17, 1
    %p61 = por %p59, %p60
    %p63 = scmp.ne.s32.totalorder %s48, %s62
    %p64 = scmp.eq.s32.totalorder %s17, 0
    %p65 = por %p63, %p64
    %s67 = sadd.s32 %s66, 1
    %p70 = scmp.eq.s32.totalorder %s11, 1
    %p71 = scmp.ne.s32.totalorder %s66, %s68
    %p72 = scmp.eq.s32.totalorder %s11, 0
    %p73 = por %p71, %p72
    %p74 = scmp.ne.s32.totalorder %s66, %s68
    %p75 = scmp.eq.s32.totalorder %s16, 1
    %p76 = por %p74, %p75
    %p77 = scmp.ne.s32.totalorder %s68, %s69
    %p78 = scmp.eq.s32.totalorder %s16, 0
    %p79 = por %p77, %p78
    %p80 = scmp.ne.s32.totalorder %s68, %s69
    %p81 = scmp.eq.s32.totalorder %s17, 1
    %p82 = por %p80, %p81
    %p84 = scmp.ne.s32.totalorder %s69, %s83
    %p85 = scmp.eq.s32.totalorder %s17, 0
    %p86 = por %p84, %p85
    %s88 = sadd.s32 %s87, 1
    %p91 = scmp.eq.s32.totalorder %s11, 1
    %p92 = scmp.ne.s32.totalorder %s87, %s89
    %p93 = scmp.eq.s32.totalorder %s11, 0
    %p94 = por %p92, %p93
    %p95 = scmp.ne.s32.totalorder %s87, %s89
    %p96 = scmp.eq.s32.totalorder %s16, 1
    %p97 = por %p95, %p96
    %p98 = scmp.ne.s32.totalorder %s89, %s90
    %p99 = scmp.eq.s32.totalorder %s16, 0
    %p100 = por %p98, %p99
    %p101 = scmp.ne.s32.totalorder %s89, %s90
    %p102 = scmp.eq.s32.totalorder %s17, 1
    %p103 = por %p101, %p102
    %p105 = scmp.ne.s32.totalorder %s90, %s104
    %p106 = scmp.eq.s32.totalorder %s17, 0
    %p107 = por %p105, %p106
    %s109 = sadd.s32 %s108, 1
    %p112 = scmp.eq.s32.totalorder %s11, 1
    %p113 = scmp.ne.s32.totalorder %s108, %s110
    %p114 = scmp.eq.s32.totalorder %s11, 0
    %p115 = por %p113, %p114
    %p116 = scmp.ne.s32.totalorder %s108, %s110
    %p117 = scmp.eq.s32.totalorder %s16, 1
    %p118 = por %p116, %p117
    %p119 = scmp.ne.s32.totalorder %s110, %s111
    %p120 = scmp.eq.s32.totalorder %s16, 0
    %p121 = por %p119, %p120
    %p122 = scmp.ne.s32.totalorder %s110, %s111
    %p123 = scmp.eq.s32.totalorder %s17, 1
    %p124 = por %p122, %p123
    %p126 = scmp.ne.s32.totalorder %s111, %s125
    %p127 = scmp.eq.s32.totalorder %s17, 0
    %p128 = por %p126, %p127
    %s129 = ssub.s32 %s11, %s18
    %p130 = scmp.eq.s32.totalorder %s129, 0
    %s132 = sadd.s32 %s131, 1
    %s133 = scalar_select %p130, %s131, %s132
    %p136 = pneg %p130
    %p137 = scmp.eq.s32.totalorder %s11, 1
    %p138 = por %p136, %p137
    %p139 = scmp.ne.s32.totalorder %s131, %s134
    %p140 = scmp.eq.s32.totalorder %s11, 0
    %p141 = por %p139, %p140
    %p142 = scmp.ne.s32.totalorder %s131, %s134
    %p143 = scmp.eq.s32.totalorder %s16, 1
    %p144 = por %p142, %p143
    %p145 = scmp.ne.s32.totalorder %s134, %s135
    %p146 = scmp.eq.s32.totalorder %s16, 0
    %p147 = por %p145, %p146
    %p148 = scmp.ne.s32.totalorder %s134, %s135
    %p149 = scmp.eq.s32.totalorder %s17, 1
    %p150 = por %p148, %p149
    %p152 = scmp.ne.s32.totalorder %s135, %s151
    %p153 = scmp.eq.s32.totalorder %s17, 0
    %p154 = por %p152, %p153
    %p155 = scmp.le.s32.totalorder 1, %s11
    %p156 = scmp.lt.s32.totalorder %s11, 3
    %p157 = pnand %p155, %p156
    %p158 = pneg %p157
    // Predicated region
    $region9: #{shadow_removal_forward.14} parent=5 // pred_check
      _
    $region10: #{shadow_removal_forward.14} parent=5 // pred_check_branch
      %160 = sbr.rel (%p157) target = $region12
    $region11: #{shadow_removal_forward.14} parent=5 // pred_region
      %s161 = ssub.s32 %s11, 1
      // Predicated region
      $region13: #{shadow_removal_forward.14} parent=11 // pred_check
        %p162 = pneg %p58
      $region14: #{shadow_removal_forward.14} parent=11 // pred_check_branch
        %164 = sbr.rel (%p162) target = $region16
      $region15: #{shadow_removal_forward.14} parent=11 // pred_region
        _
      $region16: #{shadow_removal_forward.14} parent=11 // pred_fallthru
        _
      // Predicated region
      $region17: #{shadow_removal_forward.14} parent=11 // pred_check
        %p165 = pneg %p79
      $region18: #{shadow_removal_forward.14} parent=11 // pred_check_branch
        %167 = sbr.rel (%p165) target = $region20
      $region19: #{shadow_removal_forward.14} parent=11 // pred_region
        _
      $region20: #{shadow_removal_forward.14} parent=11 // pred_fallthru
        _
      // Predicated region
      $region21: #{shadow_removal_forward.14} parent=11 // pred_check
        %p168 = pneg %p100
      $region22: #{shadow_removal_forward.14} parent=11 // pred_check_branch
        %170 = sbr.rel (%p168) target = $region24
      $region23: #{shadow_removal_forward.14} parent=11 // pred_region
        _
      $region24: #{shadow_removal_forward.14} parent=11 // pred_fallthru
        _
      // Predicated region
      $region25: #{shadow_removal_forward.14} parent=11 // pred_check
        %p171 = pneg %p121
      $region26: #{shadow_removal_forward.14} parent=11 // pred_check_branch
        %173 = sbr.rel (%p171) target = $region28
      $region27: #{shadow_removal_forward.14} parent=11 // pred_region
        _
      $region28: #{shadow_removal_forward.14} parent=11 // pred_fallthru
        _
    $region12: #{shadow_removal_forward.14} parent=5 // pred_fallthru
      _
    %p174 = scmp.lt.s32.totalorder %s11, 2
    // Predicated region
    $region29: #{shadow_removal_forward.14} parent=5 // pred_check
      %p175 = pneg %p174
    $region30: #{shadow_removal_forward.14} parent=5 // pred_check_branch
      %177 = sbr.rel (%p175) target = $region32
    $region31: #{shadow_removal_forward.14} parent=5 // pred_region
      // Predicated region
      $region33: #{shadow_removal_forward.14} parent=31 // pred_check
        %p178 = pneg %p31
      $region34: #{shadow_removal_forward.14} parent=31 // pred_check_branch
        %180 = sbr.rel (%p178) target = $region36
      $region35: #{shadow_removal_forward.14} parent=31 // pred_region
        %p181 = scmp.lt.s32.totalorder %s11, 1
        %s182 = scalar_select %p181, %s11, 1
        %s183 = smul.addr %s182, 8
        %s184 = smul.addr %s183, 4
        %s185 = scalar_lea.vmem %s0, %s184
      $region36: #{shadow_removal_forward.14} parent=31 // pred_fallthru
        _
    $region32: #{shadow_removal_forward.14} parent=5 // pred_fallthru
      _
    %p186 = scmp.le.s32.totalorder 1, %s11
    %p187 = scmp.lt.s32.totalorder %s11, 3
    %p188 = pnand %p186, %p187
    %p189 = pneg %p188
    // Predicated region
    $region37: #{shadow_removal_forward.14} parent=5 // pred_check
      _
    $region38: #{shadow_removal_forward.14} parent=5 // pred_check_branch
      %191 = sbr.rel (%p188) target = $region40
    $region39: #{shadow_removal_forward.14} parent=5 // pred_region
      %s192 = ssub.s32 %s11, 1
      %p193 = scmp.lt.s32.totalorder %s16, 1
      %s194 = scalar_select %p193, %s16, 1
      %s195 = smul.addr %s194, 8
      %s196 = smul.addr %s195, 4
      %s197 = scalar_lea.vmem %s0, %s196
      %p198 = pneg %p37
      %p199 = pneg %p34
      %p200 = pneg %p58
      %p201 = pneg %p55
      %p202 = pneg %p79
      %p203 = pneg %p76
      %p204 = pneg %p100
      %p205 = pneg %p97
      %p206 = pneg %p121
      %p207 = pneg %p118
      %p208 = pneg %p147
      %p209 = pneg %p144
      %p210 = scmp.lt.s32.totalorder %s16, 1
      %s211 = scalar_select %p210, %s16, 1
      %s212 = smul.addr %s211, 8
      %s213 = smul.addr %s212, 8
      %s214 = scalar_lea.vmem %s5, %s213
      %p215 = scmp.lt.s32.totalorder %s16, 1
      %s216 = scalar_select %p215, %s16, 1
      %s217 = smul.addr %s216, 8
      %s218 = smul.addr %s217, 4
      %s219 = scalar_lea.vmem %s0, %s218
      %p220 = scmp.lt.s32.totalorder %s16, 1
      %s221 = scalar_select %p220, %s16, 1
      %s222 = smul.addr %s221, 8
      %s223 = smul.addr %s222, 8
      %s224 = scalar_lea.vmem %s5, %s223
      %v226 = vld [vmem:[%s219] sm:$0xf]
      %v227 = vld [vmem:[%s219 + $0x4] sm:$0xf]
      %v228 = vld [vmem:[%s219 + $0x8] sm:$0xf]
      %v229 = vld [vmem:[%s219 + $0xc] sm:$0xf]
      %v230 = vld [vmem:[%s219 + $0x10] sm:$0xf]
      %v231 = vld [vmem:[%s219 + $0x14] sm:$0xf]
      %v232 = vld [vmem:[%s219 + $0x18] sm:$0xf]
      %v233 = vld [vmem:[%s219 + $0x1c] sm:$0xf]
      %v234 = vld [vmem:[%s1] sm:$0xf]
      %v235 = vld [vmem:[%s2] sm:$0x1]
      %v237 = vlaneseq
      %v238 = vshrl.u32 %v237, 7
      %v239 = vsub.s32 0, %v238
      %v240 = vrot.slane %v235, %v239
      %v250 = vunpack.c.l.b16 %v226
      %v251 = vunpack.c.l.b16 %v227
      %v252 = vunpack.c.l.b16 %v228
      %v253 = vunpack.c.l.b16 %v229
      %v254 = vunpack.c.l.b16 %v230
      %v255 = vunpack.c.l.b16 %v231
      %v256 = vunpack.c.l.b16 %v232
      %v257 = vunpack.c.l.b16 %v233
      %v258 = vpack.c.b16 %v251, %v250
      %v259 = vpack.c.b16 %v253, %v252
      %v260 = vpack.c.b16 %v255, %v254
      %v261 = vpack.c.b16 %v257, %v256
      %vm262 = vcmask 64512
      %v264 = vsel %vm262, %v258, 0
      %v267 = vsel %vm262, %v259, 0
      %v270 = vsel %vm262, %v260, 0
      %v273 = vsel %vm262, %v261, 0
      %vm275 = vcmask 1043456
      %v277 = vsel %vm275, %v234, 0
      %279 = vmatprep.subr.bf16.mxu0 0
      %280 = vmatpush1.bf16.msra.mxu0 %v277
      %281 = vmatprep.subr.bf16.mxu0 0
      %282 = vmatpush1.bf16.msra.mxu0 0
      %283 = vmatprep.subr.bf16.mxu0 0
      %284 = vmatpush1.bf16.msra.mxu0 0
      %285 = vmatprep.subr.bf16.mxu0 0
      %286 = vmatpush1.bf16.msra.mxu0 0
      %287 = vmatprep.subr.bf16.mxu0 0
      %288 = vmatpush1.bf16.msra.mxu0 0
      %289 = vmatprep.subr.bf16.mxu0 0
      %290 = vmatpush1.bf16.msra.mxu0 0
      %291 = vmatprep.subr.bf16.mxu0 0
      %292 = vmatpush1.bf16.msra.mxu0 0
      %293 = vmatprep.subr.bf16.mxu0 0
      %294 = vmatpush1.bf16.msra.mxu0 0
      %295 = vmatprep.subr.bf16.mxu0 0
      %296 = vmatpush1.bf16.msra.mxu0 0
      %297 = vmatprep.subr.bf16.mxu0 0
      %298 = vmatpush1.bf16.msra.mxu0 0
      %299 = vmatprep.subr.bf16.mxu0 0
      %300 = vmatpush1.bf16.msra.mxu0 0
      %301 = vmatprep.subr.bf16.mxu0 0
      %302 = vmatpush1.bf16.msra.mxu0 0
      %303 = vmatprep.subr.bf16.mxu0 0
      %304 = vmatpush1.bf16.msra.mxu0 0
      %305 = vmatprep.subr.bf16.mxu0 0
      %306 = vmatpush1.bf16.msra.mxu0 0
      %307 = vmatprep.subr.bf16.mxu0 0
      %308 = vmatpush1.bf16.msra.mxu0 0
      %309 = vmatprep.subr.bf16.mxu0 0
      %310 = vmatpush1.bf16.msra.mxu0 0
      %311 = vmatprep.mubr.bf16.mxu0 0
      %312 = vmatmul.mubr.bf16.gmra.mrb[0].mxu0 %v264
      %v313 = vpop.f32.mrb[0].mxu0
      %v314 = vadd.f32 %v240, %v313
      %v315 = vpop.f32.mrb[0].mxu0
      %v316 = vpop.f32.mrb[0].mxu0
      %v317 = vadd.f32 %v240, %v316
      %v318 = vpop.f32.mrb[0].mxu0
      %319 = vmatprep.mubr.bf16.mxu0 0
      %320 = vmatmul.mubr.bf16.gmra.mrb[0].mxu0 %v267
      %v321 = vpop.f32.mrb[0].mxu0
      %v322 = vadd.f32 %v240, %v321
      %v323 = vpop.f32.mrb[0].mxu0
      %v324 = vpop.f32.mrb[0].mxu0
      %v325 = vadd.f32 %v240, %v324
      %v326 = vpop.f32.mrb[0].mxu0
      %327 = vmatprep.mubr.bf16.mxu0 0
      %328 = vmatmul.mubr.bf16.gmra.mrb[0].mxu0 %v270
      %v329 = vpop.f32.mrb[0].mxu0
      %v330 = vadd.f32 %v240, %v329
      %v331 = vpop.f32.mrb[0].mxu0
      %v332 = vpop.f32.mrb[0].mxu0
      %v333 = vadd.f32 %v240, %v332
      %v334 = vpop.f32.mrb[0].mxu0
      %335 = vmatprep.mubr.bf16.mxu0 0
      %336 = vmatmul.mubr.bf16.gmra.mrb[0].mxu0 %v273
      %v337 = vpop.f32.mrb[0].mxu0
      %v338 = vadd.f32 %v240, %v337
      %v339 = vpop.f32.mrb[0].mxu0
      %v340 = vpop.f32.mrb[0].mxu0
      %v341 = vadd.f32 %v240, %v340
      %v342 = vpop.f32.mrb[0].mxu0
      %343 = vdwg.mxu0
      %v344 = vpack.c.bf16 %v317, %v314
      %v345 = vpack.c.bf16 %v325, %v322
      %v346 = vpack.c.bf16 %v333, %v330
      %v347 = vpack.c.bf16 %v341, %v338
      %vm348 = vcmask 523264
      %v350 = vsel %vm348, %v344, 0
      %v353 = vsel %vm348, %v345, 0
      %v356 = vsel %vm348, %v346, 0
      %v359 = vsel %vm348, %v347, 0
      %361 = vmatprep.subr.bf16.mxu0 0
      %362 = vmatpush1.bf16.xpose.msra.mxu0 %v350
      %363 = vmatprep.subr.bf16.mxu0 0
      %364 = vmatpush1.bf16.xpose.msra.mxu0 %v353
      %365 = vmatprep.subr.bf16.mxu0 0
      %366 = vmatpush1.bf16.xpose.msra.mxu0 %v356
      %367 = vmatprep.subr.bf16.mxu0 0
      %368 = vmatpush1.bf16.xpose.msra.mxu0 %v359
      %369 = vmatprep.subr.bf16.mxu0 0
      %370 = vmatpush1.bf16.xpose.msra.mxu0 0
      %371 = vmatprep.subr.bf16.mxu0 0
      %372 = vmatpush1.bf16.xpose.msra.mxu0 0
      %373 = vmatprep.subr.bf16.mxu0 0
      %374 = vmatpush1.bf16.xpose.msra.mxu0 0
      %375 = vmatprep.subr.bf16.mxu0 0
      %376 = vmatpush1.bf16.xpose.msra.mxu0 0
      %377 = vmatprep.subr.bf16.mxu0 0
      %378 = vmatpush1.bf16.xpose.msra.mxu0 0
      %379 = vmatprep.subr.bf16.mxu0 0
      %380 = vmatpush1.bf16.xpose.msra.mxu0 0
      %381 = vmatprep.subr.bf16.mxu0 0
      %382 = vmatpush1.bf16.xpose.msra.mxu0 0
      %383 = vmatprep.subr.bf16.mxu0 0
      %384 = vmatpush1.bf16.xpose.msra.mxu0 0
      %385 = vmatprep.subr.bf16.mxu0 0
      %386 = vmatpush1.bf16.xpose.msra.mxu0 0
      %387 = vmatprep.subr.bf16.mxu0 0
      %388 = vmatpush1.bf16.xpose.msra.mxu0 0
      %389 = vmatprep.subr.bf16.mxu0 0
      %390 = vmatpush1.bf16.xpose.msra.mxu0 0
      %391 = vmatprep.subr.bf16.mxu0 0
      %392 = vmatpush1.bf16.xpose.msra.mxu0 0
      %393 = vmatprep.mubr.bf16.mxu0 0
      %394 = vmatmul.mubr.bf16.gmra.mrb[0].mxu0 %v350
      %v395 = vpop.f32.mrb[0].mxu0
      %v396 = vadd.f32 0.0, %v395
      %v397 = vpop.f32.mrb[0].mxu0
      %v398 = vpop.f32.mrb[0].mxu0
      %v399 = vadd.f32 0.0, %v398
      %v400 = vpop.f32.mrb[0].mxu0
      %401 = vmatprep.mubr.bf16.mxu0 0
      %402 = vmatmul.mubr.bf16.gmra.mrb[0].mxu0 %v353
      %v403 = vpop.f32.mrb[0].mxu0
      %v404 = vadd.f32 0.0, %v403
      %v405 = vpop.f32.mrb[0].mxu0
      %v406 = vpop.f32.mrb[0].mxu0
      %v407 = vadd.f32 0.0, %v406
      %v408 = vpop.f32.mrb[0].mxu0
      %409 = vmatprep.mubr.bf16.mxu0 0
      %410 = vmatmul.mubr.bf16.gmra.mrb[0].mxu0 %v356
      %v411 = vpop.f32.mrb[0].mxu0
      %v412 = vadd.f32 0.0, %v411
      %v413 = vpop.f32.mrb[0].mxu0
      %v414 = vpop.f32.mrb[0].mxu0
      %v415 = vadd.f32 0.0, %v414
      %v416 = vpop.f32.mrb[0].mxu0
      %417 = vmatprep.mubr.bf16.mxu0 0
      %418 = vmatmul.mubr.bf16.gmra.mrb[0].mxu0 %v359
      %v419 = vpop.f32.mrb[0].mxu0
      %v420 = vadd.f32 0.0, %v419
      %v421 = vpop.f32.mrb[0].mxu0
      %v422 = vpop.f32.mrb[0].mxu0
      %v423 = vadd.f32 0.0, %v422
      %v424 = vpop.f32.mrb[0].mxu0
      %425 = vdwg.mxu0
      %v426 = vmul.f32 %v396, 0.125
      %v427 = vmul.f32 %v399, 0.125
      %v428 = vmul.f32 %v404, 0.125
      %v429 = vmul.f32 %v407, 0.125
      %v430 = vmul.f32 %v412, 0.125
      %v431 = vmul.f32 %v415, 0.125
      %v432 = vmul.f32 %v420, 0.125
      %v433 = vmul.f32 %v423, 0.125
      %v434 = vsel %vm348, %v426, -inf
      %435 = vmax.xlane.f32.xlu0 %v434
      %v436 = vpop.xlane.xlu0 %435
      %v437 = vsel %vm348, %v427, -inf
      %438 = vmax.xlane.f32.xlu0 %v437
      %v439 = vpop.xlane.xlu0 %438
      %v440 = vsel %vm348, %v428, -inf
      %441 = vmax.xlane.f32.xlu0 %v440
      %v442 = vpop.xlane.xlu0 %441
      %v443 = vsel %vm348, %v429, -inf
      %444 = vmax.xlane.f32.xlu0 %v443
      %v445 = vpop.xlane.xlu0 %444
      %v446 = vsel %vm348, %v430, -inf
      %447 = vmax.xlane.f32.xlu0 %v446
      %v448 = vpop.xlane.xlu0 %447
      %v449 = vsel %vm348, %v431, -inf
      %450 = vmax.xlane.f32.xlu0 %v449
      %v451 = vpop.xlane.xlu0 %450
      %v452 = vsel %vm348, %v432, -inf
      %453 = vmax.xlane.f32.xlu0 %v452
      %v454 = vpop.xlane.xlu0 %453
      %v455 = vsel %vm348, %v433, -inf
      %456 = vmax.xlane.f32.xlu0 %v455
      %v457 = vpop.xlane.xlu0 %456
      %v458 = vsub.f32 %v426, %v436
      %v459 = vsub.f32 %v427, %v439
      %v460 = vsub.f32 %v428, %v442
      %v461 = vsub.f32 %v429, %v445
      %v462 = vsub.f32 %v430, %v448
      %v463 = vsub.f32 %v431, %v451
      %v464 = vsub.f32 %v432, %v454
      %v465 = vsub.f32 %v433, %v457
      %v466 = vmul.f32 %v458, 1.442695
      %v467 = vpow.pop %v466
      %v468 = vmul.f32 %v459, 1.442695
      %v469 = vpow.pop %v468
      %v470 = vmul.f32 %v460, 1.442695
      %v471 = vpow.pop %v470
      %v472 = vmul.f32 %v461, 1.442695
      %v473 = vpow.pop %v472
      %v474 = vmul.f32 %v462, 1.442695
      %v475 = vpow.pop %v474
      %v476 = vmul.f32 %v463, 1.442695
      %v477 = vpow.pop %v476
      %v478 = vmul.f32 %v464, 1.442695
      %v479 = vpow.pop %v478
      %v480 = vmul.f32 %v465, 1.442695
      %v481 = vpow.pop %v480
      %v482 = vsel %vm348, %v467, 0.0
      %483 = vadd.xlane.f32.xlu0 %v482
      %v484 = vpop.xlane.xlu0 %483
      %v485 = vsel %vm348, %v469, 0.0
      %486 = vadd.xlane.f32.xlu0 %v485
      %v487 = vpop.xlane.xlu0 %486
      %v488 = vsel %vm348, %v471, 0.0
      %489 = vadd.xlane.f32.xlu0 %v488
      %v490 = vpop.xlane.xlu0 %489
      %v491 = vsel %vm348, %v473, 0.0
      %492 = vadd.xlane.f32.xlu0 %v491
      %v493 = vpop.xlane.xlu0 %492
      %v494 = vsel %vm348, %v475, 0.0
      %495 = vadd.xlane.f32.xlu0 %v494
      %v496 = vpop.xlane.xlu0 %495
      %v497 = vsel %vm348, %v477, 0.0
      %498 = vadd.xlane.f32.xlu0 %v497
      %v499 = vpop.xlane.xlu0 %498
      %v500 = vsel %vm348, %v479, 0.0
      %501 = vadd.xlane.f32.xlu0 %v500
      %v502 = vpop.xlane.xlu0 %501
      %v503 = vsel %vm348, %v481, 0.0
      %504 = vadd.xlane.f32.xlu0 %v503
      %v505 = vpop.xlane.xlu0 %504
      %v506 = vrcp.pop %v484
      %v507 = vrcp.pop %v487
      %v508 = vrcp.pop %v490
      %v509 = vrcp.pop %v493
      %v510 = vrcp.pop %v496
      %v511 = vrcp.pop %v499
      %v512 = vrcp.pop %v502
      %v513 = vrcp.pop %v505
      %v514 = vmul.f32 %v467, %v506
      %v515 = vmul.f32 %v469, %v507
      %v516 = vmul.f32 %v471, %v508
      %v517 = vmul.f32 %v473, %v509
      %v518 = vmul.f32 %v475, %v510
      %v519 = vmul.f32 %v477, %v511
      %v520 = vmul.f32 %v479, %v512
      %v521 = vmul.f32 %v481, %v513
      %v522 = vld [vmem:[%s3] sm:$0xf]
      %v523 = vld [vmem:[%s3 + $0x4] sm:$0xf]
      %v524 = vld [vmem:[%s3 + $0x8] sm:$0xf]
      %v525 = vld [vmem:[%s3 + $0xc] sm:$0xf]
      %v526 = vld [vmem:[%s3 + $0x10] sm:$0xf]
      %v527 = vld [vmem:[%s3 + $0x14] sm:$0xf]
      %v528 = vld [vmem:[%s3 + $0x18] sm:$0xf]
      %v529 = vld [vmem:[%s3 + $0x1c] sm:$0xf]
      %v530 = vld [vmem:[%s4] sm:$0x1]
      %v532 = vlaneseq
      %v533 = vshrl.u32 %v532, 7
      %v534 = vsub.s32 0, %v533
      %v535 = vrot.slane %v530, %v534
      %v545 = vunpack.c.l.b16 %v522
      %v546 = vunpack.c.l.b16 %v523
      %v547 = vunpack.c.l.b16 %v524
      %v548 = vunpack.c.l.b16 %v525
      %v549 = vunpack.c.l.b16 %v526
      %v550 = vunpack.c.l.b16 %v527
      %v551 = vunpack.c.l.b16 %v528
      %v552 = vunpack.c.l.b16 %v529
      %v553 = vpack.c.b16 %v546, %v545
      %v554 = vpack.c.b16 %v548, %v547
      %v555 = vpack.c.b16 %v550, %v549
      %v556 = vpack.c.b16 %v552, %v551
      %561 = vmatprep.subr.bf16.mxu0 0
      %562 = vmatpush1.bf16.msra.mxu0 %v553
      %563 = vmatprep.subr.bf16.mxu0 0
      %564 = vmatpush1.bf16.msra.mxu0 %v554
      %565 = vmatprep.subr.bf16.mxu0 0
      %566 = vmatpush1.bf16.msra.mxu0 %v555
      %567 = vmatprep.subr.bf16.mxu0 0
      %568 = vmatpush1.bf16.msra.mxu0 %v556
      %569 = vmatprep.subr.bf16.mxu0 0
      %570 = vmatpush1.bf16.msra.mxu0 0
      %571 = vmatprep.subr.bf16.mxu0 0
      %572 = vmatpush1.bf16.msra.mxu0 0
      %573 = vmatprep.subr.bf16.mxu0 0
      %574 = vmatpush1.bf16.msra.mxu0 0
      %575 = vmatprep.subr.bf16.mxu0 0
      %576 = vmatpush1.bf16.msra.mxu0 0
      %577 = vmatprep.subr.bf16.mxu0 0
      %578 = vmatpush1.bf16.msra.mxu0 0
      %579 = vmatprep.subr.bf16.mxu0 0
      %580 = vmatpush1.bf16.msra.mxu0 0
      %581 = vmatprep.subr.bf16.mxu0 0
      %582 = vmatpush1.bf16.msra.mxu0 0
      %583 = vmatprep.subr.bf16.mxu0 0
      %584 = vmatpush1.bf16.msra.mxu0 0
      %585 = vmatprep.subr.bf16.mxu0 0
      %586 = vmatpush1.bf16.msra.mxu0 0
      %587 = vmatprep.subr.bf16.mxu0 0
      %588 = vmatpush1.bf16.msra.mxu0 0
      %589 = vmatprep.subr.bf16.mxu0 0
      %590 = vmatpush1.bf16.msra.mxu0 0
      %591 = vmatprep.subr.bf16.mxu0 0
      %592 = vmatpush1.bf16.msra.mxu0 0
      %593 = vmatprep.mubr.bf16.mxu0 0
      %594 = vmatmul.mubr.bf16.gmra.mrb[0].mxu0 %v350
      %v595 = vpop.f32.mrb[0].mxu0
      %v596 = vadd.f32 %v535, %v595
      %v597 = vpop.f32.mrb[0].mxu0
      %v598 = vpop.f32.mrb[0].mxu0
      %v599 = vadd.f32 %v535, %v598
      %v600 = vpop.f32.mrb[0].mxu0
      %601 = vmatprep.mubr.bf16.mxu0 0
      %602 = vmatmul.mubr.bf16.gmra.mrb[0].mxu0 %v353
      %v603 = vpop.f32.mrb[0].mxu0
      %v604 = vadd.f32 %v535, %v603
      %v605 = vpop.f32.mrb[0].mxu0
      %v606 = vpop.f32.mrb[0].mxu0
      %v607 = vadd.f32 %v535, %v606
      %v608 = vpop.f32.mrb[0].mxu0
      %609 = vmatprep.mubr.bf16.mxu0 0
      %610 = vmatmul.mubr.bf16.gmra.mrb[0].mxu0 %v356
      %v611 = vpop.f32.mrb[0].mxu0
      %v612 = vadd.f32 %v535, %v611
      %v613 = vpop.f32.mrb[0].mxu0
      %v614 = vpop.f32.mrb[0].mxu0
      %v615 = vadd.f32 %v535, %v614
      %v616 = vpop.f32.mrb[0].mxu0
      %617 = vmatprep.mubr.bf16.mxu0 0
      %618 = vmatmul.mubr.bf16.gmra.mrb[0].mxu0 %v359
      %v619 = vpop.f32.mrb[0].mxu0
      %v620 = vadd.f32 %v535, %v619
      %v621 = vpop.f32.mrb[0].mxu0
      %v622 = vpop.f32.mrb[0].mxu0
      %v623 = vadd.f32 %v535, %v622
      %v624 = vpop.f32.mrb[0].mxu0
      %625 = vdwg.mxu0
      %v626 = vpack.c.bf16 %v515, %v514
      %v627 = vpack.c.bf16 %v517, %v516
      %v628 = vpack.c.bf16 %v519, %v518
      %v629 = vpack.c.bf16 %v521, %v520
      %v630 = vpack.c.bf16 %v599, %v596
      %v631 = vpack.c.bf16 %v607, %v604
      %v632 = vpack.c.bf16 %v615, %v612
      %v633 = vpack.c.bf16 %v623, %v620
      %v635 = vsel %vm348, %v626, 0
      %v638 = vsel %vm348, %v627, 0
      %v641 = vsel %vm348, %v628, 0
      %v644 = vsel %vm348, %v629, 0
      %646 = vmatprep.subr.bf16.mxu0 0
      %647 = vmatpush1.bf16.msra.mxu0 %v630
      %648 = vmatprep.subr.bf16.mxu0 0
      %649 = vmatpush1.bf16.msra.mxu0 %v631
      %650 = vmatprep.subr.bf16.mxu0 0
      %651 = vmatpush1.bf16.msra.mxu0 %v632
      %652 = vmatprep.subr.bf16.mxu0 0
      %653 = vmatpush1.bf16.msra.mxu0 %v633
      %654 = vmatprep.subr.bf16.mxu0 0
      %655 = vmatpush1.bf16.msra.mxu0 0
      %656 = vmatprep.subr.bf16.mxu0 0
      %657 = vmatpush1.bf16.msra.mxu0 0
      %658 = vmatprep.subr.bf16.mxu0 0
      %659 = vmatpush1.bf16.msra.mxu0 0
      %660 = vmatprep.subr.bf16.mxu0 0
      %661 = vmatpush1.bf16.msra.mxu0 0
      %662 = vmatprep.subr.bf16.mxu0 0
      %663 = vmatpush1.bf16.msra.mxu0 0
      %664 = vmatprep.subr.bf16.mxu0 0
      %665 = vmatpush1.bf16.msra.mxu0 0
      %666 = vmatprep.subr.bf16.mxu0 0
      %667 = vmatpush1.bf16.msra.mxu0 0
      %668 = vmatprep.subr.bf16.mxu0 0
      %669 = vmatpush1.bf16.msra.mxu0 0
      %670 = vmatprep.subr.bf16.mxu0 0
      %671 = vmatpush1.bf16.msra.mxu0 0
      %672 = vmatprep.subr.bf16.mxu0 0
      %673 = vmatpush1.bf16.msra.mxu0 0
      %674 = vmatprep.subr.bf16.mxu0 0
      %675 = vmatpush1.bf16.msra.mxu0 0
      %676 = vmatprep.subr.bf16.mxu0 0
      %677 = vmatpush1.bf16.msra.mxu0 0
      %678 = vmatprep.mubr.bf16.mxu0 0
      %679 = vmatmul.mubr.bf16.gmra.mrb[0].mxu0 %v635
      %v680 = vpop.f32.mrb[0].mxu0
      %v681 = vadd.f32 0.0, %v680
      %v682 = vpop.f32.mrb[0].mxu0
      %v683 = vpop.f32.mrb[0].mxu0
      %v684 = vadd.f32 0.0, %v683
      %v685 = vpop.f32.mrb[0].mxu0
      %686 = vmatprep.mubr.bf16.mxu0 0
      %687 = vmatmul.mubr.bf16.gmra.mrb[0].mxu0 %v638
      %v688 = vpop.f32.mrb[0].mxu0
      %v689 = vadd.f32 0.0, %v688
      %v690 = vpop.f32.mrb[0].mxu0
      %v691 = vpop.f32.mrb[0].mxu0
      %v692 = vadd.f32 0.0, %v691
      %v693 = vpop.f32.mrb[0].mxu0
      %694 = vmatprep.mubr.bf16.mxu0 0
      %695 = vmatmul.mubr.bf16.gmra.mrb[0].mxu0 %v641
      %v696 = vpop.f32.mrb[0].mxu0
      %v697 = vadd.f32 0.0, %v696
      %v698 = vpop.f32.mrb[0].mxu0
      %v699 = vpop.f32.mrb[0].mxu0
      %v700 = vadd.f32 0.0, %v699
      %v701 = vpop.f32.mrb[0].mxu0
      %702 = vmatprep.mubr.bf16.mxu0 0
      %703 = vmatmul.mubr.bf16.gmra.mrb[0].mxu0 %v644
      %v704 = vpop.f32.mrb[0].mxu0
      %v705 = vadd.f32 0.0, %v704
      %v706 = vpop.f32.mrb[0].mxu0
      %v707 = vpop.f32.mrb[0].mxu0
      %v708 = vadd.f32 0.0, %v707
      %v709 = vpop.f32.mrb[0].mxu0
      %710 = vdwg.mxu0
      %v711 = vmax.f32 %v681, 0.0
      %v712 = vmax.f32 %v684, 0.0
      %v713 = vmax.f32 %v689, 0.0
      %v714 = vmax.f32 %v692, 0.0
      %v715 = vmax.f32 %v697, 0.0
      %v716 = vmax.f32 %v700, 0.0
      %v717 = vmax.f32 %v705, 0.0
      %v718 = vmax.f32 %v708, 0.0
      %719 = vst.msk [vmem:[%s224] sm:$0xff] %vm348, %v711
      %720 = vst.msk [vmem:[%s224 + $0x8] sm:$0xff] %vm348, %v712
      %721 = vst.msk [vmem:[%s224 + $0x10] sm:$0xff] %vm348, %v713
      %722 = vst.msk [vmem:[%s224 + $0x18] sm:$0xff] %vm348, %v714
      %723 = vst.msk [vmem:[%s224 + $0x20] sm:$0xff] %vm348, %v715
      %724 = vst.msk [vmem:[%s224 + $0x28] sm:$0xff] %vm348, %v716
      %725 = vst.msk [vmem:[%s224 + $0x30] sm:$0xff] %vm348, %v717
      %726 = vst.msk [vmem:[%s224 + $0x38] sm:$0xff] %vm348, %v718
      %p727 = scmp.lt.s32.totalorder %s16, 1
      %s728 = scalar_select %p727, %s16, 1
      %s729 = smul.addr %s728, 8
      %s730 = smul.addr %s729, 8
      %s731 = scalar_lea.vmem %s5, %s730
      // Predicated region
      $region41: #{shadow_removal_forward.14} parent=39 // pred_check
        %p732 = pneg %p144
      $region42: #{shadow_removal_forward.14} parent=39 // pred_check_branch
        %734 = sbr.rel (%p732) target = $region44
      $region43: #{shadow_removal_forward.14} parent=39 // pred_region
        _
      $region44: #{shadow_removal_forward.14} parent=39 // pred_fallthru
        _
    $region40: #{shadow_removal_forward.14} parent=5 // pred_fallthru
      _
    %p735 = scmp.le.s32.totalorder 2, %s11
    // Predicated region
    $region45: #{shadow_removal_forward.14} parent=5 // pred_check
      %p736 = pneg %p735
    $region46: #{shadow_removal_forward.14} parent=5 // pred_check_branch
      %738 = sbr.rel (%p736) target = $region48
    $region47: #{shadow_removal_forward.14} parent=5 // pred_region
      %s739 = ssub.s32 %s11, 2
      // Predicated region
      $region49: #{shadow_removal_forward.14} parent=47 // pred_check
        %p740 = pneg %p150
      $region50: #{shadow_removal_forward.14} parent=47 // pred_check_branch
        %742 = sbr.rel (%p740) target = $region52
      $region51: #{shadow_removal_forward.14} parent=47 // pred_region
        %p743 = scmp.lt.s32.totalorder %s17, 1
        %s744 = scalar_select %p743, %s17, 1
        %s745 = smul.addr %s744, 8
        %s746 = smul.addr %s745, 8
        %s747 = scalar_lea.vmem %s5, %s746
      $region52: #{shadow_removal_forward.14} parent=47 // pred_fallthru
        _
    $region48: #{shadow_removal_forward.14} parent=5 // pred_fallthru
      _
  $region6: #{shadow_removal_forward.14} parent=0 // loop_footer
    %s15 = sadd.s32 1, %s11
  $region7: #{shadow_removal_forward.14} parent=0 // loop_footer_branch
    %10 = sbr.rel target = $region3
  $region8: #{shadow_removal_forward.14} parent=0 // loop_exit
    _

// kernel: shadow_removal_forward.15
$region0: #{shadow_removal_forward.15}
  #allocation0 [shape = 'u32[]', space=smem, size = 0x4, offset = 0x4, fixed_abs, tag = 'smem constant byte address 0x4 - core index']
  #allocation1 [shape = 'u32[144,128]{1,0:T(1,128)}', space=vmem, size = 0x12000, scoped, tag = 'internal scratch']
  %s0 = inlined_call_operand.vmem [shape: f32[128,64], index: 0, kind: input, shape index: {}]
  %s1 = inlined_call_operand.vmem [shape: f32[128,64], index: 1, kind: input, shape index: {}]
  %s2 = inlined_call_operand.vmem [shape: bf16[64,128], index: 2, kind: input, shape index: {}]
  %s3 = inlined_call_operand.vmem [shape: f32[1,128], index: 3, kind: input, shape index: {}]
  %s4 = inlined_call_operand.vmem [shape: f32[128,64], index: 4, kind: output, shape index: {}]
  %s5 = sld [smem:[#allocation0]]
  $region26: #{shadow_removal_forward.15} parent=0
    _
  %s7 = ssub.s32 1, %s5
  %s8 = scalar_select 0, %s7, %s5
  // Predicated region
  $region2: #{shadow_removal_forward.15} parent=0 // pred_check
    _
  $region3: #{shadow_removal_forward.15} parent=0 // pred_check_branch
    %10 = sbr.rel (0) target = $region5
  $region4: #{shadow_removal_forward.15} parent=0 // pred_region
    _
  $region5: #{shadow_removal_forward.15} parent=0 // pred_fallthru
    _
  // Predicated region
  $region6: #{shadow_removal_forward.15} parent=0 // pred_check
    _
  $region7: #{shadow_removal_forward.15} parent=0 // pred_check_branch
    %12 = sbr.rel (0) target = $region9
  $region8: #{shadow_removal_forward.15} parent=0 // pred_region
    _
  $region9: #{shadow_removal_forward.15} parent=0 // pred_fallthru
    _
  // Predicated region
  $region10: #{shadow_removal_forward.15} parent=0 // pred_check
    _
  $region11: #{shadow_removal_forward.15} parent=0 // pred_check_branch
    %14 = sbr.rel (0) target = $region13
  $region12: #{shadow_removal_forward.15} parent=0 // pred_region
    _
  $region13: #{shadow_removal_forward.15} parent=0 // pred_fallthru
    _
  // Predicated region
  $region14: #{shadow_removal_forward.15} parent=0 // pred_check
    _
  $region15: #{shadow_removal_forward.15} parent=0 // pred_check_branch
    %16 = sbr.rel (0) target = $region17
  $region16: #{shadow_removal_forward.15} parent=0 // pred_region
    _
  $region17: #{shadow_removal_forward.15} parent=0 // pred_fallthru
    _
  %v18 = vld [vmem:[%s1] sm:$0xff]
  %v19 = vld [vmem:[%s1 + $0x8] sm:$0xff]
  %v20 = vld [vmem:[%s1 + $0x10] sm:$0xff]
  %v21 = vld [vmem:[%s1 + $0x18] sm:$0xff]
  %v22 = vld [vmem:[%s1 + $0x20] sm:$0xff]
  %v23 = vld [vmem:[%s1 + $0x28] sm:$0xff]
  %v24 = vld [vmem:[%s1 + $0x30] sm:$0xff]
  %v25 = vld [vmem:[%s1 + $0x38] sm:$0xff]
  %v26 = vld [vmem:[%s1 + $0x40] sm:$0xff]
  %v27 = vld [vmem:[%s1 + $0x48] sm:$0xff]
  %v28 = vld [vmem:[%s1 + $0x50] sm:$0xff]
  %v29 = vld [vmem:[%s1 + $0x58] sm:$0xff]
  %v30 = vld [vmem:[%s1 + $0x60] sm:$0xff]
  %v31 = vld [vmem:[%s1 + $0x68] sm:$0xff]
  %v32 = vld [vmem:[%s1 + $0x70] sm:$0xff]
  %v33 = vld [vmem:[%s1 + $0x78] sm:$0xff]
  %v34 = vpack.c.bf16 %v19, %v18
  %v35 = vpack.c.bf16 %v21, %v20
  %v36 = vpack.c.bf16 %v23, %v22
  %v37 = vpack.c.bf16 %v25, %v24
  %v38 = vpack.c.bf16 %v27, %v26
  %v39 = vpack.c.bf16 %v29, %v28
  %v40 = vpack.c.bf16 %v31, %v30
  %v41 = vpack.c.bf16 %v33, %v32
  %v42 = vld [vmem:[%s2] sm:$0xf]
  %v43 = vld [vmem:[%s2 + $0x4] sm:$0xf]
  %v44 = vld [vmem:[%s2 + $0x8] sm:$0xf]
  %v45 = vld [vmem:[%s2 + $0xc] sm:$0xf]
  %v46 = vld [vmem:[%s2 + $0x10] sm:$0xf]
  %v47 = vld [vmem:[%s2 + $0x14] sm:$0xf]
  %v48 = vld [vmem:[%s2 + $0x18] sm:$0xf]
  %v49 = vld [vmem:[%s2 + $0x1c] sm:$0xf]
  %v50 = vld [vmem:[%s3] sm:$0x1]
  %v52 = vlaneseq
  %v53 = vshrl.u32 %v52, 7
  %v54 = vsub.s32 0, %v53
  %v55 = vrot.slane %v50, %v54
  %v65 = vunpack.c.l.b16 %v42
  %v66 = vunpack.c.l.b16 %v43
  %v67 = vunpack.c.l.b16 %v44
  %v68 = vunpack.c.l.b16 %v45
  %v69 = vunpack.c.l.b16 %v46
  %v70 = vunpack.c.l.b16 %v47
  %v71 = vunpack.c.l.b16 %v48
  %v72 = vunpack.c.l.b16 %v49
  %v73 = vpack.c.b16 %v66, %v65
  %v74 = vpack.c.b16 %v68, %v67
  %v75 = vpack.c.b16 %v70, %v69
  %v76 = vpack.c.b16 %v72, %v71
  %vm81 = vcmask 523264
  %v83 = vsel %vm81, %v34, 0
  %v86 = vsel %vm81, %v35, 0
  %v89 = vsel %vm81, %v36, 0
  %v92 = vsel %vm81, %v37, 0
  %v95 = vsel %vm81, %v38, 0
  %v98 = vsel %vm81, %v39, 0
  %v101 = vsel %vm81, %v40, 0
  %v104 = vsel %vm81, %v41, 0
  %106 = vmatprep.subr.bf16.mxu0 0
  %107 = vmatpush1.bf16.msra.mxu0 %v73
  %108 = vmatprep.subr.bf16.mxu0 0
  %109 = vmatpush1.bf16.msra.mxu0 %v74
  %110 = vmatprep.subr.bf16.mxu0 0
  %111 = vmatpush1.bf16.msra.mxu0 %v75
  %112 = vmatprep.subr.bf16.mxu0 0
  %113 = vmatpush1.bf16.msra.mxu0 %v76
  %114 = vmatprep.subr.bf16.mxu0 0
  %115 = vmatpush1.bf16.msra.mxu0 0
  %116 = vmatprep.subr.bf16.mxu0 0
  %117 = vmatpush1.bf16.msra.mxu0 0
  %118 = vmatprep.subr.bf16.mxu0 0
  %119 = vmatpush1.bf16.msra.mxu0 0
  %120 = vmatprep.subr.bf16.mxu0 0
  %121 = vmatpush1.bf16.msra.mxu0 0
  %122 = vmatprep.subr.bf16.mxu0 0
  %123 = vmatpush1.bf16.msra.mxu0 0
  %124 = vmatprep.subr.bf16.mxu0 0
  %125 = vmatpush1.bf16.msra.mxu0 0
  %126 = vmatprep.subr.bf16.mxu0 0
  %127 = vmatpush1.bf16.msra.mxu0 0
  %128 = vmatprep.subr.bf16.mxu0 0
  %129 = vmatpush1.bf16.msra.mxu0 0
  %130 = vmatprep.subr.bf16.mxu0 0
  %131 = vmatpush1.bf16.msra.mxu0 0
  %132 = vmatprep.subr.bf16.mxu0 0
  %133 = vmatpush1.bf16.msra.mxu0 0
  %134 = vmatprep.subr.bf16.mxu0 0
  %135 = vmatpush1.bf16.msra.mxu0 0
  %136 = vmatprep.subr.bf16.mxu0 0
  %137 = vmatpush1.bf16.msra.mxu0 0
  %138 = vmatprep.mubr.bf16.mxu0 0
  %139 = vmatmul.mubr.bf16.gmra.mrb[0].mxu0 %v83
  %v140 = vpop.f32.mrb[0].mxu0
  %v141 = vadd.f32 %v55, %v140
  %v142 = vpop.f32.mrb[0].mxu0
  %v143 = vpop.f32.mrb[0].mxu0
  %v144 = vadd.f32 %v55, %v143
  %v145 = vpop.f32.mrb[0].mxu0
  %146 = vmatprep.mubr.bf16.mxu0 0
  %147 = vmatmul.mubr.bf16.gmra.mrb[0].mxu0 %v86
  %v148 = vpop.f32.mrb[0].mxu0
  %v149 = vadd.f32 %v55, %v148
  %v150 = vpop.f32.mrb[0].mxu0
  %v151 = vpop.f32.mrb[0].mxu0
  %v152 = vadd.f32 %v55, %v151
  %v153 = vpop.f32.mrb[0].mxu0
  %154 = vmatprep.mubr.bf16.mxu0 0
  %155 = vmatmul.mubr.bf16.gmra.mrb[0].mxu0 %v89
  %v156 = vpop.f32.mrb[0].mxu0
  %v157 = vadd.f32 %v55, %v156
  %v158 = vpop.f32.mrb[0].mxu0
  %v159 = vpop.f32.mrb[0].mxu0
  %v160 = vadd.f32 %v55, %v159
  %v161 = vpop.f32.mrb[0].mxu0
  %162 = vmatprep.mubr.bf16.mxu0 0
  %163 = vmatmul.mubr.bf16.gmra.mrb[0].mxu0 %v92
  %v164 = vpop.f32.mrb[0].mxu0
  %v165 = vadd.f32 %v55, %v164
  %v166 = vpop.f32.mrb[0].mxu0
  %v167 = vpop.f32.mrb[0].mxu0
  %v168 = vadd.f32 %v55, %v167
  %v169 = vpop.f32.mrb[0].mxu0
  %170 = vmatprep.mubr.bf16.mxu0 0
  %171 = vmatmul.mubr.bf16.gmra.mrb[0].mxu0 %v95
  %v172 = vpop.f32.mrb[0].mxu0
  %v173 = vadd.f32 %v55, %v172
  %v174 = vpop.f32.mrb[0].mxu0
  %v175 = vpop.f32.mrb[0].mxu0
  %v176 = vadd.f32 %v55, %v175
  %v177 = vpop.f32.mrb[0].mxu0
  %178 = vmatprep.mubr.bf16.mxu0 0
  %179 = vmatmul.mubr.bf16.gmra.mrb[0].mxu0 %v98
  %v180 = vpop.f32.mrb[0].mxu0
  %v181 = vadd.f32 %v55, %v180
  %v182 = vpop.f32.mrb[0].mxu0
  %v183 = vpop.f32.mrb[0].mxu0
  %v184 = vadd.f32 %v55, %v183
  %v185 = vpop.f32.mrb[0].mxu0
  %186 = vmatprep.mubr.bf16.mxu0 0
  %187 = vmatmul.mubr.bf16.gmra.mrb[0].mxu0 %v101
  %v188 = vpop.f32.mrb[0].mxu0
  %v189 = vadd.f32 %v55, %v188
  %v190 = vpop.f32.mrb[0].mxu0
  %v191 = vpop.f32.mrb[0].mxu0
  %v192 = vadd.f32 %v55, %v191
  %v193 = vpop.f32.mrb[0].mxu0
  %194 = vmatprep.mubr.bf16.mxu0 0
  %195 = vmatmul.mubr.bf16.gmra.mrb[0].mxu0 %v104
  %v196 = vpop.f32.mrb[0].mxu0
  %v197 = vadd.f32 %v55, %v196
  %v198 = vpop.f32.mrb[0].mxu0
  %v199 = vpop.f32.mrb[0].mxu0
  %v200 = vadd.f32 %v55, %v199
  %v201 = vpop.f32.mrb[0].mxu0
  %202 = vdwg.mxu0
  %v203 = vld [vmem:[%s0] sm:$0xff]
  %v204 = vld [vmem:[%s0 + $0x8] sm:$0xff]
  %v205 = vld [vmem:[%s0 + $0x10] sm:$0xff]
  %v206 = vld [vmem:[%s0 + $0x18] sm:$0xff]
  %v207 = vld [vmem:[%s0 + $0x20] sm:$0xff]
  %v208 = vld [vmem:[%s0 + $0x28] sm:$0xff]
  %v209 = vld [vmem:[%s0 + $0x30] sm:$0xff]
  %v210 = vld [vmem:[%s0 + $0x38] sm:$0xff]
  %v211 = vld [vmem:[%s0 + $0x40] sm:$0xff]
  %v212 = vld [vmem:[%s0 + $0x48] sm:$0xff]
  %v213 = vld [vmem:[%s0 + $0x50] sm:$0xff]
  %v214 = vld [vmem:[%s0 + $0x58] sm:$0xff]
  %v215 = vld [vmem:[%s0 + $0x60] sm:$0xff]
  %v216 = vld [vmem:[%s0 + $0x68] sm:$0xff]
  %v217 = vld [vmem:[%s0 + $0x70] sm:$0xff]
  %v218 = vld [vmem:[%s0 + $0x78] sm:$0xff]
  %v219 = vadd.f32 %v141, 2.0
  %v220 = vadd.f32 %v144, 2.0
  %v221 = vadd.f32 %v149, 2.0
  %v222 = vadd.f32 %v152, 2.0
  %v223 = vadd.f32 %v157, 2.0
  %v224 = vadd.f32 %v160, 2.0
  %v225 = vadd.f32 %v165, 2.0
  %v226 = vadd.f32 %v168, 2.0
  %v227 = vadd.f32 %v173, 2.0
  %v228 = vadd.f32 %v176, 2.0
  %v229 = vadd.f32 %v181, 2.0
  %v230 = vadd.f32 %v184, 2.0
  %v231 = vadd.f32 %v189, 2.0
  %v232 = vadd.f32 %v192, 2.0
  %v233 = vadd.f32 %v197, 2.0
  %v234 = vadd.f32 %v200, 2.0
  %v235 = vmul.f32 %v203, %v219
  %v236 = vmul.f32 %v204, %v220
  %v237 = vmul.f32 %v205, %v221
  %v238 = vmul.f32 %v206, %v222
  %v239 = vmul.f32 %v207, %v223
  %v240 = vmul.f32 %v208, %v224
  %v241 = vmul.f32 %v209, %v225
  %v242 = vmul.f32 %v210, %v226
  %v243 = vmul.f32 %v211, %v227
  %v244 = vmul.f32 %v212, %v228
  %v245 = vmul.f32 %v213, %v229
  %v246 = vmul.f32 %v214, %v230
  %v247 = vmul.f32 %v215, %v231
  %v248 = vmul.f32 %v216, %v232
  %v249 = vmul.f32 %v217, %v233
  %v250 = vmul.f32 %v218, %v234
  %267 = vrot.lane.b32.xlu0 %v141, 64
  %v268 = vpop.permute.xlu0 %267
  %269 = vrot.lane.b32.xlu0 %v144, 64
  %v270 = vpop.permute.xlu0 %269
  %271 = vrot.lane.b32.xlu0 %v149, 64
  %v272 = vpop.permute.xlu0 %271
  %273 = vrot.lane.b32.xlu0 %v152, 64
  %v274 = vpop.permute.xlu0 %273
  %275 = vrot.lane.b32.xlu0 %v157, 64
  %v276 = vpop.permute.xlu0 %275
  %277 = vrot.lane.b32.xlu0 %v160, 64
  %v278 = vpop.permute.xlu0 %277
  %279 = vrot.lane.b32.xlu0 %v165, 64
  %v280 = vpop.permute.xlu0 %279
  %281 = vrot.lane.b32.xlu0 %v168, 64
  %v282 = vpop.permute.xlu0 %281
  %283 = vrot.lane.b32.xlu0 %v173, 64
  %v284 = vpop.permute.xlu0 %283
  %285 = vrot.lane.b32.xlu0 %v176, 64
  %v286 = vpop.permute.xlu0 %285
  %287 = vrot.lane.b32.xlu0 %v181, 64
  %v288 = vpop.permute.xlu0 %287
  %289 = vrot.lane.b32.xlu0 %v184, 64
  %v290 = vpop.permute.xlu0 %289
  %291 = vrot.lane.b32.xlu0 %v189, 64
  %v292 = vpop.permute.xlu0 %291
  %293 = vrot.lane.b32.xlu0 %v192, 64
  %v294 = vpop.permute.xlu0 %293
  %295 = vrot.lane.b32.xlu0 %v197, 64
  %v296 = vpop.permute.xlu0 %295
  %297 = vrot.lane.b32.xlu0 %v200, 64
  %v298 = vpop.permute.xlu0 %297
  %v315 = vadd.f32 %v235, %v268
  %v316 = vadd.f32 %v236, %v270
  %v317 = vadd.f32 %v237, %v272
  %v318 = vadd.f32 %v238, %v274
  %v319 = vadd.f32 %v239, %v276
  %v320 = vadd.f32 %v240, %v278
  %v321 = vadd.f32 %v241, %v280
  %v322 = vadd.f32 %v242, %v282
  %v323 = vadd.f32 %v243, %v284
  %v324 = vadd.f32 %v244, %v286
  %v325 = vadd.f32 %v245, %v288
  %v326 = vadd.f32 %v246, %v290
  %v327 = vadd.f32 %v247, %v292
  %v328 = vadd.f32 %v248, %v294
  %v329 = vadd.f32 %v249, %v296
  %v330 = vadd.f32 %v250, %v298
  %331 = vst.msk [vmem:[%s4] sm:$0xff] %vm81, %v315
  %332 = vst.msk [vmem:[%s4 + $0x8] sm:$0xff] %vm81, %v316
  %333 = vst.msk [vmem:[%s4 + $0x10] sm:$0xff] %vm81, %v317
  %334 = vst.msk [vmem:[%s4 + $0x18] sm:$0xff] %vm81, %v318
  %335 = vst.msk [vmem:[%s4 + $0x20] sm:$0xff] %vm81, %v319
  %336 = vst.msk [vmem:[%s4 + $0x28] sm:$0xff] %vm81, %v320
  %337 = vst.msk [vmem:[%s4 + $0x30] sm:$0xff] %vm81, %v321
  %338 = vst.msk [vmem:[%s4 + $0x38] sm:$0xff] %vm81, %v322
  %339 = vst.msk [vmem:[%s4 + $0x40] sm:$0xff] %vm81, %v323
  %340 = vst.msk [vmem:[%s4 + $0x48] sm:$0xff] %vm81, %v324
  %341 = vst.msk [vmem:[%s4 + $0x50] sm:$0xff] %vm81, %v325
  %342 = vst.msk [vmem:[%s4 + $0x58] sm:$0xff] %vm81, %v326
  %343 = vst.msk [vmem:[%s4 + $0x60] sm:$0xff] %vm81, %v327
  %344 = vst.msk [vmem:[%s4 + $0x68] sm:$0xff] %vm81, %v328
  %345 = vst.msk [vmem:[%s4 + $0x70] sm:$0xff] %vm81, %v329
  %346 = vst.msk [vmem:[%s4 + $0x78] sm:$0xff] %vm81, %v330
  // Predicated region
  $region18: #{shadow_removal_forward.15} parent=0 // pred_check
    _
  $region19: #{shadow_removal_forward.15} parent=0 // pred_check_branch
    %348 = sbr.rel (0) target = $region21
  $region20: #{shadow_removal_forward.15} parent=0 // pred_region
    _
  $region21: #{shadow_removal_forward.15} parent=0 // pred_fallthru
    _
  // Predicated region
  $region22: #{shadow_removal_forward.15} parent=0 // pred_check
    _
  $region23: #{shadow_removal_forward.15} parent=0 // pred_check_branch
    %350 = sbr.rel (0) target = $region25
  $region24: #{shadow_removal_forward.15} parent=0 // pred_region
    _
  $region25: #{shadow_removal_forward.15} parent=0 // pred_fallthru
    _

// kernel: shadow_removal_forward.13
$region0: #{shadow_removal_forward.13}
  #allocation0 [shape = 'u32[]', space=smem, size = 0x4, offset = 0x4, fixed_abs, tag = 'smem constant byte address 0x4 - core index']
  #allocation1 [shape = 'u32[144,128]{1,0:T(1,128)}', space=vmem, size = 0x12000, scoped, tag = 'internal scratch']
  %s0 = inlined_call_operand.vmem [shape: bf16[2,10,10,8], index: 0, kind: input, shape index: {}, may-alias: {0,1,2}]
  %s1 = inlined_call_operand.vmem [shape: bf16[2,10,10,8], index: 1, kind: input, shape index: {}, may-alias: {0,1,2}]
  %s2 = inlined_call_operand.vmem [shape: bf16[2,10,10,8], index: 2, kind: input, shape index: {}, may-alias: {0,1,2}]
  %s3 = inlined_call_operand.vmem [shape: bf16[9,8,64], index: 3, kind: input, shape index: {}]
  %s4 = inlined_call_operand.vmem [shape: f32[1,64], index: 4, kind: input, shape index: {}]
  %s5 = inlined_call_operand.vmem [shape: f32[2,8,8,64], index: 5, kind: output, shape index: {}]
  %s6 = sld [smem:[#allocation0]]
  $region53: #{shadow_removal_forward.13} parent=0
    _
  %s8 = ssub.s32 1, %s6
  %s9 = scalar_select 0, %s8, %s6
  loop: start=0, step=1, limit=18
  $region2: #{shadow_removal_forward.13} parent=0 // loop_pre_header
    _
  $region3: #{shadow_removal_forward.13} parent=0 // loop_header
    %s11 = sphi 0, %s15
    %p12 = scmp.ge.s32.totalorder %s11, 18
    %s18 = sphi 0, %s30
    %s19 = sphi 0, %s26
    %s20 = sphi 0, %s18
    %s21 = sphi 0, %s19
    %s22 = sphi 0, %s20
    %s23 = sphi 0, %s21
    %s35 = sphi 0, %s37
    %s38 = sphi 0, %s35
    %s39 = sphi 0, %s38
    %s55 = sphi 0, %s39
    %s65 = sphi 0, %s67
    %s68 = sphi 0, %s65
    %s69 = sphi 0, %s68
    %s85 = sphi 0, %s69
    %s95 = sphi 0, %s97
    %s98 = sphi 0, %s95
    %s99 = sphi 0, %s98
    %s115 = sphi 0, %s99
    %s119 = sphi 0, %s119
    %s121 = sphi 0, %s119
    %s122 = sphi 0, %s121
    %s136 = sphi 0, %s122
    %s140 = sphi 0, %s140
    %s142 = sphi 0, %s140
    %s143 = sphi 0, %s142
    %s157 = sphi 0, %s143
    %s165 = sphi 0, %s167
    %s168 = sphi 0, %s165
    %s169 = sphi 0, %s168
    %s185 = sphi 0, %s169
  $region4: #{shadow_removal_forward.13} parent=0 // loop_header_branch
    %14 = sbr.rel (%p12) target = $region8
  $region5: #{shadow_removal_forward.13} parent=0 // loop_body
    %s16 = ssub.s32 %s11, 1
    %s17 = ssub.s32 %s11, 2
    %s24 = sadd.s32 1, %s19
    %p25 = scmp.ge.s32.totalorder %s24, 8
    %s26 = scalar_select %p25, 0, %s24
    %s27 = sadd.s32 1, %s18
    %s28 = scalar_select %p25, %s27, %s18
    %p29 = scmp.ge.s32.totalorder %s28, 2
    %s30 = scalar_select %p29, 0, %s28
    %s31 = ssub.s32 %s18, %s30
    %s32 = ssub.s32 %s19, %s26
    %s33 = sor.u32 %s31, %s32
    %p34 = scmp.eq.s32.totalorder %s33, 0
    %s36 = sadd.s32 %s35, 1
    %s37 = scalar_select %p34, %s35, %s36
    %p40 = pneg %p34
    %p41 = scmp.eq.s32.totalorder %s11, 15
    %p42 = por %p40, %p41
    %p43 = scmp.ne.s32.totalorder %s35, %s38
    %p44 = scmp.eq.s32.totalorder %s11, 0
    %p45 = por %p43, %p44
    %p46 = scmp.ne.s32.totalorder %s35, %s38
    %p47 = scmp.eq.s32.totalorder %s16, 15
    %p48 = por %p46, %p47
    %p49 = scmp.ne.s32.totalorder %s38, %s39
    %p50 = scmp.eq.s32.totalorder %s16, 0
    %p51 = por %p49, %p50
    %p52 = scmp.ne.s32.totalorder %s38, %s39
    %p53 = scmp.eq.s32.totalorder %s17, 15
    %p54 = por %p52, %p53
    %p56 = scmp.ne.s32.totalorder %s39, %s55
    %p57 = scmp.eq.s32.totalorder %s17, 0
    %p58 = por %p56, %p57
    %s59 = sadd.s32 %s19, 1
    %s60 = sadd.s32 %s26, 1
    %s61 = ssub.s32 %s18, %s30
    %s62 = ssub.s32 %s59, %s60
    %s63 = sor.u32 %s61, %s62
    %p64 = scmp.eq.s32.totalorder %s63, 0
    %s66 = sadd.s32 %s65, 1
    %s67 = scalar_select %p64, %s65, %s66
    %p70 = pneg %p64
    %p71 = scmp.eq.s32.totalorder %s11, 15
    %p72 = por %p70, %p71
    %p73 = scmp.ne.s32.totalorder %s65, %s68
    %p74 = scmp.eq.s32.totalorder %s11, 0
    %p75 = por %p73, %p74
    %p76 = scmp.ne.s32.totalorder %s65, %s68
    %p77 = scmp.eq.s32.totalorder %s16, 15
    %p78 = por %p76, %p77
    %p79 = scmp.ne.s32.totalorder %s68, %s69
    %p80 = scmp.eq.s32.totalorder %s16, 0
    %p81 = por %p79, %p80
    %p82 = scmp.ne.s32.totalorder %s68, %s69
    %p83 = scmp.eq.s32.totalorder %s17, 15
    %p84 = por %p82, %p83
    %p86 = scmp.ne.s32.totalorder %s69, %s85
    %p87 = scmp.eq.s32.totalorder %s17, 0
    %p88 = por %p86, %p87
    %s89 = sadd.s32 %s19, 2
    %s90 = sadd.s32 %s26, 2
    %s91 = ssub.s32 %s18, %s30
    %s92 = ssub.s32 %s89, %s90
    %s93 = sor.u32 %s91, %s92
    %p94 = scmp.eq.s32.totalorder %s93, 0
    %s96 = sadd.s32 %s95, 1
    %s97 = scalar_select %p94, %s95, %s96
    %p100 = pneg %p94
    %p101 = scmp.eq.s32.totalorder %s11, 15
    %p102 = por %p100, %p101
    %p103 = scmp.ne.s32.totalorder %s95, %s98
    %p104 = scmp.eq.s32.totalorder %s11, 0
    %p105 = por %p103, %p104
    %p106 = scmp.ne.s32.totalorder %s95, %s98
    %p107 = scmp.eq.s32.totalorder %s16, 15
    %p108 = por %p106, %p107
    %p109 = scmp.ne.s32.totalorder %s98, %s99
    %p110 = scmp.eq.s32.totalorder %s16, 0
    %p111 = por %p109, %p110
    %p112 = scmp.ne.s32.totalorder %s98, %s99
    %p113 = scmp.eq.s32.totalorder %s17, 15
    %p114 = por %p112, %p113
    %p116 = scmp.ne.s32.totalorder %s99, %s115
    %p117 = scmp.eq.s32.totalorder %s17, 0
    %p118 = por %p116, %p117
    %s120 = sadd.s32 %s119, 1
    %p123 = scmp.eq.s32.totalorder %s11, 15
    %p124 = scmp.ne.s32.totalorder %s119, %s121
    %p125 = scmp.eq.s32.totalorder %s11, 0
    %p126 = por %p124, %p125
    %p127 = scmp.ne.s32.totalorder %s119, %s121
    %p128 = scmp.eq.s32.totalorder %s16, 15
    %p129 = por %p127, %p128
    %p130 = scmp.ne.s32.totalorder %s121, %s122
    %p131 = scmp.eq.s32.totalorder %s16, 0
    %p132 = por %p130, %p131
    %p133 = scmp.ne.s32.totalorder %s121, %s122
    %p134 = scmp.eq.s32.totalorder %s17, 15
    %p135 = por %p133, %p134
    %p137 = scmp.ne.s32.totalorder %s122, %s136
    %p138 = scmp.eq.s32.totalorder %s17, 0
    %p139 = por %p137, %p138
    %s141 = sadd.s32 %s140, 1
    %p144 = scmp.eq.s32.totalorder %s11, 15
    %p145 = scmp.ne.s32.totalorder %s140, %s142
    %p146 = scmp.eq.s32.totalorder %s11, 0
    %p147 = por %p145, %p146
    %p148 = scmp.ne.s32.totalorder %s140, %s142
    %p149 = scmp.eq.s32.totalorder %s16, 15
    %p150 = por %p148, %p149
    %p151 = scmp.ne.s32.totalorder %s142, %s143
    %p152 = scmp.eq.s32.totalorder %s16, 0
    %p153 = por %p151, %p152
    %p154 = scmp.ne.s32.totalorder %s142, %s143
    %p155 = scmp.eq.s32.totalorder %s17, 15
    %p156 = por %p154, %p155
    %p158 = scmp.ne.s32.totalorder %s143, %s157
    %p159 = scmp.eq.s32.totalorder %s17, 0
    %p160 = por %p158, %p159
    %s161 = ssub.s32 %s18, %s30
    %s162 = ssub.s32 %s19, %s26
    %s163 = sor.u32 %s161, %s162
    %p164 = scmp.eq.s32.totalorder %s163, 0
    %s166 = sadd.s32 %s165, 1
    %s167 = scalar_select %p164, %s165, %s166
    %p170 = pneg %p164
    %p171 = scmp.eq.s32.totalorder %s11, 15
    %p172 = por %p170, %p171
    %p173 = scmp.ne.s32.totalorder %s165, %s168
    %p174 = scmp.eq.s32.totalorder %s11, 0
    %p175 = por %p173, %p174
    %p176 = scmp.ne.s32.totalorder %s165, %s168
    %p177 = scmp.eq.s32.totalorder %s16, 15
    %p178 = por %p176, %p177
    %p179 = scmp.ne.s32.totalorder %s168, %s169
    %p180 = scmp.eq.s32.totalorder %s16, 0
    %p181 = por %p179, %p180
    %p182 = scmp.ne.s32.totalorder %s168, %s169
    %p183 = scmp.eq.s32.totalorder %s17, 15
    %p184 = por %p182, %p183
    %p186 = scmp.ne.s32.totalorder %s169, %s185
    %p187 = scmp.eq.s32.totalorder %s17, 0
    %p188 = por %p186, %p187
    %p189 = scmp.le.s32.totalorder 1, %s11
    %p190 = scmp.lt.s32.totalorder %s11, 17
    %p191 = pnand %p189, %p190
    %p192 = pneg %p191
    // Predicated region
    $region9: #{shadow_removal_forward.13} parent=5 // pred_check
      _
    $region10: #{shadow_removal_forward.13} parent=5 // pred_check_branch
      %194 = sbr.rel (%p191) target = $region12
    $region11: #{shadow_removal_forward.13} parent=5 // pred_region
      %s195 = ssub.s32 %s11, 1
      // Predicated region
      $region13: #{shadow_removal_forward.13} parent=11 // pred_check
        %p196 = pneg %p132
      $region14: #{shadow_removal_forward.13} parent=11 // pred_check_branch
        %198 = sbr.rel (%p196) target = $region16
      $region15: #{shadow_removal_forward.13} parent=11 // pred_region
        _
      $region16: #{shadow_removal_forward.13} parent=11 // pred_fallthru
        _
      // Predicated region
      $region17: #{shadow_removal_forward.13} parent=11 // pred_check
        %p199 = pneg %p153
      $region18: #{shadow_removal_forward.13} parent=11 // pred_check_branch
        %201 = sbr.rel (%p199) target = $region20
      $region19: #{shadow_removal_forward.13} parent=11 // pred_region
        _
      $region20: #{shadow_removal_forward.13} parent=11 // pred_fallthru
        _
    $region12: #{shadow_removal_forward.13} parent=5 // pred_fallthru
      _
    %p202 = scmp.lt.s32.totalorder %s11, 16
    // Predicated region
    $region21: #{shadow_removal_forward.13} parent=5 // pred_check
      %p203 = pneg %p202
    $region22: #{shadow_removal_forward.13} parent=5 // pred_check_branch
      %205 = sbr.rel (%p203) target = $region24
    $region23: #{shadow_removal_forward.13} parent=5 // pred_region
      // Predicated region
      $region25: #{shadow_removal_forward.13} parent=23 // pred_check
        %p206 = pneg %p45
      $region26: #{shadow_removal_forward.13} parent=23 // pred_check_branch
        %208 = sbr.rel (%p206) target = $region28
      $region27: #{shadow_removal_forward.13} parent=23 // pred_region
        %p209 = scmp.lt.s32.totalorder %s18, 1
        %s210 = scalar_select %p209, %s18, 1
        %p211 = scmp.lt.s32.totalorder %s19, 9
        %s212 = scalar_select %p211, %s19, 9
        %s213 = smul.addr %s212, 2
        %s214 = smul.addr %s210, 20
        %s215 = sadd.s32 %s213, %s214
        %s216 = smul.addr %s215, 4
        %s217 = scalar_lea.vmem %s0, %s216
      $region28: #{shadow_removal_forward.13} parent=23 // pred_fallthru
        _
      // Predicated region
      $region29: #{shadow_removal_forward.13} parent=23 // pred_check
        %p218 = pneg %p75
      $region30: #{shadow_removal_forward.13} parent=23 // pred_check_branch
        %220 = sbr.rel (%p218) target = $region32
      $region31: #{shadow_removal_forward.13} parent=23 // pred_region
        %s221 = sadd.s32 %s19, 1
        %p222 = scmp.lt.s32.totalorder %s18, 1
        %s223 = scalar_select %p222, %s18, 1
        %p224 = scmp.lt.s32.totalorder %s221, 9
        %s225 = scalar_select %p224, %s221, 9
        %s226 = smul.addr %s225, 2
        %s227 = smul.addr %s223, 20
        %s228 = sadd.s32 %s226, %s227
        %s229 = smul.addr %s228, 4
        %s230 = scalar_lea.vmem %s1, %s229
        %s231 = sadd.s32 %s19, 1
      $region32: #{shadow_removal_forward.13} parent=23 // pred_fallthru
        _
      // Predicated region
      $region33: #{shadow_removal_forward.13} parent=23 // pred_check
        %p232 = pneg %p105
      $region34: #{shadow_removal_forward.13} parent=23 // pred_check_branch
        %234 = sbr.rel (%p232) target = $region36
      $region35: #{shadow_removal_forward.13} parent=23 // pred_region
        %s235 = sadd.s32 %s19, 2
        %p236 = scmp.lt.s32.totalorder %s18, 1
        %s237 = scalar_select %p236, %s18, 1
        %p238 = scmp.lt.s32.totalorder %s235, 9
        %s239 = scalar_select %p238, %s235, 9
        %s240 = smul.addr %s239, 2
        %s241 = smul.addr %s237, 20
        %s242 = sadd.s32 %s240, %s241
        %s243 = smul.addr %s242, 4
        %s244 = scalar_lea.vmem %s2, %s243
        %s245 = sadd.s32 %s19, 2
      $region36: #{shadow_removal_forward.13} parent=23 // pred_fallthru
        _
    $region24: #{shadow_removal_forward.13} parent=5 // pred_fallthru
      _
    %p246 = scmp.le.s32.totalorder 1, %s11
    %p247 = scmp.lt.s32.totalorder %s11, 17
    %p248 = pnand %p246, %p247
    %p249 = pneg %p248
    // Predicated region
    $region37: #{shadow_removal_forward.13} parent=5 // pred_check
      _
    $region38: #{shadow_removal_forward.13} parent=5 // pred_check_branch
      %251 = sbr.rel (%p248) target = $region40
    $region39: #{shadow_removal_forward.13} parent=5 // pred_region
      %s252 = ssub.s32 %s11, 1
      %p253 = scmp.lt.s32.totalorder %s20, 1
      %s254 = scalar_select %p253, %s20, 1
      %p255 = scmp.lt.s32.totalorder %s21, 9
      %s256 = scalar_select %p255, %s21, 9
      %s257 = smul.addr %s256, 2
      %s258 = smul.addr %s254, 20
      %s259 = sadd.s32 %s257, %s258
      %s260 = smul.addr %s259, 4
      %s261 = scalar_lea.vmem %s0, %s260
      %p262 = pneg %p51
      %p263 = pneg %p48
      %s264 = sadd.s32 %s21, 1
      %p265 = scmp.lt.s32.totalorder %s20, 1
      %s266 = scalar_select %p265, %s20, 1
      %p267 = scmp.lt.s32.totalorder %s264, 9
      %s268 = scalar_select %p267, %s264, 9
      %s269 = smul.addr %s268, 2
      %s270 = smul.addr %s266, 20
      %s271 = sadd.s32 %s269, %s270
      %s272 = smul.addr %s271, 4
      %s273 = scalar_lea.vmem %s1, %s272
      %p274 = pneg %p81
      %p275 = pneg %p78
      %s276 = sadd.s32 %s21, 2
      %p277 = scmp.lt.s32.totalorder %s20, 1
      %s278 = scalar_select %p277, %s20, 1
      %p279 = scmp.lt.s32.totalorder %s276, 9
      %s280 = scalar_select %p279, %s276, 9
      %s281 = smul.addr %s280, 2
      %s282 = smul.addr %s278, 20
      %s283 = sadd.s32 %s281, %s282
      %s284 = smul.addr %s283, 4
      %s285 = scalar_lea.vmem %s2, %s284
      %p286 = pneg %p111
      %p287 = pneg %p108
      %p288 = pneg %p132
      %p289 = pneg %p129
      %p290 = pneg %p153
      %p291 = pneg %p150
      %p292 = pneg %p181
      %p293 = pneg %p178
      %p294 = scmp.lt.s32.totalorder %s20, 1
      %s295 = scalar_select %p294, %s20, 1
      %p296 = scmp.lt.s32.totalorder %s21, 7
      %s297 = scalar_select %p296, %s21, 7
      %s298 = smul.addr %s295, 8
      %s299 = sadd.s32 %s297, %s298
      %s300 = smul.addr %s299, 8
      %s301 = scalar_lea.vmem %s5, %s300
      %p302 = scmp.lt.s32.totalorder %s20, 1
      %s303 = scalar_select %p302, %s20, 1
      %p304 = scmp.lt.s32.totalorder %s21, 9
      %s305 = scalar_select %p304, %s21, 9
      %s306 = smul.addr %s305, 2
      %s307 = smul.addr %s303, 20
      %s308 = sadd.s32 %s306, %s307
      %s309 = smul.addr %s308, 4
      %s310 = scalar_lea.vmem %s0, %s309
      %s311 = sadd.s32 %s21, 1
      %p312 = scmp.lt.s32.totalorder %s20, 1
      %s313 = scalar_select %p312, %s20, 1
      %p314 = scmp.lt.s32.totalorder %s311, 9
      %s315 = scalar_select %p314, %s311, 9
      %s316 = smul.addr %s315, 2
      %s317 = smul.addr %s313, 20
      %s318 = sadd.s32 %s316, %s317
      %s319 = smul.addr %s318, 4
      %s320 = scalar_lea.vmem %s1, %s319
      %s321 = sadd.s32 %s21, 1
      %s322 = sadd.s32 %s21, 2
      %p323 = scmp.lt.s32.totalorder %s20, 1
      %s324 = scalar_select %p323, %s20, 1
      %p325 = scmp.lt.s32.totalorder %s322, 9
      %s326 = scalar_select %p325, %s322, 9
      %s327 = smul.addr %s326, 2
      %s328 = smul.addr %s324, 20
      %s329 = sadd.s32 %s327, %s328
      %s330 = smul.addr %s329, 4
      %s331 = scalar_lea.vmem %s2, %s330
      %s332 = sadd.s32 %s21, 2
      %p333 = scmp.lt.s32.totalorder %s20, 1
      %s334 = scalar_select %p333, %s20, 1
      %p335 = scmp.lt.s32.totalorder %s21, 7
      %s336 = scalar_select %p335, %s21, 7
      %s337 = smul.addr %s334, 8
      %s338 = sadd.s32 %s336, %s337
      %s339 = smul.addr %s338, 8
      %s340 = scalar_lea.vmem %s5, %s339
      %v342 = vld [vmem:[%s310] sm:$0xf]
      %v343 = vld [vmem:[%s310 + $0x4] sm:$0x1]
      %v344 = vld [vmem:[%s320] sm:$0xf]
      %v345 = vld [vmem:[%s320 + $0x4] sm:$0x1]
      %v346 = vld [vmem:[%s331] sm:$0xf]
      %v347 = vld [vmem:[%s331 + $0x4] sm:$0x1]
      %v348 = vld [vmem:[%s3] sm:$0xf]
      %s349 = scalar_lea.vmem %s3, 4
      %v350 = vld [vmem:[%s349] sm:$0xf]
      %v353 = vunpack.c.l.b16 %v342
      %v354 = vunpack.c.l.b16 %v343
      %v355 = vpack.c.b16 %v354, %v353
      %v357 = vshrl.u32 %v355, 16
      %v359 = vshll.u32 %v355, 16
      %v361 = vrot.slane %v359, 1
      %v362 = vor.u32 %v357, %v361
      %vm363 = vcmask 64512
      %v365 = vsel %vm363, %v362, 0
      %vm367 = vcmask 1043456
      %v369 = vsel %vm367, %v350, 0
      %371 = vmatprep.subr.bf16.mxu0 0
      %372 = vmatpush1.bf16.msra.mxu0 %v369
      %373 = vmatprep.subr.bf16.mxu0 0
      %374 = vmatpush1.bf16.msra.mxu0 0
      %375 = vmatprep.subr.bf16.mxu0 0
      %376 = vmatpush1.bf16.msra.mxu0 0
      %377 = vmatprep.subr.bf16.mxu0 0
      %378 = vmatpush1.bf16.msra.mxu0 0
      %379 = vmatprep.subr.bf16.mxu0 0
      %380 = vmatpush1.bf16.msra.mxu0 0
      %381 = vmatprep.subr.bf16.mxu0 0
      %382 = vmatpush1.bf16.msra.mxu0 0
      %383 = vmatprep.subr.bf16.mxu0 0
      %384 = vmatpush1.bf16.msra.mxu0 0
      %385 = vmatprep.subr.bf16.mxu0 0
      %386 = vmatpush1.bf16.msra.mxu0 0
      %387 = vmatprep.subr.bf16.mxu0 0
      %388 = vmatpush1.bf16.msra.mxu0 0
      %389 = vmatprep.subr.bf16.mxu0 0
      %390 = vmatpush1.bf16.msra.mxu0 0
      %391 = vmatprep.subr.bf16.mxu0 0
      %392 = vmatpush1.bf16.msra.mxu0 0
      %393 = vmatprep.subr.bf16.mxu0 0
      %394 = vmatpush1.bf16.msra.mxu0 0
      %395 = vmatprep.subr.bf16.mxu0 0
      %396 = vmatpush1.bf16.msra.mxu0 0
      %397 = vmatprep.subr.bf16.mxu0 0
      %398 = vmatpush1.bf16.msra.mxu0 0
      %399 = vmatprep.subr.bf16.mxu0 0
      %400 = vmatpush1.bf16.msra.mxu0 0
      %401 = vmatprep.subr.bf16.mxu0 0
      %402 = vmatpush1.bf16.msra.mxu0 0
      %403 = vmatprep.mubr.bf16.mxu0 0
      %404 = vmatmul.mubr.bf16.gmra.mrb[0].mxu0 %v365
      %v405 = vpop.f32.mrb[0].mxu0
      %v406 = vadd.f32 0.0, %v405
      %v407 = vpop.f32.mrb[0].mxu0
      %v408 = vpop.f32.mrb[0].mxu0
      %v409 = vpop.f32.mrb[0].mxu0
      %410 = vdwg.mxu0
      %v412 = vsel %vm363, %v342, 0
      %v415 = vsel %vm367, %v348, 0
      %417 = vmatprep.subr.bf16.mxu0 0
      %418 = vmatpush1.bf16.msra.mxu0 %v415
      %419 = vmatprep.subr.bf16.mxu0 0
      %420 = vmatpush1.bf16.msra.mxu0 0
      %421 = vmatprep.subr.bf16.mxu0 0
      %422 = vmatpush1.bf16.msra.mxu0 0
      %423 = vmatprep.subr.bf16.mxu0 0
      %424 = vmatpush1.bf16.msra.mxu0 0
      %425 = vmatprep.subr.bf16.mxu0 0
      %426 = vmatpush1.bf16.msra.mxu0 0
      %427 = vmatprep.subr.bf16.mxu0 0
      %428 = vmatpush1.bf16.msra.mxu0 0
      %429 = vmatprep.subr.bf16.mxu0 0
      %430 = vmatpush1.bf16.msra.mxu0 0
      %431 = vmatprep.subr.bf16.mxu0 0
      %432 = vmatpush1.bf16.msra.mxu0 0
      %433 = vmatprep.subr.bf16.mxu0 0
      %434 = vmatpush1.bf16.msra.mxu0 0
      %435 = vmatprep.subr.bf16.mxu0 0
      %436 = vmatpush1.bf16.msra.mxu0 0
      %437 = vmatprep.subr.bf16.mxu0 0
      %438 = vmatpush1.bf16.msra.mxu0 0
      %439 = vmatprep.subr.bf16.mxu0 0
      %440 = vmatpush1.bf16.msra.mxu0 0
      %441 = vmatprep.subr.bf16.mxu0 0
      %442 = vmatpush1.bf16.msra.mxu0 0
      %443 = vmatprep.subr.bf16.mxu0 0
      %444 = vmatpush1.bf16.msra.mxu0 0
      %445 = vmatprep.subr.bf16.mxu0 0
      %446 = vmatpush1.bf16.msra.mxu0 0
      %447 = vmatprep.subr.bf16.mxu0 0
      %448 = vmatpush1.bf16.msra.mxu0 0
      %449 = vmatprep.mubr.bf16.mxu0 0
      %450 = vmatmul.mubr.bf16.gmra.mrb[0].mxu0 %v412
      %v451 = vpop.f32.mrb[0].mxu0
      %v452 = vadd.f32 %v406, %v451
      %v453 = vpop.f32.mrb[0].mxu0
      %v454 = vpop.f32.mrb[0].mxu0
      %v455 = vpop.f32.mrb[0].mxu0
      %456 = vdwg.mxu0
      %s457 = scalar_lea.vmem %s3, 8
      %v458 = vld [vmem:[%s457] sm:$0xf]
      %v459 = vrot.slane %v355, 1
      %v461 = vsel %vm363, %v459, 0
      %v464 = vsel %vm367, %v458, 0
      %466 = vmatprep.subr.bf16.mxu0 0
      %467 = vmatpush1.bf16.msra.mxu0 %v464
      %468 = vmatprep.subr.bf16.mxu0 0
      %469 = vmatpush1.bf16.msra.mxu0 0
      %470 = vmatprep.subr.bf16.mxu0 0
      %471 = vmatpush1.bf16.msra.mxu0 0
      %472 = vmatprep.subr.bf16.mxu0 0
      %473 = vmatpush1.bf16.msra.mxu0 0
      %474 = vmatprep.subr.bf16.mxu0 0
      %475 = vmatpush1.bf16.msra.mxu0 0
      %476 = vmatprep.subr.bf16.mxu0 0
      %477 = vmatpush1.bf16.msra.mxu0 0
      %478 = vmatprep.subr.bf16.mxu0 0
      %479 = vmatpush1.bf16.msra.mxu0 0
      %480 = vmatprep.subr.bf16.mxu0 0
      %481 = vmatpush1.bf16.msra.mxu0 0
      %482 = vmatprep.subr.bf16.mxu0 0
      %483 = vmatpush1.bf16.msra.mxu0 0
      %484 = vmatprep.subr.bf16.mxu0 0
      %485 = vmatpush1.bf16.msra.mxu0 0
      %486 = vmatprep.subr.bf16.mxu0 0
      %487 = vmatpush1.bf16.msra.mxu0 0
      %488 = vmatprep.subr.bf16.mxu0 0
      %489 = vmatpush1.bf16.msra.mxu0 0
      %490 = vmatprep.subr.bf16.mxu0 0
      %491 = vmatpush1.bf16.msra.mxu0 0
      %492 = vmatprep.subr.bf16.mxu0 0
      %493 = vmatpush1.bf16.msra.mxu0 0
      %494 = vmatprep.subr.bf16.mxu0 0
      %495 = vmatpush1.bf16.msra.mxu0 0
      %496 = vmatprep.subr.bf16.mxu0 0
      %497 = vmatpush1.bf16.msra.mxu0 0
      %498 = vmatprep.mubr.bf16.mxu0 0
      %499 = vmatmul.mubr.bf16.gmra.mrb[0].mxu0 %v461
      %v500 = vpop.f32.mrb[0].mxu0
      %v501 = vadd.f32 0.0, %v500
      %v502 = vpop.f32.mrb[0].mxu0
      %v503 = vpop.f32.mrb[0].mxu0
      %v504 = vpop.f32.mrb[0].mxu0
      %505 = vdwg.mxu0
      %v506 = vadd.f32 %v452, %v501
      %s507 = scalar_lea.vmem %s3, 12
      %v508 = vld [vmem:[%s507] sm:$0xf]
      %v510 = vsel %vm363, %v344, 0
      %v513 = vsel %vm367, %v508, 0
      %515 = vmatprep.subr.bf16.mxu0 0
      %516 = vmatpush1.bf16.msra.mxu0 %v513
      %517 = vmatprep.subr.bf16.mxu0 0
      %518 = vmatpush1.bf16.msra.mxu0 0
      %519 = vmatprep.subr.bf16.mxu0 0
      %520 = vmatpush1.bf16.msra.mxu0 0
      %521 = vmatprep.subr.bf16.mxu0 0
      %522 = vmatpush1.bf16.msra.mxu0 0
      %523 = vmatprep.subr.bf16.mxu0 0
      %524 = vmatpush1.bf16.msra.mxu0 0
      %525 = vmatprep.subr.bf16.mxu0 0
      %526 = vmatpush1.bf16.msra.mxu0 0
      %527 = vmatprep.subr.bf16.mxu0 0
      %528 = vmatpush1.bf16.msra.mxu0 0
      %529 = vmatprep.subr.bf16.mxu0 0
      %530 = vmatpush1.bf16.msra.mxu0 0
      %531 = vmatprep.subr.bf16.mxu0 0
      %532 = vmatpush1.bf16.msra.mxu0 0
      %533 = vmatprep.subr.bf16.mxu0 0
      %534 = vmatpush1.bf16.msra.mxu0 0
      %535 = vmatprep.subr.bf16.mxu0 0
      %536 = vmatpush1.bf16.msra.mxu0 0
      %537 = vmatprep.subr.bf16.mxu0 0
      %538 = vmatpush1.bf16.msra.mxu0 0
      %539 = vmatprep.subr.bf16.mxu0 0
      %540 = vmatpush1.bf16.msra.mxu0 0
      %541 = vmatprep.subr.bf16.mxu0 0
      %542 = vmatpush1.bf16.msra.mxu0 0
      %543 = vmatprep.subr.bf16.mxu0 0
      %544 = vmatpush1.bf16.msra.mxu0 0
      %545 = vmatprep.subr.bf16.mxu0 0
      %546 = vmatpush1.bf16.msra.mxu0 0
      %547 = vmatprep.mubr.bf16.mxu0 0
      %548 = vmatmul.mubr.bf16.gmra.mrb[0].mxu0 %v510
      %v549 = vpop.f32.mrb[0].mxu0
      %v550 = vadd.f32 0.0, %v549
      %v551 = vpop.f32.mrb[0].mxu0
      %v552 = vpop.f32.mrb[0].mxu0
      %v553 = vpop.f32.mrb[0].mxu0
      %554 = vdwg.mxu0
      %v555 = vadd.f32 %v506, %v550
      %s556 = scalar_lea.vmem %s3, 16
      %v557 = vld [vmem:[%s556] sm:$0xf]
      %v560 = vunpack.c.l.b16 %v344
      %v561 = vunpack.c.l.b16 %v345
      %v562 = vpack.c.b16 %v561, %v560
      %v564 = vshrl.u32 %v562, 16
      %v566 = vshll.u32 %v562, 16
      %v568 = vrot.slane %v566, 1
      %v569 = vor.u32 %v564, %v568
      %v571 = vsel %vm363, %v569, 0
      %v574 = vsel %vm367, %v557, 0
      %576 = vmatprep.subr.bf16.mxu0 0
      %577 = vmatpush1.bf16.msra.mxu0 %v574
      %578 = vmatprep.subr.bf16.mxu0 0
      %579 = vmatpush1.bf16.msra.mxu0 0
      %580 = vmatprep.subr.bf16.mxu0 0
      %581 = vmatpush1.bf16.msra.mxu0 0
      %582 = vmatprep.subr.bf16.mxu0 0
      %583 = vmatpush1.bf16.msra.mxu0 0
      %584 = vmatprep.subr.bf16.mxu0 0
      %585 = vmatpush1.bf16.msra.mxu0 0
      %586 = vmatprep.subr.bf16.mxu0 0
      %587 = vmatpush1.bf16.msra.mxu0 0
      %588 = vmatprep.subr.bf16.mxu0 0
      %589 = vmatpush1.bf16.msra.mxu0 0
      %590 = vmatprep.subr.bf16.mxu0 0
      %591 = vmatpush1.bf16.msra.mxu0 0
      %592 = vmatprep.subr.bf16.mxu0 0
      %593 = vmatpush1.bf16.msra.mxu0 0
      %594 = vmatprep.subr.bf16.mxu0 0
      %595 = vmatpush1.bf16.msra.mxu0 0
      %596 = vmatprep.subr.bf16.mxu0 0
      %597 = vmatpush1.bf16.msra.mxu0 0
      %598 = vmatprep.subr.bf16.mxu0 0
      %599 = vmatpush1.bf16.msra.mxu0 0
      %600 = vmatprep.subr.bf16.mxu0 0
      %601 = vmatpush1.bf16.msra.mxu0 0
      %602 = vmatprep.subr.bf16.mxu0 0
      %603 = vmatpush1.bf16.msra.mxu0 0
      %604 = vmatprep.subr.bf16.mxu0 0
      %605 = vmatpush1.bf16.msra.mxu0 0
      %606 = vmatprep.subr.bf16.mxu0 0
      %607 = vmatpush1.bf16.msra.mxu0 0
      %608 = vmatprep.mubr.bf16.mxu0 0
      %609 = vmatmul.mubr.bf16.gmra.mrb[0].mxu0 %v571
      %v610 = vpop.f32.mrb[0].mxu0
      %v611 = vadd.f32 0.0, %v610
      %v612 = vpop.f32.mrb[0].mxu0
      %v613 = vpop.f32.mrb[0].mxu0
      %v614 = vpop.f32.mrb[0].mxu0
      %615 = vdwg.mxu0
      %v616 = vadd.f32 %v555, %v611
      %s617 = scalar_lea.vmem %s3, 20
      %v618 = vld [vmem:[%s617] sm:$0xf]
      %v619 = vrot.slane %v562, 1
      %v621 = vsel %vm363, %v619, 0
      %v624 = vsel %vm367, %v618, 0
      %626 = vmatprep.subr.bf16.mxu0 0
      %627 = vmatpush1.bf16.msra.mxu0 %v624
      %628 = vmatprep.subr.bf16.mxu0 0
      %629 = vmatpush1.bf16.msra.mxu0 0
      %630 = vmatprep.subr.bf16.mxu0 0
      %631 = vmatpush1.bf16.msra.mxu0 0
      %632 = vmatprep.subr.bf16.mxu0 0
      %633 = vmatpush1.bf16.msra.mxu0 0
      %634 = vmatprep.subr.bf16.mxu0 0
      %635 = vmatpush1.bf16.msra.mxu0 0
      %636 = vmatprep.subr.bf16.mxu0 0
      %637 = vmatpush1.bf16.msra.mxu0 0
      %638 = vmatprep.subr.bf16.mxu0 0
      %639 = vmatpush1.bf16.msra.mxu0 0
      %640 = vmatprep.subr.bf16.mxu0 0
      %641 = vmatpush1.bf16.msra.mxu0 0
      %642 = vmatprep.subr.bf16.mxu0 0
      %643 = vmatpush1.bf16.msra.mxu0 0
      %644 = vmatprep.subr.bf16.mxu0 0
      %645 = vmatpush1.bf16.msra.mxu0 0
      %646 = vmatprep.subr.bf16.mxu0 0
      %647 = vmatpush1.bf16.msra.mxu0 0
      %648 = vmatprep.subr.bf16.mxu0 0
      %649 = vmatpush1.bf16.msra.mxu0 0
      %650 = vmatprep.subr.bf16.mxu0 0
      %651 = vmatpush1.bf16.msra.mxu0 0
      %652 = vmatprep.subr.bf16.mxu0 0
      %653 = vmatpush1.bf16.msra.mxu0 0
      %654 = vmatprep.subr.bf16.mxu0 0
      %655 = vmatpush1.bf16.msra.mxu0 0
      %656 = vmatprep.subr.bf16.mxu0 0
      %657 = vmatpush1.bf16.msra.mxu0 0
      %658 = vmatprep.mubr.bf16.mxu0 0
      %659 = vmatmul.mubr.bf16.gmra.mrb[0].mxu0 %v621
      %v660 = vpop.f32.mrb[0].mxu0
      %v661 = vadd.f32 0.0, %v660
      %v662 = vpop.f32.mrb[0].mxu0
      %v663 = vpop.f32.mrb[0].mxu0
      %v664 = vpop.f32.mrb[0].mxu0
      %665 = vdwg.mxu0
      %v666 = vadd.f32 %v616, %v661
      %s667 = scalar_lea.vmem %s3, 24
      %v668 = vld [vmem:[%s667] sm:$0xf]
      %v670 = vsel %vm363, %v346, 0
      %v673 = vsel %vm367, %v668, 0
      %675 = vmatprep.subr.bf16.mxu0 0
      %676 = vmatpush1.bf16.msra.mxu0 %v673
      %677 = vmatprep.subr.bf16.mxu0 0
      %678 = vmatpush1.bf16.msra.mxu0 0
      %679 = vmatprep.subr.bf16.mxu0 0
      %680 = vmatpush1.bf16.msra.mxu0 0
      %681 = vmatprep.subr.bf16.mxu0 0
      %682 = vmatpush1.bf16.msra.mxu0 0
      %683 = vmatprep.subr.bf16.mxu0 0
      %684 = vmatpush1.bf16.msra.mxu0 0
      %685 = vmatprep.subr.bf16.mxu0 0
      %686 = vmatpush1.bf16.msra.mxu0 0
      %687 = vmatprep.subr.bf16.mxu0 0
      %688 = vmatpush1.bf16.msra.mxu0 0
      %689 = vmatprep.subr.bf16.mxu0 0
      %690 = vmatpush1.bf16.msra.mxu0 0
      %691 = vmatprep.subr.bf16.mxu0 0
      %692 = vmatpush1.bf16.msra.mxu0 0
      %693 = vmatprep.subr.bf16.mxu0 0
      %694 = vmatpush1.bf16.msra.mxu0 0
      %695 = vmatprep.subr.bf16.mxu0 0
      %696 = vmatpush1.bf16.msra.mxu0 0
      %697 = vmatprep.subr.bf16.mxu0 0
      %698 = vmatpush1.bf16.msra.mxu0 0
      %699 = vmatprep.subr.bf16.mxu0 0
      %700 = vmatpush1.bf16.msra.mxu0 0
      %701 = vmatprep.subr.bf16.mxu0 0
      %702 = vmatpush1.bf16.msra.mxu0 0
      %703 = vmatprep.subr.bf16.mxu0 0
      %704 = vmatpush1.bf16.msra.mxu0 0
      %705 = vmatprep.subr.bf16.mxu0 0
      %706 = vmatpush1.bf16.msra.mxu0 0
      %707 = vmatprep.mubr.bf16.mxu0 0
      %708 = vmatmul.mubr.bf16.gmra.mrb[0].mxu0 %v670
      %v709 = vpop.f32.mrb[0].mxu0
      %v710 = vadd.f32 0.0, %v709
      %v711 = vpop.f32.mrb[0].mxu0
      %v712 = vpop.f32.mrb[0].mxu0
      %v713 = vpop.f32.mrb[0].mxu0
      %714 = vdwg.mxu0
      %v715 = vadd.f32 %v666, %v710
      %s716 = scalar_lea.vmem %s3, 28
      %v717 = vld [vmem:[%s716] sm:$0xf]
      %v720 = vunpack.c.l.b16 %v346
      %v721 = vunpack.c.l.b16 %v347
      %v722 = vpack.c.b16 %v721, %v720
      %v724 = vshrl.u32 %v722, 16
      %v726 = vshll.u32 %v722, 16
      %v728 = vrot.slane %v726, 1
      %v729 = vor.u32 %v724, %v728
      %v731 = vsel %vm363, %v729, 0
      %v734 = vsel %vm367, %v717, 0
      %736 = vmatprep.subr.bf16.mxu0 0
      %737 = vmatpush1.bf16.msra.mxu0 %v734
      %738 = vmatprep.subr.bf16.mxu0 0
      %739 = vmatpush1.bf16.msra.mxu0 0
      %740 = vmatprep.subr.bf16.mxu0 0
      %741 = vmatpush1.bf16.msra.mxu0 0
      %742 = vmatprep.subr.bf16.mxu0 0
      %743 = vmatpush1.bf16.msra.mxu0 0
      %744 = vmatprep.subr.bf16.mxu0 0
      %745 = vmatpush1.bf16.msra.mxu0 0
      %746 = vmatprep.subr.bf16.mxu0 0
      %747 = vmatpush1.bf16.msra.mxu0 0
      %748 = vmatprep.subr.bf16.mxu0 0
      %749 = vmatpush1.bf16.msra.mxu0 0
      %750 = vmatprep.subr.bf16.mxu0 0
      %751 = vmatpush1.bf16.msra.mxu0 0
      %752 = vmatprep.subr.bf16.mxu0 0
      %753 = vmatpush1.bf16.msra.mxu0 0
      %754 = vmatprep.subr.bf16.mxu0 0
      %755 = vmatpush1.bf16.msra.mxu0 0
      %756 = vmatprep.subr.bf16.mxu0 0
      %757 = vmatpush1.bf16.msra.mxu0 0
      %758 = vmatprep.subr.bf16.mxu0 0
      %759 = vmatpush1.bf16.msra.mxu0 0
      %760 = vmatprep.subr.bf16.mxu0 0
      %761 = vmatpush1.bf16.msra.mxu0 0
      %762 = vmatprep.subr.bf16.mxu0 0
      %763 = vmatpush1.bf16.msra.mxu0 0
      %764 = vmatprep.subr.bf16.mxu0 0
      %765 = vmatpush1.bf16.msra.mxu0 0
      %766 = vmatprep.subr.bf16.mxu0 0
      %767 = vmatpush1.bf16.msra.mxu0 0
      %768 = vmatprep.mubr.bf16.mxu0 0
      %769 = vmatmul.mubr.bf16.gmra.mrb[0].mxu0 %v731
      %v770 = vpop.f32.mrb[0].mxu0
      %v771 = vadd.f32 0.0, %v770
      %v772 = vpop.f32.mrb[0].mxu0
      %v773 = vpop.f32.mrb[0].mxu0
      %v774 = vpop.f32.mrb[0].mxu0
      %775 = vdwg.mxu0
      %v776 = vadd.f32 %v715, %v771
      %s777 = scalar_lea.vmem %s3, 32
      %v778 = vld [vmem:[%s777] sm:$0xf]
      %v779 = vrot.slane %v722, 1
      %v781 = vsel %vm363, %v779, 0
      %v784 = vsel %vm367, %v778, 0
      %786 = vmatprep.subr.bf16.mxu0 0
      %787 = vmatpush1.bf16.msra.mxu0 %v784
      %788 = vmatprep.subr.bf16.mxu0 0
      %789 = vmatpush1.bf16.msra.mxu0 0
      %790 = vmatprep.subr.bf16.mxu0 0
      %791 = vmatpush1.bf16.msra.mxu0 0
      %792 = vmatprep.subr.bf16.mxu0 0
      %793 = vmatpush1.bf16.msra.mxu0 0
      %794 = vmatprep.subr.bf16.mxu0 0
      %795 = vmatpush1.bf16.msra.mxu0 0
      %796 = vmatprep.subr.bf16.mxu0 0
      %797 = vmatpush1.bf16.msra.mxu0 0
      %798 = vmatprep.subr.bf16.mxu0 0
      %799 = vmatpush1.bf16.msra.mxu0 0
      %800 = vmatprep.subr.bf16.mxu0 0
      %801 = vmatpush1.bf16.msra.mxu0 0
      %802 = vmatprep.subr.bf16.mxu0 0
      %803 = vmatpush1.bf16.msra.mxu0 0
      %804 = vmatprep.subr.bf16.mxu0 0
      %805 = vmatpush1.bf16.msra.mxu0 0
      %806 = vmatprep.subr.bf16.mxu0 0
      %807 = vmatpush1.bf16.msra.mxu0 0
      %808 = vmatprep.subr.bf16.mxu0 0
      %809 = vmatpush1.bf16.msra.mxu0 0
      %810 = vmatprep.subr.bf16.mxu0 0
      %811 = vmatpush1.bf16.msra.mxu0 0
      %812 = vmatprep.subr.bf16.mxu0 0
      %813 = vmatpush1.bf16.msra.mxu0 0
      %814 = vmatprep.subr.bf16.mxu0 0
      %815 = vmatpush1.bf16.msra.mxu0 0
      %816 = vmatprep.subr.bf16.mxu0 0
      %817 = vmatpush1.bf16.msra.mxu0 0
      %818 = vmatprep.mubr.bf16.mxu0 0
      %819 = vmatmul.mubr.bf16.gmra.mrb[0].mxu0 %v781
      %v820 = vpop.f32.mrb[0].mxu0
      %v821 = vadd.f32 0.0, %v820
      %v822 = vpop.f32.mrb[0].mxu0
      %v823 = vpop.f32.mrb[0].mxu0
      %v824 = vpop.f32.mrb[0].mxu0
      %825 = vdwg.mxu0
      %v826 = vadd.f32 %v776, %v821
      %v827 = vld [vmem:[%s4] sm:$0x1]
      %v829 = vlaneseq
      %v830 = vshrl.u32 %v829, 7
      %v831 = vsub.s32 0, %v830
      %v832 = vrot.slane %v827, %v831
      %v834 = vadd.f32 %v826, %v832
      %v835 = vmax.f32 %v834, 0.0
      %vm836 = vcmask 523264
      %837 = vst.msk [vmem:[%s340] sm:$0xff] %vm836, %v835
      %p838 = scmp.lt.s32.totalorder %s20, 1
      %s839 = scalar_select %p838, %s20, 1
      %p840 = scmp.lt.s32.totalorder %s21, 7
      %s841 = scalar_select %p840, %s21, 7
      %s842 = smul.addr %s839, 8
      %s843 = sadd.s32 %s841, %s842
      %s844 = smul.addr %s843, 8
      %s845 = scalar_lea.vmem %s5, %s844
      // Predicated region
      $region41: #{shadow_removal_forward.13} parent=39 // pred_check
        %p846 = pneg %p178
      $region42: #{shadow_removal_forward.13} parent=39 // pred_check_branch
        %848 = sbr.rel (%p846) target = $region44
      $region43: #{shadow_removal_forward.13} parent=39 // pred_region
        _
      $region44: #{shadow_removal_forward.13} parent=39 // pred_fallthru
        _
    $region40: #{shadow_removal_forward.13} parent=5 // pred_fallthru
      _
    %p849 = scmp.le.s32.totalorder 2, %s11
    // Predicated region
    $region45: #{shadow_removal_forward.13} parent=5 // pred_check
      %p850 = pneg %p849
    $region46: #{shadow_removal_forward.13} parent=5 // pred_check_branch
      %852 = sbr.rel (%p850) target = $region48
    $region47: #{shadow_removal_forward.13} parent=5 // pred_region
      %s853 = ssub.s32 %s11, 2
      // Predicated region
      $region49: #{shadow_removal_forward.13} parent=47 // pred_check
        %p854 = pneg %p184
      $region50: #{shadow_removal_forward.13} parent=47 // pred_check_branch
        %856 = sbr.rel (%p854) target = $region52
      $region51: #{shadow_removal_forward.13} parent=47 // pred_region
        %p857 = scmp.lt.s32.totalorder %s22, 1
        %s858 = scalar_select %p857, %s22, 1
        %p859 = scmp.lt.s32.totalorder %s23, 7
        %s860 = scalar_select %p859, %s23, 7
        %s861 = smul.addr %s858, 8
        %s862 = sadd.s32 %s860, %s861
        %s863 = smul.addr %s862, 8
        %s864 = scalar_lea.vmem %s5, %s863
      $region52: #{shadow_removal_forward.13} parent=47 // pred_fallthru
        _
    $region48: #{shadow_removal_forward.13} parent=5 // pred_fallthru
      _
  $region6: #{shadow_removal_forward.13} parent=0 // loop_footer
    %s15 = sadd.s32 1, %s11
  $region7: #{shadow_removal_forward.13} parent=0 // loop_footer_branch
    %10 = sbr.rel target = $region3
  $region8: #{shadow_removal_forward.13} parent=0 // loop_exit
    _

// kernel: shadow_removal_forward.17
$region0: #{shadow_removal_forward.17}
  #allocation0 [shape = 'u32[]', space=smem, size = 0x4, offset = 0x4, fixed_abs, tag = 'smem constant byte address 0x4 - core index']
  #allocation1 [shape = 'u32[144,128]{1,0:T(1,128)}', space=vmem, size = 0x12000, scoped, tag = 'internal scratch']
  %s0 = inlined_call_operand.vmem [shape: bf16[2,16,8], index: 0, kind: input, shape index: {}]
  %s1 = inlined_call_operand.vmem [shape: bf16[8,64], index: 1, kind: input, shape index: {}]
  %s2 = inlined_call_operand.vmem [shape: f32[1,64], index: 2, kind: input, shape index: {}]
  %s3 = inlined_call_operand.vmem [shape: bf16[64,64], index: 3, kind: input, shape index: {}]
  %s4 = inlined_call_operand.vmem [shape: f32[1,64], index: 4, kind: input, shape index: {}]
  %s5 = inlined_call_operand.vmem [shape: f32[2,16,64], index: 5, kind: output, shape index: {}]
  %s6 = sld [smem:[#allocation0]]
  $region53: #{shadow_removal_forward.17} parent=0
    _
  %s8 = ssub.s32 1, %s6
  %s9 = scalar_select 0, %s8, %s6
  loop: start=0, step=1, limit=4
  $region2: #{shadow_removal_forward.17} parent=0 // loop_pre_header
    _
  $region3: #{shadow_removal_forward.17} parent=0 // loop_header
    %s11 = sphi 0, %s15
    %p12 = scmp.ge.s32.totalorder %s11, 4
    %s21 = sphi 0, %s23
    %s24 = sphi 0, %s21
    %s25 = sphi 0, %s24
    %s41 = sphi 0, %s25
    %s45 = sphi 0, %s45
    %s47 = sphi 0, %s45
    %s48 = sphi 0, %s47
    %s62 = sphi 0, %s48
    %s66 = sphi 0, %s66
    %s68 = sphi 0, %s66
    %s69 = sphi 0, %s68
    %s83 = sphi 0, %s69
    %s87 = sphi 0, %s87
    %s89 = sphi 0, %s87
    %s90 = sphi 0, %s89
    %s104 = sphi 0, %s90
    %s108 = sphi 0, %s108
    %s110 = sphi 0, %s108
    %s111 = sphi 0, %s110
    %s125 = sphi 0, %s111
    %s131 = sphi 0, %s133
    %s134 = sphi 0, %s131
    %s135 = sphi 0, %s134
    %s151 = sphi 0, %s135
  $region4: #{shadow_removal_forward.17} parent=0 // loop_header_branch
    %14 = sbr.rel (%p12) target = $region8
  $region5: #{shadow_removal_forward.17} parent=0 // loop_body
    %s16 = ssub.s32 %s11, 1
    %s17 = ssub.s32 %s11, 2
    %s18 = sadd.s32 %s11, 1
    %s19 = ssub.s32 %s11, %s18
    %p20 = scmp.eq.s32.totalorder %s19, 0
    %s22 = sadd.s32 %s21, 1
    %s23 = scalar_select %p20, %s21, %s22
    %p26 = pneg %p20
    %p27 = scmp.eq.s32.totalorder %s11, 1
    %p28 = por %p26, %p27
    %p29 = scmp.ne.s32.totalorder %s21, %s24
    %p30 = scmp.eq.s32.totalorder %s11, 0
    %p31 = por %p29, %p30
    %p32 = scmp.ne.s32.totalorder %s21, %s24
    %p33 = scmp.eq.s32.totalorder %s16, 1
    %p34 = por %p32, %p33
    %p35 = scmp.ne.s32.totalorder %s24, %s25
    %p36 = scmp.eq.s32.totalorder %s16, 0
    %p37 = por %p35, %p36
    %p38 = scmp.ne.s32.totalorder %s24, %s25
    %p39 = scmp.eq.s32.totalorder %s17, 1
    %p40 = por %p38, %p39
    %p42 = scmp.ne.s32.totalorder %s25, %s41
    %p43 = scmp.eq.s32.totalorder %s17, 0
    %p44 = por %p42, %p43
    %s46 = sadd.s32 %s45, 1
    %p49 = scmp.eq.s32.totalorder %s11, 1
    %p50 = scmp.ne.s32.totalorder %s45, %s47
    %p51 = scmp.eq.s32.totalorder %s11, 0
    %p52 = por %p50, %p51
    %p53 = scmp.ne.s32.totalorder %s45, %s47
    %p54 = scmp.eq.s32.totalorder %s16, 1
    %p55 = por %p53, %p54
    %p56 = scmp.ne.s32.totalorder %s47, %s48
    %p57 = scmp.eq.s32.totalorder %s16, 0
    %p58 = por %p56, %p57
    %p59 = scmp.ne.s32.totalorder %s47, %s48
    %p60 = scmp.eq.s32.totalorder %s17, 1
    %p61 = por %p59, %p60
    %p63 = scmp.ne.s32.totalorder %s48, %s62
    %p64 = scmp.eq.s32.totalorder %s17, 0
    %p65 = por %p63, %p64
    %s67 = sadd.s32 %s66, 1
    %p70 = scmp.eq.s32.totalorder %s11, 1
    %p71 = scmp.ne.s32.totalorder %s66, %s68
    %p72 = scmp.eq.s32.totalorder %s11, 0
    %p73 = por %p71, %p72
    %p74 = scmp.ne.s32.totalorder %s66, %s68
    %p75 = scmp.eq.s32.totalorder %s16, 1
    %p76 = por %p74, %p75
    %p77 = scmp.ne.s32.totalorder %s68, %s69
    %p78 = scmp.eq.s32.totalorder %s16, 0
    %p79 = por %p77, %p78
    %p80 = scmp.ne.s32.totalorder %s68, %s69
    %p81 = scmp.eq.s32.totalorder %s17, 1
    %p82 = por %p80, %p81
    %p84 = scmp.ne.s32.totalorder %s69, %s83
    %p85 = scmp.eq.s32.totalorder %s17, 0
    %p86 = por %p84, %p85
    %s88 = sadd.s32 %s87, 1
    %p91 = scmp.eq.s32.totalorder %s11, 1
    %p92 = scmp.ne.s32.totalorder %s87, %s89
    %p93 = scmp.eq.s32.totalorder %s11, 0
    %p94 = por %p92, %p93
    %p95 = scmp.ne.s32.totalorder %s87, %s89
    %p96 = scmp.eq.s32.totalorder %s16, 1
    %p97 = por %p95, %p96
    %p98 = scmp.ne.s32.totalorder %s89, %s90
    %p99 = scmp.eq.s32.totalorder %s16, 0
    %p100 = por %p98, %p99
    %p101 = scmp.ne.s32.totalorder %s89, %s90
    %p102 = scmp.eq.s32.totalorder %s17, 1
    %p103 = por %p101, %p102
    %p105 = scmp.ne.s32.totalorder %s90, %s104
    %p106 = scmp.eq.s32.totalorder %s17, 0
    %p107 = por %p105, %p106
    %s109 = sadd.s32 %s108, 1
    %p112 = scmp.eq.s32.totalorder %s11, 1
    %p113 = scmp.ne.s32.totalorder %s108, %s110
    %p114 = scmp.eq.s32.totalorder %s11, 0
    %p115 = por %p113, %p114
    %p116 = scmp.ne.s32.totalorder %s108, %s110
    %p117 = scmp.eq.s32.totalorder %s16, 1
    %p118 = por %p116, %p117
    %p119 = scmp.ne.s32.totalorder %s110, %s111
    %p120 = scmp.eq.s32.totalorder %s16, 0
    %p121 = por %p119, %p120
    %p122 = scmp.ne.s32.totalorder %s110, %s111
    %p123 = scmp.eq.s32.totalorder %s17, 1
    %p124 = por %p122, %p123
    %p126 = scmp.ne.s32.totalorder %s111, %s125
    %p127 = scmp.eq.s32.totalorder %s17, 0
    %p128 = por %p126, %p127
    %s129 = ssub.s32 %s11, %s18
    %p130 = scmp.eq.s32.totalorder %s129, 0
    %s132 = sadd.s32 %s131, 1
    %s133 = scalar_select %p130, %s131, %s132
    %p136 = pneg %p130
    %p137 = scmp.eq.s32.totalorder %s11, 1
    %p138 = por %p136, %p137
    %p139 = scmp.ne.s32.totalorder %s131, %s134
    %p140 = scmp.eq.s32.totalorder %s11, 0
    %p141 = por %p139, %p140
    %p142 = scmp.ne.s32.totalorder %s131, %s134
    %p143 = scmp.eq.s32.totalorder %s16, 1
    %p144 = por %p142, %p143
    %p145 = scmp.ne.s32.totalorder %s134, %s135
    %p146 = scmp.eq.s32.totalorder %s16, 0
    %p147 = por %p145, %p146
    %p148 = scmp.ne.s32.totalorder %s134, %s135
    %p149 = scmp.eq.s32.totalorder %s17, 1
    %p150 = por %p148, %p149
    %p152 = scmp.ne.s32.totalorder %s135, %s151
    %p153 = scmp.eq.s32.totalorder %s17, 0
    %p154 = por %p152, %p153
    %p155 = scmp.le.s32.totalorder 1, %s11
    %p156 = scmp.lt.s32.totalorder %s11, 3
    %p157 = pnand %p155, %p156
    %p158 = pneg %p157
    // Predicated region
    $region9: #{shadow_removal_forward.17} parent=5 // pred_check
      _
    $region10: #{shadow_removal_forward.17} parent=5 // pred_check_branch
      %160 = sbr.rel (%p157) target = $region12
    $region11: #{shadow_removal_forward.17} parent=5 // pred_region
      %s161 = ssub.s32 %s11, 1
      // Predicated region
      $region13: #{shadow_removal_forward.17} parent=11 // pred_check
        %p162 = pneg %p58
      $region14: #{shadow_removal_forward.17} parent=11 // pred_check_branch
        %164 = sbr.rel (%p162) target = $region16
      $region15: #{shadow_removal_forward.17} parent=11 // pred_region
        _
      $region16: #{shadow_removal_forward.17} parent=11 // pred_fallthru
        _
      // Predicated region
      $region17: #{shadow_removal_forward.17} parent=11 // pred_check
        %p165 = pneg %p79
      $region18: #{shadow_removal_forward.17} parent=11 // pred_check_branch
        %167 = sbr.rel (%p165) target = $region20
      $region19: #{shadow_removal_forward.17} parent=11 // pred_region
        _
      $region20: #{shadow_removal_forward.17} parent=11 // pred_fallthru
        _
      // Predicated region
      $region21: #{shadow_removal_forward.17} parent=11 // pred_check
        %p168 = pneg %p100
      $region22: #{shadow_removal_forward.17} parent=11 // pred_check_branch
        %170 = sbr.rel (%p168) target = $region24
      $region23: #{shadow_removal_forward.17} parent=11 // pred_region
        _
      $region24: #{shadow_removal_forward.17} parent=11 // pred_fallthru
        _
      // Predicated region
      $region25: #{shadow_removal_forward.17} parent=11 // pred_check
        %p171 = pneg %p121
      $region26: #{shadow_removal_forward.17} parent=11 // pred_check_branch
        %173 = sbr.rel (%p171) target = $region28
      $region27: #{shadow_removal_forward.17} parent=11 // pred_region
        _
      $region28: #{shadow_removal_forward.17} parent=11 // pred_fallthru
        _
    $region12: #{shadow_removal_forward.17} parent=5 // pred_fallthru
      _
    %p174 = scmp.lt.s32.totalorder %s11, 2
    // Predicated region
    $region29: #{shadow_removal_forward.17} parent=5 // pred_check
      %p175 = pneg %p174
    $region30: #{shadow_removal_forward.17} parent=5 // pred_check_branch
      %177 = sbr.rel (%p175) target = $region32
    $region31: #{shadow_removal_forward.17} parent=5 // pred_region
      // Predicated region
      $region33: #{shadow_removal_forward.17} parent=31 // pred_check
        %p178 = pneg %p31
      $region34: #{shadow_removal_forward.17} parent=31 // pred_check_branch
        %180 = sbr.rel (%p178) target = $region36
      $region35: #{shadow_removal_forward.17} parent=31 // pred_region
        %p181 = scmp.lt.s32.totalorder %s11, 1
        %s182 = scalar_select %p181, %s11, 1
        %s183 = smul.addr %s182, 2
        %s184 = smul.addr %s183, 4
        %s185 = scalar_lea.vmem %s0, %s184
      $region36: #{shadow_removal_forward.17} parent=31 // pred_fallthru
        _
    $region32: #{shadow_removal_forward.17} parent=5 // pred_fallthru
      _
    %p186 = scmp.le.s32.totalorder 1, %s11
    %p187 = scmp.lt.s32.totalorder %s11, 3
    %p188 = pnand %p186, %p187
    %p189 = pneg %p188
    // Predicated region
    $region37: #{shadow_removal_forward.17} parent=5 // pred_check
      _
    $region38: #{shadow_removal_forward.17} parent=5 // pred_check_branch
      %191 = sbr.rel (%p188) target = $region40
    $region39: #{shadow_removal_forward.17} parent=5 // pred_region
      %s192 = ssub.s32 %s11, 1
      %p193 = scmp.lt.s32.totalorder %s16, 1
      %s194 = scalar_select %p193, %s16, 1
      %s195 = smul.addr %s194, 2
      %s196 = smul.addr %s195, 4
      %s197 = scalar_lea.vmem %s0, %s196
      %p198 = pneg %p37
      %p199 = pneg %p34
      %p200 = pneg %p58
      %p201 = pneg %p55
      %p202 = pneg %p79
      %p203 = pneg %p76
      %p204 = pneg %p100
      %p205 = pneg %p97
      %p206 = pneg %p121
      %p207 = pneg %p118
      %p208 = pneg %p147
      %p209 = pneg %p144
      %p210 = scmp.lt.s32.totalorder %s16, 1
      %s211 = scalar_select %p210, %s16, 1
      %s212 = smul.addr %s211, 2
      %s213 = smul.addr %s212, 8
      %s214 = scalar_lea.vmem %s5, %s213
      %p215 = scmp.lt.s32.totalorder %s16, 1
      %s216 = scalar_select %p215, %s16, 1
      %s217 = smul.addr %s216, 2
      %s218 = smul.addr %s217, 4
      %s219 = scalar_lea.vmem %s0, %s218
      %p220 = scmp.lt.s32.totalorder %s16, 1
      %s221 = scalar_select %p220, %s16, 1
      %s222 = smul.addr %s221, 2
      %s223 = smul.addr %s222, 8
      %s224 = scalar_lea.vmem %s5, %s223
      %v226 = vld [vmem:[%s219] sm:$0xf]
      %v227 = vld [vmem:[%s219 + $0x4] sm:$0xf]
      %v228 = vld [vmem:[%s1] sm:$0xf]
      %v229 = vld [vmem:[%s2] sm:$0x1]
      %v231 = vlaneseq
      %v232 = vshrl.u32 %v231, 7
      %v233 = vsub.s32 0, %v232
      %v234 = vrot.slane %v229, %v233
      %v238 = vunpack.c.l.b16 %v226
      %v239 = vunpack.c.l.b16 %v227
      %v240 = vpack.c.b16 %v239, %v238
      %vm241 = vcmask 64512
      %v243 = vsel %vm241, %v240, 0
      %vm245 = vcmask 1043456
      %v247 = vsel %vm245, %v228, 0
      %249 = vmatprep.subr.bf16.mxu0 0
      %250 = vmatpush1.bf16.msra.mxu0 %v247
      %251 = vmatprep.subr.bf16.mxu0 0
      %252 = vmatpush1.bf16.msra.mxu0 0
      %253 = vmatprep.subr.bf16.mxu0 0
      %254 = vmatpush1.bf16.msra.mxu0 0
      %255 = vmatprep.subr.bf16.mxu0 0
      %256 = vmatpush1.bf16.msra.mxu0 0
      %257 = vmatprep.subr.bf16.mxu0 0
      %258 = vmatpush1.bf16.msra.mxu0 0
      %259 = vmatprep.subr.bf16.mxu0 0
      %260 = vmatpush1.bf16.msra.mxu0 0
      %261 = vmatprep.subr.bf16.mxu0 0
      %262 = vmatpush1.bf16.msra.mxu0 0
      %263 = vmatprep.subr.bf16.mxu0 0
      %264 = vmatpush1.bf16.msra.mxu0 0
      %265 = vmatprep.subr.bf16.mxu0 0
      %266 = vmatpush1.bf16.msra.mxu0 0
      %267 = vmatprep.subr.bf16.mxu0 0
      %268 = vmatpush1.bf16.msra.mxu0 0
      %269 = vmatprep.subr.bf16.mxu0 0
      %270 = vmatpush1.bf16.msra.mxu0 0
      %271 = vmatprep.subr.bf16.mxu0 0
      %272 = vmatpush1.bf16.msra.mxu0 0
      %273 = vmatprep.subr.bf16.mxu0 0
      %274 = vmatpush1.bf16.msra.mxu0 0
      %275 = vmatprep.subr.bf16.mxu0 0
      %276 = vmatpush1.bf16.msra.mxu0 0
      %277 = vmatprep.subr.bf16.mxu0 0
      %278 = vmatpush1.bf16.msra.mxu0 0
      %279 = vmatprep.subr.bf16.mxu0 0
      %280 = vmatpush1.bf16.msra.mxu0 0
      %281 = vmatprep.mubr.bf16.mxu0 0
      %282 = vmatmul.mubr.bf16.gmra.mrb[0].mxu0 %v243
      %v283 = vpop.f32.mrb[0].mxu0
      %v284 = vadd.f32 %v234, %v283
      %v285 = vpop.f32.mrb[0].mxu0
      %v286 = vpop.f32.mrb[0].mxu0
      %v287 = vadd.f32 %v234, %v286
      %v288 = vpop.f32.mrb[0].mxu0
      %289 = vdwg.mxu0
      %v290 = vpack.c.bf16 %v287, %v284
      %vm291 = vcmask 523264
      %v293 = vsel %vm291, %v290, 0
      %295 = vmatprep.subr.bf16.mxu0 0
      %296 = vmatpush1.bf16.xpose.msra.mxu0 %v293
      %297 = vmatprep.subr.bf16.mxu0 0
      %298 = vmatpush1.bf16.xpose.msra.mxu0 0
      %299 = vmatprep.subr.bf16.mxu0 0
      %300 = vmatpush1.bf16.xpose.msra.mxu0 0
      %301 = vmatprep.subr.bf16.mxu0 0
      %302 = vmatpush1.bf16.xpose.msra.mxu0 0
      %303 = vmatprep.subr.bf16.mxu0 0
      %304 = vmatpush1.bf16.xpose.msra.mxu0 0
      %305 = vmatprep.subr.bf16.mxu0 0
      %306 = vmatpush1.bf16.xpose.msra.mxu0 0
      %307 = vmatprep.subr.bf16.mxu0 0
      %308 = vmatpush1.bf16.xpose.msra.mxu0 0
      %309 = vmatprep.subr.bf16.mxu0 0
      %310 = vmatpush1.bf16.xpose.msra.mxu0 0
      %311 = vmatprep.subr.bf16.mxu0 0
      %312 = vmatpush1.bf16.xpose.msra.mxu0 0
      %313 = vmatprep.subr.bf16.mxu0 0
      %314 = vmatpush1.bf16.xpose.msra.mxu0 0
      %315 = vmatprep.subr.bf16.mxu0 0
      %316 = vmatpush1.bf16.xpose.msra.mxu0 0
      %317 = vmatprep.subr.bf16.mxu0 0
      %318 = vmatpush1.bf16.xpose.msra.mxu0 0
      %319 = vmatprep.subr.bf16.mxu0 0
      %320 = vmatpush1.bf16.xpose.msra.mxu0 0
      %321 = vmatprep.subr.bf16.mxu0 0
      %322 = vmatpush1.bf16.xpose.msra.mxu0 0
      %323 = vmatprep.subr.bf16.mxu0 0
      %324 = vmatpush1.bf16.xpose.msra.mxu0 0
      %325 = vmatprep.subr.bf16.mxu0 0
      %326 = vmatpush1.bf16.xpose.msra.mxu0 0
      %327 = vmatprep.mubr.bf16.mxu0 0
      %328 = vmatmul.mubr.bf16.gmra.mrb[0].mxu0 %v293
      %v329 = vpop.f32.mrb[0].mxu0
      %v330 = vadd.f32 0.0, %v329
      %v331 = vpop.f32.mrb[0].mxu0
      %v332 = vpop.f32.mrb[0].mxu0
      %v333 = vadd.f32 0.0, %v332
      %v334 = vpop.f32.mrb[0].mxu0
      %335 = vdwg.mxu0
      %v336 = vmul.f32 %v330, 0.125
      %v337 = vmul.f32 %v333, 0.125
      %vm338 = vcmask 130048
      %v339 = vsel %vm338, %v336, -inf
      %340 = vmax.xlane.f32.xlu0 %v339
      %v341 = vpop.xlane.xlu0 %340
      %v342 = vsel %vm338, %v337, -inf
      %343 = vmax.xlane.f32.xlu0 %v342
      %v344 = vpop.xlane.xlu0 %343
      %v345 = vsub.f32 %v336, %v341
      %v346 = vsub.f32 %v337, %v344
      %v347 = vmul.f32 %v345, 1.442695
      %v348 = vpow.pop %v347
      %v349 = vmul.f32 %v346, 1.442695
      %v350 = vpow.pop %v349
      %v351 = vsel %vm338, %v348, 0.0
      %352 = vadd.xlane.f32.xlu0 %v351
      %v353 = vpop.xlane.xlu0 %352
      %v354 = vsel %vm338, %v350, 0.0
      %355 = vadd.xlane.f32.xlu0 %v354
      %v356 = vpop.xlane.xlu0 %355
      %v357 = vrcp.pop %v353
      %v358 = vrcp.pop %v356
      %v359 = vmul.f32 %v348, %v357
      %v360 = vmul.f32 %v350, %v358
      %v361 = vld [vmem:[%s3] sm:$0xf]
      %v362 = vld [vmem:[%s3 + $0x4] sm:$0xf]
      %v363 = vld [vmem:[%s3 + $0x8] sm:$0xf]
      %v364 = vld [vmem:[%s3 + $0xc] sm:$0xf]
      %v365 = vld [vmem:[%s3 + $0x10] sm:$0xf]
      %v366 = vld [vmem:[%s3 + $0x14] sm:$0xf]
      %v367 = vld [vmem:[%s3 + $0x18] sm:$0xf]
      %v368 = vld [vmem:[%s3 + $0x1c] sm:$0xf]
      %v369 = vld [vmem:[%s4] sm:$0x1]
      %v371 = vlaneseq
      %v372 = vshrl.u32 %v371, 7
      %v373 = vsub.s32 0, %v372
      %v374 = vrot.slane %v369, %v373
      %v384 = vunpack.c.l.b16 %v361
      %v385 = vunpack.c.l.b16 %v362
      %v386 = vunpack.c.l.b16 %v363
      %v387 = vunpack.c.l.b16 %v364
      %v388 = vunpack.c.l.b16 %v365
      %v389 = vunpack.c.l.b16 %v366
      %v390 = vunpack.c.l.b16 %v367
      %v391 = vunpack.c.l.b16 %v368
      %v392 = vpack.c.b16 %v385, %v384
      %v393 = vpack.c.b16 %v387, %v386
      %v394 = vpack.c.b16 %v389, %v388
      %v395 = vpack.c.b16 %v391, %v390
      %400 = vmatprep.subr.bf16.mxu0 0
      %401 = vmatpush1.bf16.msra.mxu0 %v392
      %402 = vmatprep.subr.bf16.mxu0 0
      %403 = vmatpush1.bf16.msra.mxu0 %v393
      %404 = vmatprep.subr.bf16.mxu0 0
      %405 = vmatpush1.bf16.msra.mxu0 %v394
      %406 = vmatprep.subr.bf16.mxu0 0
      %407 = vmatpush1.bf16.msra.mxu0 %v395
      %408 = vmatprep.subr.bf16.mxu0 0
      %409 = vmatpush1.bf16.msra.mxu0 0
      %410 = vmatprep.subr.bf16.mxu0 0
      %411 = vmatpush1.bf16.msra.mxu0 0
      %412 = vmatprep.subr.bf16.mxu0 0
      %413 = vmatpush1.bf16.msra.mxu0 0
      %414 = vmatprep.subr.bf16.mxu0 0
      %415 = vmatpush1.bf16.msra.mxu0 0
      %416 = vmatprep.subr.bf16.mxu0 0
      %417 = vmatpush1.bf16.msra.mxu0 0
      %418 = vmatprep.subr.bf16.mxu0 0
      %419 = vmatpush1.bf16.msra.mxu0 0
      %420 = vmatprep.subr.bf16.mxu0 0
      %421 = vmatpush1.bf16.msra.mxu0 0
      %422 = vmatprep.subr.bf16.mxu0 0
      %423 = vmatpush1.bf16.msra.mxu0 0
      %424 = vmatprep.subr.bf16.mxu0 0
      %425 = vmatpush1.bf16.msra.mxu0 0
      %426 = vmatprep.subr.bf16.mxu0 0
      %427 = vmatpush1.bf16.msra.mxu0 0
      %428 = vmatprep.subr.bf16.mxu0 0
      %429 = vmatpush1.bf16.msra.mxu0 0
      %430 = vmatprep.subr.bf16.mxu0 0
      %431 = vmatpush1.bf16.msra.mxu0 0
      %432 = vmatprep.mubr.bf16.mxu0 0
      %433 = vmatmul.mubr.bf16.gmra.mrb[0].mxu0 %v293
      %v434 = vpop.f32.mrb[0].mxu0
      %v435 = vadd.f32 %v374, %v434
      %v436 = vpop.f32.mrb[0].mxu0
      %v437 = vpop.f32.mrb[0].mxu0
      %v438 = vadd.f32 %v374, %v437
      %v439 = vpop.f32.mrb[0].mxu0
      %440 = vdwg.mxu0
      %v441 = vpack.c.bf16 %v360, %v359
      %v442 = vpack.c.bf16 %v438, %v435
      %v444 = vsel %vm338, %v441, 0
      %446 = vmatprep.subr.bf16.mxu0 0
      %447 = vmatpush1.bf16.msra.mxu0 %v442
      %448 = vmatprep.subr.bf16.mxu0 0
      %449 = vmatpush1.bf16.msra.mxu0 0
      %450 = vmatprep.subr.bf16.mxu0 0
      %451 = vmatpush1.bf16.msra.mxu0 0
      %452 = vmatprep.subr.bf16.mxu0 0
      %453 = vmatpush1.bf16.msra.mxu0 0
      %454 = vmatprep.subr.bf16.mxu0 0
      %455 = vmatpush1.bf16.msra.mxu0 0
      %456 = vmatprep.subr.bf16.mxu0 0
      %457 = vmatpush1.bf16.msra.mxu0 0
      %458 = vmatprep.subr.bf16.mxu0 0
      %459 = vmatpush1.bf16.msra.mxu0 0
      %460 = vmatprep.subr.bf16.mxu0 0
      %461 = vmatpush1.bf16.msra.mxu0 0
      %462 = vmatprep.subr.bf16.mxu0 0
      %463 = vmatpush1.bf16.msra.mxu0 0
      %464 = vmatprep.subr.bf16.mxu0 0
      %465 = vmatpush1.bf16.msra.mxu0 0
      %466 = vmatprep.subr.bf16.mxu0 0
      %467 = vmatpush1.bf16.msra.mxu0 0
      %468 = vmatprep.subr.bf16.mxu0 0
      %469 = vmatpush1.bf16.msra.mxu0 0
      %470 = vmatprep.subr.bf16.mxu0 0
      %471 = vmatpush1.bf16.msra.mxu0 0
      %472 = vmatprep.subr.bf16.mxu0 0
      %473 = vmatpush1.bf16.msra.mxu0 0
      %474 = vmatprep.subr.bf16.mxu0 0
      %475 = vmatpush1.bf16.msra.mxu0 0
      %476 = vmatprep.subr.bf16.mxu0 0
      %477 = vmatpush1.bf16.msra.mxu0 0
      %478 = vmatprep.mubr.bf16.mxu0 0
      %479 = vmatmul.mubr.bf16.gmra.mrb[0].mxu0 %v444
      %v480 = vpop.f32.mrb[0].mxu0
      %v481 = vadd.f32 0.0, %v480
      %v482 = vpop.f32.mrb[0].mxu0
      %v483 = vpop.f32.mrb[0].mxu0
      %v484 = vadd.f32 0.0, %v483
      %v485 = vpop.f32.mrb[0].mxu0
      %486 = vdwg.mxu0
      %v487 = vmax.f32 %v481, 0.0
      %v488 = vmax.f32 %v484, 0.0
      %489 = vst.msk [vmem:[%s224] sm:$0xff] %vm291, %v487
      %490 = vst.msk [vmem:[%s224 + $0x8] sm:$0xff] %vm291, %v488
      %p491 = scmp.lt.s32.totalorder %s16, 1
      %s492 = scalar_select %p491, %s16, 1
      %s493 = smul.addr %s492, 2
      %s494 = smul.addr %s493, 8
      %s495 = scalar_lea.vmem %s5, %s494
      // Predicated region
      $region41: #{shadow_removal_forward.17} parent=39 // pred_check
        %p496 = pneg %p144
      $region42: #{shadow_removal_forward.17} parent=39 // pred_check_branch
        %498 = sbr.rel (%p496) target = $region44
      $region43: #{shadow_removal_forward.17} parent=39 // pred_region
        _
      $region44: #{shadow_removal_forward.17} parent=39 // pred_fallthru
        _
    $region40: #{shadow_removal_forward.17} parent=5 // pred_fallthru
      _
    %p499 = scmp.le.s32.totalorder 2, %s11
    // Predicated region
    $region45: #{shadow_removal_forward.17} parent=5 // pred_check
      %p500 = pneg %p499
    $region46: #{shadow_removal_forward.17} parent=5 // pred_check_branch
      %502 = sbr.rel (%p500) target = $region48
    $region47: #{shadow_removal_forward.17} parent=5 // pred_region
      %s503 = ssub.s32 %s11, 2
      // Predicated region
      $region49: #{shadow_removal_forward.17} parent=47 // pred_check
        %p504 = pneg %p150
      $region50: #{shadow_removal_forward.17} parent=47 // pred_check_branch
        %506 = sbr.rel (%p504) target = $region52
      $region51: #{shadow_removal_forward.17} parent=47 // pred_region
        %p507 = scmp.lt.s32.totalorder %s17, 1
        %s508 = scalar_select %p507, %s17, 1
        %s509 = smul.addr %s508, 2
        %s510 = smul.addr %s509, 8
        %s511 = scalar_lea.vmem %s5, %s510
      $region52: #{shadow_removal_forward.17} parent=47 // pred_fallthru
        _
    $region48: #{shadow_removal_forward.17} parent=5 // pred_fallthru
      _
  $region6: #{shadow_removal_forward.17} parent=0 // loop_footer
    %s15 = sadd.s32 1, %s11
  $region7: #{shadow_removal_forward.17} parent=0 // loop_footer_branch
    %10 = sbr.rel target = $region3
  $region8: #{shadow_removal_forward.17} parent=0 // loop_exit
    _

// kernel: shadow_removal_forward.18
$region0: #{shadow_removal_forward.18}
  #allocation0 [shape = 'u32[]', space=smem, size = 0x4, offset = 0x4, fixed_abs, tag = 'smem constant byte address 0x4 - core index']
  #allocation1 [shape = 'u32[144,128]{1,0:T(1,128)}', space=vmem, size = 0x12000, scoped, tag = 'internal scratch']
  %s0 = inlined_call_operand.vmem [shape: f32[32,64], index: 0, kind: input, shape index: {}]
  %s1 = inlined_call_operand.vmem [shape: f32[32,64], index: 1, kind: input, shape index: {}]
  %s2 = inlined_call_operand.vmem [shape: bf16[64,128], index: 2, kind: input, shape index: {}]
  %s3 = inlined_call_operand.vmem [shape: f32[1,128], index: 3, kind: input, shape index: {}]
  %s4 = inlined_call_operand.vmem [shape: f32[32,64], index: 4, kind: output, shape index: {}]
  %s5 = sld [smem:[#allocation0]]
  $region26: #{shadow_removal_forward.18} parent=0
    _
  %s7 = ssub.s32 1, %s5
  %s8 = scalar_select 0, %s7, %s5
  // Predicated region
  $region2: #{shadow_removal_forward.18} parent=0 // pred_check
    _
  $region3: #{shadow_removal_forward.18} parent=0 // pred_check_branch
    %10 = sbr.rel (0) target = $region5
  $region4: #{shadow_removal_forward.18} parent=0 // pred_region
    _
  $region5: #{shadow_removal_forward.18} parent=0 // pred_fallthru
    _
  // Predicated region
  $region6: #{shadow_removal_forward.18} parent=0 // pred_check
    _
  $region7: #{shadow_removal_forward.18} parent=0 // pred_check_branch
    %12 = sbr.rel (0) target = $region9
  $region8: #{shadow_removal_forward.18} parent=0 // pred_region
    _
  $region9: #{shadow_removal_forward.18} parent=0 // pred_fallthru
    _
  // Predicated region
  $region10: #{shadow_removal_forward.18} parent=0 // pred_check
    _
  $region11: #{shadow_removal_forward.18} parent=0 // pred_check_branch
    %14 = sbr.rel (0) target = $region13
  $region12: #{shadow_removal_forward.18} parent=0 // pred_region
    _
  $region13: #{shadow_removal_forward.18} parent=0 // pred_fallthru
    _
  // Predicated region
  $region14: #{shadow_removal_forward.18} parent=0 // pred_check
    _
  $region15: #{shadow_removal_forward.18} parent=0 // pred_check_branch
    %16 = sbr.rel (0) target = $region17
  $region16: #{shadow_removal_forward.18} parent=0 // pred_region
    _
  $region17: #{shadow_removal_forward.18} parent=0 // pred_fallthru
    _
  %v18 = vld [vmem:[%s1] sm:$0xff]
  %v19 = vld [vmem:[%s1 + $0x8] sm:$0xff]
  %v20 = vld [vmem:[%s1 + $0x10] sm:$0xff]
  %v21 = vld [vmem:[%s1 + $0x18] sm:$0xff]
  %v22 = vpack.c.bf16 %v19, %v18
  %v23 = vpack.c.bf16 %v21, %v20
  %v24 = vld [vmem:[%s2] sm:$0xf]
  %v25 = vld [vmem:[%s2 + $0x4] sm:$0xf]
  %v26 = vld [vmem:[%s2 + $0x8] sm:$0xf]
  %v27 = vld [vmem:[%s2 + $0xc] sm:$0xf]
  %v28 = vld [vmem:[%s2 + $0x10] sm:$0xf]
  %v29 = vld [vmem:[%s2 + $0x14] sm:$0xf]
  %v30 = vld [vmem:[%s2 + $0x18] sm:$0xf]
  %v31 = vld [vmem:[%s2 + $0x1c] sm:$0xf]
  %v32 = vld [vmem:[%s3] sm:$0x1]
  %v34 = vlaneseq
  %v35 = vshrl.u32 %v34, 7
  %v36 = vsub.s32 0, %v35
  %v37 = vrot.slane %v32, %v36
  %v47 = vunpack.c.l.b16 %v24
  %v48 = vunpack.c.l.b16 %v25
  %v49 = vunpack.c.l.b16 %v26
  %v50 = vunpack.c.l.b16 %v27
  %v51 = vunpack.c.l.b16 %v28
  %v52 = vunpack.c.l.b16 %v29
  %v53 = vunpack.c.l.b16 %v30
  %v54 = vunpack.c.l.b16 %v31
  %v55 = vpack.c.b16 %v48, %v47
  %v56 = vpack.c.b16 %v50, %v49
  %v57 = vpack.c.b16 %v52, %v51
  %v58 = vpack.c.b16 %v54, %v53
  %vm63 = vcmask 523264
  %v65 = vsel %vm63, %v22, 0
  %v68 = vsel %vm63, %v23, 0
  %70 = vmatprep.subr.bf16.mxu0 0
  %71 = vmatpush1.bf16.msra.mxu0 %v55
  %72 = vmatprep.subr.bf16.mxu0 0
  %73 = vmatpush1.bf16.msra.mxu0 %v56
  %74 = vmatprep.subr.bf16.mxu0 0
  %75 = vmatpush1.bf16.msra.mxu0 %v57
  %76 = vmatprep.subr.bf16.mxu0 0
  %77 = vmatpush1.bf16.msra.mxu0 %v58
  %78 = vmatprep.subr.bf16.mxu0 0
  %79 = vmatpush1.bf16.msra.mxu0 0
  %80 = vmatprep.subr.bf16.mxu0 0
  %81 = vmatpush1.bf16.msra.mxu0 0
  %82 = vmatprep.subr.bf16.mxu0 0
  %83 = vmatpush1.bf16.msra.mxu0 0
  %84 = vmatprep.subr.bf16.mxu0 0
  %85 = vmatpush1.bf16.msra.mxu0 0
  %86 = vmatprep.subr.bf16.mxu0 0
  %87 = vmatpush1.bf16.msra.mxu0 0
  %88 = vmatprep.subr.bf16.mxu0 0
  %89 = vmatpush1.bf16.msra.mxu0 0
  %90 = vmatprep.subr.bf16.mxu0 0
  %91 = vmatpush1.bf16.msra.mxu0 0
  %92 = vmatprep.subr.bf16.mxu0 0
  %93 = vmatpush1.bf16.msra.mxu0 0
  %94 = vmatprep.subr.bf16.mxu0 0
  %95 = vmatpush1.bf16.msra.mxu0 0
  %96 = vmatprep.subr.bf16.mxu0 0
  %97 = vmatpush1.bf16.msra.mxu0 0
  %98 = vmatprep.subr.bf16.mxu0 0
  %99 = vmatpush1.bf16.msra.mxu0 0
  %100 = vmatprep.subr.bf16.mxu0 0
  %101 = vmatpush1.bf16.msra.mxu0 0
  %102 = vmatprep.mubr.bf16.mxu0 0
  %103 = vmatmul.mubr.bf16.gmra.mrb[0].mxu0 %v65
  %v104 = vpop.f32.mrb[0].mxu0
  %v105 = vadd.f32 %v37, %v104
  %v106 = vpop.f32.mrb[0].mxu0
  %v107 = vpop.f32.mrb[0].mxu0
  %v108 = vadd.f32 %v37, %v107
  %v109 = vpop.f32.mrb[0].mxu0
  %110 = vmatprep.mubr.bf16.mxu0 0
  %111 = vmatmul.mubr.bf16.gmra.mrb[0].mxu0 %v68
  %v112 = vpop.f32.mrb[0].mxu0
  %v113 = vadd.f32 %v37, %v112
  %v114 = vpop.f32.mrb[0].mxu0
  %v115 = vpop.f32.mrb[0].mxu0
  %v116 = vadd.f32 %v37, %v115
  %v117 = vpop.f32.mrb[0].mxu0
  %118 = vdwg.mxu0
  %v119 = vld [vmem:[%s0] sm:$0xff]
  %v120 = vld [vmem:[%s0 + $0x8] sm:$0xff]
  %v121 = vld [vmem:[%s0 + $0x10] sm:$0xff]
  %v122 = vld [vmem:[%s0 + $0x18] sm:$0xff]
  %v123 = vadd.f32 %v105, 2.0
  %v124 = vadd.f32 %v108, 2.0
  %v125 = vadd.f32 %v113, 2.0
  %v126 = vadd.f32 %v116, 2.0
  %v127 = vmul.f32 %v119, %v123
  %v128 = vmul.f32 %v120, %v124
  %v129 = vmul.f32 %v121, %v125
  %v130 = vmul.f32 %v122, %v126
  %135 = vrot.lane.b32.xlu0 %v105, 64
  %v136 = vpop.permute.xlu0 %135
  %137 = vrot.lane.b32.xlu0 %v108, 64
  %v138 = vpop.permute.xlu0 %137
  %139 = vrot.lane.b32.xlu0 %v113, 64
  %v140 = vpop.permute.xlu0 %139
  %141 = vrot.lane.b32.xlu0 %v116, 64
  %v142 = vpop.permute.xlu0 %141
  %v147 = vadd.f32 %v127, %v136
  %v148 = vadd.f32 %v128, %v138
  %v149 = vadd.f32 %v129, %v140
  %v150 = vadd.f32 %v130, %v142
  %151 = vst.msk [vmem:[%s4] sm:$0xff] %vm63, %v147
  %152 = vst.msk [vmem:[%s4 + $0x8] sm:$0xff] %vm63, %v148
  %153 = vst.msk [vmem:[%s4 + $0x10] sm:$0xff] %vm63, %v149
  %154 = vst.msk [vmem:[%s4 + $0x18] sm:$0xff] %vm63, %v150
  // Predicated region
  $region18: #{shadow_removal_forward.18} parent=0 // pred_check
    _
  $region19: #{shadow_removal_forward.18} parent=0 // pred_check_branch
    %156 = sbr.rel (0) target = $region21
  $region20: #{shadow_removal_forward.18} parent=0 // pred_region
    _
  $region21: #{shadow_removal_forward.18} parent=0 // pred_fallthru
    _
  // Predicated region
  $region22: #{shadow_removal_forward.18} parent=0 // pred_check
    _
  $region23: #{shadow_removal_forward.18} parent=0 // pred_check_branch
    %158 = sbr.rel (0) target = $region25
  $region24: #{shadow_removal_forward.18} parent=0 // pred_region
    _
  $region25: #{shadow_removal_forward.18} parent=0 // pred_fallthru
    _

// kernel: shadow_removal_forward.16
$region0: #{shadow_removal_forward.16}
  #allocation0 [shape = 'u32[]', space=smem, size = 0x4, offset = 0x4, fixed_abs, tag = 'smem constant byte address 0x4 - core index']
  #allocation1 [shape = 'u32[144,128]{1,0:T(1,128)}', space=vmem, size = 0x12000, scoped, tag = 'internal scratch']
  %s0 = inlined_call_operand.vmem [shape: bf16[2,6,6,8], index: 0, kind: input, shape index: {}, may-alias: {0,1,2}]
  %s1 = inlined_call_operand.vmem [shape: bf16[2,6,6,8], index: 1, kind: input, shape index: {}, may-alias: {0,1,2}]
  %s2 = inlined_call_operand.vmem [shape: bf16[2,6,6,8], index: 2, kind: input, shape index: {}, may-alias: {0,1,2}]
  %s3 = inlined_call_operand.vmem [shape: bf16[9,8,64], index: 3, kind: input, shape index: {}]
  %s4 = inlined_call_operand.vmem [shape: f32[1,64], index: 4, kind: input, shape index: {}]
  %s5 = inlined_call_operand.vmem [shape: f32[2,4,4,64], index: 5, kind: output, shape index: {}]
  %s6 = sld [smem:[#allocation0]]
  $region53: #{shadow_removal_forward.16} parent=0
    _
  %s8 = ssub.s32 1, %s6
  %s9 = scalar_select 0, %s8, %s6
  loop: start=0, step=1, limit=10
  $region2: #{shadow_removal_forward.16} parent=0 // loop_pre_header
    _
  $region3: #{shadow_removal_forward.16} parent=0 // loop_header
    %s11 = sphi 0, %s15
    %p12 = scmp.ge.s32.totalorder %s11, 10
    %s18 = sphi 0, %s30
    %s19 = sphi 0, %s26
    %s20 = sphi 0, %s18
    %s21 = sphi 0, %s19
    %s22 = sphi 0, %s20
    %s23 = sphi 0, %s21
    %s35 = sphi 0, %s37
    %s38 = sphi 0, %s35
    %s39 = sphi 0, %s38
    %s55 = sphi 0, %s39
    %s65 = sphi 0, %s67
    %s68 = sphi 0, %s65
    %s69 = sphi 0, %s68
    %s85 = sphi 0, %s69
    %s95 = sphi 0, %s97
    %s98 = sphi 0, %s95
    %s99 = sphi 0, %s98
    %s115 = sphi 0, %s99
    %s119 = sphi 0, %s119
    %s121 = sphi 0, %s119
    %s122 = sphi 0, %s121
    %s136 = sphi 0, %s122
    %s140 = sphi 0, %s140
    %s142 = sphi 0, %s140
    %s143 = sphi 0, %s142
    %s157 = sphi 0, %s143
    %s165 = sphi 0, %s167
    %s168 = sphi 0, %s165
    %s169 = sphi 0, %s168
    %s185 = sphi 0, %s169
  $region4: #{shadow_removal_forward.16} parent=0 // loop_header_branch
    %14 = sbr.rel (%p12) target = $region8
  $region5: #{shadow_removal_forward.16} parent=0 // loop_body
    %s16 = ssub.s32 %s11, 1
    %s17 = ssub.s32 %s11, 2
    %s24 = sadd.s32 1, %s19
    %p25 = scmp.ge.s32.totalorder %s24, 4
    %s26 = scalar_select %p25, 0, %s24
    %s27 = sadd.s32 1, %s18
    %s28 = scalar_select %p25, %s27, %s18
    %p29 = scmp.ge.s32.totalorder %s28, 2
    %s30 = scalar_select %p29, 0, %s28
    %s31 = ssub.s32 %s18, %s30
    %s32 = ssub.s32 %s19, %s26
    %s33 = sor.u32 %s31, %s32
    %p34 = scmp.eq.s32.totalorder %s33, 0
    %s36 = sadd.s32 %s35, 1
    %s37 = scalar_select %p34, %s35, %s36
    %p40 = pneg %p34
    %p41 = scmp.eq.s32.totalorder %s11, 7
    %p42 = por %p40, %p41
    %p43 = scmp.ne.s32.totalorder %s35, %s38
    %p44 = scmp.eq.s32.totalorder %s11, 0
    %p45 = por %p43, %p44
    %p46 = scmp.ne.s32.totalorder %s35, %s38
    %p47 = scmp.eq.s32.totalorder %s16, 7
    %p48 = por %p46, %p47
    %p49 = scmp.ne.s32.totalorder %s38, %s39
    %p50 = scmp.eq.s32.totalorder %s16, 0
    %p51 = por %p49, %p50
    %p52 = scmp.ne.s32.totalorder %s38, %s39
    %p53 = scmp.eq.s32.totalorder %s17, 7
    %p54 = por %p52, %p53
    %p56 = scmp.ne.s32.totalorder %s39, %s55
    %p57 = scmp.eq.s32.totalorder %s17, 0
    %p58 = por %p56, %p57
    %s59 = sadd.s32 %s19, 1
    %s60 = sadd.s32 %s26, 1
    %s61 = ssub.s32 %s18, %s30
    %s62 = ssub.s32 %s59, %s60
    %s63 = sor.u32 %s61, %s62
    %p64 = scmp.eq.s32.totalorder %s63, 0
    %s66 = sadd.s32 %s65, 1
    %s67 = scalar_select %p64, %s65, %s66
    %p70 = pneg %p64
    %p71 = scmp.eq.s32.totalorder %s11, 7
    %p72 = por %p70, %p71
    %p73 = scmp.ne.s32.totalorder %s65, %s68
    %p74 = scmp.eq.s32.totalorder %s11, 0
    %p75 = por %p73, %p74
    %p76 = scmp.ne.s32.totalorder %s65, %s68
    %p77 = scmp.eq.s32.totalorder %s16, 7
    %p78 = por %p76, %p77
    %p79 = scmp.ne.s32.totalorder %s68, %s69
    %p80 = scmp.eq.s32.totalorder %s16, 0
    %p81 = por %p79, %p80
    %p82 = scmp.ne.s32.totalorder %s68, %s69
    %p83 = scmp.eq.s32.totalorder %s17, 7
    %p84 = por %p82, %p83
    %p86 = scmp.ne.s32.totalorder %s69, %s85
    %p87 = scmp.eq.s32.totalorder %s17, 0
    %p88 = por %p86, %p87
    %s89 = sadd.s32 %s19, 2
    %s90 = sadd.s32 %s26, 2
    %s91 = ssub.s32 %s18, %s30
    %s92 = ssub.s32 %s89, %s90
    %s93 = sor.u32 %s91, %s92
    %p94 = scmp.eq.s32.totalorder %s93, 0
    %s96 = sadd.s32 %s95, 1
    %s97 = scalar_select %p94, %s95, %s96
    %p100 = pneg %p94
    %p101 = scmp.eq.s32.totalorder %s11, 7
    %p102 = por %p100, %p101
    %p103 = scmp.ne.s32.totalorder %s95, %s98
    %p104 = scmp.eq.s32.totalorder %s11, 0
    %p105 = por %p103, %p104
    %p106 = scmp.ne.s32.totalorder %s95, %s98
    %p107 = scmp.eq.s32.totalorder %s16, 7
    %p108 = por %p106, %p107
    %p109 = scmp.ne.s32.totalorder %s98, %s99
    %p110 = scmp.eq.s32.totalorder %s16, 0
    %p111 = por %p109, %p110
    %p112 = scmp.ne.s32.totalorder %s98, %s99
    %p113 = scmp.eq.s32.totalorder %s17, 7
    %p114 = por %p112, %p113
    %p116 = scmp.ne.s32.totalorder %s99, %s115
    %p117 = scmp.eq.s32.totalorder %s17, 0
    %p118 = por %p116, %p117
    %s120 = sadd.s32 %s119, 1
    %p123 = scmp.eq.s32.totalorder %s11, 7
    %p124 = scmp.ne.s32.totalorder %s119, %s121
    %p125 = scmp.eq.s32.totalorder %s11, 0
    %p126 = por %p124, %p125
    %p127 = scmp.ne.s32.totalorder %s119, %s121
    %p128 = scmp.eq.s32.totalorder %s16, 7
    %p129 = por %p127, %p128
    %p130 = scmp.ne.s32.totalorder %s121, %s122
    %p131 = scmp.eq.s32.totalorder %s16, 0
    %p132 = por %p130, %p131
    %p133 = scmp.ne.s32.totalorder %s121, %s122
    %p134 = scmp.eq.s32.totalorder %s17, 7
    %p135 = por %p133, %p134
    %p137 = scmp.ne.s32.totalorder %s122, %s136
    %p138 = scmp.eq.s32.totalorder %s17, 0
    %p139 = por %p137, %p138
    %s141 = sadd.s32 %s140, 1
    %p144 = scmp.eq.s32.totalorder %s11, 7
    %p145 = scmp.ne.s32.totalorder %s140, %s142
    %p146 = scmp.eq.s32.totalorder %s11, 0
    %p147 = por %p145, %p146
    %p148 = scmp.ne.s32.totalorder %s140, %s142
    %p149 = scmp.eq.s32.totalorder %s16, 7
    %p150 = por %p148, %p149
    %p151 = scmp.ne.s32.totalorder %s142, %s143
    %p152 = scmp.eq.s32.totalorder %s16, 0
    %p153 = por %p151, %p152
    %p154 = scmp.ne.s32.totalorder %s142, %s143
    %p155 = scmp.eq.s32.totalorder %s17, 7
    %p156 = por %p154, %p155
    %p158 = scmp.ne.s32.totalorder %s143, %s157
    %p159 = scmp.eq.s32.totalorder %s17, 0
    %p160 = por %p158, %p159
    %s161 = ssub.s32 %s18, %s30
    %s162 = ssub.s32 %s19, %s26
    %s163 = sor.u32 %s161, %s162
    %p164 = scmp.eq.s32.totalorder %s163, 0
    %s166 = sadd.s32 %s165, 1
    %s167 = scalar_select %p164, %s165, %s166
    %p170 = pneg %p164
    %p171 = scmp.eq.s32.totalorder %s11, 7
    %p172 = por %p170, %p171
    %p173 = scmp.ne.s32.totalorder %s165, %s168
    %p174 = scmp.eq.s32.totalorder %s11, 0
    %p175 = por %p173, %p174
    %p176 = scmp.ne.s32.totalorder %s165, %s168
    %p177 = scmp.eq.s32.totalorder %s16, 7
    %p178 = por %p176, %p177
    %p179 = scmp.ne.s32.totalorder %s168, %s169
    %p180 = scmp.eq.s32.totalorder %s16, 0
    %p181 = por %p179, %p180
    %p182 = scmp.ne.s32.totalorder %s168, %s169
    %p183 = scmp.eq.s32.totalorder %s17, 7
    %p184 = por %p182, %p183
    %p186 = scmp.ne.s32.totalorder %s169, %s185
    %p187 = scmp.eq.s32.totalorder %s17, 0
    %p188 = por %p186, %p187
    %p189 = scmp.le.s32.totalorder 1, %s11
    %p190 = scmp.lt.s32.totalorder %s11, 9
    %p191 = pnand %p189, %p190
    %p192 = pneg %p191
    // Predicated region
    $region9: #{shadow_removal_forward.16} parent=5 // pred_check
      _
    $region10: #{shadow_removal_forward.16} parent=5 // pred_check_branch
      %194 = sbr.rel (%p191) target = $region12
    $region11: #{shadow_removal_forward.16} parent=5 // pred_region
      %s195 = ssub.s32 %s11, 1
      // Predicated region
      $region13: #{shadow_removal_forward.16} parent=11 // pred_check
        %p196 = pneg %p132
      $region14: #{shadow_removal_forward.16} parent=11 // pred_check_branch
        %198 = sbr.rel (%p196) target = $region16
      $region15: #{shadow_removal_forward.16} parent=11 // pred_region
        _
      $region16: #{shadow_removal_forward.16} parent=11 // pred_fallthru
        _
      // Predicated region
      $region17: #{shadow_removal_forward.16} parent=11 // pred_check
        %p199 = pneg %p153
      $region18: #{shadow_removal_forward.16} parent=11 // pred_check_branch
        %201 = sbr.rel (%p199) target = $region20
      $region19: #{shadow_removal_forward.16} parent=11 // pred_region
        _
      $region20: #{shadow_removal_forward.16} parent=11 // pred_fallthru
        _
    $region12: #{shadow_removal_forward.16} parent=5 // pred_fallthru
      _
    %p202 = scmp.lt.s32.totalorder %s11, 8
    // Predicated region
    $region21: #{shadow_removal_forward.16} parent=5 // pred_check
      %p203 = pneg %p202
    $region22: #{shadow_removal_forward.16} parent=5 // pred_check_branch
      %205 = sbr.rel (%p203) target = $region24
    $region23: #{shadow_removal_forward.16} parent=5 // pred_region
      // Predicated region
      $region25: #{shadow_removal_forward.16} parent=23 // pred_check
        %p206 = pneg %p45
      $region26: #{shadow_removal_forward.16} parent=23 // pred_check_branch
        %208 = sbr.rel (%p206) target = $region28
      $region27: #{shadow_removal_forward.16} parent=23 // pred_region
        %p209 = scmp.lt.s32.totalorder %s18, 1
        %s210 = scalar_select %p209, %s18, 1
        %p211 = scmp.lt.s32.totalorder %s19, 5
        %s212 = scalar_select %p211, %s19, 5
        %s213 = smul.addr %s210, 6
        %s214 = sadd.s32 %s212, %s213
        %s215 = smul.addr %s214, 4
        %s216 = scalar_lea.vmem %s0, %s215
      $region28: #{shadow_removal_forward.16} parent=23 // pred_fallthru
        _
      // Predicated region
      $region29: #{shadow_removal_forward.16} parent=23 // pred_check
        %p217 = pneg %p75
      $region30: #{shadow_removal_forward.16} parent=23 // pred_check_branch
        %219 = sbr.rel (%p217) target = $region32
      $region31: #{shadow_removal_forward.16} parent=23 // pred_region
        %s220 = sadd.s32 %s19, 1
        %p221 = scmp.lt.s32.totalorder %s18, 1
        %s222 = scalar_select %p221, %s18, 1
        %p223 = scmp.lt.s32.totalorder %s220, 5
        %s224 = scalar_select %p223, %s220, 5
        %s225 = smul.addr %s222, 6
        %s226 = sadd.s32 %s224, %s225
        %s227 = smul.addr %s226, 4
        %s228 = scalar_lea.vmem %s1, %s227
        %s229 = sadd.s32 %s19, 1
      $region32: #{shadow_removal_forward.16} parent=23 // pred_fallthru
        _
      // Predicated region
      $region33: #{shadow_removal_forward.16} parent=23 // pred_check
        %p230 = pneg %p105
      $region34: #{shadow_removal_forward.16} parent=23 // pred_check_branch
        %232 = sbr.rel (%p230) target = $region36
      $region35: #{shadow_removal_forward.16} parent=23 // pred_region
        %s233 = sadd.s32 %s19, 2
        %p234 = scmp.lt.s32.totalorder %s18, 1
        %s235 = scalar_select %p234, %s18, 1
        %p236 = scmp.lt.s32.totalorder %s233, 5
        %s237 = scalar_select %p236, %s233, 5
        %s238 = smul.addr %s235, 6
        %s239 = sadd.s32 %s237, %s238
        %s240 = smul.addr %s239, 4
        %s241 = scalar_lea.vmem %s2, %s240
        %s242 = sadd.s32 %s19, 2
      $region36: #{shadow_removal_forward.16} parent=23 // pred_fallthru
        _
    $region24: #{shadow_removal_forward.16} parent=5 // pred_fallthru
      _
    %p243 = scmp.le.s32.totalorder 1, %s11
    %p244 = scmp.lt.s32.totalorder %s11, 9
    %p245 = pnand %p243, %p244
    %p246 = pneg %p245
    // Predicated region
    $region37: #{shadow_removal_forward.16} parent=5 // pred_check
      _
    $region38: #{shadow_removal_forward.16} parent=5 // pred_check_branch
      %248 = sbr.rel (%p245) target = $region40
    $region39: #{shadow_removal_forward.16} parent=5 // pred_region
      %s249 = ssub.s32 %s11, 1
      %p250 = scmp.lt.s32.totalorder %s20, 1
      %s251 = scalar_select %p250, %s20, 1
      %p252 = scmp.lt.s32.totalorder %s21, 5
      %s253 = scalar_select %p252, %s21, 5
      %s254 = smul.addr %s251, 6
      %s255 = sadd.s32 %s253, %s254
      %s256 = smul.addr %s255, 4
      %s257 = scalar_lea.vmem %s0, %s256
      %p258 = pneg %p51
      %p259 = pneg %p48
      %s260 = sadd.s32 %s21, 1
      %p261 = scmp.lt.s32.totalorder %s20, 1
      %s262 = scalar_select %p261, %s20, 1
      %p263 = scmp.lt.s32.totalorder %s260, 5
      %s264 = scalar_select %p263, %s260, 5
      %s265 = smul.addr %s262, 6
      %s266 = sadd.s32 %s264, %s265
      %s267 = smul.addr %s266, 4
      %s268 = scalar_lea.vmem %s1, %s267
      %p269 = pneg %p81
      %p270 = pneg %p78
      %s271 = sadd.s32 %s21, 2
      %p272 = scmp.lt.s32.totalorder %s20, 1
      %s273 = scalar_select %p272, %s20, 1
      %p274 = scmp.lt.s32.totalorder %s271, 5
      %s275 = scalar_select %p274, %s271, 5
      %s276 = smul.addr %s273, 6
      %s277 = sadd.s32 %s275, %s276
      %s278 = smul.addr %s277, 4
      %s279 = scalar_lea.vmem %s2, %s278
      %p280 = pneg %p111
      %p281 = pneg %p108
      %p282 = pneg %p132
      %p283 = pneg %p129
      %p284 = pneg %p153
      %p285 = pneg %p150
      %p286 = pneg %p181
      %p287 = pneg %p178
      %p288 = scmp.lt.s32.totalorder %s20, 1
      %s289 = scalar_select %p288, %s20, 1
      %p290 = scmp.lt.s32.totalorder %s21, 3
      %s291 = scalar_select %p290, %s21, 3
      %s292 = smul.addr %s289, 4
      %s293 = sadd.s32 %s291, %s292
      %s294 = smul.addr %s293, 4
      %s295 = scalar_lea.vmem %s5, %s294
      %p296 = scmp.lt.s32.totalorder %s20, 1
      %s297 = scalar_select %p296, %s20, 1
      %p298 = scmp.lt.s32.totalorder %s21, 5
      %s299 = scalar_select %p298, %s21, 5
      %s300 = smul.addr %s297, 6
      %s301 = sadd.s32 %s299, %s300
      %s302 = smul.addr %s301, 4
      %s303 = scalar_lea.vmem %s0, %s302
      %s304 = sadd.s32 %s21, 1
      %p305 = scmp.lt.s32.totalorder %s20, 1
      %s306 = scalar_select %p305, %s20, 1
      %p307 = scmp.lt.s32.totalorder %s304, 5
      %s308 = scalar_select %p307, %s304, 5
      %s309 = smul.addr %s306, 6
      %s310 = sadd.s32 %s308, %s309
      %s311 = smul.addr %s310, 4
      %s312 = scalar_lea.vmem %s1, %s311
      %s313 = sadd.s32 %s21, 1
      %s314 = sadd.s32 %s21, 2
      %p315 = scmp.lt.s32.totalorder %s20, 1
      %s316 = scalar_select %p315, %s20, 1
      %p317 = scmp.lt.s32.totalorder %s314, 5
      %s318 = scalar_select %p317, %s314, 5
      %s319 = smul.addr %s316, 6
      %s320 = sadd.s32 %s318, %s319
      %s321 = smul.addr %s320, 4
      %s322 = scalar_lea.vmem %s2, %s321
      %s323 = sadd.s32 %s21, 2
      %p324 = scmp.lt.s32.totalorder %s20, 1
      %s325 = scalar_select %p324, %s20, 1
      %p326 = scmp.lt.s32.totalorder %s21, 3
      %s327 = scalar_select %p326, %s21, 3
      %s328 = smul.addr %s325, 4
      %s329 = sadd.s32 %s327, %s328
      %s330 = smul.addr %s329, 4
      %s331 = scalar_lea.vmem %s5, %s330
      %v333 = vld [vmem:[%s303] sm:$0x7]
      %v334 = vld [vmem:[%s312] sm:$0x7]
      %v335 = vld [vmem:[%s322] sm:$0x7]
      %v336 = vld [vmem:[%s3] sm:$0xf]
      %s337 = scalar_lea.vmem %s3, 4
      %v338 = vld [vmem:[%s337] sm:$0xf]
      %v340 = vunpack.c.l.b16 %v333
      %v341 = vpack.c.b16 %v340, %v340
      %v343 = vshrl.u32 %v341, 16
      %v345 = vshll.u32 %v341, 16
      %v347 = vrot.slane %v345, 1
      %v348 = vor.u32 %v343, %v347
      %vm349 = vcmask 64512
      %v351 = vsel %vm349, %v348, 0
      %vm353 = vcmask 1043456
      %v355 = vsel %vm353, %v338, 0
      %357 = vmatprep.subr.bf16.mxu0 0
      %358 = vmatpush1.bf16.msra.mxu0 %v355
      %359 = vmatprep.subr.bf16.mxu0 0
      %360 = vmatpush1.bf16.msra.mxu0 0
      %361 = vmatprep.subr.bf16.mxu0 0
      %362 = vmatpush1.bf16.msra.mxu0 0
      %363 = vmatprep.subr.bf16.mxu0 0
      %364 = vmatpush1.bf16.msra.mxu0 0
      %365 = vmatprep.subr.bf16.mxu0 0
      %366 = vmatpush1.bf16.msra.mxu0 0
      %367 = vmatprep.subr.bf16.mxu0 0
      %368 = vmatpush1.bf16.msra.mxu0 0
      %369 = vmatprep.subr.bf16.mxu0 0
      %370 = vmatpush1.bf16.msra.mxu0 0
      %371 = vmatprep.subr.bf16.mxu0 0
      %372 = vmatpush1.bf16.msra.mxu0 0
      %373 = vmatprep.subr.bf16.mxu0 0
      %374 = vmatpush1.bf16.msra.mxu0 0
      %375 = vmatprep.subr.bf16.mxu0 0
      %376 = vmatpush1.bf16.msra.mxu0 0
      %377 = vmatprep.subr.bf16.mxu0 0
      %378 = vmatpush1.bf16.msra.mxu0 0
      %379 = vmatprep.subr.bf16.mxu0 0
      %380 = vmatpush1.bf16.msra.mxu0 0
      %381 = vmatprep.subr.bf16.mxu0 0
      %382 = vmatpush1.bf16.msra.mxu0 0
      %383 = vmatprep.subr.bf16.mxu0 0
      %384 = vmatpush1.bf16.msra.mxu0 0
      %385 = vmatprep.subr.bf16.mxu0 0
      %386 = vmatpush1.bf16.msra.mxu0 0
      %387 = vmatprep.subr.bf16.mxu0 0
      %388 = vmatpush1.bf16.msra.mxu0 0
      %389 = vmatprep.mubr.bf16.mxu0 0
      %390 = vmatmul.mubr.bf16.gmra.mrb[0].mxu0 %v351
      %v391 = vpop.f32.mrb[0].mxu0
      %v392 = vadd.f32 0.0, %v391
      %v393 = vpop.f32.mrb[0].mxu0
      %v394 = vpop.f32.mrb[0].mxu0
      %v395 = vpop.f32.mrb[0].mxu0
      %396 = vdwg.mxu0
      %v398 = vsel %vm349, %v333, 0
      %v401 = vsel %vm353, %v336, 0
      %403 = vmatprep.subr.bf16.mxu0 0
      %404 = vmatpush1.bf16.msra.mxu0 %v401
      %405 = vmatprep.subr.bf16.mxu0 0
      %406 = vmatpush1.bf16.msra.mxu0 0
      %407 = vmatprep.subr.bf16.mxu0 0
      %408 = vmatpush1.bf16.msra.mxu0 0
      %409 = vmatprep.subr.bf16.mxu0 0
      %410 = vmatpush1.bf16.msra.mxu0 0
      %411 = vmatprep.subr.bf16.mxu0 0
      %412 = vmatpush1.bf16.msra.mxu0 0
      %413 = vmatprep.subr.bf16.mxu0 0
      %414 = vmatpush1.bf16.msra.mxu0 0
      %415 = vmatprep.subr.bf16.mxu0 0
      %416 = vmatpush1.bf16.msra.mxu0 0
      %417 = vmatprep.subr.bf16.mxu0 0
      %418 = vmatpush1.bf16.msra.mxu0 0
      %419 = vmatprep.subr.bf16.mxu0 0
      %420 = vmatpush1.bf16.msra.mxu0 0
      %421 = vmatprep.subr.bf16.mxu0 0
      %422 = vmatpush1.bf16.msra.mxu0 0
      %423 = vmatprep.subr.bf16.mxu0 0
      %424 = vmatpush1.bf16.msra.mxu0 0
      %425 = vmatprep.subr.bf16.mxu0 0
      %426 = vmatpush1.bf16.msra.mxu0 0
      %427 = vmatprep.subr.bf16.mxu0 0
      %428 = vmatpush1.bf16.msra.mxu0 0
      %429 = vmatprep.subr.bf16.mxu0 0
      %430 = vmatpush1.bf16.msra.mxu0 0
      %431 = vmatprep.subr.bf16.mxu0 0
      %432 = vmatpush1.bf16.msra.mxu0 0
      %433 = vmatprep.subr.bf16.mxu0 0
      %434 = vmatpush1.bf16.msra.mxu0 0
      %435 = vmatprep.mubr.bf16.mxu0 0
      %436 = vmatmul.mubr.bf16.gmra.mrb[0].mxu0 %v398
      %v437 = vpop.f32.mrb[0].mxu0
      %v438 = vadd.f32 %v392, %v437
      %v439 = vpop.f32.mrb[0].mxu0
      %v440 = vpop.f32.mrb[0].mxu0
      %v441 = vpop.f32.mrb[0].mxu0
      %442 = vdwg.mxu0
      %s443 = scalar_lea.vmem %s3, 8
      %v444 = vld [vmem:[%s443] sm:$0xf]
      %v445 = vrot.slane %v341, 1
      %v447 = vsel %vm349, %v445, 0
      %v450 = vsel %vm353, %v444, 0
      %452 = vmatprep.subr.bf16.mxu0 0
      %453 = vmatpush1.bf16.msra.mxu0 %v450
      %454 = vmatprep.subr.bf16.mxu0 0
      %455 = vmatpush1.bf16.msra.mxu0 0
      %456 = vmatprep.subr.bf16.mxu0 0
      %457 = vmatpush1.bf16.msra.mxu0 0
      %458 = vmatprep.subr.bf16.mxu0 0
      %459 = vmatpush1.bf16.msra.mxu0 0
      %460 = vmatprep.subr.bf16.mxu0 0
      %461 = vmatpush1.bf16.msra.mxu0 0
      %462 = vmatprep.subr.bf16.mxu0 0
      %463 = vmatpush1.bf16.msra.mxu0 0
      %464 = vmatprep.subr.bf16.mxu0 0
      %465 = vmatpush1.bf16.msra.mxu0 0
      %466 = vmatprep.subr.bf16.mxu0 0
      %467 = vmatpush1.bf16.msra.mxu0 0
      %468 = vmatprep.subr.bf16.mxu0 0
      %469 = vmatpush1.bf16.msra.mxu0 0
      %470 = vmatprep.subr.bf16.mxu0 0
      %471 = vmatpush1.bf16.msra.mxu0 0
      %472 = vmatprep.subr.bf16.mxu0 0
      %473 = vmatpush1.bf16.msra.mxu0 0
      %474 = vmatprep.subr.bf16.mxu0 0
      %475 = vmatpush1.bf16.msra.mxu0 0
      %476 = vmatprep.subr.bf16.mxu0 0
      %477 = vmatpush1.bf16.msra.mxu0 0
      %478 = vmatprep.subr.bf16.mxu0 0
      %479 = vmatpush1.bf16.msra.mxu0 0
      %480 = vmatprep.subr.bf16.mxu0 0
      %481 = vmatpush1.bf16.msra.mxu0 0
      %482 = vmatprep.subr.bf16.mxu0 0
      %483 = vmatpush1.bf16.msra.mxu0 0
      %484 = vmatprep.mubr.bf16.mxu0 0
      %485 = vmatmul.mubr.bf16.gmra.mrb[0].mxu0 %v447
      %v486 = vpop.f32.mrb[0].mxu0
      %v487 = vadd.f32 0.0, %v486
      %v488 = vpop.f32.mrb[0].mxu0
      %v489 = vpop.f32.mrb[0].mxu0
      %v490 = vpop.f32.mrb[0].mxu0
      %491 = vdwg.mxu0
      %v492 = vadd.f32 %v438, %v487
      %s493 = scalar_lea.vmem %s3, 12
      %v494 = vld [vmem:[%s493] sm:$0xf]
      %v496 = vsel %vm349, %v334, 0
      %v499 = vsel %vm353, %v494, 0
      %501 = vmatprep.subr.bf16.mxu0 0
      %502 = vmatpush1.bf16.msra.mxu0 %v499
      %503 = vmatprep.subr.bf16.mxu0 0
      %504 = vmatpush1.bf16.msra.mxu0 0
      %505 = vmatprep.subr.bf16.mxu0 0
      %506 = vmatpush1.bf16.msra.mxu0 0
      %507 = vmatprep.subr.bf16.mxu0 0
      %508 = vmatpush1.bf16.msra.mxu0 0
      %509 = vmatprep.subr.bf16.mxu0 0
      %510 = vmatpush1.bf16.msra.mxu0 0
      %511 = vmatprep.subr.bf16.mxu0 0
      %512 = vmatpush1.bf16.msra.mxu0 0
      %513 = vmatprep.subr.bf16.mxu0 0
      %514 = vmatpush1.bf16.msra.mxu0 0
      %515 = vmatprep.subr.bf16.mxu0 0
      %516 = vmatpush1.bf16.msra.mxu0 0
      %517 = vmatprep.subr.bf16.mxu0 0
      %518 = vmatpush1.bf16.msra.mxu0 0
      %519 = vmatprep.subr.bf16.mxu0 0
      %520 = vmatpush1.bf16.msra.mxu0 0
      %521 = vmatprep.subr.bf16.mxu0 0
      %522 = vmatpush1.bf16.msra.mxu0 0
      %523 = vmatprep.subr.bf16.mxu0 0
      %524 = vmatpush1.bf16.msra.mxu0 0
      %525 = vmatprep.subr.bf16.mxu0 0
      %526 = vmatpush1.bf16.msra.mxu0 0
      %527 = vmatprep.subr.bf16.mxu0 0
      %528 = vmatpush1.bf16.msra.mxu0 0
      %529 = vmatprep.subr.bf16.mxu0 0
      %530 = vmatpush1.bf16.msra.mxu0 0
      %531 = vmatprep.subr.bf16.mxu0 0
      %532 = vmatpush1.bf16.msra.mxu0 0
      %533 = vmatprep.mubr.bf16.mxu0 0
      %534 = vmatmul.mubr.bf16.gmra.mrb[0].mxu0 %v496
      %v535 = vpop.f32.mrb[0].mxu0
      %v536 = vadd.f32 0.0, %v535
      %v537 = vpop.f32.mrb[0].mxu0
      %v538 = vpop.f32.mrb[0].mxu0
      %v539 = vpop.f32.mrb[0].mxu0
      %540 = vdwg.mxu0
      %v541 = vadd.f32 %v492, %v536
      %s542 = scalar_lea.vmem %s3, 16
      %v543 = vld [vmem:[%s542] sm:$0xf]
      %v545 = vunpack.c.l.b16 %v334
      %v546 = vpack.c.b16 %v545, %v545
      %v548 = vshrl.u32 %v546, 16
      %v550 = vshll.u32 %v546, 16
      %v552 = vrot.slane %v550, 1
      %v553 = vor.u32 %v548, %v552
      %v555 = vsel %vm349, %v553, 0
      %v558 = vsel %vm353, %v543, 0
      %560 = vmatprep.subr.bf16.mxu0 0
      %561 = vmatpush1.bf16.msra.mxu0 %v558
      %562 = vmatprep.subr.bf16.mxu0 0
      %563 = vmatpush1.bf16.msra.mxu0 0
      %564 = vmatprep.subr.bf16.mxu0 0
      %565 = vmatpush1.bf16.msra.mxu0 0
      %566 = vmatprep.subr.bf16.mxu0 0
      %567 = vmatpush1.bf16.msra.mxu0 0
      %568 = vmatprep.subr.bf16.mxu0 0
      %569 = vmatpush1.bf16.msra.mxu0 0
      %570 = vmatprep.subr.bf16.mxu0 0
      %571 = vmatpush1.bf16.msra.mxu0 0
      %572 = vmatprep.subr.bf16.mxu0 0
      %573 = vmatpush1.bf16.msra.mxu0 0
      %574 = vmatprep.subr.bf16.mxu0 0
      %575 = vmatpush1.bf16.msra.mxu0 0
      %576 = vmatprep.subr.bf16.mxu0 0
      %577 = vmatpush1.bf16.msra.mxu0 0
      %578 = vmatprep.subr.bf16.mxu0 0
      %579 = vmatpush1.bf16.msra.mxu0 0
      %580 = vmatprep.subr.bf16.mxu0 0
      %581 = vmatpush1.bf16.msra.mxu0 0
      %582 = vmatprep.subr.bf16.mxu0 0
      %583 = vmatpush1.bf16.msra.mxu0 0
      %584 = vmatprep.subr.bf16.mxu0 0
      %585 = vmatpush1.bf16.msra.mxu0 0
      %586 = vmatprep.subr.bf16.mxu0 0
      %587 = vmatpush1.bf16.msra.mxu0 0
      %588 = vmatprep.subr.bf16.mxu0 0
      %589 = vmatpush1.bf16.msra.mxu0 0
      %590 = vmatprep.subr.bf16.mxu0 0
      %591 = vmatpush1.bf16.msra.mxu0 0
      %592 = vmatprep.mubr.bf16.mxu0 0
      %593 = vmatmul.mubr.bf16.gmra.mrb[0].mxu0 %v555
      %v594 = vpop.f32.mrb[0].mxu0
      %v595 = vadd.f32 0.0, %v594
      %v596 = vpop.f32.mrb[0].mxu0
      %v597 = vpop.f32.mrb[0].mxu0
      %v598 = vpop.f32.mrb[0].mxu0
      %599 = vdwg.mxu0
      %v600 = vadd.f32 %v541, %v595
      %s601 = scalar_lea.vmem %s3, 20
      %v602 = vld [vmem:[%s601] sm:$0xf]
      %v603 = vrot.slane %v546, 1
      %v605 = vsel %vm349, %v603, 0
      %v608 = vsel %vm353, %v602, 0
      %610 = vmatprep.subr.bf16.mxu0 0
      %611 = vmatpush1.bf16.msra.mxu0 %v608
      %612 = vmatprep.subr.bf16.mxu0 0
      %613 = vmatpush1.bf16.msra.mxu0 0
      %614 = vmatprep.subr.bf16.mxu0 0
      %615 = vmatpush1.bf16.msra.mxu0 0
      %616 = vmatprep.subr.bf16.mxu0 0
      %617 = vmatpush1.bf16.msra.mxu0 0
      %618 = vmatprep.subr.bf16.mxu0 0
      %619 = vmatpush1.bf16.msra.mxu0 0
      %620 = vmatprep.subr.bf16.mxu0 0
      %621 = vmatpush1.bf16.msra.mxu0 0
      %622 = vmatprep.subr.bf16.mxu0 0
      %623 = vmatpush1.bf16.msra.mxu0 0
      %624 = vmatprep.subr.bf16.mxu0 0
      %625 = vmatpush1.bf16.msra.mxu0 0
      %626 = vmatprep.subr.bf16.mxu0 0
      %627 = vmatpush1.bf16.msra.mxu0 0
      %628 = vmatprep.subr.bf16.mxu0 0
      %629 = vmatpush1.bf16.msra.mxu0 0
      %630 = vmatprep.subr.bf16.mxu0 0
      %631 = vmatpush1.bf16.msra.mxu0 0
      %632 = vmatprep.subr.bf16.mxu0 0
      %633 = vmatpush1.bf16.msra.mxu0 0
      %634 = vmatprep.subr.bf16.mxu0 0
      %635 = vmatpush1.bf16.msra.mxu0 0
      %636 = vmatprep.subr.bf16.mxu0 0
      %637 = vmatpush1.bf16.msra.mxu0 0
      %638 = vmatprep.subr.bf16.mxu0 0
      %639 = vmatpush1.bf16.msra.mxu0 0
      %640 = vmatprep.subr.bf16.mxu0 0
      %641 = vmatpush1.bf16.msra.mxu0 0
      %642 = vmatprep.mubr.bf16.mxu0 0
      %643 = vmatmul.mubr.bf16.gmra.mrb[0].mxu0 %v605
      %v644 = vpop.f32.mrb[0].mxu0
      %v645 = vadd.f32 0.0, %v644
      %v646 = vpop.f32.mrb[0].mxu0
      %v647 = vpop.f32.mrb[0].mxu0
      %v648 = vpop.f32.mrb[0].mxu0
      %649 = vdwg.mxu0
      %v650 = vadd.f32 %v600, %v645
      %s651 = scalar_lea.vmem %s3, 24
      %v652 = vld [vmem:[%s651] sm:$0xf]
      %v654 = vsel %vm349, %v335, 0
      %v657 = vsel %vm353, %v652, 0
      %659 = vmatprep.subr.bf16.mxu0 0
      %660 = vmatpush1.bf16.msra.mxu0 %v657
      %661 = vmatprep.subr.bf16.mxu0 0
      %662 = vmatpush1.bf16.msra.mxu0 0
      %663 = vmatprep.subr.bf16.mxu0 0
      %664 = vmatpush1.bf16.msra.mxu0 0
      %665 = vmatprep.subr.bf16.mxu0 0
      %666 = vmatpush1.bf16.msra.mxu0 0
      %667 = vmatprep.subr.bf16.mxu0 0
      %668 = vmatpush1.bf16.msra.mxu0 0
      %669 = vmatprep.subr.bf16.mxu0 0
      %670 = vmatpush1.bf16.msra.mxu0 0
      %671 = vmatprep.subr.bf16.mxu0 0
      %672 = vmatpush1.bf16.msra.mxu0 0
      %673 = vmatprep.subr.bf16.mxu0 0
      %674 = vmatpush1.bf16.msra.mxu0 0
      %675 = vmatprep.subr.bf16.mxu0 0
      %676 = vmatpush1.bf16.msra.mxu0 0
      %677 = vmatprep.subr.bf16.mxu0 0
      %678 = vmatpush1.bf16.msra.mxu0 0
      %679 = vmatprep.subr.bf16.mxu0 0
      %680 = vmatpush1.bf16.msra.mxu0 0
      %681 = vmatprep.subr.bf16.mxu0 0
      %682 = vmatpush1.bf16.msra.mxu0 0
      %683 = vmatprep.subr.bf16.mxu0 0
      %684 = vmatpush1.bf16.msra.mxu0 0
      %685 = vmatprep.subr.bf16.mxu0 0
      %686 = vmatpush1.bf16.msra.mxu0 0
      %687 = vmatprep.subr.bf16.mxu0 0
      %688 = vmatpush1.bf16.msra.mxu0 0
      %689 = vmatprep.subr.bf16.mxu0 0
      %690 = vmatpush1.bf16.msra.mxu0 0
      %691 = vmatprep.mubr.bf16.mxu0 0
      %692 = vmatmul.mubr.bf16.gmra.mrb[0].mxu0 %v654
      %v693 = vpop.f32.mrb[0].mxu0
      %v694 = vadd.f32 0.0, %v693
      %v695 = vpop.f32.mrb[0].mxu0
      %v696 = vpop.f32.mrb[0].mxu0
      %v697 = vpop.f32.mrb[0].mxu0
      %698 = vdwg.mxu0
      %v699 = vadd.f32 %v650, %v694
      %s700 = scalar_lea.vmem %s3, 28
      %v701 = vld [vmem:[%s700] sm:$0xf]
      %v703 = vunpack.c.l.b16 %v335
      %v704 = vpack.c.b16 %v703, %v703
      %v706 = vshrl.u32 %v704, 16
      %v708 = vshll.u32 %v704, 16
      %v710 = vrot.slane %v708, 1
      %v711 = vor.u32 %v706, %v710
      %v713 = vsel %vm349, %v711, 0
      %v716 = vsel %vm353, %v701, 0
      %718 = vmatprep.subr.bf16.mxu0 0
      %719 = vmatpush1.bf16.msra.mxu0 %v716
      %720 = vmatprep.subr.bf16.mxu0 0
      %721 = vmatpush1.bf16.msra.mxu0 0
      %722 = vmatprep.subr.bf16.mxu0 0
      %723 = vmatpush1.bf16.msra.mxu0 0
      %724 = vmatprep.subr.bf16.mxu0 0
      %725 = vmatpush1.bf16.msra.mxu0 0
      %726 = vmatprep.subr.bf16.mxu0 0
      %727 = vmatpush1.bf16.msra.mxu0 0
      %728 = vmatprep.subr.bf16.mxu0 0
      %729 = vmatpush1.bf16.msra.mxu0 0
      %730 = vmatprep.subr.bf16.mxu0 0
      %731 = vmatpush1.bf16.msra.mxu0 0
      %732 = vmatprep.subr.bf16.mxu0 0
      %733 = vmatpush1.bf16.msra.mxu0 0
      %734 = vmatprep.subr.bf16.mxu0 0
      %735 = vmatpush1.bf16.msra.mxu0 0
      %736 = vmatprep.subr.bf16.mxu0 0
      %737 = vmatpush1.bf16.msra.mxu0 0
      %738 = vmatprep.subr.bf16.mxu0 0
      %739 = vmatpush1.bf16.msra.mxu0 0
      %740 = vmatprep.subr.bf16.mxu0 0
      %741 = vmatpush1.bf16.msra.mxu0 0
      %742 = vmatprep.subr.bf16.mxu0 0
      %743 = vmatpush1.bf16.msra.mxu0 0
      %744 = vmatprep.subr.bf16.mxu0 0
      %745 = vmatpush1.bf16.msra.mxu0 0
      %746 = vmatprep.subr.bf16.mxu0 0
      %747 = vmatpush1.bf16.msra.mxu0 0
      %748 = vmatprep.subr.bf16.mxu0 0
      %749 = vmatpush1.bf16.msra.mxu0 0
      %750 = vmatprep.mubr.bf16.mxu0 0
      %751 = vmatmul.mubr.bf16.gmra.mrb[0].mxu0 %v713
      %v752 = vpop.f32.mrb[0].mxu0
      %v753 = vadd.f32 0.0, %v752
      %v754 = vpop.f32.mrb[0].mxu0
      %v755 = vpop.f32.mrb[0].mxu0
      %v756 = vpop.f32.mrb[0].mxu0
      %757 = vdwg.mxu0
      %v758 = vadd.f32 %v699, %v753
      %s759 = scalar_lea.vmem %s3, 32
      %v760 = vld [vmem:[%s759] sm:$0xf]
      %v761 = vrot.slane %v704, 1
      %v763 = vsel %vm349, %v761, 0
      %v766 = vsel %vm353, %v760, 0
      %768 = vmatprep.subr.bf16.mxu0 0
      %769 = vmatpush1.bf16.msra.mxu0 %v766
      %770 = vmatprep.subr.bf16.mxu0 0
      %771 = vmatpush1.bf16.msra.mxu0 0
      %772 = vmatprep.subr.bf16.mxu0 0
      %773 = vmatpush1.bf16.msra.mxu0 0
      %774 = vmatprep.subr.bf16.mxu0 0
      %775 = vmatpush1.bf16.msra.mxu0 0
      %776 = vmatprep.subr.bf16.mxu0 0
      %777 = vmatpush1.bf16.msra.mxu0 0
      %778 = vmatprep.subr.bf16.mxu0 0
      %779 = vmatpush1.bf16.msra.mxu0 0
      %780 = vmatprep.subr.bf16.mxu0 0
      %781 = vmatpush1.bf16.msra.mxu0 0
      %782 = vmatprep.subr.bf16.mxu0 0
      %783 = vmatpush1.bf16.msra.mxu0 0
      %784 = vmatprep.subr.bf16.mxu0 0
      %785 = vmatpush1.bf16.msra.mxu0 0
      %786 = vmatprep.subr.bf16.mxu0 0
      %787 = vmatpush1.bf16.msra.mxu0 0
      %788 = vmatprep.subr.bf16.mxu0 0
      %789 = vmatpush1.bf16.msra.mxu0 0
      %790 = vmatprep.subr.bf16.mxu0 0
      %791 = vmatpush1.bf16.msra.mxu0 0
      %792 = vmatprep.subr.bf16.mxu0 0
      %793 = vmatpush1.bf16.msra.mxu0 0
      %794 = vmatprep.subr.bf16.mxu0 0
      %795 = vmatpush1.bf16.msra.mxu0 0
      %796 = vmatprep.subr.bf16.mxu0 0
      %797 = vmatpush1.bf16.msra.mxu0 0
      %798 = vmatprep.subr.bf16.mxu0 0
      %799 = vmatpush1.bf16.msra.mxu0 0
      %800 = vmatprep.mubr.bf16.mxu0 0
      %801 = vmatmul.mubr.bf16.gmra.mrb[0].mxu0 %v763
      %v802 = vpop.f32.mrb[0].mxu0
      %v803 = vadd.f32 0.0, %v802
      %v804 = vpop.f32.mrb[0].mxu0
      %v805 = vpop.f32.mrb[0].mxu0
      %v806 = vpop.f32.mrb[0].mxu0
      %807 = vdwg.mxu0
      %v808 = vadd.f32 %v758, %v803
      %v809 = vld [vmem:[%s4] sm:$0x1]
      %v811 = vlaneseq
      %v812 = vshrl.u32 %v811, 7
      %v813 = vsub.s32 0, %v812
      %v814 = vrot.slane %v809, %v813
      %v816 = vadd.f32 %v808, %v814
      %v817 = vmax.f32 %v816, 0.0
      %vm818 = vcmask 519168
      %819 = vst.msk [vmem:[%s331] sm:$0xf] %vm818, %v817
      %p820 = scmp.lt.s32.totalorder %s20, 1
      %s821 = scalar_select %p820, %s20, 1
      %p822 = scmp.lt.s32.totalorder %s21, 3
      %s823 = scalar_select %p822, %s21, 3
      %s824 = smul.addr %s821, 4
      %s825 = sadd.s32 %s823, %s824
      %s826 = smul.addr %s825, 4
      %s827 = scalar_lea.vmem %s5, %s826
      // Predicated region
      $region41: #{shadow_removal_forward.16} parent=39 // pred_check
        %p828 = pneg %p178
      $region42: #{shadow_removal_forward.16} parent=39 // pred_check_branch
        %830 = sbr.rel (%p828) target = $region44
      $region43: #{shadow_removal_forward.16} parent=39 // pred_region
        _
      $region44: #{shadow_removal_forward.16} parent=39 // pred_fallthru
        _
    $region40: #{shadow_removal_forward.16} parent=5 // pred_fallthru
      _
    %p831 = scmp.le.s32.totalorder 2, %s11
    // Predicated region
    $region45: #{shadow_removal_forward.16} parent=5 // pred_check
      %p832 = pneg %p831
    $region46: #{shadow_removal_forward.16} parent=5 // pred_check_branch
      %834 = sbr.rel (%p832) target = $region48
    $region47: #{shadow_removal_forward.16} parent=5 // pred_region
      %s835 = ssub.s32 %s11, 2
      // Predicated region
      $region49: #{shadow_removal_forward.16} parent=47 // pred_check
        %p836 = pneg %p184
      $region50: #{shadow_removal_forward.16} parent=47 // pred_check_branch
        %838 = sbr.rel (%p836) target = $region52
      $region51: #{shadow_removal_forward.16} parent=47 // pred_region
        %p839 = scmp.lt.s32.totalorder %s22, 1
        %s840 = scalar_select %p839, %s22, 1
        %p841 = scmp.lt.s32.totalorder %s23, 3
        %s842 = scalar_select %p841, %s23, 3
        %s843 = smul.addr %s840, 4
        %s844 = sadd.s32 %s842, %s843
        %s845 = smul.addr %s844, 4
        %s846 = scalar_lea.vmem %s5, %s845
      $region52: #{shadow_removal_forward.16} parent=47 // pred_fallthru
        _
    $region48: #{shadow_removal_forward.16} parent=5 // pred_fallthru
      _
  $region6: #{shadow_removal_forward.16} parent=0 // loop_footer
    %s15 = sadd.s32 1, %s11
  $region7: #{shadow_removal_forward.16} parent=0 // loop_footer_branch
    %10 = sbr.rel target = $region3
  $region8: #{shadow_removal_forward.16} parent=0 // loop_exit
    _

// kernel: shadow_removal_forward.11
$region0: #{shadow_removal_forward.11}
  #allocation0 [shape = 'u32[]', space=smem, size = 0x4, offset = 0x4, fixed_abs, tag = 'smem constant byte address 0x4 - core index']
  #allocation1 [shape = 'u32[144,128]{1,0:T(1,128)}', space=vmem, size = 0x12000, scoped, tag = 'internal scratch']
  %s0 = inlined_call_operand.vmem [shape: bf16[2,256,8], index: 0, kind: input, shape index: {}]
  %s1 = inlined_call_operand.vmem [shape: bf16[8,64], index: 1, kind: input, shape index: {}]
  %s2 = inlined_call_operand.vmem [shape: f32[1,64], index: 2, kind: input, shape index: {}]
  %s3 = inlined_call_operand.vmem [shape: bf16[64,64], index: 3, kind: input, shape index: {}]
  %s4 = inlined_call_operand.vmem [shape: f32[1,64], index: 4, kind: input, shape index: {}]
  %s5 = inlined_call_operand.vmem [shape: f32[2,256,64], index: 5, kind: output, shape index: {}]
  %s6 = sld [smem:[#allocation0]]
  $region53: #{shadow_removal_forward.11} parent=0
    _
  %s8 = ssub.s32 1, %s6
  %s9 = scalar_select 0, %s8, %s6
  loop: start=0, step=1, limit=4
  $region2: #{shadow_removal_forward.11} parent=0 // loop_pre_header
    _
  $region3: #{shadow_removal_forward.11} parent=0 // loop_header
    %s11 = sphi 0, %s15
    %p12 = scmp.ge.s32.totalorder %s11, 4
    %s21 = sphi 0, %s23
    %s24 = sphi 0, %s21
    %s25 = sphi 0, %s24
    %s41 = sphi 0, %s25
    %s45 = sphi 0, %s45
    %s47 = sphi 0, %s45
    %s48 = sphi 0, %s47
    %s62 = sphi 0, %s48
    %s66 = sphi 0, %s66
    %s68 = sphi 0, %s66
    %s69 = sphi 0, %s68
    %s83 = sphi 0, %s69
    %s87 = sphi 0, %s87
    %s89 = sphi 0, %s87
    %s90 = sphi 0, %s89
    %s104 = sphi 0, %s90
    %s108 = sphi 0, %s108
    %s110 = sphi 0, %s108
    %s111 = sphi 0, %s110
    %s125 = sphi 0, %s111
    %s131 = sphi 0, %s133
    %s134 = sphi 0, %s131
    %s135 = sphi 0, %s134
    %s151 = sphi 0, %s135
  $region4: #{shadow_removal_forward.11} parent=0 // loop_header_branch
    %14 = sbr.rel (%p12) target = $region8
  $region5: #{shadow_removal_forward.11} parent=0 // loop_body
    %s16 = ssub.s32 %s11, 1
    %s17 = ssub.s32 %s11, 2
    %s18 = sadd.s32 %s11, 1
    %s19 = ssub.s32 %s11, %s18
    %p20 = scmp.eq.s32.totalorder %s19, 0
    %s22 = sadd.s32 %s21, 1
    %s23 = scalar_select %p20, %s21, %s22
    %p26 = pneg %p20
    %p27 = scmp.eq.s32.totalorder %s11, 1
    %p28 = por %p26, %p27
    %p29 = scmp.ne.s32.totalorder %s21, %s24
    %p30 = scmp.eq.s32.totalorder %s11, 0
    %p31 = por %p29, %p30
    %p32 = scmp.ne.s32.totalorder %s21, %s24
    %p33 = scmp.eq.s32.totalorder %s16, 1
    %p34 = por %p32, %p33
    %p35 = scmp.ne.s32.totalorder %s24, %s25
    %p36 = scmp.eq.s32.totalorder %s16, 0
    %p37 = por %p35, %p36
    %p38 = scmp.ne.s32.totalorder %s24, %s25
    %p39 = scmp.eq.s32.totalorder %s17, 1
    %p40 = por %p38, %p39
    %p42 = scmp.ne.s32.totalorder %s25, %s41
    %p43 = scmp.eq.s32.totalorder %s17, 0
    %p44 = por %p42, %p43
    %s46 = sadd.s32 %s45, 1
    %p49 = scmp.eq.s32.totalorder %s11, 1
    %p50 = scmp.ne.s32.totalorder %s45, %s47
    %p51 = scmp.eq.s32.totalorder %s11, 0
    %p52 = por %p50, %p51
    %p53 = scmp.ne.s32.totalorder %s45, %s47
    %p54 = scmp.eq.s32.totalorder %s16, 1
    %p55 = por %p53, %p54
    %p56 = scmp.ne.s32.totalorder %s47, %s48
    %p57 = scmp.eq.s32.totalorder %s16, 0
    %p58 = por %p56, %p57
    %p59 = scmp.ne.s32.totalorder %s47, %s48
    %p60 = scmp.eq.s32.totalorder %s17, 1
    %p61 = por %p59, %p60
    %p63 = scmp.ne.s32.totalorder %s48, %s62
    %p64 = scmp.eq.s32.totalorder %s17, 0
    %p65 = por %p63, %p64
    %s67 = sadd.s32 %s66, 1
    %p70 = scmp.eq.s32.totalorder %s11, 1
    %p71 = scmp.ne.s32.totalorder %s66, %s68
    %p72 = scmp.eq.s32.totalorder %s11, 0
    %p73 = por %p71, %p72
    %p74 = scmp.ne.s32.totalorder %s66, %s68
    %p75 = scmp.eq.s32.totalorder %s16, 1
    %p76 = por %p74, %p75
    %p77 = scmp.ne.s32.totalorder %s68, %s69
    %p78 = scmp.eq.s32.totalorder %s16, 0
    %p79 = por %p77, %p78
    %p80 = scmp.ne.s32.totalorder %s68, %s69
    %p81 = scmp.eq.s32.totalorder %s17, 1
    %p82 = por %p80, %p81
    %p84 = scmp.ne.s32.totalorder %s69, %s83
    %p85 = scmp.eq.s32.totalorder %s17, 0
    %p86 = por %p84, %p85
    %s88 = sadd.s32 %s87, 1
    %p91 = scmp.eq.s32.totalorder %s11, 1
    %p92 = scmp.ne.s32.totalorder %s87, %s89
    %p93 = scmp.eq.s32.totalorder %s11, 0
    %p94 = por %p92, %p93
    %p95 = scmp.ne.s32.totalorder %s87, %s89
    %p96 = scmp.eq.s32.totalorder %s16, 1
    %p97 = por %p95, %p96
    %p98 = scmp.ne.s32.totalorder %s89, %s90
    %p99 = scmp.eq.s32.totalorder %s16, 0
    %p100 = por %p98, %p99
    %p101 = scmp.ne.s32.totalorder %s89, %s90
    %p102 = scmp.eq.s32.totalorder %s17, 1
    %p103 = por %p101, %p102
    %p105 = scmp.ne.s32.totalorder %s90, %s104
    %p106 = scmp.eq.s32.totalorder %s17, 0
    %p107 = por %p105, %p106
    %s109 = sadd.s32 %s108, 1
    %p112 = scmp.eq.s32.totalorder %s11, 1
    %p113 = scmp.ne.s32.totalorder %s108, %s110
    %p114 = scmp.eq.s32.totalorder %s11, 0
    %p115 = por %p113, %p114
    %p116 = scmp.ne.s32.totalorder %s108, %s110
    %p117 = scmp.eq.s32.totalorder %s16, 1
    %p118 = por %p116, %p117
    %p119 = scmp.ne.s32.totalorder %s110, %s111
    %p120 = scmp.eq.s32.totalorder %s16, 0
    %p121 = por %p119, %p120
    %p122 = scmp.ne.s32.totalorder %s110, %s111
    %p123 = scmp.eq.s32.totalorder %s17, 1
    %p124 = por %p122, %p123
    %p126 = scmp.ne.s32.totalorder %s111, %s125
    %p127 = scmp.eq.s32.totalorder %s17, 0
    %p128 = por %p126, %p127
    %s129 = ssub.s32 %s11, %s18
    %p130 = scmp.eq.s32.totalorder %s129, 0
    %s132 = sadd.s32 %s131, 1
    %s133 = scalar_select %p130, %s131, %s132
    %p136 = pneg %p130
    %p137 = scmp.eq.s32.totalorder %s11, 1
    %p138 = por %p136, %p137
    %p139 = scmp.ne.s32.totalorder %s131, %s134
    %p140 = scmp.eq.s32.totalorder %s11, 0
    %p141 = por %p139, %p140
    %p142 = scmp.ne.s32.totalorder %s131, %s134
    %p143 = scmp.eq.s32.totalorder %s16, 1
    %p144 = por %p142, %p143
    %p145 = scmp.ne.s32.totalorder %s134, %s135
    %p146 = scmp.eq.s32.totalorder %s16, 0
    %p147 = por %p145, %p146
    %p148 = scmp.ne.s32.totalorder %s134, %s135
    %p149 = scmp.eq.s32.totalorder %s17, 1
    %p150 = por %p148, %p149
    %p152 = scmp.ne.s32.totalorder %s135, %s151
    %p153 = scmp.eq.s32.totalorder %s17, 0
    %p154 = por %p152, %p153
    %p155 = scmp.le.s32.totalorder 1, %s11
    %p156 = scmp.lt.s32.totalorder %s11, 3
    %p157 = pnand %p155, %p156
    %p158 = pneg %p157
    // Predicated region
    $region9: #{shadow_removal_forward.11} parent=5 // pred_check
      _
    $region10: #{shadow_removal_forward.11} parent=5 // pred_check_branch
      %160 = sbr.rel (%p157) target = $region12
    $region11: #{shadow_removal_forward.11} parent=5 // pred_region
      %s161 = ssub.s32 %s11, 1
      // Predicated region
      $region13: #{shadow_removal_forward.11} parent=11 // pred_check
        %p162 = pneg %p58
      $region14: #{shadow_removal_forward.11} parent=11 // pred_check_branch
        %164 = sbr.rel (%p162) target = $region16
      $region15: #{shadow_removal_forward.11} parent=11 // pred_region
        _
      $region16: #{shadow_removal_forward.11} parent=11 // pred_fallthru
        _
      // Predicated region
      $region17: #{shadow_removal_forward.11} parent=11 // pred_check
        %p165 = pneg %p79
      $region18: #{shadow_removal_forward.11} parent=11 // pred_check_branch
        %167 = sbr.rel (%p165) target = $region20
      $region19: #{shadow_removal_forward.11} parent=11 // pred_region
        _
      $region20: #{shadow_removal_forward.11} parent=11 // pred_fallthru
        _
      // Predicated region
      $region21: #{shadow_removal_forward.11} parent=11 // pred_check
        %p168 = pneg %p100
      $region22: #{shadow_removal_forward.11} parent=11 // pred_check_branch
        %170 = sbr.rel (%p168) target = $region24
      $region23: #{shadow_removal_forward.11} parent=11 // pred_region
        _
      $region24: #{shadow_removal_forward.11} parent=11 // pred_fallthru
        _
      // Predicated region
      $region25: #{shadow_removal_forward.11} parent=11 // pred_check
        %p171 = pneg %p121
      $region26: #{shadow_removal_forward.11} parent=11 // pred_check_branch
        %173 = sbr.rel (%p171) target = $region28
      $region27: #{shadow_removal_forward.11} parent=11 // pred_region
        _
      $region28: #{shadow_removal_forward.11} parent=11 // pred_fallthru
        _
    $region12: #{shadow_removal_forward.11} parent=5 // pred_fallthru
      _
    %p174 = scmp.lt.s32.totalorder %s11, 2
    // Predicated region
    $region29: #{shadow_removal_forward.11} parent=5 // pred_check
      %p175 = pneg %p174
    $region30: #{shadow_removal_forward.11} parent=5 // pred_check_branch
      %177 = sbr.rel (%p175) target = $region32
    $region31: #{shadow_removal_forward.11} parent=5 // pred_region
      // Predicated region
      $region33: #{shadow_removal_forward.11} parent=31 // pred_check
        %p178 = pneg %p31
      $region34: #{shadow_removal_forward.11} parent=31 // pred_check_branch
        %180 = sbr.rel (%p178) target = $region36
      $region35: #{shadow_removal_forward.11} parent=31 // pred_region
        %p181 = scmp.lt.s32.totalorder %s11, 1
        %s182 = scalar_select %p181, %s11, 1
        %s183 = smul.addr %s182, 32
        %s184 = smul.addr %s183, 4
        %s185 = scalar_lea.vmem %s0, %s184
      $region36: #{shadow_removal_forward.11} parent=31 // pred_fallthru
        _
    $region32: #{shadow_removal_forward.11} parent=5 // pred_fallthru
      _
    %p186 = scmp.le.s32.totalorder 1, %s11
    %p187 = scmp.lt.s32.totalorder %s11, 3
    %p188 = pnand %p186, %p187
    %p189 = pneg %p188
    // Predicated region
    $region37: #{shadow_removal_forward.11} parent=5 // pred_check
      _
    $region38: #{shadow_removal_forward.11} parent=5 // pred_check_branch
      %191 = sbr.rel (%p188) target = $region40
    $region39: #{shadow_removal_forward.11} parent=5 // pred_region
      %s192 = ssub.s32 %s11, 1
      %p193 = scmp.lt.s32.totalorder %s16, 1
      %s194 = scalar_select %p193, %s16, 1
      %s195 = smul.addr %s194, 32
      %s196 = smul.addr %s195, 4
      %s197 = scalar_lea.vmem %s0, %s196
      %p198 = pneg %p37
      %p199 = pneg %p34
      %p200 = pneg %p58
      %p201 = pneg %p55
      %p202 = pneg %p79
      %p203 = pneg %p76
      %p204 = pneg %p100
      %p205 = pneg %p97
      %p206 = pneg %p121
      %p207 = pneg %p118
      %p208 = pneg %p147
      %p209 = pneg %p144
      %p210 = scmp.lt.s32.totalorder %s16, 1
      %s211 = scalar_select %p210, %s16, 1
      %s212 = smul.addr %s211, 32
      %s213 = smul.addr %s212, 8
      %s214 = scalar_lea.vmem %s5, %s213
      %p215 = scmp.lt.s32.totalorder %s16, 1
      %s216 = scalar_select %p215, %s16, 1
      %s217 = smul.addr %s216, 32
      %s218 = smul.addr %s217, 4
      %s219 = scalar_lea.vmem %s0, %s218
      %p220 = scmp.lt.s32.totalorder %s16, 1
      %s221 = scalar_select %p220, %s16, 1
      %s222 = smul.addr %s221, 32
      %s223 = smul.addr %s222, 8
      %s224 = scalar_lea.vmem %s5, %s223
      %v226 = vld [vmem:[%s219] sm:$0xf]
      %v227 = vld [vmem:[%s219 + $0x4] sm:$0xf]
      %v228 = vld [vmem:[%s219 + $0x8] sm:$0xf]
      %v229 = vld [vmem:[%s219 + $0xc] sm:$0xf]
      %v230 = vld [vmem:[%s219 + $0x10] sm:$0xf]
      %v231 = vld [vmem:[%s219 + $0x14] sm:$0xf]
      %v232 = vld [vmem:[%s219 + $0x18] sm:$0xf]
      %v233 = vld [vmem:[%s219 + $0x1c] sm:$0xf]
      %v234 = vld [vmem:[%s219 + $0x20] sm:$0xf]
      %v235 = vld [vmem:[%s219 + $0x24] sm:$0xf]
      %v236 = vld [vmem:[%s219 + $0x28] sm:$0xf]
      %v237 = vld [vmem:[%s219 + $0x2c] sm:$0xf]
      %v238 = vld [vmem:[%s219 + $0x30] sm:$0xf]
      %v239 = vld [vmem:[%s219 + $0x34] sm:$0xf]
      %v240 = vld [vmem:[%s219 + $0x38] sm:$0xf]
      %v241 = vld [vmem:[%s219 + $0x3c] sm:$0xf]
      %v242 = vld [vmem:[%s219 + $0x40] sm:$0xf]
      %v243 = vld [vmem:[%s219 + $0x44] sm:$0xf]
      %v244 = vld [vmem:[%s219 + $0x48] sm:$0xf]
      %v245 = vld [vmem:[%s219 + $0x4c] sm:$0xf]
      %v246 = vld [vmem:[%s219 + $0x50] sm:$0xf]
      %v247 = vld [vmem:[%s219 + $0x54] sm:$0xf]
      %v248 = vld [vmem:[%s219 + $0x58] sm:$0xf]
      %v249 = vld [vmem:[%s219 + $0x5c] sm:$0xf]
      %v250 = vld [vmem:[%s219 + $0x60] sm:$0xf]
      %v251 = vld [vmem:[%s219 + $0x64] sm:$0xf]
      %v252 = vld [vmem:[%s219 + $0x68] sm:$0xf]
      %v253 = vld [vmem:[%s219 + $0x6c] sm:$0xf]
      %v254 = vld [vmem:[%s219 + $0x70] sm:$0xf]
      %v255 = vld [vmem:[%s219 + $0x74] sm:$0xf]
      %v256 = vld [vmem:[%s219 + $0x78] sm:$0xf]
      %v257 = vld [vmem:[%s219 + $0x7c] sm:$0xf]
      %v258 = vld [vmem:[%s1] sm:$0xf]
      %v259 = vld [vmem:[%s2] sm:$0x1]
      %v261 = vlaneseq
      %v262 = vshrl.u32 %v261, 7
      %v263 = vsub.s32 0, %v262
      %v264 = vrot.slane %v259, %v263
      %v298 = vunpack.c.l.b16 %v226
      %v299 = vunpack.c.l.b16 %v227
      %v300 = vunpack.c.l.b16 %v228
      %v301 = vunpack.c.l.b16 %v229
      %v302 = vunpack.c.l.b16 %v230
      %v303 = vunpack.c.l.b16 %v231
      %v304 = vunpack.c.l.b16 %v232
      %v305 = vunpack.c.l.b16 %v233
      %v306 = vunpack.c.l.b16 %v234
      %v307 = vunpack.c.l.b16 %v235
      %v308 = vunpack.c.l.b16 %v236
      %v309 = vunpack.c.l.b16 %v237
      %v310 = vunpack.c.l.b16 %v238
      %v311 = vunpack.c.l.b16 %v239
      %v312 = vunpack.c.l.b16 %v240
      %v313 = vunpack.c.l.b16 %v241
      %v314 = vunpack.c.l.b16 %v242
      %v315 = vunpack.c.l.b16 %v243
      %v316 = vunpack.c.l.b16 %v244
      %v317 = vunpack.c.l.b16 %v245
      %v318 = vunpack.c.l.b16 %v246
      %v319 = vunpack.c.l.b16 %v247
      %v320 = vunpack.c.l.b16 %v248
      %v321 = vunpack.c.l.b16 %v249
      %v322 = vunpack.c.l.b16 %v250
      %v323 = vunpack.c.l.b16 %v251
      %v324 = vunpack.c.l.b16 %v252
      %v325 = vunpack.c.l.b16 %v253
      %v326 = vunpack.c.l.b16 %v254
      %v327 = vunpack.c.l.b16 %v255
      %v328 = vunpack.c.l.b16 %v256
      %v329 = vunpack.c.l.b16 %v257
      %v330 = vpack.c.b16 %v299, %v298
      %v331 = vpack.c.b16 %v301, %v300
      %v332 = vpack.c.b16 %v303, %v302
      %v333 = vpack.c.b16 %v305, %v304
      %v334 = vpack.c.b16 %v307, %v306
      %v335 = vpack.c.b16 %v309, %v308
      %v336 = vpack.c.b16 %v311, %v310
      %v337 = vpack.c.b16 %v313, %v312
      %v338 = vpack.c.b16 %v315, %v314
      %v339 = vpack.c.b16 %v317, %v316
      %v340 = vpack.c.b16 %v319, %v318
      %v341 = vpack.c.b16 %v321, %v320
      %v342 = vpack.c.b16 %v323, %v322
      %v343 = vpack.c.b16 %v325, %v324
      %v344 = vpack.c.b16 %v327, %v326
      %v345 = vpack.c.b16 %v329, %v328
      %vm346 = vcmask 64512
      %v348 = vsel %vm346, %v330, 0
      %v351 = vsel %vm346, %v331, 0
      %v354 = vsel %vm346, %v332, 0
      %v357 = vsel %vm346, %v333, 0
      %v360 = vsel %vm346, %v334, 0
      %v363 = vsel %vm346, %v335, 0
      %v366 = vsel %vm346, %v336, 0
      %v369 = vsel %vm346, %v337, 0
      %v372 = vsel %vm346, %v338, 0
      %v375 = vsel %vm346, %v339, 0
      %v378 = vsel %vm346, %v340, 0
      %v381 = vsel %vm346, %v341, 0
      %v384 = vsel %vm346, %v342, 0
      %v387 = vsel %vm346, %v343, 0
      %v390 = vsel %vm346, %v344, 0
      %v393 = vsel %vm346, %v345, 0
      %vm395 = vcmask 1043456
      %v397 = vsel %vm395, %v258, 0
      %399 = vmatprep.subr.bf16.mxu0 0
      %400 = vmatpush1.bf16.msra.mxu0 %v397
      %401 = vmatprep.subr.bf16.mxu0 0
      %402 = vmatpush1.bf16.msra.mxu0 0
      %403 = vmatprep.subr.bf16.mxu0 0
      %404 = vmatpush1.bf16.msra.mxu0 0
      %405 = vmatprep.subr.bf16.mxu0 0
      %406 = vmatpush1.bf16.msra.mxu0 0
      %407 = vmatprep.subr.bf16.mxu0 0
      %408 = vmatpush1.bf16.msra.mxu0 0
      %409 = vmatprep.subr.bf16.mxu0 0
      %410 = vmatpush1.bf16.msra.mxu0 0
      %411 = vmatprep.subr.bf16.mxu0 0
      %412 = vmatpush1.bf16.msra.mxu0 0
      %413 = vmatprep.subr.bf16.mxu0 0
      %414 = vmatpush1.bf16.msra.mxu0 0
      %415 = vmatprep.subr.bf16.mxu0 0
      %416 = vmatpush1.bf16.msra.mxu0 0
      %417 = vmatprep.subr.bf16.mxu0 0
      %418 = vmatpush1.bf16.msra.mxu0 0
      %419 = vmatprep.subr.bf16.mxu0 0
      %420 = vmatpush1.bf16.msra.mxu0 0
      %421 = vmatprep.subr.bf16.mxu0 0
      %422 = vmatpush1.bf16.msra.mxu0 0
      %423 = vmatprep.subr.bf16.mxu0 0
      %424 = vmatpush1.bf16.msra.mxu0 0
      %425 = vmatprep.subr.bf16.mxu0 0
      %426 = vmatpush1.bf16.msra.mxu0 0
      %427 = vmatprep.subr.bf16.mxu0 0
      %428 = vmatpush1.bf16.msra.mxu0 0
      %429 = vmatprep.subr.bf16.mxu0 0
      %430 = vmatpush1.bf16.msra.mxu0 0
      %431 = vmatprep.mubr.bf16.mxu0 0
      %432 = vmatmul.mubr.bf16.gmra.mrb[0].mxu0 %v348
      %v433 = vpop.f32.mrb[0].mxu0
      %v434 = vadd.f32 %v264, %v433
      %v435 = vpop.f32.mrb[0].mxu0
      %v436 = vpop.f32.mrb[0].mxu0
      %v437 = vadd.f32 %v264, %v436
      %v438 = vpop.f32.mrb[0].mxu0
      %439 = vmatprep.mubr.bf16.mxu0 0
      %440 = vmatmul.mubr.bf16.gmra.mrb[0].mxu0 %v351
      %v441 = vpop.f32.mrb[0].mxu0
      %v442 = vadd.f32 %v264, %v441
      %v443 = vpop.f32.mrb[0].mxu0
      %v444 = vpop.f32.mrb[0].mxu0
      %v445 = vadd.f32 %v264, %v444
      %v446 = vpop.f32.mrb[0].mxu0
      %447 = vmatprep.mubr.bf16.mxu0 0
      %448 = vmatmul.mubr.bf16.gmra.mrb[0].mxu0 %v354
      %v449 = vpop.f32.mrb[0].mxu0
      %v450 = vadd.f32 %v264, %v449
      %v451 = vpop.f32.mrb[0].mxu0
      %v452 = vpop.f32.mrb[0].mxu0
      %v453 = vadd.f32 %v264, %v452
      %v454 = vpop.f32.mrb[0].mxu0
      %455 = vmatprep.mubr.bf16.mxu0 0
      %456 = vmatmul.mubr.bf16.gmra.mrb[0].mxu0 %v357
      %v457 = vpop.f32.mrb[0].mxu0
      %v458 = vadd.f32 %v264, %v457
      %v459 = vpop.f32.mrb[0].mxu0
      %v460 = vpop.f32.mrb[0].mxu0
      %v461 = vadd.f32 %v264, %v460
      %v462 = vpop.f32.mrb[0].mxu0
      %463 = vmatprep.mubr.bf16.mxu0 0
      %464 = vmatmul.mubr.bf16.gmra.mrb[0].mxu0 %v360
      %v465 = vpop.f32.mrb[0].mxu0
      %v466 = vadd.f32 %v264, %v465
      %v467 = vpop.f32.mrb[0].mxu0
      %v468 = vpop.f32.mrb[0].mxu0
      %v469 = vadd.f32 %v264, %v468
      %v470 = vpop.f32.mrb[0].mxu0
      %471 = vmatprep.mubr.bf16.mxu0 0
      %472 = vmatmul.mubr.bf16.gmra.mrb[0].mxu0 %v363
      %v473 = vpop.f32.mrb[0].mxu0
      %v474 = vadd.f32 %v264, %v473
      %v475 = vpop.f32.mrb[0].mxu0
      %v476 = vpop.f32.mrb[0].mxu0
      %v477 = vadd.f32 %v264, %v476
      %v478 = vpop.f32.mrb[0].mxu0
      %479 = vmatprep.mubr.bf16.mxu0 0
      %480 = vmatmul.mubr.bf16.gmra.mrb[0].mxu0 %v366
      %v481 = vpop.f32.mrb[0].mxu0
      %v482 = vadd.f32 %v264, %v481
      %v483 = vpop.f32.mrb[0].mxu0
      %v484 = vpop.f32.mrb[0].mxu0
      %v485 = vadd.f32 %v264, %v484
      %v486 = vpop.f32.mrb[0].mxu0
      %487 = vmatprep.mubr.bf16.mxu0 0
      %488 = vmatmul.mubr.bf16.gmra.mrb[0].mxu0 %v369
      %v489 = vpop.f32.mrb[0].mxu0
      %v490 = vadd.f32 %v264, %v489
      %v491 = vpop.f32.mrb[0].mxu0
      %v492 = vpop.f32.mrb[0].mxu0
      %v493 = vadd.f32 %v264, %v492
      %v494 = vpop.f32.mrb[0].mxu0
      %495 = vmatprep.mubr.bf16.mxu0 0
      %496 = vmatmul.mubr.bf16.gmra.mrb[0].mxu0 %v372
      %v497 = vpop.f32.mrb[0].mxu0
      %v498 = vadd.f32 %v264, %v497
      %v499 = vpop.f32.mrb[0].mxu0
      %v500 = vpop.f32.mrb[0].mxu0
      %v501 = vadd.f32 %v264, %v500
      %v502 = vpop.f32.mrb[0].mxu0
      %503 = vmatprep.mubr.bf16.mxu0 0
      %504 = vmatmul.mubr.bf16.gmra.mrb[0].mxu0 %v375
      %v505 = vpop.f32.mrb[0].mxu0
      %v506 = vadd.f32 %v264, %v505
      %v507 = vpop.f32.mrb[0].mxu0
      %v508 = vpop.f32.mrb[0].mxu0
      %v509 = vadd.f32 %v264, %v508
      %v510 = vpop.f32.mrb[0].mxu0
      %511 = vmatprep.mubr.bf16.mxu0 0
      %512 = vmatmul.mubr.bf16.gmra.mrb[0].mxu0 %v378
      %v513 = vpop.f32.mrb[0].mxu0
      %v514 = vadd.f32 %v264, %v513
      %v515 = vpop.f32.mrb[0].mxu0
      %v516 = vpop.f32.mrb[0].mxu0
      %v517 = vadd.f32 %v264, %v516
      %v518 = vpop.f32.mrb[0].mxu0
      %519 = vmatprep.mubr.bf16.mxu0 0
      %520 = vmatmul.mubr.bf16.gmra.mrb[0].mxu0 %v381
      %v521 = vpop.f32.mrb[0].mxu0
      %v522 = vadd.f32 %v264, %v521
      %v523 = vpop.f32.mrb[0].mxu0
      %v524 = vpop.f32.mrb[0].mxu0
      %v525 = vadd.f32 %v264, %v524
      %v526 = vpop.f32.mrb[0].mxu0
      %527 = vmatprep.mubr.bf16.mxu0 0
      %528 = vmatmul.mubr.bf16.gmra.mrb[0].mxu0 %v384
      %v529 = vpop.f32.mrb[0].mxu0
      %v530 = vadd.f32 %v264, %v529
      %v531 = vpop.f32.mrb[0].mxu0
      %v532 = vpop.f32.mrb[0].mxu0
      %v533 = vadd.f32 %v264, %v532
      %v534 = vpop.f32.mrb[0].mxu0
      %535 = vmatprep.mubr.bf16.mxu0 0
      %536 = vmatmul.mubr.bf16.gmra.mrb[0].mxu0 %v387
      %v537 = vpop.f32.mrb[0].mxu0
      %v538 = vadd.f32 %v264, %v537
      %v539 = vpop.f32.mrb[0].mxu0
      %v540 = vpop.f32.mrb[0].mxu0
      %v541 = vadd.f32 %v264, %v540
      %v542 = vpop.f32.mrb[0].mxu0
      %543 = vmatprep.mubr.bf16.mxu0 0
      %544 = vmatmul.mubr.bf16.gmra.mrb[0].mxu0 %v390
      %v545 = vpop.f32.mrb[0].mxu0
      %v546 = vadd.f32 %v264, %v545
      %v547 = vpop.f32.mrb[0].mxu0
      %v548 = vpop.f32.mrb[0].mxu0
      %v549 = vadd.f32 %v264, %v548
      %v550 = vpop.f32.mrb[0].mxu0
      %551 = vmatprep.mubr.bf16.mxu0 0
      %552 = vmatmul.mubr.bf16.gmra.mrb[0].mxu0 %v393
      %v553 = vpop.f32.mrb[0].mxu0
      %v554 = vadd.f32 %v264, %v553
      %v555 = vpop.f32.mrb[0].mxu0
      %v556 = vpop.f32.mrb[0].mxu0
      %v557 = vadd.f32 %v264, %v556
      %v558 = vpop.f32.mrb[0].mxu0
      %559 = vdwg.mxu0
      %v560 = vpack.c.bf16 %v437, %v434
      %v561 = vpack.c.bf16 %v445, %v442
      %v562 = vpack.c.bf16 %v453, %v450
      %v563 = vpack.c.bf16 %v461, %v458
      %v564 = vpack.c.bf16 %v469, %v466
      %v565 = vpack.c.bf16 %v477, %v474
      %v566 = vpack.c.bf16 %v485, %v482
      %v567 = vpack.c.bf16 %v493, %v490
      %v568 = vpack.c.bf16 %v501, %v498
      %v569 = vpack.c.bf16 %v509, %v506
      %v570 = vpack.c.bf16 %v517, %v514
      %v571 = vpack.c.bf16 %v525, %v522
      %v572 = vpack.c.bf16 %v533, %v530
      %v573 = vpack.c.bf16 %v541, %v538
      %v574 = vpack.c.bf16 %v549, %v546
      %v575 = vpack.c.bf16 %v557, %v554
      %vm576 = vcmask 523264
      %v578 = vsel %vm576, %v560, 0
      %v581 = vsel %vm576, %v561, 0
      %v584 = vsel %vm576, %v562, 0
      %v587 = vsel %vm576, %v563, 0
      %v590 = vsel %vm576, %v564, 0
      %v593 = vsel %vm576, %v565, 0
      %v596 = vsel %vm576, %v566, 0
      %v599 = vsel %vm576, %v567, 0
      %v602 = vsel %vm576, %v568, 0
      %v605 = vsel %vm576, %v569, 0
      %v608 = vsel %vm576, %v570, 0
      %v611 = vsel %vm576, %v571, 0
      %v614 = vsel %vm576, %v572, 0
      %v617 = vsel %vm576, %v573, 0
      %v620 = vsel %vm576, %v574, 0
      %v623 = vsel %vm576, %v575, 0
      %625 = vmatprep.subr.bf16.mxu0 0
      %626 = vmatpush1.bf16.xpose.msra.mxu0 %v578
      %627 = vmatprep.subr.bf16.mxu0 0
      %628 = vmatpush1.bf16.xpose.msra.mxu0 %v581
      %629 = vmatprep.subr.bf16.mxu0 0
      %630 = vmatpush1.bf16.xpose.msra.mxu0 %v584
      %631 = vmatprep.subr.bf16.mxu0 0
      %632 = vmatpush1.bf16.xpose.msra.mxu0 %v587
      %633 = vmatprep.subr.bf16.mxu0 0
      %634 = vmatpush1.bf16.xpose.msra.mxu0 %v590
      %635 = vmatprep.subr.bf16.mxu0 0
      %636 = vmatpush1.bf16.xpose.msra.mxu0 %v593
      %637 = vmatprep.subr.bf16.mxu0 0
      %638 = vmatpush1.bf16.xpose.msra.mxu0 %v596
      %639 = vmatprep.subr.bf16.mxu0 0
      %640 = vmatpush1.bf16.xpose.msra.mxu0 %v599
      %641 = vmatprep.subr.bf16.mxu0 0
      %642 = vmatpush1.bf16.xpose.msra.mxu0 %v602
      %643 = vmatprep.subr.bf16.mxu0 0
      %644 = vmatpush1.bf16.xpose.msra.mxu0 %v605
      %645 = vmatprep.subr.bf16.mxu0 0
      %646 = vmatpush1.bf16.xpose.msra.mxu0 %v608
      %647 = vmatprep.subr.bf16.mxu0 0
      %648 = vmatpush1.bf16.xpose.msra.mxu0 %v611
      %649 = vmatprep.subr.bf16.mxu0 0
      %650 = vmatpush1.bf16.xpose.msra.mxu0 %v614
      %651 = vmatprep.subr.bf16.mxu0 0
      %652 = vmatpush1.bf16.xpose.msra.mxu0 %v617
      %653 = vmatprep.subr.bf16.mxu0 0
      %654 = vmatpush1.bf16.xpose.msra.mxu0 %v620
      %655 = vmatprep.subr.bf16.mxu0 0
      %656 = vmatpush1.bf16.xpose.msra.mxu0 %v623
      %657 = vmatprep.mubr.bf16.mxu0 0
      %658 = vmatmul.mubr.bf16.gmra.mrb[0].mxu0 %v578
      %v659 = vpop.f32.mrb[0].mxu0
      %v660 = vadd.f32 0.0, %v659
      %v661 = vpop.f32.mrb[0].mxu0
      %v662 = vadd.f32 0.0, %v661
      %v663 = vpop.f32.mrb[0].mxu0
      %v664 = vadd.f32 0.0, %v663
      %v665 = vpop.f32.mrb[0].mxu0
      %v666 = vadd.f32 0.0, %v665
      %667 = vmatprep.mubr.bf16.mxu0 0
      %668 = vmatmul.mubr.bf16.gmra.mrb[0].mxu0 %v581
      %v669 = vpop.f32.mrb[0].mxu0
      %v670 = vadd.f32 0.0, %v669
      %v671 = vpop.f32.mrb[0].mxu0
      %v672 = vadd.f32 0.0, %v671
      %v673 = vpop.f32.mrb[0].mxu0
      %v674 = vadd.f32 0.0, %v673
      %v675 = vpop.f32.mrb[0].mxu0
      %v676 = vadd.f32 0.0, %v675
      %677 = vmatprep.mubr.bf16.mxu0 0
      %678 = vmatmul.mubr.bf16.gmra.mrb[0].mxu0 %v584
      %v679 = vpop.f32.mrb[0].mxu0
      %v680 = vadd.f32 0.0, %v679
      %v681 = vpop.f32.mrb[0].mxu0
      %v682 = vadd.f32 0.0, %v681
      %v683 = vpop.f32.mrb[0].mxu0
      %v684 = vadd.f32 0.0, %v683
      %v685 = vpop.f32.mrb[0].mxu0
      %v686 = vadd.f32 0.0, %v685
      %687 = vmatprep.mubr.bf16.mxu0 0
      %688 = vmatmul.mubr.bf16.gmra.mrb[0].mxu0 %v587
      %v689 = vpop.f32.mrb[0].mxu0
      %v690 = vadd.f32 0.0, %v689
      %v691 = vpop.f32.mrb[0].mxu0
      %v692 = vadd.f32 0.0, %v691
      %v693 = vpop.f32.mrb[0].mxu0
      %v694 = vadd.f32 0.0, %v693
      %v695 = vpop.f32.mrb[0].mxu0
      %v696 = vadd.f32 0.0, %v695
      %697 = vmatprep.mubr.bf16.mxu0 0
      %698 = vmatmul.mubr.bf16.gmra.mrb[0].mxu0 %v590
      %v699 = vpop.f32.mrb[0].mxu0
      %v700 = vadd.f32 0.0, %v699
      %v701 = vpop.f32.mrb[0].mxu0
      %v702 = vadd.f32 0.0, %v701
      %v703 = vpop.f32.mrb[0].mxu0
      %v704 = vadd.f32 0.0, %v703
      %v705 = vpop.f32.mrb[0].mxu0
      %v706 = vadd.f32 0.0, %v705
      %707 = vmatprep.mubr.bf16.mxu0 0
      %708 = vmatmul.mubr.bf16.gmra.mrb[0].mxu0 %v593
      %v709 = vpop.f32.mrb[0].mxu0
      %v710 = vadd.f32 0.0, %v709
      %v711 = vpop.f32.mrb[0].mxu0
      %v712 = vadd.f32 0.0, %v711
      %v713 = vpop.f32.mrb[0].mxu0
      %v714 = vadd.f32 0.0, %v713
      %v715 = vpop.f32.mrb[0].mxu0
      %v716 = vadd.f32 0.0, %v715
      %717 = vmatprep.mubr.bf16.mxu0 0
      %718 = vmatmul.mubr.bf16.gmra.mrb[0].mxu0 %v596
      %v719 = vpop.f32.mrb[0].mxu0
      %v720 = vadd.f32 0.0, %v719
      %v721 = vpop.f32.mrb[0].mxu0
      %v722 = vadd.f32 0.0, %v721
      %v723 = vpop.f32.mrb[0].mxu0
      %v724 = vadd.f32 0.0, %v723
      %v725 = vpop.f32.mrb[0].mxu0
      %v726 = vadd.f32 0.0, %v725
      %727 = vmatprep.mubr.bf16.mxu0 0
      %728 = vmatmul.mubr.bf16.gmra.mrb[0].mxu0 %v599
      %v729 = vpop.f32.mrb[0].mxu0
      %v730 = vadd.f32 0.0, %v729
      %v731 = vpop.f32.mrb[0].mxu0
      %v732 = vadd.f32 0.0, %v731
      %v733 = vpop.f32.mrb[0].mxu0
      %v734 = vadd.f32 0.0, %v733
      %v735 = vpop.f32.mrb[0].mxu0
      %v736 = vadd.f32 0.0, %v735
      %737 = vmatprep.mubr.bf16.mxu0 0
      %738 = vmatmul.mubr.bf16.gmra.mrb[0].mxu0 %v602
      %v739 = vpop.f32.mrb[0].mxu0
      %v740 = vadd.f32 0.0, %v739
      %v741 = vpop.f32.mrb[0].mxu0
      %v742 = vadd.f32 0.0, %v741
      %v743 = vpop.f32.mrb[0].mxu0
      %v744 = vadd.f32 0.0, %v743
      %v745 = vpop.f32.mrb[0].mxu0
      %v746 = vadd.f32 0.0, %v745
      %747 = vmatprep.mubr.bf16.mxu0 0
      %748 = vmatmul.mubr.bf16.gmra.mrb[0].mxu0 %v605
      %v749 = vpop.f32.mrb[0].mxu0
      %v750 = vadd.f32 0.0, %v749
      %v751 = vpop.f32.mrb[0].mxu0
      %v752 = vadd.f32 0.0, %v751
      %v753 = vpop.f32.mrb[0].mxu0
      %v754 = vadd.f32 0.0, %v753
      %v755 = vpop.f32.mrb[0].mxu0
      %v756 = vadd.f32 0.0, %v755
      %757 = vmatprep.mubr.bf16.mxu0 0
      %758 = vmatmul.mubr.bf16.gmra.mrb[0].mxu0 %v608
      %v759 = vpop.f32.mrb[0].mxu0
      %v760 = vadd.f32 0.0, %v759
      %v761 = vpop.f32.mrb[0].mxu0
      %v762 = vadd.f32 0.0, %v761
      %v763 = vpop.f32.mrb[0].mxu0
      %v764 = vadd.f32 0.0, %v763
      %v765 = vpop.f32.mrb[0].mxu0
      %v766 = vadd.f32 0.0, %v765
      %767 = vmatprep.mubr.bf16.mxu0 0
      %768 = vmatmul.mubr.bf16.gmra.mrb[0].mxu0 %v611
      %v769 = vpop.f32.mrb[0].mxu0
      %v770 = vadd.f32 0.0, %v769
      %v771 = vpop.f32.mrb[0].mxu0
      %v772 = vadd.f32 0.0, %v771
      %v773 = vpop.f32.mrb[0].mxu0
      %v774 = vadd.f32 0.0, %v773
      %v775 = vpop.f32.mrb[0].mxu0
      %v776 = vadd.f32 0.0, %v775
      %777 = vmatprep.mubr.bf16.mxu0 0
      %778 = vmatmul.mubr.bf16.gmra.mrb[0].mxu0 %v614
      %v779 = vpop.f32.mrb[0].mxu0
      %v780 = vadd.f32 0.0, %v779
      %v781 = vpop.f32.mrb[0].mxu0
      %v782 = vadd.f32 0.0, %v781
      %v783 = vpop.f32.mrb[0].mxu0
      %v784 = vadd.f32 0.0, %v783
      %v785 = vpop.f32.mrb[0].mxu0
      %v786 = vadd.f32 0.0, %v785
      %787 = vmatprep.mubr.bf16.mxu0 0
      %788 = vmatmul.mubr.bf16.gmra.mrb[0].mxu0 %v617
      %v789 = vpop.f32.mrb[0].mxu0
      %v790 = vadd.f32 0.0, %v789
      %v791 = vpop.f32.mrb[0].mxu0
      %v792 = vadd.f32 0.0, %v791
      %v793 = vpop.f32.mrb[0].mxu0
      %v794 = vadd.f32 0.0, %v793
      %v795 = vpop.f32.mrb[0].mxu0
      %v796 = vadd.f32 0.0, %v795
      %797 = vmatprep.mubr.bf16.mxu0 0
      %798 = vmatmul.mubr.bf16.gmra.mrb[0].mxu0 %v620
      %v799 = vpop.f32.mrb[0].mxu0
      %v800 = vadd.f32 0.0, %v799
      %v801 = vpop.f32.mrb[0].mxu0
      %v802 = vadd.f32 0.0, %v801
      %v803 = vpop.f32.mrb[0].mxu0
      %v804 = vadd.f32 0.0, %v803
      %v805 = vpop.f32.mrb[0].mxu0
      %v806 = vadd.f32 0.0, %v805
      %807 = vmatprep.mubr.bf16.mxu0 0
      %808 = vmatmul.mubr.bf16.gmra.mrb[0].mxu0 %v623
      %v809 = vpop.f32.mrb[0].mxu0
      %v810 = vadd.f32 0.0, %v809
      %v811 = vpop.f32.mrb[0].mxu0
      %v812 = vadd.f32 0.0, %v811
      %v813 = vpop.f32.mrb[0].mxu0
      %v814 = vadd.f32 0.0, %v813
      %v815 = vpop.f32.mrb[0].mxu0
      %v816 = vadd.f32 0.0, %v815
      %817 = vdwg.mxu0
      %v818 = vmul.f32 %v660, 0.125
      %v819 = vmul.f32 %v662, 0.125
      %v820 = vmul.f32 %v664, 0.125
      %v821 = vmul.f32 %v666, 0.125
      %v822 = vmul.f32 %v670, 0.125
      %v823 = vmul.f32 %v672, 0.125
      %v824 = vmul.f32 %v674, 0.125
      %v825 = vmul.f32 %v676, 0.125
      %v826 = vmul.f32 %v680, 0.125
      %v827 = vmul.f32 %v682, 0.125
      %v828 = vmul.f32 %v684, 0.125
      %v829 = vmul.f32 %v686, 0.125
      %v830 = vmul.f32 %v690, 0.125
      %v831 = vmul.f32 %v692, 0.125
      %v832 = vmul.f32 %v694, 0.125
      %v833 = vmul.f32 %v696, 0.125
      %v834 = vmul.f32 %v700, 0.125
      %v835 = vmul.f32 %v702, 0.125
      %v836 = vmul.f32 %v704, 0.125
      %v837 = vmul.f32 %v706, 0.125
      %v838 = vmul.f32 %v710, 0.125
      %v839 = vmul.f32 %v712, 0.125
      %v840 = vmul.f32 %v714, 0.125
      %v841 = vmul.f32 %v716, 0.125
      %v842 = vmul.f32 %v720, 0.125
      %v843 = vmul.f32 %v722, 0.125
      %v844 = vmul.f32 %v724, 0.125
      %v845 = vmul.f32 %v726, 0.125
      %v846 = vmul.f32 %v730, 0.125
      %v847 = vmul.f32 %v732, 0.125
      %v848 = vmul.f32 %v734, 0.125
      %v849 = vmul.f32 %v736, 0.125
      %v850 = vmul.f32 %v740, 0.125
      %v851 = vmul.f32 %v742, 0.125
      %v852 = vmul.f32 %v744, 0.125
      %v853 = vmul.f32 %v746, 0.125
      %v854 = vmul.f32 %v750, 0.125
      %v855 = vmul.f32 %v752, 0.125
      %v856 = vmul.f32 %v754, 0.125
      %v857 = vmul.f32 %v756, 0.125
      %v858 = vmul.f32 %v760, 0.125
      %v859 = vmul.f32 %v762, 0.125
      %v860 = vmul.f32 %v764, 0.125
      %v861 = vmul.f32 %v766, 0.125
      %v862 = vmul.f32 %v770, 0.125
      %v863 = vmul.f32 %v772, 0.125
      %v864 = vmul.f32 %v774, 0.125
      %v865 = vmul.f32 %v776, 0.125
      %v866 = vmul.f32 %v780, 0.125
      %v867 = vmul.f32 %v782, 0.125
      %v868 = vmul.f32 %v784, 0.125
      %v869 = vmul.f32 %v786, 0.125
      %v870 = vmul.f32 %v790, 0.125
      %v871 = vmul.f32 %v792, 0.125
      %v872 = vmul.f32 %v794, 0.125
      %v873 = vmul.f32 %v796, 0.125
      %v874 = vmul.f32 %v800, 0.125
      %v875 = vmul.f32 %v802, 0.125
      %v876 = vmul.f32 %v804, 0.125
      %v877 = vmul.f32 %v806, 0.125
      %v878 = vmul.f32 %v810, 0.125
      %v879 = vmul.f32 %v812, 0.125
      %v880 = vmul.f32 %v814, 0.125
      %v881 = vmul.f32 %v816, 0.125
      %v882 = vmax.f32 %v818, %v819
      %883 = vmax.xlane.f32.xlu0 %v882
      %v884 = vpop.xlane.xlu0 %883
      %v885 = vmax.f32 %v820, %v821
      %886 = vmax.xlane.f32.xlu0 %v885
      %v887 = vpop.xlane.xlu0 %886
      %v888 = vmax.f32 %v822, %v823
      %889 = vmax.xlane.f32.xlu0 %v888
      %v890 = vpop.xlane.xlu0 %889
      %v891 = vmax.f32 %v824, %v825
      %892 = vmax.xlane.f32.xlu0 %v891
      %v893 = vpop.xlane.xlu0 %892
      %v894 = vmax.f32 %v826, %v827
      %895 = vmax.xlane.f32.xlu0 %v894
      %v896 = vpop.xlane.xlu0 %895
      %v897 = vmax.f32 %v828, %v829
      %898 = vmax.xlane.f32.xlu0 %v897
      %v899 = vpop.xlane.xlu0 %898
      %v900 = vmax.f32 %v830, %v831
      %901 = vmax.xlane.f32.xlu0 %v900
      %v902 = vpop.xlane.xlu0 %901
      %v903 = vmax.f32 %v832, %v833
      %904 = vmax.xlane.f32.xlu0 %v903
      %v905 = vpop.xlane.xlu0 %904
      %v906 = vmax.f32 %v834, %v835
      %907 = vmax.xlane.f32.xlu0 %v906
      %v908 = vpop.xlane.xlu0 %907
      %v909 = vmax.f32 %v836, %v837
      %910 = vmax.xlane.f32.xlu0 %v909
      %v911 = vpop.xlane.xlu0 %910
      %v912 = vmax.f32 %v838, %v839
      %913 = vmax.xlane.f32.xlu0 %v912
      %v914 = vpop.xlane.xlu0 %913
      %v915 = vmax.f32 %v840, %v841
      %916 = vmax.xlane.f32.xlu0 %v915
      %v917 = vpop.xlane.xlu0 %916
      %v918 = vmax.f32 %v842, %v843
      %919 = vmax.xlane.f32.xlu0 %v918
      %v920 = vpop.xlane.xlu0 %919
      %v921 = vmax.f32 %v844, %v845
      %922 = vmax.xlane.f32.xlu0 %v921
      %v923 = vpop.xlane.xlu0 %922
      %v924 = vmax.f32 %v846, %v847
      %925 = vmax.xlane.f32.xlu0 %v924
      %v926 = vpop.xlane.xlu0 %925
      %v927 = vmax.f32 %v848, %v849
      %928 = vmax.xlane.f32.xlu0 %v927
      %v929 = vpop.xlane.xlu0 %928
      %v930 = vmax.f32 %v850, %v851
      %931 = vmax.xlane.f32.xlu0 %v930
      %v932 = vpop.xlane.xlu0 %931
      %v933 = vmax.f32 %v852, %v853
      %934 = vmax.xlane.f32.xlu0 %v933
      %v935 = vpop.xlane.xlu0 %934
      %v936 = vmax.f32 %v854, %v855
      %937 = vmax.xlane.f32.xlu0 %v936
      %v938 = vpop.xlane.xlu0 %937
      %v939 = vmax.f32 %v856, %v857
      %940 = vmax.xlane.f32.xlu0 %v939
      %v941 = vpop.xlane.xlu0 %940
      %v942 = vmax.f32 %v858, %v859
      %943 = vmax.xlane.f32.xlu0 %v942
      %v944 = vpop.xlane.xlu0 %943
      %v945 = vmax.f32 %v860, %v861
      %946 = vmax.xlane.f32.xlu0 %v945
      %v947 = vpop.xlane.xlu0 %946
      %v948 = vmax.f32 %v862, %v863
      %949 = vmax.xlane.f32.xlu0 %v948
      %v950 = vpop.xlane.xlu0 %949
      %v951 = vmax.f32 %v864, %v865
      %952 = vmax.xlane.f32.xlu0 %v951
      %v953 = vpop.xlane.xlu0 %952
      %v954 = vmax.f32 %v866, %v867
      %955 = vmax.xlane.f32.xlu0 %v954
      %v956 = vpop.xlane.xlu0 %955
      %v957 = vmax.f32 %v868, %v869
      %958 = vmax.xlane.f32.xlu0 %v957
      %v959 = vpop.xlane.xlu0 %958
      %v960 = vmax.f32 %v870, %v871
      %961 = vmax.xlane.f32.xlu0 %v960
      %v962 = vpop.xlane.xlu0 %961
      %v963 = vmax.f32 %v872, %v873
      %964 = vmax.xlane.f32.xlu0 %v963
      %v965 = vpop.xlane.xlu0 %964
      %v966 = vmax.f32 %v874, %v875
      %967 = vmax.xlane.f32.xlu0 %v966
      %v968 = vpop.xlane.xlu0 %967
      %v969 = vmax.f32 %v876, %v877
      %970 = vmax.xlane.f32.xlu0 %v969
      %v971 = vpop.xlane.xlu0 %970
      %v972 = vmax.f32 %v878, %v879
      %973 = vmax.xlane.f32.xlu0 %v972
      %v974 = vpop.xlane.xlu0 %973
      %v975 = vmax.f32 %v880, %v881
      %976 = vmax.xlane.f32.xlu0 %v975
      %v977 = vpop.xlane.xlu0 %976
      %v978 = vsub.f32 %v818, %v884
      %v979 = vsub.f32 %v819, %v884
      %v980 = vsub.f32 %v820, %v887
      %v981 = vsub.f32 %v821, %v887
      %v982 = vsub.f32 %v822, %v890
      %v983 = vsub.f32 %v823, %v890
      %v984 = vsub.f32 %v824, %v893
      %v985 = vsub.f32 %v825, %v893
      %v986 = vsub.f32 %v826, %v896
      %v987 = vsub.f32 %v827, %v896
      %v988 = vsub.f32 %v828, %v899
      %v989 = vsub.f32 %v829, %v899
      %v990 = vsub.f32 %v830, %v902
      %v991 = vsub.f32 %v831, %v902
      %v992 = vsub.f32 %v832, %v905
      %v993 = vsub.f32 %v833, %v905
      %v994 = vsub.f32 %v834, %v908
      %v995 = vsub.f32 %v835, %v908
      %v996 = vsub.f32 %v836, %v911
      %v997 = vsub.f32 %v837, %v911
      %v998 = vsub.f32 %v838, %v914
      %v999 = vsub.f32 %v839, %v914
      %v1000 = vsub.f32 %v840, %v917
      %v1001 = vsub.f32 %v841, %v917
      %v1002 = vsub.f32 %v842, %v920
      %v1003 = vsub.f32 %v843, %v920
      %v1004 = vsub.f32 %v844, %v923
      %v1005 = vsub.f32 %v845, %v923
      %v1006 = vsub.f32 %v846, %v926
      %v1007 = vsub.f32 %v847, %v926
      %v1008 = vsub.f32 %v848, %v929
      %v1009 = vsub.f32 %v849, %v929
      %v1010 = vsub.f32 %v850, %v932
      %v1011 = vsub.f32 %v851, %v932
      %v1012 = vsub.f32 %v852, %v935
      %v1013 = vsub.f32 %v853, %v935
      %v1014 = vsub.f32 %v854, %v938
      %v1015 = vsub.f32 %v855, %v938
      %v1016 = vsub.f32 %v856, %v941
      %v1017 = vsub.f32 %v857, %v941
      %v1018 = vsub.f32 %v858, %v944
      %v1019 = vsub.f32 %v859, %v944
      %v1020 = vsub.f32 %v860, %v947
      %v1021 = vsub.f32 %v861, %v947
      %v1022 = vsub.f32 %v862, %v950
      %v1023 = vsub.f32 %v863, %v950
      %v1024 = vsub.f32 %v864, %v953
      %v1025 = vsub.f32 %v865, %v953
      %v1026 = vsub.f32 %v866, %v956
      %v1027 = vsub.f32 %v867, %v956
      %v1028 = vsub.f32 %v868, %v959
      %v1029 = vsub.f32 %v869, %v959
      %v1030 = vsub.f32 %v870, %v962
      %v1031 = vsub.f32 %v871, %v962
      %v1032 = vsub.f32 %v872, %v965
      %v1033 = vsub.f32 %v873, %v965
      %v1034 = vsub.f32 %v874, %v968
      %v1035 = vsub.f32 %v875, %v968
      %v1036 = vsub.f32 %v876, %v971
      %v1037 = vsub.f32 %v877, %v971
      %v1038 = vsub.f32 %v878, %v974
      %v1039 = vsub.f32 %v879, %v974
      %v1040 = vsub.f32 %v880, %v977
      %v1041 = vsub.f32 %v881, %v977
      %v1042 = vmul.f32 %v978, 1.442695
      %v1043 = vpow.pop %v1042
      %v1044 = vmul.f32 %v979, 1.442695
      %v1045 = vpow.pop %v1044
      %v1046 = vmul.f32 %v980, 1.442695
      %v1047 = vpow.pop %v1046
      %v1048 = vmul.f32 %v981, 1.442695
      %v1049 = vpow.pop %v1048
      %v1050 = vmul.f32 %v982, 1.442695
      %v1051 = vpow.pop %v1050
      %v1052 = vmul.f32 %v983, 1.442695
      %v1053 = vpow.pop %v1052
      %v1054 = vmul.f32 %v984, 1.442695
      %v1055 = vpow.pop %v1054
      %v1056 = vmul.f32 %v985, 1.442695
      %v1057 = vpow.pop %v1056
      %v1058 = vmul.f32 %v986, 1.442695
      %v1059 = vpow.pop %v1058
      %v1060 = vmul.f32 %v987, 1.442695
      %v1061 = vpow.pop %v1060
      %v1062 = vmul.f32 %v988, 1.442695
      %v1063 = vpow.pop %v1062
      %v1064 = vmul.f32 %v989, 1.442695
      %v1065 = vpow.pop %v1064
      %v1066 = vmul.f32 %v990, 1.442695
      %v1067 = vpow.pop %v1066
      %v1068 = vmul.f32 %v991, 1.442695
      %v1069 = vpow.pop %v1068
      %v1070 = vmul.f32 %v992, 1.442695
      %v1071 = vpow.pop %v1070
      %v1072 = vmul.f32 %v993, 1.442695
      %v1073 = vpow.pop %v1072
      %v1074 = vmul.f32 %v994, 1.442695
      %v1075 = vpow.pop %v1074
      %v1076 = vmul.f32 %v995, 1.442695
      %v1077 = vpow.pop %v1076
      %v1078 = vmul.f32 %v996, 1.442695
      %v1079 = vpow.pop %v1078
      %v1080 = vmul.f32 %v997, 1.442695
      %v1081 = vpow.pop %v1080
      %v1082 = vmul.f32 %v998, 1.442695
      %v1083 = vpow.pop %v1082
      %v1084 = vmul.f32 %v999, 1.442695
      %v1085 = vpow.pop %v1084
      %v1086 = vmul.f32 %v1000, 1.442695
      %v1087 = vpow.pop %v1086
      %v1088 = vmul.f32 %v1001, 1.442695
      %v1089 = vpow.pop %v1088
      %v1090 = vmul.f32 %v1002, 1.442695
      %v1091 = vpow.pop %v1090
      %v1092 = vmul.f32 %v1003, 1.442695
      %v1093 = vpow.pop %v1092
      %v1094 = vmul.f32 %v1004, 1.442695
      %v1095 = vpow.pop %v1094
      %v1096 = vmul.f32 %v1005, 1.442695
      %v1097 = vpow.pop %v1096
      %v1098 = vmul.f32 %v1006, 1.442695
      %v1099 = vpow.pop %v1098
      %v1100 = vmul.f32 %v1007, 1.442695
      %v1101 = vpow.pop %v1100
      %v1102 = vmul.f32 %v1008, 1.442695
      %v1103 = vpow.pop %v1102
      %v1104 = vmul.f32 %v1009, 1.442695
      %v1105 = vpow.pop %v1104
      %v1106 = vmul.f32 %v1010, 1.442695
      %v1107 = vpow.pop %v1106
      %v1108 = vmul.f32 %v1011, 1.442695
      %v1109 = vpow.pop %v1108
      %v1110 = vmul.f32 %v1012, 1.442695
      %v1111 = vpow.pop %v1110
      %v1112 = vmul.f32 %v1013, 1.442695
      %v1113 = vpow.pop %v1112
      %v1114 = vmul.f32 %v1014, 1.442695
      %v1115 = vpow.pop %v1114
      %v1116 = vmul.f32 %v1015, 1.442695
      %v1117 = vpow.pop %v1116
      %v1118 = vmul.f32 %v1016, 1.442695
      %v1119 = vpow.pop %v1118
      %v1120 = vmul.f32 %v1017, 1.442695
      %v1121 = vpow.pop %v1120
      %v1122 = vmul.f32 %v1018, 1.442695
      %v1123 = vpow.pop %v1122
      %v1124 = vmul.f32 %v1019, 1.442695
      %v1125 = vpow.pop %v1124
      %v1126 = vmul.f32 %v1020, 1.442695
      %v1127 = vpow.pop %v1126
      %v1128 = vmul.f32 %v1021, 1.442695
      %v1129 = vpow.pop %v1128
      %v1130 = vmul.f32 %v1022, 1.442695
      %v1131 = vpow.pop %v1130
      %v1132 = vmul.f32 %v1023, 1.442695
      %v1133 = vpow.pop %v1132
      %v1134 = vmul.f32 %v1024, 1.442695
      %v1135 = vpow.pop %v1134
      %v1136 = vmul.f32 %v1025, 1.442695
      %v1137 = vpow.pop %v1136
      %v1138 = vmul.f32 %v1026, 1.442695
      %v1139 = vpow.pop %v1138
      %v1140 = vmul.f32 %v1027, 1.442695
      %v1141 = vpow.pop %v1140
      %v1142 = vmul.f32 %v1028, 1.442695
      %v1143 = vpow.pop %v1142
      %v1144 = vmul.f32 %v1029, 1.442695
      %v1145 = vpow.pop %v1144
      %v1146 = vmul.f32 %v1030, 1.442695
      %v1147 = vpow.pop %v1146
      %v1148 = vmul.f32 %v1031, 1.442695
      %v1149 = vpow.pop %v1148
      %v1150 = vmul.f32 %v1032, 1.442695
      %v1151 = vpow.pop %v1150
      %v1152 = vmul.f32 %v1033, 1.442695
      %v1153 = vpow.pop %v1152
      %v1154 = vmul.f32 %v1034, 1.442695
      %v1155 = vpow.pop %v1154
      %v1156 = vmul.f32 %v1035, 1.442695
      %v1157 = vpow.pop %v1156
      %v1158 = vmul.f32 %v1036, 1.442695
      %v1159 = vpow.pop %v1158
      %v1160 = vmul.f32 %v1037, 1.442695
      %v1161 = vpow.pop %v1160
      %v1162 = vmul.f32 %v1038, 1.442695
      %v1163 = vpow.pop %v1162
      %v1164 = vmul.f32 %v1039, 1.442695
      %v1165 = vpow.pop %v1164
      %v1166 = vmul.f32 %v1040, 1.442695
      %v1167 = vpow.pop %v1166
      %v1168 = vmul.f32 %v1041, 1.442695
      %v1169 = vpow.pop %v1168
      %v1170 = vadd.f32 %v1043, %v1045
      %1171 = vadd.xlane.f32.xlu0 %v1170
      %v1172 = vpop.xlane.xlu0 %1171
      %v1173 = vadd.f32 %v1047, %v1049
      %1174 = vadd.xlane.f32.xlu0 %v1173
      %v1175 = vpop.xlane.xlu0 %1174
      %v1176 = vadd.f32 %v1051, %v1053
      %1177 = vadd.xlane.f32.xlu0 %v1176
      %v1178 = vpop.xlane.xlu0 %1177
      %v1179 = vadd.f32 %v1055, %v1057
      %1180 = vadd.xlane.f32.xlu0 %v1179
      %v1181 = vpop.xlane.xlu0 %1180
      %v1182 = vadd.f32 %v1059, %v1061
      %1183 = vadd.xlane.f32.xlu0 %v1182
      %v1184 = vpop.xlane.xlu0 %1183
      %v1185 = vadd.f32 %v1063, %v1065
      %1186 = vadd.xlane.f32.xlu0 %v1185
      %v1187 = vpop.xlane.xlu0 %1186
      %v1188 = vadd.f32 %v1067, %v1069
      %1189 = vadd.xlane.f32.xlu0 %v1188
      %v1190 = vpop.xlane.xlu0 %1189
      %v1191 = vadd.f32 %v1071, %v1073
      %1192 = vadd.xlane.f32.xlu0 %v1191
      %v1193 = vpop.xlane.xlu0 %1192
      %v1194 = vadd.f32 %v1075, %v1077
      %1195 = vadd.xlane.f32.xlu0 %v1194
      %v1196 = vpop.xlane.xlu0 %1195
      %v1197 = vadd.f32 %v1079, %v1081
      %1198 = vadd.xlane.f32.xlu0 %v1197
      %v1199 = vpop.xlane.xlu0 %1198
      %v1200 = vadd.f32 %v1083, %v1085
      %1201 = vadd.xlane.f32.xlu0 %v1200
      %v1202 = vpop.xlane.xlu0 %1201
      %v1203 = vadd.f32 %v1087, %v1089
      %1204 = vadd.xlane.f32.xlu0 %v1203
      %v1205 = vpop.xlane.xlu0 %1204
      %v1206 = vadd.f32 %v1091, %v1093
      %1207 = vadd.xlane.f32.xlu0 %v1206
      %v1208 = vpop.xlane.xlu0 %1207
      %v1209 = vadd.f32 %v1095, %v1097
      %1210 = vadd.xlane.f32.xlu0 %v1209
      %v1211 = vpop.xlane.xlu0 %1210
      %v1212 = vadd.f32 %v1099, %v1101
      %1213 = vadd.xlane.f32.xlu0 %v1212
      %v1214 = vpop.xlane.xlu0 %1213
      %v1215 = vadd.f32 %v1103, %v1105
      %1216 = vadd.xlane.f32.xlu0 %v1215
      %v1217 = vpop.xlane.xlu0 %1216
      %v1218 = vadd.f32 %v1107, %v1109
      %1219 = vadd.xlane.f32.xlu0 %v1218
      %v1220 = vpop.xlane.xlu0 %1219
      %v1221 = vadd.f32 %v1111, %v1113
      %1222 = vadd.xlane.f32.xlu0 %v1221
      %v1223 = vpop.xlane.xlu0 %1222
      %v1224 = vadd.f32 %v1115, %v1117
      %1225 = vadd.xlane.f32.xlu0 %v1224
      %v1226 = vpop.xlane.xlu0 %1225
      %v1227 = vadd.f32 %v1119, %v1121
      %1228 = vadd.xlane.f32.xlu0 %v1227
      %v1229 = vpop.xlane.xlu0 %1228
      %v1230 = vadd.f32 %v1123, %v1125
      %1231 = vadd.xlane.f32.xlu0 %v1230
      %v1232 = vpop.xlane.xlu0 %1231
      %v1233 = vadd.f32 %v1127, %v1129
      %1234 = vadd.xlane.f32.xlu0 %v1233
      %v1235 = vpop.xlane.xlu0 %1234
      %v1236 = vadd.f32 %v1131, %v1133
      %1237 = vadd.xlane.f32.xlu0 %v1236
      %v1238 = vpop.xlane.xlu0 %1237
      %v1239 = vadd.f32 %v1135, %v1137
      %1240 = vadd.xlane.f32.xlu0 %v1239
      %v1241 = vpop.xlane.xlu0 %1240
      %v1242 = vadd.f32 %v1139, %v1141
      %1243 = vadd.xlane.f32.xlu0 %v1242
      %v1244 = vpop.xlane.xlu0 %1243
      %v1245 = vadd.f32 %v1143, %v1145
      %1246 = vadd.xlane.f32.xlu0 %v1245
      %v1247 = vpop.xlane.xlu0 %1246
      %v1248 = vadd.f32 %v1147, %v1149
      %1249 = vadd.xlane.f32.xlu0 %v1248
      %v1250 = vpop.xlane.xlu0 %1249
      %v1251 = vadd.f32 %v1151, %v1153
      %1252 = vadd.xlane.f32.xlu0 %v1251
      %v1253 = vpop.xlane.xlu0 %1252
      %v1254 = vadd.f32 %v1155, %v1157
      %1255 = vadd.xlane.f32.xlu0 %v1254
      %v1256 = vpop.xlane.xlu0 %1255
      %v1257 = vadd.f32 %v1159, %v1161
      %1258 = vadd.xlane.f32.xlu0 %v1257
      %v1259 = vpop.xlane.xlu0 %1258
      %v1260 = vadd.f32 %v1163, %v1165
      %1261 = vadd.xlane.f32.xlu0 %v1260
      %v1262 = vpop.xlane.xlu0 %1261
      %v1263 = vadd.f32 %v1167, %v1169
      %1264 = vadd.xlane.f32.xlu0 %v1263
      %v1265 = vpop.xlane.xlu0 %1264
      %v1266 = vrcp.pop %v1172
      %v1267 = vrcp.pop %v1175
      %v1268 = vrcp.pop %v1178
      %v1269 = vrcp.pop %v1181
      %v1270 = vrcp.pop %v1184
      %v1271 = vrcp.pop %v1187
      %v1272 = vrcp.pop %v1190
      %v1273 = vrcp.pop %v1193
      %v1274 = vrcp.pop %v1196
      %v1275 = vrcp.pop %v1199
      %v1276 = vrcp.pop %v1202
      %v1277 = vrcp.pop %v1205
      %v1278 = vrcp.pop %v1208
      %v1279 = vrcp.pop %v1211
      %v1280 = vrcp.pop %v1214
      %v1281 = vrcp.pop %v1217
      %v1282 = vrcp.pop %v1220
      %v1283 = vrcp.pop %v1223
      %v1284 = vrcp.pop %v1226
      %v1285 = vrcp.pop %v1229
      %v1286 = vrcp.pop %v1232
      %v1287 = vrcp.pop %v1235
      %v1288 = vrcp.pop %v1238
      %v1289 = vrcp.pop %v1241
      %v1290 = vrcp.pop %v1244
      %v1291 = vrcp.pop %v1247
      %v1292 = vrcp.pop %v1250
      %v1293 = vrcp.pop %v1253
      %v1294 = vrcp.pop %v1256
      %v1295 = vrcp.pop %v1259
      %v1296 = vrcp.pop %v1262
      %v1297 = vrcp.pop %v1265
      %v1298 = vmul.f32 %v1043, %v1266
      %v1299 = vmul.f32 %v1045, %v1266
      %v1300 = vmul.f32 %v1047, %v1267
      %v1301 = vmul.f32 %v1049, %v1267
      %v1302 = vmul.f32 %v1051, %v1268
      %v1303 = vmul.f32 %v1053, %v1268
      %v1304 = vmul.f32 %v1055, %v1269
      %v1305 = vmul.f32 %v1057, %v1269
      %v1306 = vmul.f32 %v1059, %v1270
      %v1307 = vmul.f32 %v1061, %v1270
      %v1308 = vmul.f32 %v1063, %v1271
      %v1309 = vmul.f32 %v1065, %v1271
      %v1310 = vmul.f32 %v1067, %v1272
      %v1311 = vmul.f32 %v1069, %v1272
      %v1312 = vmul.f32 %v1071, %v1273
      %v1313 = vmul.f32 %v1073, %v1273
      %v1314 = vmul.f32 %v1075, %v1274
      %v1315 = vmul.f32 %v1077, %v1274
      %v1316 = vmul.f32 %v1079, %v1275
      %v1317 = vmul.f32 %v1081, %v1275
      %v1318 = vmul.f32 %v1083, %v1276
      %v1319 = vmul.f32 %v1085, %v1276
      %v1320 = vmul.f32 %v1087, %v1277
      %v1321 = vmul.f32 %v1089, %v1277
      %v1322 = vmul.f32 %v1091, %v1278
      %v1323 = vmul.f32 %v1093, %v1278
      %v1324 = vmul.f32 %v1095, %v1279
      %v1325 = vmul.f32 %v1097, %v1279
      %v1326 = vmul.f32 %v1099, %v1280
      %v1327 = vmul.f32 %v1101, %v1280
      %v1328 = vmul.f32 %v1103, %v1281
      %v1329 = vmul.f32 %v1105, %v1281
      %v1330 = vmul.f32 %v1107, %v1282
      %v1331 = vmul.f32 %v1109, %v1282
      %v1332 = vmul.f32 %v1111, %v1283
      %v1333 = vmul.f32 %v1113, %v1283
      %v1334 = vmul.f32 %v1115, %v1284
      %v1335 = vmul.f32 %v1117, %v1284
      %v1336 = vmul.f32 %v1119, %v1285
      %v1337 = vmul.f32 %v1121, %v1285
      %v1338 = vmul.f32 %v1123, %v1286
      %v1339 = vmul.f32 %v1125, %v1286
      %v1340 = vmul.f32 %v1127, %v1287
      %v1341 = vmul.f32 %v1129, %v1287
      %v1342 = vmul.f32 %v1131, %v1288
      %v1343 = vmul.f32 %v1133, %v1288
      %v1344 = vmul.f32 %v1135, %v1289
      %v1345 = vmul.f32 %v1137, %v1289
      %v1346 = vmul.f32 %v1139, %v1290
      %v1347 = vmul.f32 %v1141, %v1290
      %v1348 = vmul.f32 %v1143, %v1291
      %v1349 = vmul.f32 %v1145, %v1291
      %v1350 = vmul.f32 %v1147, %v1292
      %v1351 = vmul.f32 %v1149, %v1292
      %v1352 = vmul.f32 %v1151, %v1293
      %v1353 = vmul.f32 %v1153, %v1293
      %v1354 = vmul.f32 %v1155, %v1294
      %v1355 = vmul.f32 %v1157, %v1294
      %v1356 = vmul.f32 %v1159, %v1295
      %v1357 = vmul.f32 %v1161, %v1295
      %v1358 = vmul.f32 %v1163, %v1296
      %v1359 = vmul.f32 %v1165, %v1296
      %v1360 = vmul.f32 %v1167, %v1297
      %v1361 = vmul.f32 %v1169, %v1297
      %v1362 = vld [vmem:[%s3] sm:$0xf]
      %v1363 = vld [vmem:[%s3 + $0x4] sm:$0xf]
      %v1364 = vld [vmem:[%s3 + $0x8] sm:$0xf]
      %v1365 = vld [vmem:[%s3 + $0xc] sm:$0xf]
      %v1366 = vld [vmem:[%s3 + $0x10] sm:$0xf]
      %v1367 = vld [vmem:[%s3 + $0x14] sm:$0xf]
      %v1368 = vld [vmem:[%s3 + $0x18] sm:$0xf]
      %v1369 = vld [vmem:[%s3 + $0x1c] sm:$0xf]
      %v1370 = vld [vmem:[%s4] sm:$0x1]
      %v1372 = vlaneseq
      %v1373 = vshrl.u32 %v1372, 7
      %v1374 = vsub.s32 0, %v1373
      %v1375 = vrot.slane %v1370, %v1374
      %v1385 = vunpack.c.l.b16 %v1362
      %v1386 = vunpack.c.l.b16 %v1363
      %v1387 = vunpack.c.l.b16 %v1364
      %v1388 = vunpack.c.l.b16 %v1365
      %v1389 = vunpack.c.l.b16 %v1366
      %v1390 = vunpack.c.l.b16 %v1367
      %v1391 = vunpack.c.l.b16 %v1368
      %v1392 = vunpack.c.l.b16 %v1369
      %v1393 = vpack.c.b16 %v1386, %v1385
      %v1394 = vpack.c.b16 %v1388, %v1387
      %v1395 = vpack.c.b16 %v1390, %v1389
      %v1396 = vpack.c.b16 %v1392, %v1391
      %1401 = vmatprep.subr.bf16.mxu0 0
      %1402 = vmatpush1.bf16.msra.mxu0 %v1393
      %1403 = vmatprep.subr.bf16.mxu0 0
      %1404 = vmatpush1.bf16.msra.mxu0 %v1394
      %1405 = vmatprep.subr.bf16.mxu0 0
      %1406 = vmatpush1.bf16.msra.mxu0 %v1395
      %1407 = vmatprep.subr.bf16.mxu0 0
      %1408 = vmatpush1.bf16.msra.mxu0 %v1396
      %1409 = vmatprep.subr.bf16.mxu0 0
      %1410 = vmatpush1.bf16.msra.mxu0 0
      %1411 = vmatprep.subr.bf16.mxu0 0
      %1412 = vmatpush1.bf16.msra.mxu0 0
      %1413 = vmatprep.subr.bf16.mxu0 0
      %1414 = vmatpush1.bf16.msra.mxu0 0
      %1415 = vmatprep.subr.bf16.mxu0 0
      %1416 = vmatpush1.bf16.msra.mxu0 0
      %1417 = vmatprep.subr.bf16.mxu0 0
      %1418 = vmatpush1.bf16.msra.mxu0 0
      %1419 = vmatprep.subr.bf16.mxu0 0
      %1420 = vmatpush1.bf16.msra.mxu0 0
      %1421 = vmatprep.subr.bf16.mxu0 0
      %1422 = vmatpush1.bf16.msra.mxu0 0
      %1423 = vmatprep.subr.bf16.mxu0 0
      %1424 = vmatpush1.bf16.msra.mxu0 0
      %1425 = vmatprep.subr.bf16.mxu0 0
      %1426 = vmatpush1.bf16.msra.mxu0 0
      %1427 = vmatprep.subr.bf16.mxu0 0
      %1428 = vmatpush1.bf16.msra.mxu0 0
      %1429 = vmatprep.subr.bf16.mxu0 0
      %1430 = vmatpush1.bf16.msra.mxu0 0
      %1431 = vmatprep.subr.bf16.mxu0 0
      %1432 = vmatpush1.bf16.msra.mxu0 0
      %1433 = vmatprep.mubr.bf16.mxu0 0
      %1434 = vmatmul.mubr.bf16.gmra.mrb[0].mxu0 %v578
      %v1435 = vpop.f32.mrb[0].mxu0
      %v1436 = vadd.f32 %v1375, %v1435
      %v1437 = vpop.f32.mrb[0].mxu0
      %v1438 = vpop.f32.mrb[0].mxu0
      %v1439 = vadd.f32 %v1375, %v1438
      %v1440 = vpop.f32.mrb[0].mxu0
      %1441 = vmatprep.mubr.bf16.mxu0 0
      %1442 = vmatmul.mubr.bf16.gmra.mrb[0].mxu0 %v581
      %v1443 = vpop.f32.mrb[0].mxu0
      %v1444 = vadd.f32 %v1375, %v1443
      %v1445 = vpop.f32.mrb[0].mxu0
      %v1446 = vpop.f32.mrb[0].mxu0
      %v1447 = vadd.f32 %v1375, %v1446
      %v1448 = vpop.f32.mrb[0].mxu0
      %1449 = vmatprep.mubr.bf16.mxu0 0
      %1450 = vmatmul.mubr.bf16.gmra.mrb[0].mxu0 %v584
      %v1451 = vpop.f32.mrb[0].mxu0
      %v1452 = vadd.f32 %v1375, %v1451
      %v1453 = vpop.f32.mrb[0].mxu0
      %v1454 = vpop.f32.mrb[0].mxu0
      %v1455 = vadd.f32 %v1375, %v1454
      %v1456 = vpop.f32.mrb[0].mxu0
      %1457 = vmatprep.mubr.bf16.mxu0 0
      %1458 = vmatmul.mubr.bf16.gmra.mrb[0].mxu0 %v587
      %v1459 = vpop.f32.mrb[0].mxu0
      %v1460 = vadd.f32 %v1375, %v1459
      %v1461 = vpop.f32.mrb[0].mxu0
      %v1462 = vpop.f32.mrb[0].mxu0
      %v1463 = vadd.f32 %v1375, %v1462
      %v1464 = vpop.f32.mrb[0].mxu0
      %1465 = vmatprep.mubr.bf16.mxu0 0
      %1466 = vmatmul.mubr.bf16.gmra.mrb[0].mxu0 %v590
      %v1467 = vpop.f32.mrb[0].mxu0
      %v1468 = vadd.f32 %v1375, %v1467
      %v1469 = vpop.f32.mrb[0].mxu0
      %v1470 = vpop.f32.mrb[0].mxu0
      %v1471 = vadd.f32 %v1375, %v1470
      %v1472 = vpop.f32.mrb[0].mxu0
      %1473 = vmatprep.mubr.bf16.mxu0 0
      %1474 = vmatmul.mubr.bf16.gmra.mrb[0].mxu0 %v593
      %v1475 = vpop.f32.mrb[0].mxu0
      %v1476 = vadd.f32 %v1375, %v1475
      %v1477 = vpop.f32.mrb[0].mxu0
      %v1478 = vpop.f32.mrb[0].mxu0
      %v1479 = vadd.f32 %v1375, %v1478
      %v1480 = vpop.f32.mrb[0].mxu0
      %1481 = vmatprep.mubr.bf16.mxu0 0
      %1482 = vmatmul.mubr.bf16.gmra.mrb[0].mxu0 %v596
      %v1483 = vpop.f32.mrb[0].mxu0
      %v1484 = vadd.f32 %v1375, %v1483
      %v1485 = vpop.f32.mrb[0].mxu0
      %v1486 = vpop.f32.mrb[0].mxu0
      %v1487 = vadd.f32 %v1375, %v1486
      %v1488 = vpop.f32.mrb[0].mxu0
      %1489 = vmatprep.mubr.bf16.mxu0 0
      %1490 = vmatmul.mubr.bf16.gmra.mrb[0].mxu0 %v599
      %v1491 = vpop.f32.mrb[0].mxu0
      %v1492 = vadd.f32 %v1375, %v1491
      %v1493 = vpop.f32.mrb[0].mxu0
      %v1494 = vpop.f32.mrb[0].mxu0
      %v1495 = vadd.f32 %v1375, %v1494
      %v1496 = vpop.f32.mrb[0].mxu0
      %1497 = vmatprep.mubr.bf16.mxu0 0
      %1498 = vmatmul.mubr.bf16.gmra.mrb[0].mxu0 %v602
      %v1499 = vpop.f32.mrb[0].mxu0
      %v1500 = vadd.f32 %v1375, %v1499
      %v1501 = vpop.f32.mrb[0].mxu0
      %v1502 = vpop.f32.mrb[0].mxu0
      %v1503 = vadd.f32 %v1375, %v1502
      %v1504 = vpop.f32.mrb[0].mxu0
      %1505 = vmatprep.mubr.bf16.mxu0 0
      %1506 = vmatmul.mubr.bf16.gmra.mrb[0].mxu0 %v605
      %v1507 = vpop.f32.mrb[0].mxu0
      %v1508 = vadd.f32 %v1375, %v1507
      %v1509 = vpop.f32.mrb[0].mxu0
      %v1510 = vpop.f32.mrb[0].mxu0
      %v1511 = vadd.f32 %v1375, %v1510
      %v1512 = vpop.f32.mrb[0].mxu0
      %1513 = vmatprep.mubr.bf16.mxu0 0
      %1514 = vmatmul.mubr.bf16.gmra.mrb[0].mxu0 %v608
      %v1515 = vpop.f32.mrb[0].mxu0
      %v1516 = vadd.f32 %v1375, %v1515
      %v1517 = vpop.f32.mrb[0].mxu0
      %v1518 = vpop.f32.mrb[0].mxu0
      %v1519 = vadd.f32 %v1375, %v1518
      %v1520 = vpop.f32.mrb[0].mxu0
      %1521 = vmatprep.mubr.bf16.mxu0 0
      %1522 = vmatmul.mubr.bf16.gmra.mrb[0].mxu0 %v611
      %v1523 = vpop.f32.mrb[0].mxu0
      %v1524 = vadd.f32 %v1375, %v1523
      %v1525 = vpop.f32.mrb[0].mxu0
      %v1526 = vpop.f32.mrb[0].mxu0
      %v1527 = vadd.f32 %v1375, %v1526
      %v1528 = vpop.f32.mrb[0].mxu0
      %1529 = vmatprep.mubr.bf16.mxu0 0
      %1530 = vmatmul.mubr.bf16.gmra.mrb[0].mxu0 %v614
      %v1531 = vpop.f32.mrb[0].mxu0
      %v1532 = vadd.f32 %v1375, %v1531
      %v1533 = vpop.f32.mrb[0].mxu0
      %v1534 = vpop.f32.mrb[0].mxu0
      %v1535 = vadd.f32 %v1375, %v1534
      %v1536 = vpop.f32.mrb[0].mxu0
      %1537 = vmatprep.mubr.bf16.mxu0 0
      %1538 = vmatmul.mubr.bf16.gmra.mrb[0].mxu0 %v617
      %v1539 = vpop.f32.mrb[0].mxu0
      %v1540 = vadd.f32 %v1375, %v1539
      %v1541 = vpop.f32.mrb[0].mxu0
      %v1542 = vpop.f32.mrb[0].mxu0
      %v1543 = vadd.f32 %v1375, %v1542
      %v1544 = vpop.f32.mrb[0].mxu0
      %1545 = vmatprep.mubr.bf16.mxu0 0
      %1546 = vmatmul.mubr.bf16.gmra.mrb[0].mxu0 %v620
      %v1547 = vpop.f32.mrb[0].mxu0
      %v1548 = vadd.f32 %v1375, %v1547
      %v1549 = vpop.f32.mrb[0].mxu0
      %v1550 = vpop.f32.mrb[0].mxu0
      %v1551 = vadd.f32 %v1375, %v1550
      %v1552 = vpop.f32.mrb[0].mxu0
      %1553 = vmatprep.mubr.bf16.mxu0 0
      %1554 = vmatmul.mubr.bf16.gmra.mrb[0].mxu0 %v623
      %v1555 = vpop.f32.mrb[0].mxu0
      %v1556 = vadd.f32 %v1375, %v1555
      %v1557 = vpop.f32.mrb[0].mxu0
      %v1558 = vpop.f32.mrb[0].mxu0
      %v1559 = vadd.f32 %v1375, %v1558
      %v1560 = vpop.f32.mrb[0].mxu0
      %1561 = vdwg.mxu0
      %v1562 = vpack.c.bf16 %v1300, %v1298
      %v1563 = vpack.c.bf16 %v1301, %v1299
      %v1564 = vpack.c.bf16 %v1304, %v1302
      %v1565 = vpack.c.bf16 %v1305, %v1303
      %v1566 = vpack.c.bf16 %v1308, %v1306
      %v1567 = vpack.c.bf16 %v1309, %v1307
      %v1568 = vpack.c.bf16 %v1312, %v1310
      %v1569 = vpack.c.bf16 %v1313, %v1311
      %v1570 = vpack.c.bf16 %v1316, %v1314
      %v1571 = vpack.c.bf16 %v1317, %v1315
      %v1572 = vpack.c.bf16 %v1320, %v1318
      %v1573 = vpack.c.bf16 %v1321, %v1319
      %v1574 = vpack.c.bf16 %v1324, %v1322
      %v1575 = vpack.c.bf16 %v1325, %v1323
      %v1576 = vpack.c.bf16 %v1328, %v1326
      %v1577 = vpack.c.bf16 %v1329, %v1327
      %v1578 = vpack.c.bf16 %v1332, %v1330
      %v1579 = vpack.c.bf16 %v1333, %v1331
      %v1580 = vpack.c.bf16 %v1336, %v1334
      %v1581 = vpack.c.bf16 %v1337, %v1335
      %v1582 = vpack.c.bf16 %v1340, %v1338
      %v1583 = vpack.c.bf16 %v1341, %v1339
      %v1584 = vpack.c.bf16 %v1344, %v1342
      %v1585 = vpack.c.bf16 %v1345, %v1343
      %v1586 = vpack.c.bf16 %v1348, %v1346
      %v1587 = vpack.c.bf16 %v1349, %v1347
      %v1588 = vpack.c.bf16 %v1352, %v1350
      %v1589 = vpack.c.bf16 %v1353, %v1351
      %v1590 = vpack.c.bf16 %v1356, %v1354
      %v1591 = vpack.c.bf16 %v1357, %v1355
      %v1592 = vpack.c.bf16 %v1360, %v1358
      %v1593 = vpack.c.bf16 %v1361, %v1359
      %v1594 = vpack.c.bf16 %v1439, %v1436
      %v1595 = vpack.c.bf16 %v1447, %v1444
      %v1596 = vpack.c.bf16 %v1455, %v1452
      %v1597 = vpack.c.bf16 %v1463, %v1460
      %v1598 = vpack.c.bf16 %v1471, %v1468
      %v1599 = vpack.c.bf16 %v1479, %v1476
      %v1600 = vpack.c.bf16 %v1487, %v1484
      %v1601 = vpack.c.bf16 %v1495, %v1492
      %v1602 = vpack.c.bf16 %v1503, %v1500
      %v1603 = vpack.c.bf16 %v1511, %v1508
      %v1604 = vpack.c.bf16 %v1519, %v1516
      %v1605 = vpack.c.bf16 %v1527, %v1524
      %v1606 = vpack.c.bf16 %v1535, %v1532
      %v1607 = vpack.c.bf16 %v1543, %v1540
      %v1608 = vpack.c.bf16 %v1551, %v1548
      %v1609 = vpack.c.bf16 %v1559, %v1556
      %1610 = vmatprep.subr.bf16.mxu0 0
      %1611 = vmatpush1.bf16.msra.mxu0 %v1594
      %1612 = vmatprep.subr.bf16.mxu0 0
      %1613 = vmatpush1.bf16.msra.mxu0 %v1595
      %1614 = vmatprep.subr.bf16.mxu0 0
      %1615 = vmatpush1.bf16.msra.mxu0 %v1596
      %1616 = vmatprep.subr.bf16.mxu0 0
      %1617 = vmatpush1.bf16.msra.mxu0 %v1597
      %1618 = vmatprep.subr.bf16.mxu0 0
      %1619 = vmatpush1.bf16.msra.mxu0 %v1598
      %1620 = vmatprep.subr.bf16.mxu0 0
      %1621 = vmatpush1.bf16.msra.mxu0 %v1599
      %1622 = vmatprep.subr.bf16.mxu0 0
      %1623 = vmatpush1.bf16.msra.mxu0 %v1600
      %1624 = vmatprep.subr.bf16.mxu0 0
      %1625 = vmatpush1.bf16.msra.mxu0 %v1601
      %1626 = vmatprep.subr.bf16.mxu0 0
      %1627 = vmatpush1.bf16.msra.mxu0 %v1602
      %1628 = vmatprep.subr.bf16.mxu0 0
      %1629 = vmatpush1.bf16.msra.mxu0 %v1603
      %1630 = vmatprep.subr.bf16.mxu0 0
      %1631 = vmatpush1.bf16.msra.mxu0 %v1604
      %1632 = vmatprep.subr.bf16.mxu0 0
      %1633 = vmatpush1.bf16.msra.mxu0 %v1605
      %1634 = vmatprep.subr.bf16.mxu0 0
      %1635 = vmatpush1.bf16.msra.mxu0 %v1606
      %1636 = vmatprep.subr.bf16.mxu0 0
      %1637 = vmatpush1.bf16.msra.mxu0 %v1607
      %1638 = vmatprep.subr.bf16.mxu0 0
      %1639 = vmatpush1.bf16.msra.mxu0 %v1608
      %1640 = vmatprep.subr.bf16.mxu0 0
      %1641 = vmatpush1.bf16.msra.mxu0 %v1609
      %1642 = vmatprep.mubr.bf16.mxu0 %v1563
      %1643 = vmatmul.mubr.bf16.gmra.mrb[0].mxu0 %v1562
      %v1644 = vpop.f32.mrb[0].mxu0
      %v1645 = vadd.f32 0.0, %v1644
      %v1646 = vpop.f32.mrb[0].mxu0
      %v1647 = vpop.f32.mrb[0].mxu0
      %v1648 = vadd.f32 0.0, %v1647
      %v1649 = vpop.f32.mrb[0].mxu0
      %1650 = vmatprep.mubr.bf16.mxu0 %v1565
      %1651 = vmatmul.mubr.bf16.gmra.mrb[0].mxu0 %v1564
      %v1652 = vpop.f32.mrb[0].mxu0
      %v1653 = vadd.f32 0.0, %v1652
      %v1654 = vpop.f32.mrb[0].mxu0
      %v1655 = vpop.f32.mrb[0].mxu0
      %v1656 = vadd.f32 0.0, %v1655
      %v1657 = vpop.f32.mrb[0].mxu0
      %1658 = vmatprep.mubr.bf16.mxu0 %v1567
      %1659 = vmatmul.mubr.bf16.gmra.mrb[0].mxu0 %v1566
      %v1660 = vpop.f32.mrb[0].mxu0
      %v1661 = vadd.f32 0.0, %v1660
      %v1662 = vpop.f32.mrb[0].mxu0
      %v1663 = vpop.f32.mrb[0].mxu0
      %v1664 = vadd.f32 0.0, %v1663
      %v1665 = vpop.f32.mrb[0].mxu0
      %1666 = vmatprep.mubr.bf16.mxu0 %v1569
      %1667 = vmatmul.mubr.bf16.gmra.mrb[0].mxu0 %v1568
      %v1668 = vpop.f32.mrb[0].mxu0
      %v1669 = vadd.f32 0.0, %v1668
      %v1670 = vpop.f32.mrb[0].mxu0
      %v1671 = vpop.f32.mrb[0].mxu0
      %v1672 = vadd.f32 0.0, %v1671
      %v1673 = vpop.f32.mrb[0].mxu0
      %1674 = vmatprep.mubr.bf16.mxu0 %v1571
      %1675 = vmatmul.mubr.bf16.gmra.mrb[0].mxu0 %v1570
      %v1676 = vpop.f32.mrb[0].mxu0
      %v1677 = vadd.f32 0.0, %v1676
      %v1678 = vpop.f32.mrb[0].mxu0
      %v1679 = vpop.f32.mrb[0].mxu0
      %v1680 = vadd.f32 0.0, %v1679
      %v1681 = vpop.f32.mrb[0].mxu0
      %1682 = vmatprep.mubr.bf16.mxu0 %v1573
      %1683 = vmatmul.mubr.bf16.gmra.mrb[0].mxu0 %v1572
      %v1684 = vpop.f32.mrb[0].mxu0
      %v1685 = vadd.f32 0.0, %v1684
      %v1686 = vpop.f32.mrb[0].mxu0
      %v1687 = vpop.f32.mrb[0].mxu0
      %v1688 = vadd.f32 0.0, %v1687
      %v1689 = vpop.f32.mrb[0].mxu0
      %1690 = vmatprep.mubr.bf16.mxu0 %v1575
      %1691 = vmatmul.mubr.bf16.gmra.mrb[0].mxu0 %v1574
      %v1692 = vpop.f32.mrb[0].mxu0
      %v1693 = vadd.f32 0.0, %v1692
      %v1694 = vpop.f32.mrb[0].mxu0
      %v1695 = vpop.f32.mrb[0].mxu0
      %v1696 = vadd.f32 0.0, %v1695
      %v1697 = vpop.f32.mrb[0].mxu0
      %1698 = vmatprep.mubr.bf16.mxu0 %v1577
      %1699 = vmatmul.mubr.bf16.gmra.mrb[0].mxu0 %v1576
      %v1700 = vpop.f32.mrb[0].mxu0
      %v1701 = vadd.f32 0.0, %v1700
      %v1702 = vpop.f32.mrb[0].mxu0
      %v1703 = vpop.f32.mrb[0].mxu0
      %v1704 = vadd.f32 0.0, %v1703
      %v1705 = vpop.f32.mrb[0].mxu0
      %1706 = vmatprep.mubr.bf16.mxu0 %v1579
      %1707 = vmatmul.mubr.bf16.gmra.mrb[0].mxu0 %v1578
      %v1708 = vpop.f32.mrb[0].mxu0
      %v1709 = vadd.f32 0.0, %v1708
      %v1710 = vpop.f32.mrb[0].mxu0
      %v1711 = vpop.f32.mrb[0].mxu0
      %v1712 = vadd.f32 0.0, %v1711
      %v1713 = vpop.f32.mrb[0].mxu0
      %1714 = vmatprep.mubr.bf16.mxu0 %v1581
      %1715 = vmatmul.mubr.bf16.gmra.mrb[0].mxu0 %v1580
      %v1716 = vpop.f32.mrb[0].mxu0
      %v1717 = vadd.f32 0.0, %v1716
      %v1718 = vpop.f32.mrb[0].mxu0
      %v1719 = vpop.f32.mrb[0].mxu0
      %v1720 = vadd.f32 0.0, %v1719
      %v1721 = vpop.f32.mrb[0].mxu0
      %1722 = vmatprep.mubr.bf16.mxu0 %v1583
      %1723 = vmatmul.mubr.bf16.gmra.mrb[0].mxu0 %v1582
      %v1724 = vpop.f32.mrb[0].mxu0
      %v1725 = vadd.f32 0.0, %v1724
      %v1726 = vpop.f32.mrb[0].mxu0
      %v1727 = vpop.f32.mrb[0].mxu0
      %v1728 = vadd.f32 0.0, %v1727
      %v1729 = vpop.f32.mrb[0].mxu0
      %1730 = vmatprep.mubr.bf16.mxu0 %v1585
      %1731 = vmatmul.mubr.bf16.gmra.mrb[0].mxu0 %v1584
      %v1732 = vpop.f32.mrb[0].mxu0
      %v1733 = vadd.f32 0.0, %v1732
      %v1734 = vpop.f32.mrb[0].mxu0
      %v1735 = vpop.f32.mrb[0].mxu0
      %v1736 = vadd.f32 0.0, %v1735
      %v1737 = vpop.f32.mrb[0].mxu0
      %1738 = vmatprep.mubr.bf16.mxu0 %v1587
      %1739 = vmatmul.mubr.bf16.gmra.mrb[0].mxu0 %v1586
      %v1740 = vpop.f32.mrb[0].mxu0
      %v1741 = vadd.f32 0.0, %v1740
      %v1742 = vpop.f32.mrb[0].mxu0
      %v1743 = vpop.f32.mrb[0].mxu0
      %v1744 = vadd.f32 0.0, %v1743
      %v1745 = vpop.f32.mrb[0].mxu0
      %1746 = vmatprep.mubr.bf16.mxu0 %v1589
      %1747 = vmatmul.mubr.bf16.gmra.mrb[0].mxu0 %v1588
      %v1748 = vpop.f32.mrb[0].mxu0
      %v1749 = vadd.f32 0.0, %v1748
      %v1750 = vpop.f32.mrb[0].mxu0
      %v1751 = vpop.f32.mrb[0].mxu0
      %v1752 = vadd.f32 0.0, %v1751
      %v1753 = vpop.f32.mrb[0].mxu0
      %1754 = vmatprep.mubr.bf16.mxu0 %v1591
      %1755 = vmatmul.mubr.bf16.gmra.mrb[0].mxu0 %v1590
      %v1756 = vpop.f32.mrb[0].mxu0
      %v1757 = vadd.f32 0.0, %v1756
      %v1758 = vpop.f32.mrb[0].mxu0
      %v1759 = vpop.f32.mrb[0].mxu0
      %v1760 = vadd.f32 0.0, %v1759
      %v1761 = vpop.f32.mrb[0].mxu0
      %1762 = vmatprep.mubr.bf16.mxu0 %v1593
      %1763 = vmatmul.mubr.bf16.gmra.mrb[0].mxu0 %v1592
      %v1764 = vpop.f32.mrb[0].mxu0
      %v1765 = vadd.f32 0.0, %v1764
      %v1766 = vpop.f32.mrb[0].mxu0
      %v1767 = vpop.f32.mrb[0].mxu0
      %v1768 = vadd.f32 0.0, %v1767
      %v1769 = vpop.f32.mrb[0].mxu0
      %1770 = vdwg.mxu0
      %v1771 = vmax.f32 %v1645, 0.0
      %v1772 = vmax.f32 %v1648, 0.0
      %v1773 = vmax.f32 %v1653, 0.0
      %v1774 = vmax.f32 %v1656, 0.0
      %v1775 = vmax.f32 %v1661, 0.0
      %v1776 = vmax.f32 %v1664, 0.0
      %v1777 = vmax.f32 %v1669, 0.0
      %v1778 = vmax.f32 %v1672, 0.0
      %v1779 = vmax.f32 %v1677, 0.0
      %v1780 = vmax.f32 %v1680, 0.0
      %v1781 = vmax.f32 %v1685, 0.0
      %v1782 = vmax.f32 %v1688, 0.0
      %v1783 = vmax.f32 %v1693, 0.0
      %v1784 = vmax.f32 %v1696, 0.0
      %v1785 = vmax.f32 %v1701, 0.0
      %v1786 = vmax.f32 %v1704, 0.0
      %v1787 = vmax.f32 %v1709, 0.0
      %v1788 = vmax.f32 %v1712, 0.0
      %v1789 = vmax.f32 %v1717, 0.0
      %v1790 = vmax.f32 %v1720, 0.0
      %v1791 = vmax.f32 %v1725, 0.0
      %v1792 = vmax.f32 %v1728, 0.0
      %v1793 = vmax.f32 %v1733, 0.0
      %v1794 = vmax.f32 %v1736, 0.0
      %v1795 = vmax.f32 %v1741, 0.0
      %v1796 = vmax.f32 %v1744, 0.0
      %v1797 = vmax.f32 %v1749, 0.0
      %v1798 = vmax.f32 %v1752, 0.0
      %v1799 = vmax.f32 %v1757, 0.0
      %v1800 = vmax.f32 %v1760, 0.0
      %v1801 = vmax.f32 %v1765, 0.0
      %v1802 = vmax.f32 %v1768, 0.0
      %1803 = vst.msk [vmem:[%s224] sm:$0xff] %vm576, %v1771
      %1804 = vst.msk [vmem:[%s224 + $0x8] sm:$0xff] %vm576, %v1772
      %1805 = vst.msk [vmem:[%s224 + $0x10] sm:$0xff] %vm576, %v1773
      %1806 = vst.msk [vmem:[%s224 + $0x18] sm:$0xff] %vm576, %v1774
      %1807 = vst.msk [vmem:[%s224 + $0x20] sm:$0xff] %vm576, %v1775
      %1808 = vst.msk [vmem:[%s224 + $0x28] sm:$0xff] %vm576, %v1776
      %1809 = vst.msk [vmem:[%s224 + $0x30] sm:$0xff] %vm576, %v1777
      %1810 = vst.msk [vmem:[%s224 + $0x38] sm:$0xff] %vm576, %v1778
      %1811 = vst.msk [vmem:[%s224 + $0x40] sm:$0xff] %vm576, %v1779
      %1812 = vst.msk [vmem:[%s224 + $0x48] sm:$0xff] %vm576, %v1780
      %1813 = vst.msk [vmem:[%s224 + $0x50] sm:$0xff] %vm576, %v1781
      %1814 = vst.msk [vmem:[%s224 + $0x58] sm:$0xff] %vm576, %v1782
      %1815 = vst.msk [vmem:[%s224 + $0x60] sm:$0xff] %vm576, %v1783
      %1816 = vst.msk [vmem:[%s224 + $0x68] sm:$0xff] %vm576, %v1784
      %1817 = vst.msk [vmem:[%s224 + $0x70] sm:$0xff] %vm576, %v1785
      %1818 = vst.msk [vmem:[%s224 + $0x78] sm:$0xff] %vm576, %v1786
      %1819 = vst.msk [vmem:[%s224 + $0x80] sm:$0xff] %vm576, %v1787
      %1820 = vst.msk [vmem:[%s224 + $0x88] sm:$0xff] %vm576, %v1788
      %1821 = vst.msk [vmem:[%s224 + $0x90] sm:$0xff] %vm576, %v1789
      %1822 = vst.msk [vmem:[%s224 + $0x98] sm:$0xff] %vm576, %v1790
      %1823 = vst.msk [vmem:[%s224 + $0xa0] sm:$0xff] %vm576, %v1791
      %1824 = vst.msk [vmem:[%s224 + $0xa8] sm:$0xff] %vm576, %v1792
      %1825 = vst.msk [vmem:[%s224 + $0xb0] sm:$0xff] %vm576, %v1793
      %1826 = vst.msk [vmem:[%s224 + $0xb8] sm:$0xff] %vm576, %v1794
      %1827 = vst.msk [vmem:[%s224 + $0xc0] sm:$0xff] %vm576, %v1795
      %1828 = vst.msk [vmem:[%s224 + $0xc8] sm:$0xff] %vm576, %v1796
      %1829 = vst.msk [vmem:[%s224 + $0xd0] sm:$0xff] %vm576, %v1797
      %1830 = vst.msk [vmem:[%s224 + $0xd8] sm:$0xff] %vm576, %v1798
      %1831 = vst.msk [vmem:[%s224 + $0xe0] sm:$0xff] %vm576, %v1799
      %1832 = vst.msk [vmem:[%s224 + $0xe8] sm:$0xff] %vm576, %v1800
      %1833 = vst.msk [vmem:[%s224 + $0xf0] sm:$0xff] %vm576, %v1801
      %1834 = vst.msk [vmem:[%s224 + $0xf8] sm:$0xff] %vm576, %v1802
      %p1835 = scmp.lt.s32.totalorder %s16, 1
      %s1836 = scalar_select %p1835, %s16, 1
      %s1837 = smul.addr %s1836, 32
      %s1838 = smul.addr %s1837, 8
      %s1839 = scalar_lea.vmem %s5, %s1838
      // Predicated region
      $region41: #{shadow_removal_forward.11} parent=39 // pred_check
        %p1840 = pneg %p144
      $region42: #{shadow_removal_forward.11} parent=39 // pred_check_branch
        %1842 = sbr.rel (%p1840) target = $region44
      $region43: #{shadow_removal_forward.11} parent=39 // pred_region
        _
      $region44: #{shadow_removal_forward.11} parent=39 // pred_fallthru
        _
    $region40: #{shadow_removal_forward.11} parent=5 // pred_fallthru
      _
    %p1843 = scmp.le.s32.totalorder 2, %s11
    // Predicated region
    $region45: #{shadow_removal_forward.11} parent=5 // pred_check
      %p1844 = pneg %p1843
    $region46: #{shadow_removal_forward.11} parent=5 // pred_check_branch
      %1846 = sbr.rel (%p1844) target = $region48
    $region47: #{shadow_removal_forward.11} parent=5 // pred_region
      %s1847 = ssub.s32 %s11, 2
      // Predicated region
      $region49: #{shadow_removal_forward.11} parent=47 // pred_check
        %p1848 = pneg %p150
      $region50: #{shadow_removal_forward.11} parent=47 // pred_check_branch
        %1850 = sbr.rel (%p1848) target = $region52
      $region51: #{shadow_removal_forward.11} parent=47 // pred_region
        %p1851 = scmp.lt.s32.totalorder %s17, 1
        %s1852 = scalar_select %p1851, %s17, 1
        %s1853 = smul.addr %s1852, 32
        %s1854 = smul.addr %s1853, 8
        %s1855 = scalar_lea.vmem %s5, %s1854
      $region52: #{shadow_removal_forward.11} parent=47 // pred_fallthru
        _
    $region48: #{shadow_removal_forward.11} parent=5 // pred_fallthru
      _
  $region6: #{shadow_removal_forward.11} parent=0 // loop_footer
    %s15 = sadd.s32 1, %s11
  $region7: #{shadow_removal_forward.11} parent=0 // loop_footer_branch
    %10 = sbr.rel target = $region3
  $region8: #{shadow_removal_forward.11} parent=0 // loop_exit
    _

// kernel: shadow_removal_forward.10
$region0: #{shadow_removal_forward.10}
  #allocation0 [shape = 'u32[]', space=smem, size = 0x4, offset = 0x4, fixed_abs, tag = 'smem constant byte address 0x4 - core index']
  #allocation1 [shape = 'u32[144,128]{1,0:T(1,128)}', space=vmem, size = 0x12000, scoped, tag = 'internal scratch']
  %s0 = inlined_call_operand.vmem [shape: bf16[2,18,18,8], index: 0, kind: input, shape index: {}, may-alias: {0,1,2}]
  %s1 = inlined_call_operand.vmem [shape: bf16[2,18,18,8], index: 1, kind: input, shape index: {}, may-alias: {0,1,2}]
  %s2 = inlined_call_operand.vmem [shape: bf16[2,18,18,8], index: 2, kind: input, shape index: {}, may-alias: {0,1,2}]
  %s3 = inlined_call_operand.vmem [shape: bf16[9,8,64], index: 3, kind: input, shape index: {}]
  %s4 = inlined_call_operand.vmem [shape: f32[1,64], index: 4, kind: input, shape index: {}]
  %s5 = inlined_call_operand.vmem [shape: f32[2,16,16,64], index: 5, kind: output, shape index: {}]
  %s6 = sld [smem:[#allocation0]]
  $region53: #{shadow_removal_forward.10} parent=0
    _
  %s8 = ssub.s32 1, %s6
  %s9 = scalar_select 0, %s8, %s6
  loop: start=0, step=1, limit=34
  $region2: #{shadow_removal_forward.10} parent=0 // loop_pre_header
    _
  $region3: #{shadow_removal_forward.10} parent=0 // loop_header
    %s11 = sphi 0, %s15
    %p12 = scmp.ge.s32.totalorder %s11, 34
    %s18 = sphi 0, %s30
    %s19 = sphi 0, %s26
    %s20 = sphi 0, %s18
    %s21 = sphi 0, %s19
    %s22 = sphi 0, %s20
    %s23 = sphi 0, %s21
    %s35 = sphi 0, %s37
    %s38 = sphi 0, %s35
    %s39 = sphi 0, %s38
    %s55 = sphi 0, %s39
    %s65 = sphi 0, %s67
    %s68 = sphi 0, %s65
    %s69 = sphi 0, %s68
    %s85 = sphi 0, %s69
    %s95 = sphi 0, %s97
    %s98 = sphi 0, %s95
    %s99 = sphi 0, %s98
    %s115 = sphi 0, %s99
    %s119 = sphi 0, %s119
    %s121 = sphi 0, %s119
    %s122 = sphi 0, %s121
    %s136 = sphi 0, %s122
    %s140 = sphi 0, %s140
    %s142 = sphi 0, %s140
    %s143 = sphi 0, %s142
    %s157 = sphi 0, %s143
    %s165 = sphi 0, %s167
    %s168 = sphi 0, %s165
    %s169 = sphi 0, %s168
    %s185 = sphi 0, %s169
  $region4: #{shadow_removal_forward.10} parent=0 // loop_header_branch
    %14 = sbr.rel (%p12) target = $region8
  $region5: #{shadow_removal_forward.10} parent=0 // loop_body
    %s16 = ssub.s32 %s11, 1
    %s17 = ssub.s32 %s11, 2
    %s24 = sadd.s32 1, %s19
    %p25 = scmp.ge.s32.totalorder %s24, 16
    %s26 = scalar_select %p25, 0, %s24
    %s27 = sadd.s32 1, %s18
    %s28 = scalar_select %p25, %s27, %s18
    %p29 = scmp.ge.s32.totalorder %s28, 2
    %s30 = scalar_select %p29, 0, %s28
    %s31 = ssub.s32 %s18, %s30
    %s32 = ssub.s32 %s19, %s26
    %s33 = sor.u32 %s31, %s32
    %p34 = scmp.eq.s32.totalorder %s33, 0
    %s36 = sadd.s32 %s35, 1
    %s37 = scalar_select %p34, %s35, %s36
    %p40 = pneg %p34
    %p41 = scmp.eq.s32.totalorder %s11, 31
    %p42 = por %p40, %p41
    %p43 = scmp.ne.s32.totalorder %s35, %s38
    %p44 = scmp.eq.s32.totalorder %s11, 0
    %p45 = por %p43, %p44
    %p46 = scmp.ne.s32.totalorder %s35, %s38
    %p47 = scmp.eq.s32.totalorder %s16, 31
    %p48 = por %p46, %p47
    %p49 = scmp.ne.s32.totalorder %s38, %s39
    %p50 = scmp.eq.s32.totalorder %s16, 0
    %p51 = por %p49, %p50
    %p52 = scmp.ne.s32.totalorder %s38, %s39
    %p53 = scmp.eq.s32.totalorder %s17, 31
    %p54 = por %p52, %p53
    %p56 = scmp.ne.s32.totalorder %s39, %s55
    %p57 = scmp.eq.s32.totalorder %s17, 0
    %p58 = por %p56, %p57
    %s59 = sadd.s32 %s19, 1
    %s60 = sadd.s32 %s26, 1
    %s61 = ssub.s32 %s18, %s30
    %s62 = ssub.s32 %s59, %s60
    %s63 = sor.u32 %s61, %s62
    %p64 = scmp.eq.s32.totalorder %s63, 0
    %s66 = sadd.s32 %s65, 1
    %s67 = scalar_select %p64, %s65, %s66
    %p70 = pneg %p64
    %p71 = scmp.eq.s32.totalorder %s11, 31
    %p72 = por %p70, %p71
    %p73 = scmp.ne.s32.totalorder %s65, %s68
    %p74 = scmp.eq.s32.totalorder %s11, 0
    %p75 = por %p73, %p74
    %p76 = scmp.ne.s32.totalorder %s65, %s68
    %p77 = scmp.eq.s32.totalorder %s16, 31
    %p78 = por %p76, %p77
    %p79 = scmp.ne.s32.totalorder %s68, %s69
    %p80 = scmp.eq.s32.totalorder %s16, 0
    %p81 = por %p79, %p80
    %p82 = scmp.ne.s32.totalorder %s68, %s69
    %p83 = scmp.eq.s32.totalorder %s17, 31
    %p84 = por %p82, %p83
    %p86 = scmp.ne.s32.totalorder %s69, %s85
    %p87 = scmp.eq.s32.totalorder %s17, 0
    %p88 = por %p86, %p87
    %s89 = sadd.s32 %s19, 2
    %s90 = sadd.s32 %s26, 2
    %s91 = ssub.s32 %s18, %s30
    %s92 = ssub.s32 %s89, %s90
    %s93 = sor.u32 %s91, %s92
    %p94 = scmp.eq.s32.totalorder %s93, 0
    %s96 = sadd.s32 %s95, 1
    %s97 = scalar_select %p94, %s95, %s96
    %p100 = pneg %p94
    %p101 = scmp.eq.s32.totalorder %s11, 31
    %p102 = por %p100, %p101
    %p103 = scmp.ne.s32.totalorder %s95, %s98
    %p104 = scmp.eq.s32.totalorder %s11, 0
    %p105 = por %p103, %p104
    %p106 = scmp.ne.s32.totalorder %s95, %s98
    %p107 = scmp.eq.s32.totalorder %s16, 31
    %p108 = por %p106, %p107
    %p109 = scmp.ne.s32.totalorder %s98, %s99
    %p110 = scmp.eq.s32.totalorder %s16, 0
    %p111 = por %p109, %p110
    %p112 = scmp.ne.s32.totalorder %s98, %s99
    %p113 = scmp.eq.s32.totalorder %s17, 31
    %p114 = por %p112, %p113
    %p116 = scmp.ne.s32.totalorder %s99, %s115
    %p117 = scmp.eq.s32.totalorder %s17, 0
    %p118 = por %p116, %p117
    %s120 = sadd.s32 %s119, 1
    %p123 = scmp.eq.s32.totalorder %s11, 31
    %p124 = scmp.ne.s32.totalorder %s119, %s121
    %p125 = scmp.eq.s32.totalorder %s11, 0
    %p126 = por %p124, %p125
    %p127 = scmp.ne.s32.totalorder %s119, %s121
    %p128 = scmp.eq.s32.totalorder %s16, 31
    %p129 = por %p127, %p128
    %p130 = scmp.ne.s32.totalorder %s121, %s122
    %p131 = scmp.eq.s32.totalorder %s16, 0
    %p132 = por %p130, %p131
    %p133 = scmp.ne.s32.totalorder %s121, %s122
    %p134 = scmp.eq.s32.totalorder %s17, 31
    %p135 = por %p133, %p134
    %p137 = scmp.ne.s32.totalorder %s122, %s136
    %p138 = scmp.eq.s32.totalorder %s17, 0
    %p139 = por %p137, %p138
    %s141 = sadd.s32 %s140, 1
    %p144 = scmp.eq.s32.totalorder %s11, 31
    %p145 = scmp.ne.s32.totalorder %s140, %s142
    %p146 = scmp.eq.s32.totalorder %s11, 0
    %p147 = por %p145, %p146
    %p148 = scmp.ne.s32.totalorder %s140, %s142
    %p149 = scmp.eq.s32.totalorder %s16, 31
    %p150 = por %p148, %p149
    %p151 = scmp.ne.s32.totalorder %s142, %s143
    %p152 = scmp.eq.s32.totalorder %s16, 0
    %p153 = por %p151, %p152
    %p154 = scmp.ne.s32.totalorder %s142, %s143
    %p155 = scmp.eq.s32.totalorder %s17, 31
    %p156 = por %p154, %p155
    %p158 = scmp.ne.s32.totalorder %s143, %s157
    %p159 = scmp.eq.s32.totalorder %s17, 0
    %p160 = por %p158, %p159
    %s161 = ssub.s32 %s18, %s30
    %s162 = ssub.s32 %s19, %s26
    %s163 = sor.u32 %s161, %s162
    %p164 = scmp.eq.s32.totalorder %s163, 0
    %s166 = sadd.s32 %s165, 1
    %s167 = scalar_select %p164, %s165, %s166
    %p170 = pneg %p164
    %p171 = scmp.eq.s32.totalorder %s11, 31
    %p172 = por %p170, %p171
    %p173 = scmp.ne.s32.totalorder %s165, %s168
    %p174 = scmp.eq.s32.totalorder %s11, 0
    %p175 = por %p173, %p174
    %p176 = scmp.ne.s32.totalorder %s165, %s168
    %p177 = scmp.eq.s32.totalorder %s16, 31
    %p178 = por %p176, %p177
    %p179 = scmp.ne.s32.totalorder %s168, %s169
    %p180 = scmp.eq.s32.totalorder %s16, 0
    %p181 = por %p179, %p180
    %p182 = scmp.ne.s32.totalorder %s168, %s169
    %p183 = scmp.eq.s32.totalorder %s17, 31
    %p184 = por %p182, %p183
    %p186 = scmp.ne.s32.totalorder %s169, %s185
    %p187 = scmp.eq.s32.totalorder %s17, 0
    %p188 = por %p186, %p187
    %p189 = scmp.le.s32.totalorder 1, %s11
    %p190 = scmp.lt.s32.totalorder %s11, 33
    %p191 = pnand %p189, %p190
    %p192 = pneg %p191
    // Predicated region
    $region9: #{shadow_removal_forward.10} parent=5 // pred_check
      _
    $region10: #{shadow_removal_forward.10} parent=5 // pred_check_branch
      %194 = sbr.rel (%p191) target = $region12
    $region11: #{shadow_removal_forward.10} parent=5 // pred_region
      %s195 = ssub.s32 %s11, 1
      // Predicated region
      $region13: #{shadow_removal_forward.10} parent=11 // pred_check
        %p196 = pneg %p132
      $region14: #{shadow_removal_forward.10} parent=11 // pred_check_branch
        %198 = sbr.rel (%p196) target = $region16
      $region15: #{shadow_removal_forward.10} parent=11 // pred_region
        _
      $region16: #{shadow_removal_forward.10} parent=11 // pred_fallthru
        _
      // Predicated region
      $region17: #{shadow_removal_forward.10} parent=11 // pred_check
        %p199 = pneg %p153
      $region18: #{shadow_removal_forward.10} parent=11 // pred_check_branch
        %201 = sbr.rel (%p199) target = $region20
      $region19: #{shadow_removal_forward.10} parent=11 // pred_region
        _
      $region20: #{shadow_removal_forward.10} parent=11 // pred_fallthru
        _
    $region12: #{shadow_removal_forward.10} parent=5 // pred_fallthru
      _
    %p202 = scmp.lt.s32.totalorder %s11, 32
    // Predicated region
    $region21: #{shadow_removal_forward.10} parent=5 // pred_check
      %p203 = pneg %p202
    $region22: #{shadow_removal_forward.10} parent=5 // pred_check_branch
      %205 = sbr.rel (%p203) target = $region24
    $region23: #{shadow_removal_forward.10} parent=5 // pred_region
      // Predicated region
      $region25: #{shadow_removal_forward.10} parent=23 // pred_check
        %p206 = pneg %p45
      $region26: #{shadow_removal_forward.10} parent=23 // pred_check_branch
        %208 = sbr.rel (%p206) target = $region28
      $region27: #{shadow_removal_forward.10} parent=23 // pred_region
        %p209 = scmp.lt.s32.totalorder %s18, 1
        %s210 = scalar_select %p209, %s18, 1
        %p211 = scmp.lt.s32.totalorder %s19, 17
        %s212 = scalar_select %p211, %s19, 17
        %s213 = smul.addr %s212, 3
        %s214 = smul.addr %s210, 54
        %s215 = sadd.s32 %s213, %s214
        %s216 = smul.addr %s215, 4
        %s217 = scalar_lea.vmem %s0, %s216
      $region28: #{shadow_removal_forward.10} parent=23 // pred_fallthru
        _
      // Predicated region
      $region29: #{shadow_removal_forward.10} parent=23 // pred_check
        %p218 = pneg %p75
      $region30: #{shadow_removal_forward.10} parent=23 // pred_check_branch
        %220 = sbr.rel (%p218) target = $region32
      $region31: #{shadow_removal_forward.10} parent=23 // pred_region
        %s221 = sadd.s32 %s19, 1
        %p222 = scmp.lt.s32.totalorder %s18, 1
        %s223 = scalar_select %p222, %s18, 1
        %p224 = scmp.lt.s32.totalorder %s221, 17
        %s225 = scalar_select %p224, %s221, 17
        %s226 = smul.addr %s225, 3
        %s227 = smul.addr %s223, 54
        %s228 = sadd.s32 %s226, %s227
        %s229 = smul.addr %s228, 4
        %s230 = scalar_lea.vmem %s1, %s229
        %s231 = sadd.s32 %s19, 1
      $region32: #{shadow_removal_forward.10} parent=23 // pred_fallthru
        _
      // Predicated region
      $region33: #{shadow_removal_forward.10} parent=23 // pred_check
        %p232 = pneg %p105
      $region34: #{shadow_removal_forward.10} parent=23 // pred_check_branch
        %234 = sbr.rel (%p232) target = $region36
      $region35: #{shadow_removal_forward.10} parent=23 // pred_region
        %s235 = sadd.s32 %s19, 2
        %p236 = scmp.lt.s32.totalorder %s18, 1
        %s237 = scalar_select %p236, %s18, 1
        %p238 = scmp.lt.s32.totalorder %s235, 17
        %s239 = scalar_select %p238, %s235, 17
        %s240 = smul.addr %s239, 3
        %s241 = smul.addr %s237, 54
        %s242 = sadd.s32 %s240, %s241
        %s243 = smul.addr %s242, 4
        %s244 = scalar_lea.vmem %s2, %s243
        %s245 = sadd.s32 %s19, 2
      $region36: #{shadow_removal_forward.10} parent=23 // pred_fallthru
        _
    $region24: #{shadow_removal_forward.10} parent=5 // pred_fallthru
      _
    %p246 = scmp.le.s32.totalorder 1, %s11
    %p247 = scmp.lt.s32.totalorder %s11, 33
    %p248 = pnand %p246, %p247
    %p249 = pneg %p248
    // Predicated region
    $region37: #{shadow_removal_forward.10} parent=5 // pred_check
      _
    $region38: #{shadow_removal_forward.10} parent=5 // pred_check_branch
      %251 = sbr.rel (%p248) target = $region40
    $region39: #{shadow_removal_forward.10} parent=5 // pred_region
      %s252 = ssub.s32 %s11, 1
      %p253 = scmp.lt.s32.totalorder %s20, 1
      %s254 = scalar_select %p253, %s20, 1
      %p255 = scmp.lt.s32.totalorder %s21, 17
      %s256 = scalar_select %p255, %s21, 17
      %s257 = smul.addr %s256, 3
      %s258 = smul.addr %s254, 54
      %s259 = sadd.s32 %s257, %s258
      %s260 = smul.addr %s259, 4
      %s261 = scalar_lea.vmem %s0, %s260
      %p262 = pneg %p51
      %p263 = pneg %p48
      %s264 = sadd.s32 %s21, 1
      %p265 = scmp.lt.s32.totalorder %s20, 1
      %s266 = scalar_select %p265, %s20, 1
      %p267 = scmp.lt.s32.totalorder %s264, 17
      %s268 = scalar_select %p267, %s264, 17
      %s269 = smul.addr %s268, 3
      %s270 = smul.addr %s266, 54
      %s271 = sadd.s32 %s269, %s270
      %s272 = smul.addr %s271, 4
      %s273 = scalar_lea.vmem %s1, %s272
      %p274 = pneg %p81
      %p275 = pneg %p78
      %s276 = sadd.s32 %s21, 2
      %p277 = scmp.lt.s32.totalorder %s20, 1
      %s278 = scalar_select %p277, %s20, 1
      %p279 = scmp.lt.s32.totalorder %s276, 17
      %s280 = scalar_select %p279, %s276, 17
      %s281 = smul.addr %s280, 3
      %s282 = smul.addr %s278, 54
      %s283 = sadd.s32 %s281, %s282
      %s284 = smul.addr %s283, 4
      %s285 = scalar_lea.vmem %s2, %s284
      %p286 = pneg %p111
      %p287 = pneg %p108
      %p288 = pneg %p132
      %p289 = pneg %p129
      %p290 = pneg %p153
      %p291 = pneg %p150
      %p292 = pneg %p181
      %p293 = pneg %p178
      %p294 = scmp.lt.s32.totalorder %s20, 1
      %s295 = scalar_select %p294, %s20, 1
      %p296 = scmp.lt.s32.totalorder %s21, 15
      %s297 = scalar_select %p296, %s21, 15
      %s298 = smul.addr %s297, 2
      %s299 = smul.addr %s295, 32
      %s300 = sadd.s32 %s298, %s299
      %s301 = smul.addr %s300, 8
      %s302 = scalar_lea.vmem %s5, %s301
      %p303 = scmp.lt.s32.totalorder %s20, 1
      %s304 = scalar_select %p303, %s20, 1
      %p305 = scmp.lt.s32.totalorder %s21, 17
      %s306 = scalar_select %p305, %s21, 17
      %s307 = smul.addr %s306, 3
      %s308 = smul.addr %s304, 54
      %s309 = sadd.s32 %s307, %s308
      %s310 = smul.addr %s309, 4
      %s311 = scalar_lea.vmem %s0, %s310
      %s312 = sadd.s32 %s21, 1
      %p313 = scmp.lt.s32.totalorder %s20, 1
      %s314 = scalar_select %p313, %s20, 1
      %p315 = scmp.lt.s32.totalorder %s312, 17
      %s316 = scalar_select %p315, %s312, 17
      %s317 = smul.addr %s316, 3
      %s318 = smul.addr %s314, 54
      %s319 = sadd.s32 %s317, %s318
      %s320 = smul.addr %s319, 4
      %s321 = scalar_lea.vmem %s1, %s320
      %s322 = sadd.s32 %s21, 1
      %s323 = sadd.s32 %s21, 2
      %p324 = scmp.lt.s32.totalorder %s20, 1
      %s325 = scalar_select %p324, %s20, 1
      %p326 = scmp.lt.s32.totalorder %s323, 17
      %s327 = scalar_select %p326, %s323, 17
      %s328 = smul.addr %s327, 3
      %s329 = smul.addr %s325, 54
      %s330 = sadd.s32 %s328, %s329
      %s331 = smul.addr %s330, 4
      %s332 = scalar_lea.vmem %s2, %s331
      %s333 = sadd.s32 %s21, 2
      %p334 = scmp.lt.s32.totalorder %s20, 1
      %s335 = scalar_select %p334, %s20, 1
      %p336 = scmp.lt.s32.totalorder %s21, 15
      %s337 = scalar_select %p336, %s21, 15
      %s338 = smul.addr %s337, 2
      %s339 = smul.addr %s335, 32
      %s340 = sadd.s32 %s338, %s339
      %s341 = smul.addr %s340, 8
      %s342 = scalar_lea.vmem %s5, %s341
      %v344 = vld [vmem:[%s311] sm:$0xf]
      %v345 = vld [vmem:[%s311 + $0x4] sm:$0xf]
      %v346 = vld [vmem:[%s311 + $0x8] sm:$0x1]
      %v347 = vld [vmem:[%s321] sm:$0xf]
      %v348 = vld [vmem:[%s321 + $0x4] sm:$0xf]
      %v349 = vld [vmem:[%s321 + $0x8] sm:$0x1]
      %v350 = vld [vmem:[%s332] sm:$0xf]
      %v351 = vld [vmem:[%s332 + $0x4] sm:$0xf]
      %v352 = vld [vmem:[%s332 + $0x8] sm:$0x1]
      %v353 = vld [vmem:[%s3] sm:$0xf]
      %s354 = scalar_lea.vmem %s3, 4
      %v355 = vld [vmem:[%s354] sm:$0xf]
      %v359 = vunpack.c.l.b16 %v344
      %v360 = vunpack.c.l.b16 %v345
      %v361 = vunpack.c.l.b16 %v346
      %v362 = vpack.c.b16 %v360, %v359
      %v363 = vpack.c.b16 %v361, %v361
      %vm364 = vsmask.f32 7424
      %v366 = vshrl.u32 %v362, 16
      %v368 = vshll.u32 %v362, 16
      %v370 = vrot.slane %v368, 1
      %v371 = vor.u32 %v366, %v370
      %v373 = vshll.u32 %v363, 16
      %v375 = vrot.slane %v373, 1
      %v376 = vsel %vm364, %v371, %v375
      %vm377 = vcmask 64512
      %v379 = vsel %vm377, %v376, 0
      %vm381 = vcmask 1043456
      %v383 = vsel %vm381, %v355, 0
      %385 = vmatprep.subr.bf16.mxu0 0
      %386 = vmatpush1.bf16.msra.mxu0 %v383
      %387 = vmatprep.subr.bf16.mxu0 0
      %388 = vmatpush1.bf16.msra.mxu0 0
      %389 = vmatprep.subr.bf16.mxu0 0
      %390 = vmatpush1.bf16.msra.mxu0 0
      %391 = vmatprep.subr.bf16.mxu0 0
      %392 = vmatpush1.bf16.msra.mxu0 0
      %393 = vmatprep.subr.bf16.mxu0 0
      %394 = vmatpush1.bf16.msra.mxu0 0
      %395 = vmatprep.subr.bf16.mxu0 0
      %396 = vmatpush1.bf16.msra.mxu0 0
      %397 = vmatprep.subr.bf16.mxu0 0
      %398 = vmatpush1.bf16.msra.mxu0 0
      %399 = vmatprep.subr.bf16.mxu0 0
      %400 = vmatpush1.bf16.msra.mxu0 0
      %401 = vmatprep.subr.bf16.mxu0 0
      %402 = vmatpush1.bf16.msra.mxu0 0
      %403 = vmatprep.subr.bf16.mxu0 0
      %404 = vmatpush1.bf16.msra.mxu0 0
      %405 = vmatprep.subr.bf16.mxu0 0
      %406 = vmatpush1.bf16.msra.mxu0 0
      %407 = vmatprep.subr.bf16.mxu0 0
      %408 = vmatpush1.bf16.msra.mxu0 0
      %409 = vmatprep.subr.bf16.mxu0 0
      %410 = vmatpush1.bf16.msra.mxu0 0
      %411 = vmatprep.subr.bf16.mxu0 0
      %412 = vmatpush1.bf16.msra.mxu0 0
      %413 = vmatprep.subr.bf16.mxu0 0
      %414 = vmatpush1.bf16.msra.mxu0 0
      %415 = vmatprep.subr.bf16.mxu0 0
      %416 = vmatpush1.bf16.msra.mxu0 0
      %417 = vmatprep.mubr.bf16.mxu0 0
      %418 = vmatmul.mubr.bf16.gmra.mrb[0].mxu0 %v379
      %v419 = vpop.f32.mrb[0].mxu0
      %v420 = vadd.f32 0.0, %v419
      %v421 = vpop.f32.mrb[0].mxu0
      %v422 = vpop.f32.mrb[0].mxu0
      %v423 = vadd.f32 0.0, %v422
      %v424 = vpop.f32.mrb[0].mxu0
      %425 = vdwg.mxu0
      %v426 = vsel %vm377, %v362, 0
      %v429 = vsel %vm381, %v353, 0
      %431 = vmatprep.subr.bf16.mxu0 0
      %432 = vmatpush1.bf16.msra.mxu0 %v429
      %433 = vmatprep.subr.bf16.mxu0 0
      %434 = vmatpush1.bf16.msra.mxu0 0
      %435 = vmatprep.subr.bf16.mxu0 0
      %436 = vmatpush1.bf16.msra.mxu0 0
      %437 = vmatprep.subr.bf16.mxu0 0
      %438 = vmatpush1.bf16.msra.mxu0 0
      %439 = vmatprep.subr.bf16.mxu0 0
      %440 = vmatpush1.bf16.msra.mxu0 0
      %441 = vmatprep.subr.bf16.mxu0 0
      %442 = vmatpush1.bf16.msra.mxu0 0
      %443 = vmatprep.subr.bf16.mxu0 0
      %444 = vmatpush1.bf16.msra.mxu0 0
      %445 = vmatprep.subr.bf16.mxu0 0
      %446 = vmatpush1.bf16.msra.mxu0 0
      %447 = vmatprep.subr.bf16.mxu0 0
      %448 = vmatpush1.bf16.msra.mxu0 0
      %449 = vmatprep.subr.bf16.mxu0 0
      %450 = vmatpush1.bf16.msra.mxu0 0
      %451 = vmatprep.subr.bf16.mxu0 0
      %452 = vmatpush1.bf16.msra.mxu0 0
      %453 = vmatprep.subr.bf16.mxu0 0
      %454 = vmatpush1.bf16.msra.mxu0 0
      %455 = vmatprep.subr.bf16.mxu0 0
      %456 = vmatpush1.bf16.msra.mxu0 0
      %457 = vmatprep.subr.bf16.mxu0 0
      %458 = vmatpush1.bf16.msra.mxu0 0
      %459 = vmatprep.subr.bf16.mxu0 0
      %460 = vmatpush1.bf16.msra.mxu0 0
      %461 = vmatprep.subr.bf16.mxu0 0
      %462 = vmatpush1.bf16.msra.mxu0 0
      %463 = vmatprep.mubr.bf16.mxu0 0
      %464 = vmatmul.mubr.bf16.gmra.mrb[0].mxu0 %v426
      %v465 = vpop.f32.mrb[0].mxu0
      %v466 = vadd.f32 %v420, %v465
      %v467 = vpop.f32.mrb[0].mxu0
      %v468 = vpop.f32.mrb[0].mxu0
      %v469 = vadd.f32 %v423, %v468
      %v470 = vpop.f32.mrb[0].mxu0
      %471 = vdwg.mxu0
      %s472 = scalar_lea.vmem %s3, 8
      %v473 = vld [vmem:[%s472] sm:$0xf]
      %vm474 = vcmask 1046528
      %v475 = vrot.slane %v362, 1
      %v476 = vrot.slane %v363, 1
      %v477 = vsel %vm474, %v475, %v476
      %v479 = vsel %vm377, %v477, 0
      %v482 = vsel %vm381, %v473, 0
      %484 = vmatprep.subr.bf16.mxu0 0
      %485 = vmatpush1.bf16.msra.mxu0 %v482
      %486 = vmatprep.subr.bf16.mxu0 0
      %487 = vmatpush1.bf16.msra.mxu0 0
      %488 = vmatprep.subr.bf16.mxu0 0
      %489 = vmatpush1.bf16.msra.mxu0 0
      %490 = vmatprep.subr.bf16.mxu0 0
      %491 = vmatpush1.bf16.msra.mxu0 0
      %492 = vmatprep.subr.bf16.mxu0 0
      %493 = vmatpush1.bf16.msra.mxu0 0
      %494 = vmatprep.subr.bf16.mxu0 0
      %495 = vmatpush1.bf16.msra.mxu0 0
      %496 = vmatprep.subr.bf16.mxu0 0
      %497 = vmatpush1.bf16.msra.mxu0 0
      %498 = vmatprep.subr.bf16.mxu0 0
      %499 = vmatpush1.bf16.msra.mxu0 0
      %500 = vmatprep.subr.bf16.mxu0 0
      %501 = vmatpush1.bf16.msra.mxu0 0
      %502 = vmatprep.subr.bf16.mxu0 0
      %503 = vmatpush1.bf16.msra.mxu0 0
      %504 = vmatprep.subr.bf16.mxu0 0
      %505 = vmatpush1.bf16.msra.mxu0 0
      %506 = vmatprep.subr.bf16.mxu0 0
      %507 = vmatpush1.bf16.msra.mxu0 0
      %508 = vmatprep.subr.bf16.mxu0 0
      %509 = vmatpush1.bf16.msra.mxu0 0
      %510 = vmatprep.subr.bf16.mxu0 0
      %511 = vmatpush1.bf16.msra.mxu0 0
      %512 = vmatprep.subr.bf16.mxu0 0
      %513 = vmatpush1.bf16.msra.mxu0 0
      %514 = vmatprep.subr.bf16.mxu0 0
      %515 = vmatpush1.bf16.msra.mxu0 0
      %516 = vmatprep.mubr.bf16.mxu0 0
      %517 = vmatmul.mubr.bf16.gmra.mrb[0].mxu0 %v479
      %v518 = vpop.f32.mrb[0].mxu0
      %v519 = vadd.f32 0.0, %v518
      %v520 = vpop.f32.mrb[0].mxu0
      %v521 = vpop.f32.mrb[0].mxu0
      %v522 = vadd.f32 0.0, %v521
      %v523 = vpop.f32.mrb[0].mxu0
      %524 = vdwg.mxu0
      %v525 = vadd.f32 %v466, %v519
      %v526 = vadd.f32 %v469, %v522
      %s527 = scalar_lea.vmem %s3, 12
      %v528 = vld [vmem:[%s527] sm:$0xf]
      %v531 = vunpack.c.l.b16 %v347
      %v532 = vunpack.c.l.b16 %v348
      %v533 = vpack.c.b16 %v532, %v531
      %v535 = vsel %vm377, %v533, 0
      %v538 = vsel %vm381, %v528, 0
      %540 = vmatprep.subr.bf16.mxu0 0
      %541 = vmatpush1.bf16.msra.mxu0 %v538
      %542 = vmatprep.subr.bf16.mxu0 0
      %543 = vmatpush1.bf16.msra.mxu0 0
      %544 = vmatprep.subr.bf16.mxu0 0
      %545 = vmatpush1.bf16.msra.mxu0 0
      %546 = vmatprep.subr.bf16.mxu0 0
      %547 = vmatpush1.bf16.msra.mxu0 0
      %548 = vmatprep.subr.bf16.mxu0 0
      %549 = vmatpush1.bf16.msra.mxu0 0
      %550 = vmatprep.subr.bf16.mxu0 0
      %551 = vmatpush1.bf16.msra.mxu0 0
      %552 = vmatprep.subr.bf16.mxu0 0
      %553 = vmatpush1.bf16.msra.mxu0 0
      %554 = vmatprep.subr.bf16.mxu0 0
      %555 = vmatpush1.bf16.msra.mxu0 0
      %556 = vmatprep.subr.bf16.mxu0 0
      %557 = vmatpush1.bf16.msra.mxu0 0
      %558 = vmatprep.subr.bf16.mxu0 0
      %559 = vmatpush1.bf16.msra.mxu0 0
      %560 = vmatprep.subr.bf16.mxu0 0
      %561 = vmatpush1.bf16.msra.mxu0 0
      %562 = vmatprep.subr.bf16.mxu0 0
      %563 = vmatpush1.bf16.msra.mxu0 0
      %564 = vmatprep.subr.bf16.mxu0 0
      %565 = vmatpush1.bf16.msra.mxu0 0
      %566 = vmatprep.subr.bf16.mxu0 0
      %567 = vmatpush1.bf16.msra.mxu0 0
      %568 = vmatprep.subr.bf16.mxu0 0
      %569 = vmatpush1.bf16.msra.mxu0 0
      %570 = vmatprep.subr.bf16.mxu0 0
      %571 = vmatpush1.bf16.msra.mxu0 0
      %572 = vmatprep.mubr.bf16.mxu0 0
      %573 = vmatmul.mubr.bf16.gmra.mrb[0].mxu0 %v535
      %v574 = vpop.f32.mrb[0].mxu0
      %v575 = vadd.f32 0.0, %v574
      %v576 = vpop.f32.mrb[0].mxu0
      %v577 = vpop.f32.mrb[0].mxu0
      %v578 = vadd.f32 0.0, %v577
      %v579 = vpop.f32.mrb[0].mxu0
      %580 = vdwg.mxu0
      %v581 = vadd.f32 %v525, %v575
      %v582 = vadd.f32 %v526, %v578
      %s583 = scalar_lea.vmem %s3, 16
      %v584 = vld [vmem:[%s583] sm:$0xf]
      %v586 = vunpack.c.l.b16 %v349
      %v587 = vpack.c.b16 %v586, %v586
      %v588 = vshrl.u32 %v533, 16
      %v590 = vshll.u32 %v533, 16
      %v592 = vrot.slane %v590, 1
      %v593 = vor.u32 %v588, %v592
      %v595 = vshll.u32 %v587, 16
      %v597 = vrot.slane %v595, 1
      %v598 = vsel %vm364, %v593, %v597
      %v600 = vsel %vm377, %v598, 0
      %v603 = vsel %vm381, %v584, 0
      %605 = vmatprep.subr.bf16.mxu0 0
      %606 = vmatpush1.bf16.msra.mxu0 %v603
      %607 = vmatprep.subr.bf16.mxu0 0
      %608 = vmatpush1.bf16.msra.mxu0 0
      %609 = vmatprep.subr.bf16.mxu0 0
      %610 = vmatpush1.bf16.msra.mxu0 0
      %611 = vmatprep.subr.bf16.mxu0 0
      %612 = vmatpush1.bf16.msra.mxu0 0
      %613 = vmatprep.subr.bf16.mxu0 0
      %614 = vmatpush1.bf16.msra.mxu0 0
      %615 = vmatprep.subr.bf16.mxu0 0
      %616 = vmatpush1.bf16.msra.mxu0 0
      %617 = vmatprep.subr.bf16.mxu0 0
      %618 = vmatpush1.bf16.msra.mxu0 0
      %619 = vmatprep.subr.bf16.mxu0 0
      %620 = vmatpush1.bf16.msra.mxu0 0
      %621 = vmatprep.subr.bf16.mxu0 0
      %622 = vmatpush1.bf16.msra.mxu0 0
      %623 = vmatprep.subr.bf16.mxu0 0
      %624 = vmatpush1.bf16.msra.mxu0 0
      %625 = vmatprep.subr.bf16.mxu0 0
      %626 = vmatpush1.bf16.msra.mxu0 0
      %627 = vmatprep.subr.bf16.mxu0 0
      %628 = vmatpush1.bf16.msra.mxu0 0
      %629 = vmatprep.subr.bf16.mxu0 0
      %630 = vmatpush1.bf16.msra.mxu0 0
      %631 = vmatprep.subr.bf16.mxu0 0
      %632 = vmatpush1.bf16.msra.mxu0 0
      %633 = vmatprep.subr.bf16.mxu0 0
      %634 = vmatpush1.bf16.msra.mxu0 0
      %635 = vmatprep.subr.bf16.mxu0 0
      %636 = vmatpush1.bf16.msra.mxu0 0
      %637 = vmatprep.mubr.bf16.mxu0 0
      %638 = vmatmul.mubr.bf16.gmra.mrb[0].mxu0 %v600
      %v639 = vpop.f32.mrb[0].mxu0
      %v640 = vadd.f32 0.0, %v639
      %v641 = vpop.f32.mrb[0].mxu0
      %v642 = vpop.f32.mrb[0].mxu0
      %v643 = vadd.f32 0.0, %v642
      %v644 = vpop.f32.mrb[0].mxu0
      %645 = vdwg.mxu0
      %v646 = vadd.f32 %v581, %v640
      %v647 = vadd.f32 %v582, %v643
      %s648 = scalar_lea.vmem %s3, 20
      %v649 = vld [vmem:[%s648] sm:$0xf]
      %v650 = vrot.slane %v533, 1
      %v651 = vrot.slane %v587, 1
      %v652 = vsel %vm474, %v650, %v651
      %v654 = vsel %vm377, %v652, 0
      %v657 = vsel %vm381, %v649, 0
      %659 = vmatprep.subr.bf16.mxu0 0
      %660 = vmatpush1.bf16.msra.mxu0 %v657
      %661 = vmatprep.subr.bf16.mxu0 0
      %662 = vmatpush1.bf16.msra.mxu0 0
      %663 = vmatprep.subr.bf16.mxu0 0
      %664 = vmatpush1.bf16.msra.mxu0 0
      %665 = vmatprep.subr.bf16.mxu0 0
      %666 = vmatpush1.bf16.msra.mxu0 0
      %667 = vmatprep.subr.bf16.mxu0 0
      %668 = vmatpush1.bf16.msra.mxu0 0
      %669 = vmatprep.subr.bf16.mxu0 0
      %670 = vmatpush1.bf16.msra.mxu0 0
      %671 = vmatprep.subr.bf16.mxu0 0
      %672 = vmatpush1.bf16.msra.mxu0 0
      %673 = vmatprep.subr.bf16.mxu0 0
      %674 = vmatpush1.bf16.msra.mxu0 0
      %675 = vmatprep.subr.bf16.mxu0 0
      %676 = vmatpush1.bf16.msra.mxu0 0
      %677 = vmatprep.subr.bf16.mxu0 0
      %678 = vmatpush1.bf16.msra.mxu0 0
      %679 = vmatprep.subr.bf16.mxu0 0
      %680 = vmatpush1.bf16.msra.mxu0 0
      %681 = vmatprep.subr.bf16.mxu0 0
      %682 = vmatpush1.bf16.msra.mxu0 0
      %683 = vmatprep.subr.bf16.mxu0 0
      %684 = vmatpush1.bf16.msra.mxu0 0
      %685 = vmatprep.subr.bf16.mxu0 0
      %686 = vmatpush1.bf16.msra.mxu0 0
      %687 = vmatprep.subr.bf16.mxu0 0
      %688 = vmatpush1.bf16.msra.mxu0 0
      %689 = vmatprep.subr.bf16.mxu0 0
      %690 = vmatpush1.bf16.msra.mxu0 0
      %691 = vmatprep.mubr.bf16.mxu0 0
      %692 = vmatmul.mubr.bf16.gmra.mrb[0].mxu0 %v654
      %v693 = vpop.f32.mrb[0].mxu0
      %v694 = vadd.f32 0.0, %v693
      %v695 = vpop.f32.mrb[0].mxu0
      %v696 = vpop.f32.mrb[0].mxu0
      %v697 = vadd.f32 0.0, %v696
      %v698 = vpop.f32.mrb[0].mxu0
      %699 = vdwg.mxu0
      %v700 = vadd.f32 %v646, %v694
      %v701 = vadd.f32 %v647, %v697
      %s702 = scalar_lea.vmem %s3, 24
      %v703 = vld [vmem:[%s702] sm:$0xf]
      %v706 = vunpack.c.l.b16 %v350
      %v707 = vunpack.c.l.b16 %v351
      %v708 = vpack.c.b16 %v707, %v706
      %v710 = vsel %vm377, %v708, 0
      %v713 = vsel %vm381, %v703, 0
      %715 = vmatprep.subr.bf16.mxu0 0
      %716 = vmatpush1.bf16.msra.mxu0 %v713
      %717 = vmatprep.subr.bf16.mxu0 0
      %718 = vmatpush1.bf16.msra.mxu0 0
      %719 = vmatprep.subr.bf16.mxu0 0
      %720 = vmatpush1.bf16.msra.mxu0 0
      %721 = vmatprep.subr.bf16.mxu0 0
      %722 = vmatpush1.bf16.msra.mxu0 0
      %723 = vmatprep.subr.bf16.mxu0 0
      %724 = vmatpush1.bf16.msra.mxu0 0
      %725 = vmatprep.subr.bf16.mxu0 0
      %726 = vmatpush1.bf16.msra.mxu0 0
      %727 = vmatprep.subr.bf16.mxu0 0
      %728 = vmatpush1.bf16.msra.mxu0 0
      %729 = vmatprep.subr.bf16.mxu0 0
      %730 = vmatpush1.bf16.msra.mxu0 0
      %731 = vmatprep.subr.bf16.mxu0 0
      %732 = vmatpush1.bf16.msra.mxu0 0
      %733 = vmatprep.subr.bf16.mxu0 0
      %734 = vmatpush1.bf16.msra.mxu0 0
      %735 = vmatprep.subr.bf16.mxu0 0
      %736 = vmatpush1.bf16.msra.mxu0 0
      %737 = vmatprep.subr.bf16.mxu0 0
      %738 = vmatpush1.bf16.msra.mxu0 0
      %739 = vmatprep.subr.bf16.mxu0 0
      %740 = vmatpush1.bf16.msra.mxu0 0
      %741 = vmatprep.subr.bf16.mxu0 0
      %742 = vmatpush1.bf16.msra.mxu0 0
      %743 = vmatprep.subr.bf16.mxu0 0
      %744 = vmatpush1.bf16.msra.mxu0 0
      %745 = vmatprep.subr.bf16.mxu0 0
      %746 = vmatpush1.bf16.msra.mxu0 0
      %747 = vmatprep.mubr.bf16.mxu0 0
      %748 = vmatmul.mubr.bf16.gmra.mrb[0].mxu0 %v710
      %v749 = vpop.f32.mrb[0].mxu0
      %v750 = vadd.f32 0.0, %v749
      %v751 = vpop.f32.mrb[0].mxu0
      %v752 = vpop.f32.mrb[0].mxu0
      %v753 = vadd.f32 0.0, %v752
      %v754 = vpop.f32.mrb[0].mxu0
      %755 = vdwg.mxu0
      %v756 = vadd.f32 %v700, %v750
      %v757 = vadd.f32 %v701, %v753
      %s758 = scalar_lea.vmem %s3, 28
      %v759 = vld [vmem:[%s758] sm:$0xf]
      %v761 = vunpack.c.l.b16 %v352
      %v762 = vpack.c.b16 %v761, %v761
      %v763 = vshrl.u32 %v708, 16
      %v765 = vshll.u32 %v708, 16
      %v767 = vrot.slane %v765, 1
      %v768 = vor.u32 %v763, %v767
      %v770 = vshll.u32 %v762, 16
      %v772 = vrot.slane %v770, 1
      %v773 = vsel %vm364, %v768, %v772
      %v775 = vsel %vm377, %v773, 0
      %v778 = vsel %vm381, %v759, 0
      %780 = vmatprep.subr.bf16.mxu0 0
      %781 = vmatpush1.bf16.msra.mxu0 %v778
      %782 = vmatprep.subr.bf16.mxu0 0
      %783 = vmatpush1.bf16.msra.mxu0 0
      %784 = vmatprep.subr.bf16.mxu0 0
      %785 = vmatpush1.bf16.msra.mxu0 0
      %786 = vmatprep.subr.bf16.mxu0 0
      %787 = vmatpush1.bf16.msra.mxu0 0
      %788 = vmatprep.subr.bf16.mxu0 0
      %789 = vmatpush1.bf16.msra.mxu0 0
      %790 = vmatprep.subr.bf16.mxu0 0
      %791 = vmatpush1.bf16.msra.mxu0 0
      %792 = vmatprep.subr.bf16.mxu0 0
      %793 = vmatpush1.bf16.msra.mxu0 0
      %794 = vmatprep.subr.bf16.mxu0 0
      %795 = vmatpush1.bf16.msra.mxu0 0
      %796 = vmatprep.subr.bf16.mxu0 0
      %797 = vmatpush1.bf16.msra.mxu0 0
      %798 = vmatprep.subr.bf16.mxu0 0
      %799 = vmatpush1.bf16.msra.mxu0 0
      %800 = vmatprep.subr.bf16.mxu0 0
      %801 = vmatpush1.bf16.msra.mxu0 0
      %802 = vmatprep.subr.bf16.mxu0 0
      %803 = vmatpush1.bf16.msra.mxu0 0
      %804 = vmatprep.subr.bf16.mxu0 0
      %805 = vmatpush1.bf16.msra.mxu0 0
      %806 = vmatprep.subr.bf16.mxu0 0
      %807 = vmatpush1.bf16.msra.mxu0 0
      %808 = vmatprep.subr.bf16.mxu0 0
      %809 = vmatpush1.bf16.msra.mxu0 0
      %810 = vmatprep.subr.bf16.mxu0 0
      %811 = vmatpush1.bf16.msra.mxu0 0
      %812 = vmatprep.mubr.bf16.mxu0 0
      %813 = vmatmul.mubr.bf16.gmra.mrb[0].mxu0 %v775
      %v814 = vpop.f32.mrb[0].mxu0
      %v815 = vadd.f32 0.0, %v814
      %v816 = vpop.f32.mrb[0].mxu0
      %v817 = vpop.f32.mrb[0].mxu0
      %v818 = vadd.f32 0.0, %v817
      %v819 = vpop.f32.mrb[0].mxu0
      %820 = vdwg.mxu0
      %v821 = vadd.f32 %v756, %v815
      %v822 = vadd.f32 %v757, %v818
      %s823 = scalar_lea.vmem %s3, 32
      %v824 = vld [vmem:[%s823] sm:$0xf]
      %v825 = vrot.slane %v708, 1
      %v826 = vrot.slane %v762, 1
      %v827 = vsel %vm474, %v825, %v826
      %v829 = vsel %vm377, %v827, 0
      %v832 = vsel %vm381, %v824, 0
      %834 = vmatprep.subr.bf16.mxu0 0
      %835 = vmatpush1.bf16.msra.mxu0 %v832
      %836 = vmatprep.subr.bf16.mxu0 0
      %837 = vmatpush1.bf16.msra.mxu0 0
      %838 = vmatprep.subr.bf16.mxu0 0
      %839 = vmatpush1.bf16.msra.mxu0 0
      %840 = vmatprep.subr.bf16.mxu0 0
      %841 = vmatpush1.bf16.msra.mxu0 0
      %842 = vmatprep.subr.bf16.mxu0 0
      %843 = vmatpush1.bf16.msra.mxu0 0
      %844 = vmatprep.subr.bf16.mxu0 0
      %845 = vmatpush1.bf16.msra.mxu0 0
      %846 = vmatprep.subr.bf16.mxu0 0
      %847 = vmatpush1.bf16.msra.mxu0 0
      %848 = vmatprep.subr.bf16.mxu0 0
      %849 = vmatpush1.bf16.msra.mxu0 0
      %850 = vmatprep.subr.bf16.mxu0 0
      %851 = vmatpush1.bf16.msra.mxu0 0
      %852 = vmatprep.subr.bf16.mxu0 0
      %853 = vmatpush1.bf16.msra.mxu0 0
      %854 = vmatprep.subr.bf16.mxu0 0
      %855 = vmatpush1.bf16.msra.mxu0 0
      %856 = vmatprep.subr.bf16.mxu0 0
      %857 = vmatpush1.bf16.msra.mxu0 0
      %858 = vmatprep.subr.bf16.mxu0 0
      %859 = vmatpush1.bf16.msra.mxu0 0
      %860 = vmatprep.subr.bf16.mxu0 0
      %861 = vmatpush1.bf16.msra.mxu0 0
      %862 = vmatprep.subr.bf16.mxu0 0
      %863 = vmatpush1.bf16.msra.mxu0 0
      %864 = vmatprep.subr.bf16.mxu0 0
      %865 = vmatpush1.bf16.msra.mxu0 0
      %866 = vmatprep.mubr.bf16.mxu0 0
      %867 = vmatmul.mubr.bf16.gmra.mrb[0].mxu0 %v829
      %v868 = vpop.f32.mrb[0].mxu0
      %v869 = vadd.f32 0.0, %v868
      %v870 = vpop.f32.mrb[0].mxu0
      %v871 = vpop.f32.mrb[0].mxu0
      %v872 = vadd.f32 0.0, %v871
      %v873 = vpop.f32.mrb[0].mxu0
      %874 = vdwg.mxu0
      %v875 = vadd.f32 %v821, %v869
      %v876 = vadd.f32 %v822, %v872
      %v877 = vld [vmem:[%s4] sm:$0x1]
      %v879 = vlaneseq
      %v880 = vshrl.u32 %v879, 7
      %v881 = vsub.s32 0, %v880
      %v882 = vrot.slane %v877, %v881
      %v884 = vadd.f32 %v875, %v882
      %v885 = vadd.f32 %v876, %v882
      %v886 = vmax.f32 %v884, 0.0
      %v887 = vmax.f32 %v885, 0.0
      %vm888 = vcmask 523264
      %889 = vst.msk [vmem:[%s342] sm:$0xff] %vm888, %v886
      %890 = vst.msk [vmem:[%s342 + $0x8] sm:$0xff] %vm888, %v887
      %p891 = scmp.lt.s32.totalorder %s20, 1
      %s892 = scalar_select %p891, %s20, 1
      %p893 = scmp.lt.s32.totalorder %s21, 15
      %s894 = scalar_select %p893, %s21, 15
      %s895 = smul.addr %s894, 2
      %s896 = smul.addr %s892, 32
      %s897 = sadd.s32 %s895, %s896
      %s898 = smul.addr %s897, 8
      %s899 = scalar_lea.vmem %s5, %s898
      // Predicated region
      $region41: #{shadow_removal_forward.10} parent=39 // pred_check
        %p900 = pneg %p178
      $region42: #{shadow_removal_forward.10} parent=39 // pred_check_branch
        %902 = sbr.rel (%p900) target = $region44
      $region43: #{shadow_removal_forward.10} parent=39 // pred_region
        _
      $region44: #{shadow_removal_forward.10} parent=39 // pred_fallthru
        _
    $region40: #{shadow_removal_forward.10} parent=5 // pred_fallthru
      _
    %p903 = scmp.le.s32.totalorder 2, %s11
    // Predicated region
    $region45: #{shadow_removal_forward.10} parent=5 // pred_check
      %p904 = pneg %p903
    $region46: #{shadow_removal_forward.10} parent=5 // pred_check_branch
      %906 = sbr.rel (%p904) target = $region48
    $region47: #{shadow_removal_forward.10} parent=5 // pred_region
      %s907 = ssub.s32 %s11, 2
      // Predicated region
      $region49: #{shadow_removal_forward.10} parent=47 // pred_check
        %p908 = pneg %p184
      $region50: #{shadow_removal_forward.10} parent=47 // pred_check_branch
        %910 = sbr.rel (%p908) target = $region52
      $region51: #{shadow_removal_forward.10} parent=47 // pred_region
        %p911 = scmp.lt.s32.totalorder %s22, 1
        %s912 = scalar_select %p911, %s22, 1
        %p913 = scmp.lt.s32.totalorder %s23, 15
        %s914 = scalar_select %p913, %s23, 15
        %s915 = smul.addr %s914, 2
        %s916 = smul.addr %s912, 32
        %s917 = sadd.s32 %s915, %s916
        %s918 = smul.addr %s917, 8
        %s919 = scalar_lea.vmem %s5, %s918
      $region52: #{shadow_removal_forward.10} parent=47 // pred_fallthru
        _
    $region48: #{shadow_removal_forward.10} parent=5 // pred_fallthru
      _
  $region6: #{shadow_removal_forward.10} parent=0 // loop_footer
    %s15 = sadd.s32 1, %s11
  $region7: #{shadow_removal_forward.10} parent=0 // loop_footer_branch
    %10 = sbr.rel target = $region3
  $region8: #{shadow_removal_forward.10} parent=0 // loop_exit
    _

// kernel: shadow_removal_forward.12
$region0: #{shadow_removal_forward.12}
  #allocation0 [shape = 'u32[]', space=smem, size = 0x4, offset = 0x4, fixed_abs, tag = 'smem constant byte address 0x4 - core index']
  #allocation1 [shape = 'u32[144,128]{1,0:T(1,128)}', space=vmem, size = 0x12000, scoped, tag = 'internal scratch']
  %s0 = inlined_call_operand.vmem [shape: f32[512,64], index: 0, kind: input, shape index: {}]
  %s1 = inlined_call_operand.vmem [shape: f32[512,64], index: 1, kind: input, shape index: {}]
  %s2 = inlined_call_operand.vmem [shape: bf16[64,128], index: 2, kind: input, shape index: {}]
  %s3 = inlined_call_operand.vmem [shape: f32[1,128], index: 3, kind: input, shape index: {}]
  %s4 = inlined_call_operand.vmem [shape: f32[512,64], index: 4, kind: output, shape index: {}]
  %s5 = sld [smem:[#allocation0]]
  $region26: #{shadow_removal_forward.12} parent=0
    _
  %s7 = ssub.s32 1, %s5
  %s8 = scalar_select 0, %s7, %s5
  // Predicated region
  $region2: #{shadow_removal_forward.12} parent=0 // pred_check
    _
  $region3: #{shadow_removal_forward.12} parent=0 // pred_check_branch
    %10 = sbr.rel (0) target = $region5
  $region4: #{shadow_removal_forward.12} parent=0 // pred_region
    _
  $region5: #{shadow_removal_forward.12} parent=0 // pred_fallthru
    _
  // Predicated region
  $region6: #{shadow_removal_forward.12} parent=0 // pred_check
    _
  $region7: #{shadow_removal_forward.12} parent=0 // pred_check_branch
    %12 = sbr.rel (0) target = $region9
  $region8: #{shadow_removal_forward.12} parent=0 // pred_region
    _
  $region9: #{shadow_removal_forward.12} parent=0 // pred_fallthru
    _
  // Predicated region
  $region10: #{shadow_removal_forward.12} parent=0 // pred_check
    _
  $region11: #{shadow_removal_forward.12} parent=0 // pred_check_branch
    %14 = sbr.rel (0) target = $region13
  $region12: #{shadow_removal_forward.12} parent=0 // pred_region
    _
  $region13: #{shadow_removal_forward.12} parent=0 // pred_fallthru
    _
  // Predicated region
  $region14: #{shadow_removal_forward.12} parent=0 // pred_check
    _
  $region15: #{shadow_removal_forward.12} parent=0 // pred_check_branch
    %16 = sbr.rel (0) target = $region17
  $region16: #{shadow_removal_forward.12} parent=0 // pred_region
    _
  $region17: #{shadow_removal_forward.12} parent=0 // pred_fallthru
    _
  %v18 = vld [vmem:[%s1] sm:$0xff]
  %v19 = vld [vmem:[%s1 + $0x8] sm:$0xff]
  %v20 = vld [vmem:[%s1 + $0x10] sm:$0xff]
  %v21 = vld [vmem:[%s1 + $0x18] sm:$0xff]
  %v22 = vld [vmem:[%s1 + $0x20] sm:$0xff]
  %v23 = vld [vmem:[%s1 + $0x28] sm:$0xff]
  %v24 = vld [vmem:[%s1 + $0x30] sm:$0xff]
  %v25 = vld [vmem:[%s1 + $0x38] sm:$0xff]
  %v26 = vld [vmem:[%s1 + $0x40] sm:$0xff]
  %v27 = vld [vmem:[%s1 + $0x48] sm:$0xff]
  %v28 = vld [vmem:[%s1 + $0x50] sm:$0xff]
  %v29 = vld [vmem:[%s1 + $0x58] sm:$0xff]
  %v30 = vld [vmem:[%s1 + $0x60] sm:$0xff]
  %v31 = vld [vmem:[%s1 + $0x68] sm:$0xff]
  %v32 = vld [vmem:[%s1 + $0x70] sm:$0xff]
  %v33 = vld [vmem:[%s1 + $0x78] sm:$0xff]
  %v34 = vld [vmem:[%s1 + $0x80] sm:$0xff]
  %v35 = vld [vmem:[%s1 + $0x88] sm:$0xff]
  %v36 = vld [vmem:[%s1 + $0x90] sm:$0xff]
  %v37 = vld [vmem:[%s1 + $0x98] sm:$0xff]
  %v38 = vld [vmem:[%s1 + $0xa0] sm:$0xff]
  %v39 = vld [vmem:[%s1 + $0xa8] sm:$0xff]
  %v40 = vld [vmem:[%s1 + $0xb0] sm:$0xff]
  %v41 = vld [vmem:[%s1 + $0xb8] sm:$0xff]
  %v42 = vld [vmem:[%s1 + $0xc0] sm:$0xff]
  %v43 = vld [vmem:[%s1 + $0xc8] sm:$0xff]
  %v44 = vld [vmem:[%s1 + $0xd0] sm:$0xff]
  %v45 = vld [vmem:[%s1 + $0xd8] sm:$0xff]
  %v46 = vld [vmem:[%s1 + $0xe0] sm:$0xff]
  %v47 = vld [vmem:[%s1 + $0xe8] sm:$0xff]
  %v48 = vld [vmem:[%s1 + $0xf0] sm:$0xff]
  %v49 = vld [vmem:[%s1 + $0xf8] sm:$0xff]
  %v50 = vld [vmem:[%s1 + $0x100] sm:$0xff]
  %v51 = vld [vmem:[%s1 + $0x108] sm:$0xff]
  %v52 = vld [vmem:[%s1 + $0x110] sm:$0xff]
  %v53 = vld [vmem:[%s1 + $0x118] sm:$0xff]
  %v54 = vld [vmem:[%s1 + $0x120] sm:$0xff]
  %v55 = vld [vmem:[%s1 + $0x128] sm:$0xff]
  %v56 = vld [vmem:[%s1 + $0x130] sm:$0xff]
  %v57 = vld [vmem:[%s1 + $0x138] sm:$0xff]
  %v58 = vld [vmem:[%s1 + $0x140] sm:$0xff]
  %v59 = vld [vmem:[%s1 + $0x148] sm:$0xff]
  %v60 = vld [vmem:[%s1 + $0x150] sm:$0xff]
  %v61 = vld [vmem:[%s1 + $0x158] sm:$0xff]
  %v62 = vld [vmem:[%s1 + $0x160] sm:$0xff]
  %v63 = vld [vmem:[%s1 + $0x168] sm:$0xff]
  %v64 = vld [vmem:[%s1 + $0x170] sm:$0xff]
  %v65 = vld [vmem:[%s1 + $0x178] sm:$0xff]
  %v66 = vld [vmem:[%s1 + $0x180] sm:$0xff]
  %v67 = vld [vmem:[%s1 + $0x188] sm:$0xff]
  %v68 = vld [vmem:[%s1 + $0x190] sm:$0xff]
  %v69 = vld [vmem:[%s1 + $0x198] sm:$0xff]
  %v70 = vld [vmem:[%s1 + $0x1a0] sm:$0xff]
  %v71 = vld [vmem:[%s1 + $0x1a8] sm:$0xff]
  %v72 = vld [vmem:[%s1 + $0x1b0] sm:$0xff]
  %v73 = vld [vmem:[%s1 + $0x1b8] sm:$0xff]
  %v74 = vld [vmem:[%s1 + $0x1c0] sm:$0xff]
  %v75 = vld [vmem:[%s1 + $0x1c8] sm:$0xff]
  %v76 = vld [vmem:[%s1 + $0x1d0] sm:$0xff]
  %v77 = vld [vmem:[%s1 + $0x1d8] sm:$0xff]
  %v78 = vld [vmem:[%s1 + $0x1e0] sm:$0xff]
  %v79 = vld [vmem:[%s1 + $0x1e8] sm:$0xff]
  %v80 = vld [vmem:[%s1 + $0x1f0] sm:$0xff]
  %v81 = vld [vmem:[%s1 + $0x1f8] sm:$0xff]
  %v82 = vpack.c.bf16 %v19, %v18
  %v83 = vpack.c.bf16 %v21, %v20
  %v84 = vpack.c.bf16 %v23, %v22
  %v85 = vpack.c.bf16 %v25, %v24
  %v86 = vpack.c.bf16 %v27, %v26
  %v87 = vpack.c.bf16 %v29, %v28
  %v88 = vpack.c.bf16 %v31, %v30
  %v89 = vpack.c.bf16 %v33, %v32
  %v90 = vpack.c.bf16 %v35, %v34
  %v91 = vpack.c.bf16 %v37, %v36
  %v92 = vpack.c.bf16 %v39, %v38
  %v93 = vpack.c.bf16 %v41, %v40
  %v94 = vpack.c.bf16 %v43, %v42
  %v95 = vpack.c.bf16 %v45, %v44
  %v96 = vpack.c.bf16 %v47, %v46
  %v97 = vpack.c.bf16 %v49, %v48
  %v98 = vpack.c.bf16 %v51, %v50
  %v99 = vpack.c.bf16 %v53, %v52
  %v100 = vpack.c.bf16 %v55, %v54
  %v101 = vpack.c.bf16 %v57, %v56
  %v102 = vpack.c.bf16 %v59, %v58
  %v103 = vpack.c.bf16 %v61, %v60
  %v104 = vpack.c.bf16 %v63, %v62
  %v105 = vpack.c.bf16 %v65, %v64
  %v106 = vpack.c.bf16 %v67, %v66
  %v107 = vpack.c.bf16 %v69, %v68
  %v108 = vpack.c.bf16 %v71, %v70
  %v109 = vpack.c.bf16 %v73, %v72
  %v110 = vpack.c.bf16 %v75, %v74
  %v111 = vpack.c.bf16 %v77, %v76
  %v112 = vpack.c.bf16 %v79, %v78
  %v113 = vpack.c.bf16 %v81, %v80
  %v114 = vld [vmem:[%s2] sm:$0xf]
  %v115 = vld [vmem:[%s2 + $0x4] sm:$0xf]
  %v116 = vld [vmem:[%s2 + $0x8] sm:$0xf]
  %v117 = vld [vmem:[%s2 + $0xc] sm:$0xf]
  %v118 = vld [vmem:[%s2 + $0x10] sm:$0xf]
  %v119 = vld [vmem:[%s2 + $0x14] sm:$0xf]
  %v120 = vld [vmem:[%s2 + $0x18] sm:$0xf]
  %v121 = vld [vmem:[%s2 + $0x1c] sm:$0xf]
  %v122 = vld [vmem:[%s3] sm:$0x1]
  %v124 = vlaneseq
  %v125 = vshrl.u32 %v124, 7
  %v126 = vsub.s32 0, %v125
  %v127 = vrot.slane %v122, %v126
  %v137 = vunpack.c.l.b16 %v114
  %v138 = vunpack.c.l.b16 %v115
  %v139 = vunpack.c.l.b16 %v116
  %v140 = vunpack.c.l.b16 %v117
  %v141 = vunpack.c.l.b16 %v118
  %v142 = vunpack.c.l.b16 %v119
  %v143 = vunpack.c.l.b16 %v120
  %v144 = vunpack.c.l.b16 %v121
  %v145 = vpack.c.b16 %v138, %v137
  %v146 = vpack.c.b16 %v140, %v139
  %v147 = vpack.c.b16 %v142, %v141
  %v148 = vpack.c.b16 %v144, %v143
  %vm153 = vcmask 523264
  %v155 = vsel %vm153, %v82, 0
  %v158 = vsel %vm153, %v83, 0
  %v161 = vsel %vm153, %v84, 0
  %v164 = vsel %vm153, %v85, 0
  %v167 = vsel %vm153, %v86, 0
  %v170 = vsel %vm153, %v87, 0
  %v173 = vsel %vm153, %v88, 0
  %v176 = vsel %vm153, %v89, 0
  %v179 = vsel %vm153, %v90, 0
  %v182 = vsel %vm153, %v91, 0
  %v185 = vsel %vm153, %v92, 0
  %v188 = vsel %vm153, %v93, 0
  %v191 = vsel %vm153, %v94, 0
  %v194 = vsel %vm153, %v95, 0
  %v197 = vsel %vm153, %v96, 0
  %v200 = vsel %vm153, %v97, 0
  %v203 = vsel %vm153, %v98, 0
  %v206 = vsel %vm153, %v99, 0
  %v209 = vsel %vm153, %v100, 0
  %v212 = vsel %vm153, %v101, 0
  %v215 = vsel %vm153, %v102, 0
  %v218 = vsel %vm153, %v103, 0
  %v221 = vsel %vm153, %v104, 0
  %v224 = vsel %vm153, %v105, 0
  %v227 = vsel %vm153, %v106, 0
  %v230 = vsel %vm153, %v107, 0
  %v233 = vsel %vm153, %v108, 0
  %v236 = vsel %vm153, %v109, 0
  %v239 = vsel %vm153, %v110, 0
  %v242 = vsel %vm153, %v111, 0
  %v245 = vsel %vm153, %v112, 0
  %v248 = vsel %vm153, %v113, 0
  %250 = vmatprep.subr.bf16.mxu0 0
  %251 = vmatpush1.bf16.msra.mxu0 %v145
  %252 = vmatprep.subr.bf16.mxu0 0
  %253 = vmatpush1.bf16.msra.mxu0 %v146
  %254 = vmatprep.subr.bf16.mxu0 0
  %255 = vmatpush1.bf16.msra.mxu0 %v147
  %256 = vmatprep.subr.bf16.mxu0 0
  %257 = vmatpush1.bf16.msra.mxu0 %v148
  %258 = vmatprep.subr.bf16.mxu0 0
  %259 = vmatpush1.bf16.msra.mxu0 0
  %260 = vmatprep.subr.bf16.mxu0 0
  %261 = vmatpush1.bf16.msra.mxu0 0
  %262 = vmatprep.subr.bf16.mxu0 0
  %263 = vmatpush1.bf16.msra.mxu0 0
  %264 = vmatprep.subr.bf16.mxu0 0
  %265 = vmatpush1.bf16.msra.mxu0 0
  %266 = vmatprep.subr.bf16.mxu0 0
  %267 = vmatpush1.bf16.msra.mxu0 0
  %268 = vmatprep.subr.bf16.mxu0 0
  %269 = vmatpush1.bf16.msra.mxu0 0
  %270 = vmatprep.subr.bf16.mxu0 0
  %271 = vmatpush1.bf16.msra.mxu0 0
  %272 = vmatprep.subr.bf16.mxu0 0
  %273 = vmatpush1.bf16.msra.mxu0 0
  %274 = vmatprep.subr.bf16.mxu0 0
  %275 = vmatpush1.bf16.msra.mxu0 0
  %276 = vmatprep.subr.bf16.mxu0 0
  %277 = vmatpush1.bf16.msra.mxu0 0
  %278 = vmatprep.subr.bf16.mxu0 0
  %279 = vmatpush1.bf16.msra.mxu0 0
  %280 = vmatprep.subr.bf16.mxu0 0
  %281 = vmatpush1.bf16.msra.mxu0 0
  %282 = vmatprep.mubr.bf16.mxu0 0
  %283 = vmatmul.mubr.bf16.gmra.mrb[0].mxu0 %v155
  %v284 = vpop.f32.mrb[0].mxu0
  %v285 = vadd.f32 %v127, %v284
  %v286 = vpop.f32.mrb[0].mxu0
  %v287 = vpop.f32.mrb[0].mxu0
  %v288 = vadd.f32 %v127, %v287
  %v289 = vpop.f32.mrb[0].mxu0
  %290 = vmatprep.mubr.bf16.mxu0 0
  %291 = vmatmul.mubr.bf16.gmra.mrb[0].mxu0 %v158
  %v292 = vpop.f32.mrb[0].mxu0
  %v293 = vadd.f32 %v127, %v292
  %v294 = vpop.f32.mrb[0].mxu0
  %v295 = vpop.f32.mrb[0].mxu0
  %v296 = vadd.f32 %v127, %v295
  %v297 = vpop.f32.mrb[0].mxu0
  %298 = vmatprep.mubr.bf16.mxu0 0
  %299 = vmatmul.mubr.bf16.gmra.mrb[0].mxu0 %v161
  %v300 = vpop.f32.mrb[0].mxu0
  %v301 = vadd.f32 %v127, %v300
  %v302 = vpop.f32.mrb[0].mxu0
  %v303 = vpop.f32.mrb[0].mxu0
  %v304 = vadd.f32 %v127, %v303
  %v305 = vpop.f32.mrb[0].mxu0
  %306 = vmatprep.mubr.bf16.mxu0 0
  %307 = vmatmul.mubr.bf16.gmra.mrb[0].mxu0 %v164
  %v308 = vpop.f32.mrb[0].mxu0
  %v309 = vadd.f32 %v127, %v308
  %v310 = vpop.f32.mrb[0].mxu0
  %v311 = vpop.f32.mrb[0].mxu0
  %v312 = vadd.f32 %v127, %v311
  %v313 = vpop.f32.mrb[0].mxu0
  %314 = vmatprep.mubr.bf16.mxu0 0
  %315 = vmatmul.mubr.bf16.gmra.mrb[0].mxu0 %v167
  %v316 = vpop.f32.mrb[0].mxu0
  %v317 = vadd.f32 %v127, %v316
  %v318 = vpop.f32.mrb[0].mxu0
  %v319 = vpop.f32.mrb[0].mxu0
  %v320 = vadd.f32 %v127, %v319
  %v321 = vpop.f32.mrb[0].mxu0
  %322 = vmatprep.mubr.bf16.mxu0 0
  %323 = vmatmul.mubr.bf16.gmra.mrb[0].mxu0 %v170
  %v324 = vpop.f32.mrb[0].mxu0
  %v325 = vadd.f32 %v127, %v324
  %v326 = vpop.f32.mrb[0].mxu0
  %v327 = vpop.f32.mrb[0].mxu0
  %v328 = vadd.f32 %v127, %v327
  %v329 = vpop.f32.mrb[0].mxu0
  %330 = vmatprep.mubr.bf16.mxu0 0
  %331 = vmatmul.mubr.bf16.gmra.mrb[0].mxu0 %v173
  %v332 = vpop.f32.mrb[0].mxu0
  %v333 = vadd.f32 %v127, %v332
  %v334 = vpop.f32.mrb[0].mxu0
  %v335 = vpop.f32.mrb[0].mxu0
  %v336 = vadd.f32 %v127, %v335
  %v337 = vpop.f32.mrb[0].mxu0
  %338 = vmatprep.mubr.bf16.mxu0 0
  %339 = vmatmul.mubr.bf16.gmra.mrb[0].mxu0 %v176
  %v340 = vpop.f32.mrb[0].mxu0
  %v341 = vadd.f32 %v127, %v340
  %v342 = vpop.f32.mrb[0].mxu0
  %v343 = vpop.f32.mrb[0].mxu0
  %v344 = vadd.f32 %v127, %v343
  %v345 = vpop.f32.mrb[0].mxu0
  %346 = vmatprep.mubr.bf16.mxu0 0
  %347 = vmatmul.mubr.bf16.gmra.mrb[0].mxu0 %v179
  %v348 = vpop.f32.mrb[0].mxu0
  %v349 = vadd.f32 %v127, %v348
  %v350 = vpop.f32.mrb[0].mxu0
  %v351 = vpop.f32.mrb[0].mxu0
  %v352 = vadd.f32 %v127, %v351
  %v353 = vpop.f32.mrb[0].mxu0
  %354 = vmatprep.mubr.bf16.mxu0 0
  %355 = vmatmul.mubr.bf16.gmra.mrb[0].mxu0 %v182
  %v356 = vpop.f32.mrb[0].mxu0
  %v357 = vadd.f32 %v127, %v356
  %v358 = vpop.f32.mrb[0].mxu0
  %v359 = vpop.f32.mrb[0].mxu0
  %v360 = vadd.f32 %v127, %v359
  %v361 = vpop.f32.mrb[0].mxu0
  %362 = vmatprep.mubr.bf16.mxu0 0
  %363 = vmatmul.mubr.bf16.gmra.mrb[0].mxu0 %v185
  %v364 = vpop.f32.mrb[0].mxu0
  %v365 = vadd.f32 %v127, %v364
  %v366 = vpop.f32.mrb[0].mxu0
  %v367 = vpop.f32.mrb[0].mxu0
  %v368 = vadd.f32 %v127, %v367
  %v369 = vpop.f32.mrb[0].mxu0
  %370 = vmatprep.mubr.bf16.mxu0 0
  %371 = vmatmul.mubr.bf16.gmra.mrb[0].mxu0 %v188
  %v372 = vpop.f32.mrb[0].mxu0
  %v373 = vadd.f32 %v127, %v372
  %v374 = vpop.f32.mrb[0].mxu0
  %v375 = vpop.f32.mrb[0].mxu0
  %v376 = vadd.f32 %v127, %v375
  %v377 = vpop.f32.mrb[0].mxu0
  %378 = vmatprep.mubr.bf16.mxu0 0
  %379 = vmatmul.mubr.bf16.gmra.mrb[0].mxu0 %v191
  %v380 = vpop.f32.mrb[0].mxu0
  %v381 = vadd.f32 %v127, %v380
  %v382 = vpop.f32.mrb[0].mxu0
  %v383 = vpop.f32.mrb[0].mxu0
  %v384 = vadd.f32 %v127, %v383
  %v385 = vpop.f32.mrb[0].mxu0
  %386 = vmatprep.mubr.bf16.mxu0 0
  %387 = vmatmul.mubr.bf16.gmra.mrb[0].mxu0 %v194
  %v388 = vpop.f32.mrb[0].mxu0
  %v389 = vadd.f32 %v127, %v388
  %v390 = vpop.f32.mrb[0].mxu0
  %v391 = vpop.f32.mrb[0].mxu0
  %v392 = vadd.f32 %v127, %v391
  %v393 = vpop.f32.mrb[0].mxu0
  %394 = vmatprep.mubr.bf16.mxu0 0
  %395 = vmatmul.mubr.bf16.gmra.mrb[0].mxu0 %v197
  %v396 = vpop.f32.mrb[0].mxu0
  %v397 = vadd.f32 %v127, %v396
  %v398 = vpop.f32.mrb[0].mxu0
  %v399 = vpop.f32.mrb[0].mxu0
  %v400 = vadd.f32 %v127, %v399
  %v401 = vpop.f32.mrb[0].mxu0
  %402 = vmatprep.mubr.bf16.mxu0 0
  %403 = vmatmul.mubr.bf16.gmra.mrb[0].mxu0 %v200
  %v404 = vpop.f32.mrb[0].mxu0
  %v405 = vadd.f32 %v127, %v404
  %v406 = vpop.f32.mrb[0].mxu0
  %v407 = vpop.f32.mrb[0].mxu0
  %v408 = vadd.f32 %v127, %v407
  %v409 = vpop.f32.mrb[0].mxu0
  %410 = vmatprep.mubr.bf16.mxu0 0
  %411 = vmatmul.mubr.bf16.gmra.mrb[0].mxu0 %v203
  %v412 = vpop.f32.mrb[0].mxu0
  %v413 = vadd.f32 %v127, %v412
  %v414 = vpop.f32.mrb[0].mxu0
  %v415 = vpop.f32.mrb[0].mxu0
  %v416 = vadd.f32 %v127, %v415
  %v417 = vpop.f32.mrb[0].mxu0
  %418 = vmatprep.mubr.bf16.mxu0 0
  %419 = vmatmul.mubr.bf16.gmra.mrb[0].mxu0 %v206
  %v420 = vpop.f32.mrb[0].mxu0
  %v421 = vadd.f32 %v127, %v420
  %v422 = vpop.f32.mrb[0].mxu0
  %v423 = vpop.f32.mrb[0].mxu0
  %v424 = vadd.f32 %v127, %v423
  %v425 = vpop.f32.mrb[0].mxu0
  %426 = vmatprep.mubr.bf16.mxu0 0
  %427 = vmatmul.mubr.bf16.gmra.mrb[0].mxu0 %v209
  %v428 = vpop.f32.mrb[0].mxu0
  %v429 = vadd.f32 %v127, %v428
  %v430 = vpop.f32.mrb[0].mxu0
  %v431 = vpop.f32.mrb[0].mxu0
  %v432 = vadd.f32 %v127, %v431
  %v433 = vpop.f32.mrb[0].mxu0
  %434 = vmatprep.mubr.bf16.mxu0 0
  %435 = vmatmul.mubr.bf16.gmra.mrb[0].mxu0 %v212
  %v436 = vpop.f32.mrb[0].mxu0
  %v437 = vadd.f32 %v127, %v436
  %v438 = vpop.f32.mrb[0].mxu0
  %v439 = vpop.f32.mrb[0].mxu0
  %v440 = vadd.f32 %v127, %v439
  %v441 = vpop.f32.mrb[0].mxu0
  %442 = vmatprep.mubr.bf16.mxu0 0
  %443 = vmatmul.mubr.bf16.gmra.mrb[0].mxu0 %v215
  %v444 = vpop.f32.mrb[0].mxu0
  %v445 = vadd.f32 %v127, %v444
  %v446 = vpop.f32.mrb[0].mxu0
  %v447 = vpop.f32.mrb[0].mxu0
  %v448 = vadd.f32 %v127, %v447
  %v449 = vpop.f32.mrb[0].mxu0
  %450 = vmatprep.mubr.bf16.mxu0 0
  %451 = vmatmul.mubr.bf16.gmra.mrb[0].mxu0 %v218
  %v452 = vpop.f32.mrb[0].mxu0
  %v453 = vadd.f32 %v127, %v452
  %v454 = vpop.f32.mrb[0].mxu0
  %v455 = vpop.f32.mrb[0].mxu0
  %v456 = vadd.f32 %v127, %v455
  %v457 = vpop.f32.mrb[0].mxu0
  %458 = vmatprep.mubr.bf16.mxu0 0
  %459 = vmatmul.mubr.bf16.gmra.mrb[0].mxu0 %v221
  %v460 = vpop.f32.mrb[0].mxu0
  %v461 = vadd.f32 %v127, %v460
  %v462 = vpop.f32.mrb[0].mxu0
  %v463 = vpop.f32.mrb[0].mxu0
  %v464 = vadd.f32 %v127, %v463
  %v465 = vpop.f32.mrb[0].mxu0
  %466 = vmatprep.mubr.bf16.mxu0 0
  %467 = vmatmul.mubr.bf16.gmra.mrb[0].mxu0 %v224
  %v468 = vpop.f32.mrb[0].mxu0
  %v469 = vadd.f32 %v127, %v468
  %v470 = vpop.f32.mrb[0].mxu0
  %v471 = vpop.f32.mrb[0].mxu0
  %v472 = vadd.f32 %v127, %v471
  %v473 = vpop.f32.mrb[0].mxu0
  %474 = vmatprep.mubr.bf16.mxu0 0
  %475 = vmatmul.mubr.bf16.gmra.mrb[0].mxu0 %v227
  %v476 = vpop.f32.mrb[0].mxu0
  %v477 = vadd.f32 %v127, %v476
  %v478 = vpop.f32.mrb[0].mxu0
  %v479 = vpop.f32.mrb[0].mxu0
  %v480 = vadd.f32 %v127, %v479
  %v481 = vpop.f32.mrb[0].mxu0
  %482 = vmatprep.mubr.bf16.mxu0 0
  %483 = vmatmul.mubr.bf16.gmra.mrb[0].mxu0 %v230
  %v484 = vpop.f32.mrb[0].mxu0
  %v485 = vadd.f32 %v127, %v484
  %v486 = vpop.f32.mrb[0].mxu0
  %v487 = vpop.f32.mrb[0].mxu0
  %v488 = vadd.f32 %v127, %v487
  %v489 = vpop.f32.mrb[0].mxu0
  %490 = vmatprep.mubr.bf16.mxu0 0
  %491 = vmatmul.mubr.bf16.gmra.mrb[0].mxu0 %v233
  %v492 = vpop.f32.mrb[0].mxu0
  %v493 = vadd.f32 %v127, %v492
  %v494 = vpop.f32.mrb[0].mxu0
  %v495 = vpop.f32.mrb[0].mxu0
  %v496 = vadd.f32 %v127, %v495
  %v497 = vpop.f32.mrb[0].mxu0
  %498 = vmatprep.mubr.bf16.mxu0 0
  %499 = vmatmul.mubr.bf16.gmra.mrb[0].mxu0 %v236
  %v500 = vpop.f32.mrb[0].mxu0
  %v501 = vadd.f32 %v127, %v500
  %v502 = vpop.f32.mrb[0].mxu0
  %v503 = vpop.f32.mrb[0].mxu0
  %v504 = vadd.f32 %v127, %v503
  %v505 = vpop.f32.mrb[0].mxu0
  %506 = vmatprep.mubr.bf16.mxu0 0
  %507 = vmatmul.mubr.bf16.gmra.mrb[0].mxu0 %v239
  %v508 = vpop.f32.mrb[0].mxu0
  %v509 = vadd.f32 %v127, %v508
  %v510 = vpop.f32.mrb[0].mxu0
  %v511 = vpop.f32.mrb[0].mxu0
  %v512 = vadd.f32 %v127, %v511
  %v513 = vpop.f32.mrb[0].mxu0
  %514 = vmatprep.mubr.bf16.mxu0 0
  %515 = vmatmul.mubr.bf16.gmra.mrb[0].mxu0 %v242
  %v516 = vpop.f32.mrb[0].mxu0
  %v517 = vadd.f32 %v127, %v516
  %v518 = vpop.f32.mrb[0].mxu0
  %v519 = vpop.f32.mrb[0].mxu0
  %v520 = vadd.f32 %v127, %v519
  %v521 = vpop.f32.mrb[0].mxu0
  %522 = vmatprep.mubr.bf16.mxu0 0
  %523 = vmatmul.mubr.bf16.gmra.mrb[0].mxu0 %v245
  %v524 = vpop.f32.mrb[0].mxu0
  %v525 = vadd.f32 %v127, %v524
  %v526 = vpop.f32.mrb[0].mxu0
  %v527 = vpop.f32.mrb[0].mxu0
  %v528 = vadd.f32 %v127, %v527
  %v529 = vpop.f32.mrb[0].mxu0
  %530 = vmatprep.mubr.bf16.mxu0 0
  %531 = vmatmul.mubr.bf16.gmra.mrb[0].mxu0 %v248
  %v532 = vpop.f32.mrb[0].mxu0
  %v533 = vadd.f32 %v127, %v532
  %v534 = vpop.f32.mrb[0].mxu0
  %v535 = vpop.f32.mrb[0].mxu0
  %v536 = vadd.f32 %v127, %v535
  %v537 = vpop.f32.mrb[0].mxu0
  %538 = vdwg.mxu0
  %v539 = vld [vmem:[%s0] sm:$0xff]
  %v540 = vld [vmem:[%s0 + $0x8] sm:$0xff]
  %v541 = vld [vmem:[%s0 + $0x10] sm:$0xff]
  %v542 = vld [vmem:[%s0 + $0x18] sm:$0xff]
  %v543 = vld [vmem:[%s0 + $0x20] sm:$0xff]
  %v544 = vld [vmem:[%s0 + $0x28] sm:$0xff]
  %v545 = vld [vmem:[%s0 + $0x30] sm:$0xff]
  %v546 = vld [vmem:[%s0 + $0x38] sm:$0xff]
  %v547 = vld [vmem:[%s0 + $0x40] sm:$0xff]
  %v548 = vld [vmem:[%s0 + $0x48] sm:$0xff]
  %v549 = vld [vmem:[%s0 + $0x50] sm:$0xff]
  %v550 = vld [vmem:[%s0 + $0x58] sm:$0xff]
  %v551 = vld [vmem:[%s0 + $0x60] sm:$0xff]
  %v552 = vld [vmem:[%s0 + $0x68] sm:$0xff]
  %v553 = vld [vmem:[%s0 + $0x70] sm:$0xff]
  %v554 = vld [vmem:[%s0 + $0x78] sm:$0xff]
  %v555 = vld [vmem:[%s0 + $0x80] sm:$0xff]
  %v556 = vld [vmem:[%s0 + $0x88] sm:$0xff]
  %v557 = vld [vmem:[%s0 + $0x90] sm:$0xff]
  %v558 = vld [vmem:[%s0 + $0x98] sm:$0xff]
  %v559 = vld [vmem:[%s0 + $0xa0] sm:$0xff]
  %v560 = vld [vmem:[%s0 + $0xa8] sm:$0xff]
  %v561 = vld [vmem:[%s0 + $0xb0] sm:$0xff]
  %v562 = vld [vmem:[%s0 + $0xb8] sm:$0xff]
  %v563 = vld [vmem:[%s0 + $0xc0] sm:$0xff]
  %v564 = vld [vmem:[%s0 + $0xc8] sm:$0xff]
  %v565 = vld [vmem:[%s0 + $0xd0] sm:$0xff]
  %v566 = vld [vmem:[%s0 + $0xd8] sm:$0xff]
  %v567 = vld [vmem:[%s0 + $0xe0] sm:$0xff]
  %v568 = vld [vmem:[%s0 + $0xe8] sm:$0xff]
  %v569 = vld [vmem:[%s0 + $0xf0] sm:$0xff]
  %v570 = vld [vmem:[%s0 + $0xf8] sm:$0xff]
  %v571 = vld [vmem:[%s0 + $0x100] sm:$0xff]
  %v572 = vld [vmem:[%s0 + $0x108] sm:$0xff]
  %v573 = vld [vmem:[%s0 + $0x110] sm:$0xff]
  %v574 = vld [vmem:[%s0 + $0x118] sm:$0xff]
  %v575 = vld [vmem:[%s0 + $0x120] sm:$0xff]
  %v576 = vld [vmem:[%s0 + $0x128] sm:$0xff]
  %v577 = vld [vmem:[%s0 + $0x130] sm:$0xff]
  %v578 = vld [vmem:[%s0 + $0x138] sm:$0xff]
  %v579 = vld [vmem:[%s0 + $0x140] sm:$0xff]
  %v580 = vld [vmem:[%s0 + $0x148] sm:$0xff]
  %v581 = vld [vmem:[%s0 + $0x150] sm:$0xff]
  %v582 = vld [vmem:[%s0 + $0x158] sm:$0xff]
  %v583 = vld [vmem:[%s0 + $0x160] sm:$0xff]
  %v584 = vld [vmem:[%s0 + $0x168] sm:$0xff]
  %v585 = vld [vmem:[%s0 + $0x170] sm:$0xff]
  %v586 = vld [vmem:[%s0 + $0x178] sm:$0xff]
  %v587 = vld [vmem:[%s0 + $0x180] sm:$0xff]
  %v588 = vld [vmem:[%s0 + $0x188] sm:$0xff]
  %v589 = vld [vmem:[%s0 + $0x190] sm:$0xff]
  %v590 = vld [vmem:[%s0 + $0x198] sm:$0xff]
  %v591 = vld [vmem:[%s0 + $0x1a0] sm:$0xff]
  %v592 = vld [vmem:[%s0 + $0x1a8] sm:$0xff]
  %v593 = vld [vmem:[%s0 + $0x1b0] sm:$0xff]
  %v594 = vld [vmem:[%s0 + $0x1b8] sm:$0xff]
  %v595 = vld [vmem:[%s0 + $0x1c0] sm:$0xff]
  %v596 = vld [vmem:[%s0 + $0x1c8] sm:$0xff]
  %v597 = vld [vmem:[%s0 + $0x1d0] sm:$0xff]
  %v598 = vld [vmem:[%s0 + $0x1d8] sm:$0xff]
  %v599 = vld [vmem:[%s0 + $0x1e0] sm:$0xff]
  %v600 = vld [vmem:[%s0 + $0x1e8] sm:$0xff]
  %v601 = vld [vmem:[%s0 + $0x1f0] sm:$0xff]
  %v602 = vld [vmem:[%s0 + $0x1f8] sm:$0xff]
  %v603 = vadd.f32 %v285, 2.0
  %v604 = vadd.f32 %v288, 2.0
  %v605 = vadd.f32 %v293, 2.0
  %v606 = vadd.f32 %v296, 2.0
  %v607 = vadd.f32 %v301, 2.0
  %v608 = vadd.f32 %v304, 2.0
  %v609 = vadd.f32 %v309, 2.0
  %v610 = vadd.f32 %v312, 2.0
  %v611 = vadd.f32 %v317, 2.0
  %v612 = vadd.f32 %v320, 2.0
  %v613 = vadd.f32 %v325, 2.0
  %v614 = vadd.f32 %v328, 2.0
  %v615 = vadd.f32 %v333, 2.0
  %v616 = vadd.f32 %v336, 2.0
  %v617 = vadd.f32 %v341, 2.0
  %v618 = vadd.f32 %v344, 2.0
  %v619 = vadd.f32 %v349, 2.0
  %v620 = vadd.f32 %v352, 2.0
  %v621 = vadd.f32 %v357, 2.0
  %v622 = vadd.f32 %v360, 2.0
  %v623 = vadd.f32 %v365, 2.0
  %v624 = vadd.f32 %v368, 2.0
  %v625 = vadd.f32 %v373, 2.0
  %v626 = vadd.f32 %v376, 2.0
  %v627 = vadd.f32 %v381, 2.0
  %v628 = vadd.f32 %v384, 2.0
  %v629 = vadd.f32 %v389, 2.0
  %v630 = vadd.f32 %v392, 2.0
  %v631 = vadd.f32 %v397, 2.0
  %v632 = vadd.f32 %v400, 2.0
  %v633 = vadd.f32 %v405, 2.0
  %v634 = vadd.f32 %v408, 2.0
  %v635 = vadd.f32 %v413, 2.0
  %v636 = vadd.f32 %v416, 2.0
  %v637 = vadd.f32 %v421, 2.0
  %v638 = vadd.f32 %v424, 2.0
  %v639 = vadd.f32 %v429, 2.0
  %v640 = vadd.f32 %v432, 2.0
  %v641 = vadd.f32 %v437, 2.0
  %v642 = vadd.f32 %v440, 2.0
  %v643 = vadd.f32 %v445, 2.0
  %v644 = vadd.f32 %v448, 2.0
  %v645 = vadd.f32 %v453, 2.0
  %v646 = vadd.f32 %v456, 2.0
  %v647 = vadd.f32 %v461, 2.0
  %v648 = vadd.f32 %v464, 2.0
  %v649 = vadd.f32 %v469, 2.0
  %v650 = vadd.f32 %v472, 2.0
  %v651 = vadd.f32 %v477, 2.0
  %v652 = vadd.f32 %v480, 2.0
  %v653 = vadd.f32 %v485, 2.0
  %v654 = vadd.f32 %v488, 2.0
  %v655 = vadd.f32 %v493, 2.0
  %v656 = vadd.f32 %v496, 2.0
  %v657 = vadd.f32 %v501, 2.0
  %v658 = vadd.f32 %v504, 2.0
  %v659 = vadd.f32 %v509, 2.0
  %v660 = vadd.f32 %v512, 2.0
  %v661 = vadd.f32 %v517, 2.0
  %v662 = vadd.f32 %v520, 2.0
  %v663 = vadd.f32 %v525, 2.0
  %v664 = vadd.f32 %v528, 2.0
  %v665 = vadd.f32 %v533, 2.0
  %v666 = vadd.f32 %v536, 2.0
  %v667 = vmul.f32 %v539, %v603
  %v668 = vmul.f32 %v540, %v604
  %v669 = vmul.f32 %v541, %v605
  %v670 = vmul.f32 %v542, %v606
  %v671 = vmul.f32 %v543, %v607
  %v672 = vmul.f32 %v544, %v608
  %v673 = vmul.f32 %v545, %v609
  %v674 = vmul.f32 %v546, %v610
  %v675 = vmul.f32 %v547, %v611
  %v676 = vmul.f32 %v548, %v612
  %v677 = vmul.f32 %v549, %v613
  %v678 = vmul.f32 %v550, %v614
  %v679 = vmul.f32 %v551, %v615
  %v680 = vmul.f32 %v552, %v616
  %v681 = vmul.f32 %v553, %v617
  %v682 = vmul.f32 %v554, %v618
  %v683 = vmul.f32 %v555, %v619
  %v684 = vmul.f32 %v556, %v620
  %v685 = vmul.f32 %v557, %v621
  %v686 = vmul.f32 %v558, %v622
  %v687 = vmul.f32 %v559, %v623
  %v688 = vmul.f32 %v560, %v624
  %v689 = vmul.f32 %v561, %v625
  %v690 = vmul.f32 %v562, %v626
  %v691 = vmul.f32 %v563, %v627
  %v692 = vmul.f32 %v564, %v628
  %v693 = vmul.f32 %v565, %v629
  %v694 = vmul.f32 %v566, %v630
  %v695 = vmul.f32 %v567, %v631
  %v696 = vmul.f32 %v568, %v632
  %v697 = vmul.f32 %v569, %v633
  %v698 = vmul.f32 %v570, %v634
  %v699 = vmul.f32 %v571, %v635
  %v700 = vmul.f32 %v572, %v636
  %v701 = vmul.f32 %v573, %v637
  %v702 = vmul.f32 %v574, %v638
  %v703 = vmul.f32 %v575, %v639
  %v704 = vmul.f32 %v576, %v640
  %v705 = vmul.f32 %v577, %v641
  %v706 = vmul.f32 %v578, %v642
  %v707 = vmul.f32 %v579, %v643
  %v708 = vmul.f32 %v580, %v644
  %v709 = vmul.f32 %v581, %v645
  %v710 = vmul.f32 %v582, %v646
  %v711 = vmul.f32 %v583, %v647
  %v712 = vmul.f32 %v584, %v648
  %v713 = vmul.f32 %v585, %v649
  %v714 = vmul.f32 %v586, %v650
  %v715 = vmul.f32 %v587, %v651
  %v716 = vmul.f32 %v588, %v652
  %v717 = vmul.f32 %v589, %v653
  %v718 = vmul.f32 %v590, %v654
  %v719 = vmul.f32 %v591, %v655
  %v720 = vmul.f32 %v592, %v656
  %v721 = vmul.f32 %v593, %v657
  %v722 = vmul.f32 %v594, %v658
  %v723 = vmul.f32 %v595, %v659
  %v724 = vmul.f32 %v596, %v660
  %v725 = vmul.f32 %v597, %v661
  %v726 = vmul.f32 %v598, %v662
  %v727 = vmul.f32 %v599, %v663
  %v728 = vmul.f32 %v600, %v664
  %v729 = vmul.f32 %v601, %v665
  %v730 = vmul.f32 %v602, %v666
  %795 = vrot.lane.b32.xlu0 %v285, 64
  %v796 = vpop.permute.xlu0 %795
  %797 = vrot.lane.b32.xlu0 %v288, 64
  %v798 = vpop.permute.xlu0 %797
  %799 = vrot.lane.b32.xlu0 %v293, 64
  %v800 = vpop.permute.xlu0 %799
  %801 = vrot.lane.b32.xlu0 %v296, 64
  %v802 = vpop.permute.xlu0 %801
  %803 = vrot.lane.b32.xlu0 %v301, 64
  %v804 = vpop.permute.xlu0 %803
  %805 = vrot.lane.b32.xlu0 %v304, 64
  %v806 = vpop.permute.xlu0 %805
  %807 = vrot.lane.b32.xlu0 %v309, 64
  %v808 = vpop.permute.xlu0 %807
  %809 = vrot.lane.b32.xlu0 %v312, 64
  %v810 = vpop.permute.xlu0 %809
  %811 = vrot.lane.b32.xlu0 %v317, 64
  %v812 = vpop.permute.xlu0 %811
  %813 = vrot.lane.b32.xlu0 %v320, 64
  %v814 = vpop.permute.xlu0 %813
  %815 = vrot.lane.b32.xlu0 %v325, 64
  %v816 = vpop.permute.xlu0 %815
  %817 = vrot.lane.b32.xlu0 %v328, 64
  %v818 = vpop.permute.xlu0 %817
  %819 = vrot.lane.b32.xlu0 %v333, 64
  %v820 = vpop.permute.xlu0 %819
  %821 = vrot.lane.b32.xlu0 %v336, 64
  %v822 = vpop.permute.xlu0 %821
  %823 = vrot.lane.b32.xlu0 %v341, 64
  %v824 = vpop.permute.xlu0 %823
  %825 = vrot.lane.b32.xlu0 %v344, 64
  %v826 = vpop.permute.xlu0 %825
  %827 = vrot.lane.b32.xlu0 %v349, 64
  %v828 = vpop.permute.xlu0 %827
  %829 = vrot.lane.b32.xlu0 %v352, 64
  %v830 = vpop.permute.xlu0 %829
  %831 = vrot.lane.b32.xlu0 %v357, 64
  %v832 = vpop.permute.xlu0 %831
  %833 = vrot.lane.b32.xlu0 %v360, 64
  %v834 = vpop.permute.xlu0 %833
  %835 = vrot.lane.b32.xlu0 %v365, 64
  %v836 = vpop.permute.xlu0 %835
  %837 = vrot.lane.b32.xlu0 %v368, 64
  %v838 = vpop.permute.xlu0 %837
  %839 = vrot.lane.b32.xlu0 %v373, 64
  %v840 = vpop.permute.xlu0 %839
  %841 = vrot.lane.b32.xlu0 %v376, 64
  %v842 = vpop.permute.xlu0 %841
  %843 = vrot.lane.b32.xlu0 %v381, 64
  %v844 = vpop.permute.xlu0 %843
  %845 = vrot.lane.b32.xlu0 %v384, 64
  %v846 = vpop.permute.xlu0 %845
  %847 = vrot.lane.b32.xlu0 %v389, 64
  %v848 = vpop.permute.xlu0 %847
  %849 = vrot.lane.b32.xlu0 %v392, 64
  %v850 = vpop.permute.xlu0 %849
  %851 = vrot.lane.b32.xlu0 %v397, 64
  %v852 = vpop.permute.xlu0 %851
  %853 = vrot.lane.b32.xlu0 %v400, 64
  %v854 = vpop.permute.xlu0 %853
  %855 = vrot.lane.b32.xlu0 %v405, 64
  %v856 = vpop.permute.xlu0 %855
  %857 = vrot.lane.b32.xlu0 %v408, 64
  %v858 = vpop.permute.xlu0 %857
  %859 = vrot.lane.b32.xlu0 %v413, 64
  %v860 = vpop.permute.xlu0 %859
  %861 = vrot.lane.b32.xlu0 %v416, 64
  %v862 = vpop.permute.xlu0 %861
  %863 = vrot.lane.b32.xlu0 %v421, 64
  %v864 = vpop.permute.xlu0 %863
  %865 = vrot.lane.b32.xlu0 %v424, 64
  %v866 = vpop.permute.xlu0 %865
  %867 = vrot.lane.b32.xlu0 %v429, 64
  %v868 = vpop.permute.xlu0 %867
  %869 = vrot.lane.b32.xlu0 %v432, 64
  %v870 = vpop.permute.xlu0 %869
  %871 = vrot.lane.b32.xlu0 %v437, 64
  %v872 = vpop.permute.xlu0 %871
  %873 = vrot.lane.b32.xlu0 %v440, 64
  %v874 = vpop.permute.xlu0 %873
  %875 = vrot.lane.b32.xlu0 %v445, 64
  %v876 = vpop.permute.xlu0 %875
  %877 = vrot.lane.b32.xlu0 %v448, 64
  %v878 = vpop.permute.xlu0 %877
  %879 = vrot.lane.b32.xlu0 %v453, 64
  %v880 = vpop.permute.xlu0 %879
  %881 = vrot.lane.b32.xlu0 %v456, 64
  %v882 = vpop.permute.xlu0 %881
  %883 = vrot.lane.b32.xlu0 %v461, 64
  %v884 = vpop.permute.xlu0 %883
  %885 = vrot.lane.b32.xlu0 %v464, 64
  %v886 = vpop.permute.xlu0 %885
  %887 = vrot.lane.b32.xlu0 %v469, 64
  %v888 = vpop.permute.xlu0 %887
  %889 = vrot.lane.b32.xlu0 %v472, 64
  %v890 = vpop.permute.xlu0 %889
  %891 = vrot.lane.b32.xlu0 %v477, 64
  %v892 = vpop.permute.xlu0 %891
  %893 = vrot.lane.b32.xlu0 %v480, 64
  %v894 = vpop.permute.xlu0 %893
  %895 = vrot.lane.b32.xlu0 %v485, 64
  %v896 = vpop.permute.xlu0 %895
  %897 = vrot.lane.b32.xlu0 %v488, 64
  %v898 = vpop.permute.xlu0 %897
  %899 = vrot.lane.b32.xlu0 %v493, 64
  %v900 = vpop.permute.xlu0 %899
  %901 = vrot.lane.b32.xlu0 %v496, 64
  %v902 = vpop.permute.xlu0 %901
  %903 = vrot.lane.b32.xlu0 %v501, 64
  %v904 = vpop.permute.xlu0 %903
  %905 = vrot.lane.b32.xlu0 %v504, 64
  %v906 = vpop.permute.xlu0 %905
  %907 = vrot.lane.b32.xlu0 %v509, 64
  %v908 = vpop.permute.xlu0 %907
  %909 = vrot.lane.b32.xlu0 %v512, 64
  %v910 = vpop.permute.xlu0 %909
  %911 = vrot.lane.b32.xlu0 %v517, 64
  %v912 = vpop.permute.xlu0 %911
  %913 = vrot.lane.b32.xlu0 %v520, 64
  %v914 = vpop.permute.xlu0 %913
  %915 = vrot.lane.b32.xlu0 %v525, 64
  %v916 = vpop.permute.xlu0 %915
  %917 = vrot.lane.b32.xlu0 %v528, 64
  %v918 = vpop.permute.xlu0 %917
  %919 = vrot.lane.b32.xlu0 %v533, 64
  %v920 = vpop.permute.xlu0 %919
  %921 = vrot.lane.b32.xlu0 %v536, 64
  %v922 = vpop.permute.xlu0 %921
  %v987 = vadd.f32 %v667, %v796
  %v988 = vadd.f32 %v668, %v798
  %v989 = vadd.f32 %v669, %v800
  %v990 = vadd.f32 %v670, %v802
  %v991 = vadd.f32 %v671, %v804
  %v992 = vadd.f32 %v672, %v806
  %v993 = vadd.f32 %v673, %v808
  %v994 = vadd.f32 %v674, %v810
  %v995 = vadd.f32 %v675, %v812
  %v996 = vadd.f32 %v676, %v814
  %v997 = vadd.f32 %v677, %v816
  %v998 = vadd.f32 %v678, %v818
  %v999 = vadd.f32 %v679, %v820
  %v1000 = vadd.f32 %v680, %v822
  %v1001 = vadd.f32 %v681, %v824
  %v1002 = vadd.f32 %v682, %v826
  %v1003 = vadd.f32 %v683, %v828
  %v1004 = vadd.f32 %v684, %v830
  %v1005 = vadd.f32 %v685, %v832
  %v1006 = vadd.f32 %v686, %v834
  %v1007 = vadd.f32 %v687, %v836
  %v1008 = vadd.f32 %v688, %v838
  %v1009 = vadd.f32 %v689, %v840
  %v1010 = vadd.f32 %v690, %v842
  %v1011 = vadd.f32 %v691, %v844
  %v1012 = vadd.f32 %v692, %v846
  %v1013 = vadd.f32 %v693, %v848
  %v1014 = vadd.f32 %v694, %v850
  %v1015 = vadd.f32 %v695, %v852
  %v1016 = vadd.f32 %v696, %v854
  %v1017 = vadd.f32 %v697, %v856
  %v1018 = vadd.f32 %v698, %v858
  %v1019 = vadd.f32 %v699, %v860
  %v1020 = vadd.f32 %v700, %v862
  %v1021 = vadd.f32 %v701, %v864
  %v1022 = vadd.f32 %v702, %v866
  %v1023 = vadd.f32 %v703, %v868
  %v1024 = vadd.f32 %v704, %v870
  %v1025 = vadd.f32 %v705, %v872
  %v1026 = vadd.f32 %v706, %v874
  %v1027 = vadd.f32 %v707, %v876
  %v1028 = vadd.f32 %v708, %v878
  %v1029 = vadd.f32 %v709, %v880
  %v1030 = vadd.f32 %v710, %v882
  %v1031 = vadd.f32 %v711, %v884
  %v1032 = vadd.f32 %v712, %v886
  %v1033 = vadd.f32 %v713, %v888
  %v1034 = vadd.f32 %v714, %v890
  %v1035 = vadd.f32 %v715, %v892
  %v1036 = vadd.f32 %v716, %v894
  %v1037 = vadd.f32 %v717, %v896
  %v1038 = vadd.f32 %v718, %v898
  %v1039 = vadd.f32 %v719, %v900
  %v1040 = vadd.f32 %v720, %v902
  %v1041 = vadd.f32 %v721, %v904
  %v1042 = vadd.f32 %v722, %v906
  %v1043 = vadd.f32 %v723, %v908
  %v1044 = vadd.f32 %v724, %v910
  %v1045 = vadd.f32 %v725, %v912
  %v1046 = vadd.f32 %v726, %v914
  %v1047 = vadd.f32 %v727, %v916
  %v1048 = vadd.f32 %v728, %v918
  %v1049 = vadd.f32 %v729, %v920
  %v1050 = vadd.f32 %v730, %v922
  %1051 = vst.msk [vmem:[%s4] sm:$0xff] %vm153, %v987
  %1052 = vst.msk [vmem:[%s4 + $0x8] sm:$0xff] %vm153, %v988
  %1053 = vst.msk [vmem:[%s4 + $0x10] sm:$0xff] %vm153, %v989
  %1054 = vst.msk [vmem:[%s4 + $0x18] sm:$0xff] %vm153, %v990
  %1055 = vst.msk [vmem:[%s4 + $0x20] sm:$0xff] %vm153, %v991
  %1056 = vst.msk [vmem:[%s4 + $0x28] sm:$0xff] %vm153, %v992
  %1057 = vst.msk [vmem:[%s4 + $0x30] sm:$0xff] %vm153, %v993
  %1058 = vst.msk [vmem:[%s4 + $0x38] sm:$0xff] %vm153, %v994
  %1059 = vst.msk [vmem:[%s4 + $0x40] sm:$0xff] %vm153, %v995
  %1060 = vst.msk [vmem:[%s4 + $0x48] sm:$0xff] %vm153, %v996
  %1061 = vst.msk [vmem:[%s4 + $0x50] sm:$0xff] %vm153, %v997
  %1062 = vst.msk [vmem:[%s4 + $0x58] sm:$0xff] %vm153, %v998
  %1063 = vst.msk [vmem:[%s4 + $0x60] sm:$0xff] %vm153, %v999
  %1064 = vst.msk [vmem:[%s4 + $0x68] sm:$0xff] %vm153, %v1000
  %1065 = vst.msk [vmem:[%s4 + $0x70] sm:$0xff] %vm153, %v1001
  %1066 = vst.msk [vmem:[%s4 + $0x78] sm:$0xff] %vm153, %v1002
  %1067 = vst.msk [vmem:[%s4 + $0x80] sm:$0xff] %vm153, %v1003
  %1068 = vst.msk [vmem:[%s4 + $0x88] sm:$0xff] %vm153, %v1004
  %1069 = vst.msk [vmem:[%s4 + $0x90] sm:$0xff] %vm153, %v1005
  %1070 = vst.msk [vmem:[%s4 + $0x98] sm:$0xff] %vm153, %v1006
  %1071 = vst.msk [vmem:[%s4 + $0xa0] sm:$0xff] %vm153, %v1007
  %1072 = vst.msk [vmem:[%s4 + $0xa8] sm:$0xff] %vm153, %v1008
  %1073 = vst.msk [vmem:[%s4 + $0xb0] sm:$0xff] %vm153, %v1009
  %1074 = vst.msk [vmem:[%s4 + $0xb8] sm:$0xff] %vm153, %v1010
  %1075 = vst.msk [vmem:[%s4 + $0xc0] sm:$0xff] %vm153, %v1011
  %1076 = vst.msk [vmem:[%s4 + $0xc8] sm:$0xff] %vm153, %v1012
  %1077 = vst.msk [vmem:[%s4 + $0xd0] sm:$0xff] %vm153, %v1013
  %1078 = vst.msk [vmem:[%s4 + $0xd8] sm:$0xff] %vm153, %v1014
  %1079 = vst.msk [vmem:[%s4 + $0xe0] sm:$0xff] %vm153, %v1015
  %1080 = vst.msk [vmem:[%s4 + $0xe8] sm:$0xff] %vm153, %v1016
  %1081 = vst.msk [vmem:[%s4 + $0xf0] sm:$0xff] %vm153, %v1017
  %1082 = vst.msk [vmem:[%s4 + $0xf8] sm:$0xff] %vm153, %v1018
  %1083 = vst.msk [vmem:[%s4 + $0x100] sm:$0xff] %vm153, %v1019
  %1084 = vst.msk [vmem:[%s4 + $0x108] sm:$0xff] %vm153, %v1020
  %1085 = vst.msk [vmem:[%s4 + $0x110] sm:$0xff] %vm153, %v1021
  %1086 = vst.msk [vmem:[%s4 + $0x118] sm:$0xff] %vm153, %v1022
  %1087 = vst.msk [vmem:[%s4 + $0x120] sm:$0xff] %vm153, %v1023
  %1088 = vst.msk [vmem:[%s4 + $0x128] sm:$0xff] %vm153, %v1024
  %1089 = vst.msk [vmem:[%s4 + $0x130] sm:$0xff] %vm153, %v1025
  %1090 = vst.msk [vmem:[%s4 + $0x138] sm:$0xff] %vm153, %v1026
  %1091 = vst.msk [vmem:[%s4 + $0x140] sm:$0xff] %vm153, %v1027
  %1092 = vst.msk [vmem:[%s4 + $0x148] sm:$0xff] %vm153, %v1028
  %1093 = vst.msk [vmem:[%s4 + $0x150] sm:$0xff] %vm153, %v1029
  %1094 = vst.msk [vmem:[%s4 + $0x158] sm:$0xff] %vm153, %v1030
  %1095 = vst.msk [vmem:[%s4 + $0x160] sm:$0xff] %vm153, %v1031
  %1096 = vst.msk [vmem:[%s4 + $0x168] sm:$0xff] %vm153, %v1032
  %1097 = vst.msk [vmem:[%s4 + $0x170] sm:$0xff] %vm153, %v1033
  %1098 = vst.msk [vmem:[%s4 + $0x178] sm:$0xff] %vm153, %v1034
  %1099 = vst.msk [vmem:[%s4 + $0x180] sm:$0xff] %vm153, %v1035
  %1100 = vst.msk [vmem:[%s4 + $0x188] sm:$0xff] %vm153, %v1036
  %1101 = vst.msk [vmem:[%s4 + $0x190] sm:$0xff] %vm153, %v1037
  %1102 = vst.msk [vmem:[%s4 + $0x198] sm:$0xff] %vm153, %v1038
  %1103 = vst.msk [vmem:[%s4 + $0x1a0] sm:$0xff] %vm153, %v1039
  %1104 = vst.msk [vmem:[%s4 + $0x1a8] sm:$0xff] %vm153, %v1040
  %1105 = vst.msk [vmem:[%s4 + $0x1b0] sm:$0xff] %vm153, %v1041
  %1106 = vst.msk [vmem:[%s4 + $0x1b8] sm:$0xff] %vm153, %v1042
  %1107 = vst.msk [vmem:[%s4 + $0x1c0] sm:$0xff] %vm153, %v1043
  %1108 = vst.msk [vmem:[%s4 + $0x1c8] sm:$0xff] %vm153, %v1044
  %1109 = vst.msk [vmem:[%s4 + $0x1d0] sm:$0xff] %vm153, %v1045
  %1110 = vst.msk [vmem:[%s4 + $0x1d8] sm:$0xff] %vm153, %v1046
  %1111 = vst.msk [vmem:[%s4 + $0x1e0] sm:$0xff] %vm153, %v1047
  %1112 = vst.msk [vmem:[%s4 + $0x1e8] sm:$0xff] %vm153, %v1048
  %1113 = vst.msk [vmem:[%s4 + $0x1f0] sm:$0xff] %vm153, %v1049
  %1114 = vst.msk [vmem:[%s4 + $0x1f8] sm:$0xff] %vm153, %v1050
  // Predicated region
  $region18: #{shadow_removal_forward.12} parent=0 // pred_check
    _
  $region19: #{shadow_removal_forward.12} parent=0 // pred_check_branch
    %1116 = sbr.rel (0) target = $region21
  $region20: #{shadow_removal_forward.12} parent=0 // pred_region
    _
  $region21: #{shadow_removal_forward.12} parent=0 // pred_fallthru
    _
  // Predicated region
  $region22: #{shadow_removal_forward.12} parent=0 // pred_check
    _
  $region23: #{shadow_removal_forward.12} parent=0 // pred_check_branch
    %1118 = sbr.rel (0) target = $region25
  $region24: #{shadow_removal_forward.12} parent=0 // pred_region
    _
  $region25: #{shadow_removal_forward.12} parent=0 // pred_fallthru
    _

// kernel: shadow_removal_forward.19
$region0: #{shadow_removal_forward.19}
  #allocation0 [shape = 'u32[]', space=smem, size = 0x4, offset = 0x4, fixed_abs, tag = 'smem constant byte address 0x4 - core index']
  #allocation1 [shape = 'u32[144,128]{1,0:T(1,128)}', space=vmem, size = 0x12000, scoped, tag = 'internal scratch']
  %s0 = inlined_call_operand.vmem [shape: bf16[2,18,18,192], index: 0, kind: input, shape index: {}, may-alias: {0,1,2}]
  %s1 = inlined_call_operand.vmem [shape: bf16[2,18,18,192], index: 1, kind: input, shape index: {}, may-alias: {0,1,2}]
  %s2 = inlined_call_operand.vmem [shape: bf16[2,18,18,192], index: 2, kind: input, shape index: {}, may-alias: {0,1,2}]
  %s3 = inlined_call_operand.vmem [shape: bf16[9,192,128], index: 3, kind: input, shape index: {}]
  %s4 = inlined_call_operand.vmem [shape: f32[1,128], index: 4, kind: input, shape index: {}]
  %s5 = inlined_call_operand.vmem [shape: f32[2,16,16,128], index: 5, kind: output, shape index: {}]
  %s6 = sld [smem:[#allocation0]]
  $region53: #{shadow_removal_forward.19} parent=0
    _
  %s8 = ssub.s32 1, %s6
  %s9 = scalar_select 0, %s8, %s6
  loop: start=0, step=1, limit=34
  $region2: #{shadow_removal_forward.19} parent=0 // loop_pre_header
    _
  $region3: #{shadow_removal_forward.19} parent=0 // loop_header
    %s11 = sphi 0, %s15
    %p12 = scmp.ge.s32.totalorder %s11, 34
    %s18 = sphi 0, %s30
    %s19 = sphi 0, %s26
    %s20 = sphi 0, %s18
    %s21 = sphi 0, %s19
    %s22 = sphi 0, %s20
    %s23 = sphi 0, %s21
    %s35 = sphi 0, %s37
    %s38 = sphi 0, %s35
    %s39 = sphi 0, %s38
    %s55 = sphi 0, %s39
    %s65 = sphi 0, %s67
    %s68 = sphi 0, %s65
    %s69 = sphi 0, %s68
    %s85 = sphi 0, %s69
    %s95 = sphi 0, %s97
    %s98 = sphi 0, %s95
    %s99 = sphi 0, %s98
    %s115 = sphi 0, %s99
    %s119 = sphi 0, %s119
    %s121 = sphi 0, %s119
    %s122 = sphi 0, %s121
    %s136 = sphi 0, %s122
    %s140 = sphi 0, %s140
    %s142 = sphi 0, %s140
    %s143 = sphi 0, %s142
    %s157 = sphi 0, %s143
    %s165 = sphi 0, %s167
    %s168 = sphi 0, %s165
    %s169 = sphi 0, %s168
    %s185 = sphi 0, %s169
  $region4: #{shadow_removal_forward.19} parent=0 // loop_header_branch
    %14 = sbr.rel (%p12) target = $region8
  $region5: #{shadow_removal_forward.19} parent=0 // loop_body
    %s16 = ssub.s32 %s11, 1
    %s17 = ssub.s32 %s11, 2
    %s24 = sadd.s32 1, %s19
    %p25 = scmp.ge.s32.totalorder %s24, 16
    %s26 = scalar_select %p25, 0, %s24
    %s27 = sadd.s32 1, %s18
    %s28 = scalar_select %p25, %s27, %s18
    %p29 = scmp.ge.s32.totalorder %s28, 2
    %s30 = scalar_select %p29, 0, %s28
    %s31 = ssub.s32 %s18, %s30
    %s32 = ssub.s32 %s19, %s26
    %s33 = sor.u32 %s31, %s32
    %p34 = scmp.eq.s32.totalorder %s33, 0
    %s36 = sadd.s32 %s35, 1
    %s37 = scalar_select %p34, %s35, %s36
    %p40 = pneg %p34
    %p41 = scmp.eq.s32.totalorder %s11, 31
    %p42 = por %p40, %p41
    %p43 = scmp.ne.s32.totalorder %s35, %s38
    %p44 = scmp.eq.s32.totalorder %s11, 0
    %p45 = por %p43, %p44
    %p46 = scmp.ne.s32.totalorder %s35, %s38
    %p47 = scmp.eq.s32.totalorder %s16, 31
    %p48 = por %p46, %p47
    %p49 = scmp.ne.s32.totalorder %s38, %s39
    %p50 = scmp.eq.s32.totalorder %s16, 0
    %p51 = por %p49, %p50
    %p52 = scmp.ne.s32.totalorder %s38, %s39
    %p53 = scmp.eq.s32.totalorder %s17, 31
    %p54 = por %p52, %p53
    %p56 = scmp.ne.s32.totalorder %s39, %s55
    %p57 = scmp.eq.s32.totalorder %s17, 0
    %p58 = por %p56, %p57
    %s59 = sadd.s32 %s19, 1
    %s60 = sadd.s32 %s26, 1
    %s61 = ssub.s32 %s18, %s30
    %s62 = ssub.s32 %s59, %s60
    %s63 = sor.u32 %s61, %s62
    %p64 = scmp.eq.s32.totalorder %s63, 0
    %s66 = sadd.s32 %s65, 1
    %s67 = scalar_select %p64, %s65, %s66
    %p70 = pneg %p64
    %p71 = scmp.eq.s32.totalorder %s11, 31
    %p72 = por %p70, %p71
    %p73 = scmp.ne.s32.totalorder %s65, %s68
    %p74 = scmp.eq.s32.totalorder %s11, 0
    %p75 = por %p73, %p74
    %p76 = scmp.ne.s32.totalorder %s65, %s68
    %p77 = scmp.eq.s32.totalorder %s16, 31
    %p78 = por %p76, %p77
    %p79 = scmp.ne.s32.totalorder %s68, %s69
    %p80 = scmp.eq.s32.totalorder %s16, 0
    %p81 = por %p79, %p80
    %p82 = scmp.ne.s32.totalorder %s68, %s69
    %p83 = scmp.eq.s32.totalorder %s17, 31
    %p84 = por %p82, %p83
    %p86 = scmp.ne.s32.totalorder %s69, %s85
    %p87 = scmp.eq.s32.totalorder %s17, 0
    %p88 = por %p86, %p87
    %s89 = sadd.s32 %s19, 2
    %s90 = sadd.s32 %s26, 2
    %s91 = ssub.s32 %s18, %s30
    %s92 = ssub.s32 %s89, %s90
    %s93 = sor.u32 %s91, %s92
    %p94 = scmp.eq.s32.totalorder %s93, 0
    %s96 = sadd.s32 %s95, 1
    %s97 = scalar_select %p94, %s95, %s96
    %p100 = pneg %p94
    %p101 = scmp.eq.s32.totalorder %s11, 31
    %p102 = por %p100, %p101
    %p103 = scmp.ne.s32.totalorder %s95, %s98
    %p104 = scmp.eq.s32.totalorder %s11, 0
    %p105 = por %p103, %p104
    %p106 = scmp.ne.s32.totalorder %s95, %s98
    %p107 = scmp.eq.s32.totalorder %s16, 31
    %p108 = por %p106, %p107
    %p109 = scmp.ne.s32.totalorder %s98, %s99
    %p110 = scmp.eq.s32.totalorder %s16, 0
    %p111 = por %p109, %p110
    %p112 = scmp.ne.s32.totalorder %s98, %s99
    %p113 = scmp.eq.s32.totalorder %s17, 31
    %p114 = por %p112, %p113
    %p116 = scmp.ne.s32.totalorder %s99, %s115
    %p117 = scmp.eq.s32.totalorder %s17, 0
    %p118 = por %p116, %p117
    %s120 = sadd.s32 %s119, 1
    %p123 = scmp.eq.s32.totalorder %s11, 31
    %p124 = scmp.ne.s32.totalorder %s119, %s121
    %p125 = scmp.eq.s32.totalorder %s11, 0
    %p126 = por %p124, %p125
    %p127 = scmp.ne.s32.totalorder %s119, %s121
    %p128 = scmp.eq.s32.totalorder %s16, 31
    %p129 = por %p127, %p128
    %p130 = scmp.ne.s32.totalorder %s121, %s122
    %p131 = scmp.eq.s32.totalorder %s16, 0
    %p132 = por %p130, %p131
    %p133 = scmp.ne.s32.totalorder %s121, %s122
    %p134 = scmp.eq.s32.totalorder %s17, 31
    %p135 = por %p133, %p134
    %p137 = scmp.ne.s32.totalorder %s122, %s136
    %p138 = scmp.eq.s32.totalorder %s17, 0
    %p139 = por %p137, %p138
    %s141 = sadd.s32 %s140, 1
    %p144 = scmp.eq.s32.totalorder %s11, 31
    %p145 = scmp.ne.s32.totalorder %s140, %s142
    %p146 = scmp.eq.s32.totalorder %s11, 0
    %p147 = por %p145, %p146
    %p148 = scmp.ne.s32.totalorder %s140, %s142
    %p149 = scmp.eq.s32.totalorder %s16, 31
    %p150 = por %p148, %p149
    %p151 = scmp.ne.s32.totalorder %s142, %s143
    %p152 = scmp.eq.s32.totalorder %s16, 0
    %p153 = por %p151, %p152
    %p154 = scmp.ne.s32.totalorder %s142, %s143
    %p155 = scmp.eq.s32.totalorder %s17, 31
    %p156 = por %p154, %p155
    %p158 = scmp.ne.s32.totalorder %s143, %s157
    %p159 = scmp.eq.s32.totalorder %s17, 0
    %p160 = por %p158, %p159
    %s161 = ssub.s32 %s18, %s30
    %s162 = ssub.s32 %s19, %s26
    %s163 = sor.u32 %s161, %s162
    %p164 = scmp.eq.s32.totalorder %s163, 0
    %s166 = sadd.s32 %s165, 1
    %s167 = scalar_select %p164, %s165, %s166
    %p170 = pneg %p164
    %p171 = scmp.eq.s32.totalorder %s11, 31
    %p172 = por %p170, %p171
    %p173 = scmp.ne.s32.totalorder %s165, %s168
    %p174 = scmp.eq.s32.totalorder %s11, 0
    %p175 = por %p173, %p174
    %p176 = scmp.ne.s32.totalorder %s165, %s168
    %p177 = scmp.eq.s32.totalorder %s16, 31
    %p178 = por %p176, %p177
    %p179 = scmp.ne.s32.totalorder %s168, %s169
    %p180 = scmp.eq.s32.totalorder %s16, 0
    %p181 = por %p179, %p180
    %p182 = scmp.ne.s32.totalorder %s168, %s169
    %p183 = scmp.eq.s32.totalorder %s17, 31
    %p184 = por %p182, %p183
    %p186 = scmp.ne.s32.totalorder %s169, %s185
    %p187 = scmp.eq.s32.totalorder %s17, 0
    %p188 = por %p186, %p187
    %p189 = scmp.le.s32.totalorder 1, %s11
    %p190 = scmp.lt.s32.totalorder %s11, 33
    %p191 = pnand %p189, %p190
    %p192 = pneg %p191
    // Predicated region
    $region9: #{shadow_removal_forward.19} parent=5 // pred_check
      _
    $region10: #{shadow_removal_forward.19} parent=5 // pred_check_branch
      %194 = sbr.rel (%p191) target = $region12
    $region11: #{shadow_removal_forward.19} parent=5 // pred_region
      %s195 = ssub.s32 %s11, 1
      // Predicated region
      $region13: #{shadow_removal_forward.19} parent=11 // pred_check
        %p196 = pneg %p132
      $region14: #{shadow_removal_forward.19} parent=11 // pred_check_branch
        %198 = sbr.rel (%p196) target = $region16
      $region15: #{shadow_removal_forward.19} parent=11 // pred_region
        _
      $region16: #{shadow_removal_forward.19} parent=11 // pred_fallthru
        _
      // Predicated region
      $region17: #{shadow_removal_forward.19} parent=11 // pred_check
        %p199 = pneg %p153
      $region18: #{shadow_removal_forward.19} parent=11 // pred_check_branch
        %201 = sbr.rel (%p199) target = $region20
      $region19: #{shadow_removal_forward.19} parent=11 // pred_region
        _
      $region20: #{shadow_removal_forward.19} parent=11 // pred_fallthru
        _
    $region12: #{shadow_removal_forward.19} parent=5 // pred_fallthru
      _
    %p202 = scmp.lt.s32.totalorder %s11, 32
    // Predicated region
    $region21: #{shadow_removal_forward.19} parent=5 // pred_check
      %p203 = pneg %p202
    $region22: #{shadow_removal_forward.19} parent=5 // pred_check_branch
      %205 = sbr.rel (%p203) target = $region24
    $region23: #{shadow_removal_forward.19} parent=5 // pred_region
      // Predicated region
      $region25: #{shadow_removal_forward.19} parent=23 // pred_check
        %p206 = pneg %p45
      $region26: #{shadow_removal_forward.19} parent=23 // pred_check_branch
        %208 = sbr.rel (%p206) target = $region28
      $region27: #{shadow_removal_forward.19} parent=23 // pred_region
        %p209 = scmp.lt.s32.totalorder %s18, 1
        %s210 = scalar_select %p209, %s18, 1
        %p211 = scmp.lt.s32.totalorder %s19, 17
        %s212 = scalar_select %p211, %s19, 17
        %s213 = smul.addr %s212, 6
        %s214 = smul.addr %s210, 108
        %s215 = sadd.s32 %s213, %s214
        %s216 = smul.addr %s215, 4
        %s217 = scalar_lea.vmem %s0, %s216
      $region28: #{shadow_removal_forward.19} parent=23 // pred_fallthru
        _
      // Predicated region
      $region29: #{shadow_removal_forward.19} parent=23 // pred_check
        %p218 = pneg %p75
      $region30: #{shadow_removal_forward.19} parent=23 // pred_check_branch
        %220 = sbr.rel (%p218) target = $region32
      $region31: #{shadow_removal_forward.19} parent=23 // pred_region
        %s221 = sadd.s32 %s19, 1
        %p222 = scmp.lt.s32.totalorder %s18, 1
        %s223 = scalar_select %p222, %s18, 1
        %p224 = scmp.lt.s32.totalorder %s221, 17
        %s225 = scalar_select %p224, %s221, 17
        %s226 = smul.addr %s225, 6
        %s227 = smul.addr %s223, 108
        %s228 = sadd.s32 %s226, %s227
        %s229 = smul.addr %s228, 4
        %s230 = scalar_lea.vmem %s1, %s229
        %s231 = sadd.s32 %s19, 1
      $region32: #{shadow_removal_forward.19} parent=23 // pred_fallthru
        _
      // Predicated region
      $region33: #{shadow_removal_forward.19} parent=23 // pred_check
        %p232 = pneg %p105
      $region34: #{shadow_removal_forward.19} parent=23 // pred_check_branch
        %234 = sbr.rel (%p232) target = $region36
      $region35: #{shadow_removal_forward.19} parent=23 // pred_region
        %s235 = sadd.s32 %s19, 2
        %p236 = scmp.lt.s32.totalorder %s18, 1
        %s237 = scalar_select %p236, %s18, 1
        %p238 = scmp.lt.s32.totalorder %s235, 17
        %s239 = scalar_select %p238, %s235, 17
        %s240 = smul.addr %s239, 6
        %s241 = smul.addr %s237, 108
        %s242 = sadd.s32 %s240, %s241
        %s243 = smul.addr %s242, 4
        %s244 = scalar_lea.vmem %s2, %s243
        %s245 = sadd.s32 %s19, 2
      $region36: #{shadow_removal_forward.19} parent=23 // pred_fallthru
        _
    $region24: #{shadow_removal_forward.19} parent=5 // pred_fallthru
      _
    %p246 = scmp.le.s32.totalorder 1, %s11
    %p247 = scmp.lt.s32.totalorder %s11, 33
    %p248 = pnand %p246, %p247
    %p249 = pneg %p248
    // Predicated region
    $region37: #{shadow_removal_forward.19} parent=5 // pred_check
      _
    $region38: #{shadow_removal_forward.19} parent=5 // pred_check_branch
      %251 = sbr.rel (%p248) target = $region40
    $region39: #{shadow_removal_forward.19} parent=5 // pred_region
      %s252 = ssub.s32 %s11, 1
      %p253 = scmp.lt.s32.totalorder %s20, 1
      %s254 = scalar_select %p253, %s20, 1
      %p255 = scmp.lt.s32.totalorder %s21, 17
      %s256 = scalar_select %p255, %s21, 17
      %s257 = smul.addr %s256, 6
      %s258 = smul.addr %s254, 108
      %s259 = sadd.s32 %s257, %s258
      %s260 = smul.addr %s259, 4
      %s261 = scalar_lea.vmem %s0, %s260
      %p262 = pneg %p51
      %p263 = pneg %p48
      %s264 = sadd.s32 %s21, 1
      %p265 = scmp.lt.s32.totalorder %s20, 1
      %s266 = scalar_select %p265, %s20, 1
      %p267 = scmp.lt.s32.totalorder %s264, 17
      %s268 = scalar_select %p267, %s264, 17
      %s269 = smul.addr %s268, 6
      %s270 = smul.addr %s266, 108
      %s271 = sadd.s32 %s269, %s270
      %s272 = smul.addr %s271, 4
      %s273 = scalar_lea.vmem %s1, %s272
      %p274 = pneg %p81
      %p275 = pneg %p78
      %s276 = sadd.s32 %s21, 2
      %p277 = scmp.lt.s32.totalorder %s20, 1
      %s278 = scalar_select %p277, %s20, 1
      %p279 = scmp.lt.s32.totalorder %s276, 17
      %s280 = scalar_select %p279, %s276, 17
      %s281 = smul.addr %s280, 6
      %s282 = smul.addr %s278, 108
      %s283 = sadd.s32 %s281, %s282
      %s284 = smul.addr %s283, 4
      %s285 = scalar_lea.vmem %s2, %s284
      %p286 = pneg %p111
      %p287 = pneg %p108
      %p288 = pneg %p132
      %p289 = pneg %p129
      %p290 = pneg %p153
      %p291 = pneg %p150
      %p292 = pneg %p181
      %p293 = pneg %p178
      %p294 = scmp.lt.s32.totalorder %s20, 1
      %s295 = scalar_select %p294, %s20, 1
      %p296 = scmp.lt.s32.totalorder %s21, 15
      %s297 = scalar_select %p296, %s21, 15
      %s298 = smul.addr %s297, 2
      %s299 = smul.addr %s295, 32
      %s300 = sadd.s32 %s298, %s299
      %s301 = smul.addr %s300, 8
      %s302 = scalar_lea.vmem %s5, %s301
      %p303 = scmp.lt.s32.totalorder %s20, 1
      %s304 = scalar_select %p303, %s20, 1
      %p305 = scmp.lt.s32.totalorder %s21, 17
      %s306 = scalar_select %p305, %s21, 17
      %s307 = smul.addr %s306, 6
      %s308 = smul.addr %s304, 108
      %s309 = sadd.s32 %s307, %s308
      %s310 = smul.addr %s309, 4
      %s311 = scalar_lea.vmem %s0, %s310
      %s312 = sadd.s32 %s21, 1
      %p313 = scmp.lt.s32.totalorder %s20, 1
      %s314 = scalar_select %p313, %s20, 1
      %p315 = scmp.lt.s32.totalorder %s312, 17
      %s316 = scalar_select %p315, %s312, 17
      %s317 = smul.addr %s316, 6
      %s318 = smul.addr %s314, 108
      %s319 = sadd.s32 %s317, %s318
      %s320 = smul.addr %s319, 4
      %s321 = scalar_lea.vmem %s1, %s320
      %s322 = sadd.s32 %s21, 1
      %s323 = sadd.s32 %s21, 2
      %p324 = scmp.lt.s32.totalorder %s20, 1
      %s325 = scalar_select %p324, %s20, 1
      %p326 = scmp.lt.s32.totalorder %s323, 17
      %s327 = scalar_select %p326, %s323, 17
      %s328 = smul.addr %s327, 6
      %s329 = smul.addr %s325, 108
      %s330 = sadd.s32 %s328, %s329
      %s331 = smul.addr %s330, 4
      %s332 = scalar_lea.vmem %s2, %s331
      %s333 = sadd.s32 %s21, 2
      %p334 = scmp.lt.s32.totalorder %s20, 1
      %s335 = scalar_select %p334, %s20, 1
      %p336 = scmp.lt.s32.totalorder %s21, 15
      %s337 = scalar_select %p336, %s21, 15
      %s338 = smul.addr %s337, 2
      %s339 = smul.addr %s335, 32
      %s340 = sadd.s32 %s338, %s339
      %s341 = smul.addr %s340, 8
      %s342 = scalar_lea.vmem %s5, %s341
      %v344 = vld [vmem:[%s311] sm:$0xff]
      %v345 = vld [vmem:[%s311 + $0x8] sm:$0xff]
      %v346 = vld [vmem:[%s311 + $0x10] sm:$0x11]
      %v347 = vld [vmem:[%s321] sm:$0xff]
      %v348 = vld [vmem:[%s321 + $0x8] sm:$0xff]
      %v349 = vld [vmem:[%s321 + $0x10] sm:$0x11]
      %v350 = vld [vmem:[%s332] sm:$0xff]
      %v351 = vld [vmem:[%s332 + $0x8] sm:$0xff]
      %v352 = vld [vmem:[%s332 + $0x10] sm:$0x11]
      %v353 = vld [vmem:[%s3] sm:$0xf]
      %v354 = vld [vmem:[%s3 + $0x4] sm:$0xf]
      %v355 = vld [vmem:[%s3 + $0x8] sm:$0xf]
      %v356 = vld [vmem:[%s3 + $0xc] sm:$0xf]
      %v357 = vld [vmem:[%s3 + $0x10] sm:$0xf]
      %v358 = vld [vmem:[%s3 + $0x14] sm:$0xf]
      %v359 = vld [vmem:[%s3 + $0x18] sm:$0xf]
      %v360 = vld [vmem:[%s3 + $0x1c] sm:$0xf]
      %v361 = vld [vmem:[%s3 + $0x20] sm:$0xf]
      %v362 = vld [vmem:[%s3 + $0x24] sm:$0xf]
      %v363 = vld [vmem:[%s3 + $0x28] sm:$0xf]
      %v364 = vld [vmem:[%s3 + $0x2c] sm:$0xf]
      %v365 = vld [vmem:[%s3 + $0x30] sm:$0xf]
      %v366 = vld [vmem:[%s3 + $0x34] sm:$0xf]
      %v367 = vld [vmem:[%s3 + $0x38] sm:$0xf]
      %v368 = vld [vmem:[%s3 + $0x3c] sm:$0xf]
      %v369 = vld [vmem:[%s3 + $0x40] sm:$0xf]
      %v370 = vld [vmem:[%s3 + $0x44] sm:$0xf]
      %v371 = vld [vmem:[%s3 + $0x48] sm:$0xf]
      %v372 = vld [vmem:[%s3 + $0x4c] sm:$0xf]
      %v373 = vld [vmem:[%s3 + $0x50] sm:$0xf]
      %v374 = vld [vmem:[%s3 + $0x54] sm:$0xf]
      %v375 = vld [vmem:[%s3 + $0x58] sm:$0xf]
      %v376 = vld [vmem:[%s3 + $0x5c] sm:$0xf]
      %s377 = scalar_lea.vmem %s3, 96
      %v378 = vld [vmem:[%s377] sm:$0xf]
      %v379 = vld [vmem:[%s377 + $0x4] sm:$0xf]
      %v380 = vld [vmem:[%s377 + $0x8] sm:$0xf]
      %v381 = vld [vmem:[%s377 + $0xc] sm:$0xf]
      %v382 = vld [vmem:[%s377 + $0x10] sm:$0xf]
      %v383 = vld [vmem:[%s377 + $0x14] sm:$0xf]
      %v384 = vld [vmem:[%s377 + $0x18] sm:$0xf]
      %v385 = vld [vmem:[%s377 + $0x1c] sm:$0xf]
      %v386 = vld [vmem:[%s377 + $0x20] sm:$0xf]
      %v387 = vld [vmem:[%s377 + $0x24] sm:$0xf]
      %v388 = vld [vmem:[%s377 + $0x28] sm:$0xf]
      %v389 = vld [vmem:[%s377 + $0x2c] sm:$0xf]
      %v390 = vld [vmem:[%s377 + $0x30] sm:$0xf]
      %v391 = vld [vmem:[%s377 + $0x34] sm:$0xf]
      %v392 = vld [vmem:[%s377 + $0x38] sm:$0xf]
      %v393 = vld [vmem:[%s377 + $0x3c] sm:$0xf]
      %v394 = vld [vmem:[%s377 + $0x40] sm:$0xf]
      %v395 = vld [vmem:[%s377 + $0x44] sm:$0xf]
      %v396 = vld [vmem:[%s377 + $0x48] sm:$0xf]
      %v397 = vld [vmem:[%s377 + $0x4c] sm:$0xf]
      %v398 = vld [vmem:[%s377 + $0x50] sm:$0xf]
      %v399 = vld [vmem:[%s377 + $0x54] sm:$0xf]
      %v400 = vld [vmem:[%s377 + $0x58] sm:$0xf]
      %v401 = vld [vmem:[%s377 + $0x5c] sm:$0xf]
      %v405 = vunpack.c.l.b16 %v344
      %v406 = vunpack.c.h.b16 %v344
      %v407 = vunpack.c.l.b16 %v345
      %v408 = vunpack.c.h.b16 %v345
      %v409 = vunpack.c.l.b16 %v346
      %v410 = vunpack.c.h.b16 %v346
      %v411 = vpack.c.b16 %v407, %v405
      %v412 = vpack.c.b16 %v408, %v406
      %v413 = vpack.c.b16 %v409, %v409
      %v414 = vpack.c.b16 %v410, %v410
      %vm415 = vsmask.f32 7424
      %v417 = vshrl.u32 %v411, 16
      %v419 = vshll.u32 %v411, 16
      %v421 = vrot.slane %v419, 1
      %v422 = vor.u32 %v417, %v421
      %v424 = vshll.u32 %v413, 16
      %v426 = vrot.slane %v424, 1
      %v427 = vsel %vm415, %v422, %v426
      %v429 = vshrl.u32 %v412, 16
      %v431 = vshll.u32 %v412, 16
      %v433 = vrot.slane %v431, 1
      %v434 = vor.u32 %v429, %v433
      %v436 = vshll.u32 %v414, 16
      %v438 = vrot.slane %v436, 1
      %v439 = vsel %vm415, %v434, %v438
      %v465 = vunpack.c.l.b16 %v378
      %v466 = vunpack.c.l.b16 %v379
      %v467 = vunpack.c.l.b16 %v380
      %v468 = vunpack.c.l.b16 %v381
      %v469 = vunpack.c.l.b16 %v382
      %v470 = vunpack.c.l.b16 %v383
      %v471 = vunpack.c.l.b16 %v384
      %v472 = vunpack.c.l.b16 %v385
      %v473 = vunpack.c.l.b16 %v386
      %v474 = vunpack.c.l.b16 %v387
      %v475 = vunpack.c.l.b16 %v388
      %v476 = vunpack.c.l.b16 %v389
      %v477 = vunpack.c.l.b16 %v390
      %v478 = vunpack.c.l.b16 %v391
      %v479 = vunpack.c.l.b16 %v392
      %v480 = vunpack.c.l.b16 %v393
      %v481 = vunpack.c.l.b16 %v394
      %v482 = vunpack.c.l.b16 %v395
      %v483 = vunpack.c.l.b16 %v396
      %v484 = vunpack.c.l.b16 %v397
      %v485 = vunpack.c.l.b16 %v398
      %v486 = vunpack.c.l.b16 %v399
      %v487 = vunpack.c.l.b16 %v400
      %v488 = vunpack.c.l.b16 %v401
      %v489 = vpack.c.b16 %v466, %v465
      %v490 = vpack.c.b16 %v468, %v467
      %v491 = vpack.c.b16 %v470, %v469
      %v492 = vpack.c.b16 %v472, %v471
      %v493 = vpack.c.b16 %v474, %v473
      %v494 = vpack.c.b16 %v476, %v475
      %v495 = vpack.c.b16 %v478, %v477
      %v496 = vpack.c.b16 %v480, %v479
      %v497 = vpack.c.b16 %v482, %v481
      %v498 = vpack.c.b16 %v484, %v483
      %v499 = vpack.c.b16 %v486, %v485
      %v500 = vpack.c.b16 %v488, %v487
      %vm513 = vcmask 523264
      %v515 = vsel %vm513, %v439, 0
      %517 = vmatprep.subr.bf16.mxu0 0
      %518 = vmatpush1.bf16.msra.mxu0 %v489
      %519 = vmatprep.subr.bf16.mxu0 0
      %520 = vmatpush1.bf16.msra.mxu0 %v490
      %521 = vmatprep.subr.bf16.mxu0 0
      %522 = vmatpush1.bf16.msra.mxu0 %v491
      %523 = vmatprep.subr.bf16.mxu0 0
      %524 = vmatpush1.bf16.msra.mxu0 %v492
      %525 = vmatprep.subr.bf16.mxu0 0
      %526 = vmatpush1.bf16.msra.mxu0 %v493
      %527 = vmatprep.subr.bf16.mxu0 0
      %528 = vmatpush1.bf16.msra.mxu0 %v494
      %529 = vmatprep.subr.bf16.mxu0 0
      %530 = vmatpush1.bf16.msra.mxu0 %v495
      %531 = vmatprep.subr.bf16.mxu0 0
      %532 = vmatpush1.bf16.msra.mxu0 %v496
      %533 = vmatprep.subr.bf16.mxu0 0
      %534 = vmatpush1.bf16.msra.mxu0 %v497
      %535 = vmatprep.subr.bf16.mxu0 0
      %536 = vmatpush1.bf16.msra.mxu0 %v498
      %537 = vmatprep.subr.bf16.mxu0 0
      %538 = vmatpush1.bf16.msra.mxu0 %v499
      %539 = vmatprep.subr.bf16.mxu0 0
      %540 = vmatpush1.bf16.msra.mxu0 %v500
      %541 = vmatprep.subr.bf16.mxu0 0
      %542 = vmatpush1.bf16.msra.mxu0 0
      %543 = vmatprep.subr.bf16.mxu0 0
      %544 = vmatpush1.bf16.msra.mxu0 0
      %545 = vmatprep.subr.bf16.mxu0 0
      %546 = vmatpush1.bf16.msra.mxu0 0
      %547 = vmatprep.subr.bf16.mxu0 0
      %548 = vmatpush1.bf16.msra.mxu0 0
      %549 = vmatprep.mubr.bf16.mxu0 %v515
      %550 = vmatmul.mubr.bf16.gmra.mrb[0].mxu0 %v427
      %v551 = vpop.f32.mrb[0].mxu0
      %v552 = vadd.f32 0.0, %v551
      %v553 = vpop.f32.mrb[0].mxu0
      %v554 = vpop.f32.mrb[0].mxu0
      %v555 = vadd.f32 0.0, %v554
      %v556 = vpop.f32.mrb[0].mxu0
      %557 = vdwg.mxu0
      %v583 = vunpack.c.l.b16 %v353
      %v584 = vunpack.c.l.b16 %v354
      %v585 = vunpack.c.l.b16 %v355
      %v586 = vunpack.c.l.b16 %v356
      %v587 = vunpack.c.l.b16 %v357
      %v588 = vunpack.c.l.b16 %v358
      %v589 = vunpack.c.l.b16 %v359
      %v590 = vunpack.c.l.b16 %v360
      %v591 = vunpack.c.l.b16 %v361
      %v592 = vunpack.c.l.b16 %v362
      %v593 = vunpack.c.l.b16 %v363
      %v594 = vunpack.c.l.b16 %v364
      %v595 = vunpack.c.l.b16 %v365
      %v596 = vunpack.c.l.b16 %v366
      %v597 = vunpack.c.l.b16 %v367
      %v598 = vunpack.c.l.b16 %v368
      %v599 = vunpack.c.l.b16 %v369
      %v600 = vunpack.c.l.b16 %v370
      %v601 = vunpack.c.l.b16 %v371
      %v602 = vunpack.c.l.b16 %v372
      %v603 = vunpack.c.l.b16 %v373
      %v604 = vunpack.c.l.b16 %v374
      %v605 = vunpack.c.l.b16 %v375
      %v606 = vunpack.c.l.b16 %v376
      %v607 = vpack.c.b16 %v584, %v583
      %v608 = vpack.c.b16 %v586, %v585
      %v609 = vpack.c.b16 %v588, %v587
      %v610 = vpack.c.b16 %v590, %v589
      %v611 = vpack.c.b16 %v592, %v591
      %v612 = vpack.c.b16 %v594, %v593
      %v613 = vpack.c.b16 %v596, %v595
      %v614 = vpack.c.b16 %v598, %v597
      %v615 = vpack.c.b16 %v600, %v599
      %v616 = vpack.c.b16 %v602, %v601
      %v617 = vpack.c.b16 %v604, %v603
      %v618 = vpack.c.b16 %v606, %v605
      %v631 = vsel %vm513, %v412, 0
      %633 = vmatprep.subr.bf16.mxu0 0
      %634 = vmatpush1.bf16.msra.mxu0 %v607
      %635 = vmatprep.subr.bf16.mxu0 0
      %636 = vmatpush1.bf16.msra.mxu0 %v608
      %637 = vmatprep.subr.bf16.mxu0 0
      %638 = vmatpush1.bf16.msra.mxu0 %v609
      %639 = vmatprep.subr.bf16.mxu0 0
      %640 = vmatpush1.bf16.msra.mxu0 %v610
      %641 = vmatprep.subr.bf16.mxu0 0
      %642 = vmatpush1.bf16.msra.mxu0 %v611
      %643 = vmatprep.subr.bf16.mxu0 0
      %644 = vmatpush1.bf16.msra.mxu0 %v612
      %645 = vmatprep.subr.bf16.mxu0 0
      %646 = vmatpush1.bf16.msra.mxu0 %v613
      %647 = vmatprep.subr.bf16.mxu0 0
      %648 = vmatpush1.bf16.msra.mxu0 %v614
      %649 = vmatprep.subr.bf16.mxu0 0
      %650 = vmatpush1.bf16.msra.mxu0 %v615
      %651 = vmatprep.subr.bf16.mxu0 0
      %652 = vmatpush1.bf16.msra.mxu0 %v616
      %653 = vmatprep.subr.bf16.mxu0 0
      %654 = vmatpush1.bf16.msra.mxu0 %v617
      %655 = vmatprep.subr.bf16.mxu0 0
      %656 = vmatpush1.bf16.msra.mxu0 %v618
      %657 = vmatprep.subr.bf16.mxu0 0
      %658 = vmatpush1.bf16.msra.mxu0 0
      %659 = vmatprep.subr.bf16.mxu0 0
      %660 = vmatpush1.bf16.msra.mxu0 0
      %661 = vmatprep.subr.bf16.mxu0 0
      %662 = vmatpush1.bf16.msra.mxu0 0
      %663 = vmatprep.subr.bf16.mxu0 0
      %664 = vmatpush1.bf16.msra.mxu0 0
      %665 = vmatprep.mubr.bf16.mxu0 %v631
      %666 = vmatmul.mubr.bf16.gmra.mrb[0].mxu0 %v411
      %v667 = vpop.f32.mrb[0].mxu0
      %v668 = vadd.f32 %v552, %v667
      %v669 = vpop.f32.mrb[0].mxu0
      %v670 = vpop.f32.mrb[0].mxu0
      %v671 = vadd.f32 %v555, %v670
      %v672 = vpop.f32.mrb[0].mxu0
      %673 = vdwg.mxu0
      %s674 = scalar_lea.vmem %s3, 192
      %v675 = vld [vmem:[%s674] sm:$0xf]
      %v676 = vld [vmem:[%s674 + $0x4] sm:$0xf]
      %v677 = vld [vmem:[%s674 + $0x8] sm:$0xf]
      %v678 = vld [vmem:[%s674 + $0xc] sm:$0xf]
      %v679 = vld [vmem:[%s674 + $0x10] sm:$0xf]
      %v680 = vld [vmem:[%s674 + $0x14] sm:$0xf]
      %v681 = vld [vmem:[%s674 + $0x18] sm:$0xf]
      %v682 = vld [vmem:[%s674 + $0x1c] sm:$0xf]
      %v683 = vld [vmem:[%s674 + $0x20] sm:$0xf]
      %v684 = vld [vmem:[%s674 + $0x24] sm:$0xf]
      %v685 = vld [vmem:[%s674 + $0x28] sm:$0xf]
      %v686 = vld [vmem:[%s674 + $0x2c] sm:$0xf]
      %v687 = vld [vmem:[%s674 + $0x30] sm:$0xf]
      %v688 = vld [vmem:[%s674 + $0x34] sm:$0xf]
      %v689 = vld [vmem:[%s674 + $0x38] sm:$0xf]
      %v690 = vld [vmem:[%s674 + $0x3c] sm:$0xf]
      %v691 = vld [vmem:[%s674 + $0x40] sm:$0xf]
      %v692 = vld [vmem:[%s674 + $0x44] sm:$0xf]
      %v693 = vld [vmem:[%s674 + $0x48] sm:$0xf]
      %v694 = vld [vmem:[%s674 + $0x4c] sm:$0xf]
      %v695 = vld [vmem:[%s674 + $0x50] sm:$0xf]
      %v696 = vld [vmem:[%s674 + $0x54] sm:$0xf]
      %v697 = vld [vmem:[%s674 + $0x58] sm:$0xf]
      %v698 = vld [vmem:[%s674 + $0x5c] sm:$0xf]
      %vm699 = vcmask 1046528
      %v700 = vrot.slane %v411, 1
      %v701 = vrot.slane %v413, 1
      %v702 = vsel %vm699, %v700, %v701
      %v703 = vrot.slane %v412, 1
      %v704 = vrot.slane %v414, 1
      %v705 = vsel %vm699, %v703, %v704
      %v731 = vunpack.c.l.b16 %v675
      %v732 = vunpack.c.l.b16 %v676
      %v733 = vunpack.c.l.b16 %v677
      %v734 = vunpack.c.l.b16 %v678
      %v735 = vunpack.c.l.b16 %v679
      %v736 = vunpack.c.l.b16 %v680
      %v737 = vunpack.c.l.b16 %v681
      %v738 = vunpack.c.l.b16 %v682
      %v739 = vunpack.c.l.b16 %v683
      %v740 = vunpack.c.l.b16 %v684
      %v741 = vunpack.c.l.b16 %v685
      %v742 = vunpack.c.l.b16 %v686
      %v743 = vunpack.c.l.b16 %v687
      %v744 = vunpack.c.l.b16 %v688
      %v745 = vunpack.c.l.b16 %v689
      %v746 = vunpack.c.l.b16 %v690
      %v747 = vunpack.c.l.b16 %v691
      %v748 = vunpack.c.l.b16 %v692
      %v749 = vunpack.c.l.b16 %v693
      %v750 = vunpack.c.l.b16 %v694
      %v751 = vunpack.c.l.b16 %v695
      %v752 = vunpack.c.l.b16 %v696
      %v753 = vunpack.c.l.b16 %v697
      %v754 = vunpack.c.l.b16 %v698
      %v755 = vpack.c.b16 %v732, %v731
      %v756 = vpack.c.b16 %v734, %v733
      %v757 = vpack.c.b16 %v736, %v735
      %v758 = vpack.c.b16 %v738, %v737
      %v759 = vpack.c.b16 %v740, %v739
      %v760 = vpack.c.b16 %v742, %v741
      %v761 = vpack.c.b16 %v744, %v743
      %v762 = vpack.c.b16 %v746, %v745
      %v763 = vpack.c.b16 %v748, %v747
      %v764 = vpack.c.b16 %v750, %v749
      %v765 = vpack.c.b16 %v752, %v751
      %v766 = vpack.c.b16 %v754, %v753
      %v780 = vsel %vm513, %v705, 0
      %782 = vmatprep.subr.bf16.mxu0 0
      %783 = vmatpush1.bf16.msra.mxu0 %v755
      %784 = vmatprep.subr.bf16.mxu0 0
      %785 = vmatpush1.bf16.msra.mxu0 %v756
      %786 = vmatprep.subr.bf16.mxu0 0
      %787 = vmatpush1.bf16.msra.mxu0 %v757
      %788 = vmatprep.subr.bf16.mxu0 0
      %789 = vmatpush1.bf16.msra.mxu0 %v758
      %790 = vmatprep.subr.bf16.mxu0 0
      %791 = vmatpush1.bf16.msra.mxu0 %v759
      %792 = vmatprep.subr.bf16.mxu0 0
      %793 = vmatpush1.bf16.msra.mxu0 %v760
      %794 = vmatprep.subr.bf16.mxu0 0
      %795 = vmatpush1.bf16.msra.mxu0 %v761
      %796 = vmatprep.subr.bf16.mxu0 0
      %797 = vmatpush1.bf16.msra.mxu0 %v762
      %798 = vmatprep.subr.bf16.mxu0 0
      %799 = vmatpush1.bf16.msra.mxu0 %v763
      %800 = vmatprep.subr.bf16.mxu0 0
      %801 = vmatpush1.bf16.msra.mxu0 %v764
      %802 = vmatprep.subr.bf16.mxu0 0
      %803 = vmatpush1.bf16.msra.mxu0 %v765
      %804 = vmatprep.subr.bf16.mxu0 0
      %805 = vmatpush1.bf16.msra.mxu0 %v766
      %806 = vmatprep.subr.bf16.mxu0 0
      %807 = vmatpush1.bf16.msra.mxu0 0
      %808 = vmatprep.subr.bf16.mxu0 0
      %809 = vmatpush1.bf16.msra.mxu0 0
      %810 = vmatprep.subr.bf16.mxu0 0
      %811 = vmatpush1.bf16.msra.mxu0 0
      %812 = vmatprep.subr.bf16.mxu0 0
      %813 = vmatpush1.bf16.msra.mxu0 0
      %814 = vmatprep.mubr.bf16.mxu0 %v780
      %815 = vmatmul.mubr.bf16.gmra.mrb[0].mxu0 %v702
      %v816 = vpop.f32.mrb[0].mxu0
      %v817 = vadd.f32 0.0, %v816
      %v818 = vpop.f32.mrb[0].mxu0
      %v819 = vpop.f32.mrb[0].mxu0
      %v820 = vadd.f32 0.0, %v819
      %v821 = vpop.f32.mrb[0].mxu0
      %822 = vdwg.mxu0
      %v823 = vadd.f32 %v668, %v817
      %v824 = vadd.f32 %v671, %v820
      %s825 = scalar_lea.vmem %s3, 288
      %v826 = vld [vmem:[%s825] sm:$0xf]
      %v827 = vld [vmem:[%s825 + $0x4] sm:$0xf]
      %v828 = vld [vmem:[%s825 + $0x8] sm:$0xf]
      %v829 = vld [vmem:[%s825 + $0xc] sm:$0xf]
      %v830 = vld [vmem:[%s825 + $0x10] sm:$0xf]
      %v831 = vld [vmem:[%s825 + $0x14] sm:$0xf]
      %v832 = vld [vmem:[%s825 + $0x18] sm:$0xf]
      %v833 = vld [vmem:[%s825 + $0x1c] sm:$0xf]
      %v834 = vld [vmem:[%s825 + $0x20] sm:$0xf]
      %v835 = vld [vmem:[%s825 + $0x24] sm:$0xf]
      %v836 = vld [vmem:[%s825 + $0x28] sm:$0xf]
      %v837 = vld [vmem:[%s825 + $0x2c] sm:$0xf]
      %v838 = vld [vmem:[%s825 + $0x30] sm:$0xf]
      %v839 = vld [vmem:[%s825 + $0x34] sm:$0xf]
      %v840 = vld [vmem:[%s825 + $0x38] sm:$0xf]
      %v841 = vld [vmem:[%s825 + $0x3c] sm:$0xf]
      %v842 = vld [vmem:[%s825 + $0x40] sm:$0xf]
      %v843 = vld [vmem:[%s825 + $0x44] sm:$0xf]
      %v844 = vld [vmem:[%s825 + $0x48] sm:$0xf]
      %v845 = vld [vmem:[%s825 + $0x4c] sm:$0xf]
      %v846 = vld [vmem:[%s825 + $0x50] sm:$0xf]
      %v847 = vld [vmem:[%s825 + $0x54] sm:$0xf]
      %v848 = vld [vmem:[%s825 + $0x58] sm:$0xf]
      %v849 = vld [vmem:[%s825 + $0x5c] sm:$0xf]
      %v852 = vunpack.c.l.b16 %v347
      %v853 = vunpack.c.h.b16 %v347
      %v854 = vunpack.c.l.b16 %v348
      %v855 = vunpack.c.h.b16 %v348
      %v856 = vpack.c.b16 %v854, %v852
      %v857 = vpack.c.b16 %v855, %v853
      %v883 = vunpack.c.l.b16 %v826
      %v884 = vunpack.c.l.b16 %v827
      %v885 = vunpack.c.l.b16 %v828
      %v886 = vunpack.c.l.b16 %v829
      %v887 = vunpack.c.l.b16 %v830
      %v888 = vunpack.c.l.b16 %v831
      %v889 = vunpack.c.l.b16 %v832
      %v890 = vunpack.c.l.b16 %v833
      %v891 = vunpack.c.l.b16 %v834
      %v892 = vunpack.c.l.b16 %v835
      %v893 = vunpack.c.l.b16 %v836
      %v894 = vunpack.c.l.b16 %v837
      %v895 = vunpack.c.l.b16 %v838
      %v896 = vunpack.c.l.b16 %v839
      %v897 = vunpack.c.l.b16 %v840
      %v898 = vunpack.c.l.b16 %v841
      %v899 = vunpack.c.l.b16 %v842
      %v900 = vunpack.c.l.b16 %v843
      %v901 = vunpack.c.l.b16 %v844
      %v902 = vunpack.c.l.b16 %v845
      %v903 = vunpack.c.l.b16 %v846
      %v904 = vunpack.c.l.b16 %v847
      %v905 = vunpack.c.l.b16 %v848
      %v906 = vunpack.c.l.b16 %v849
      %v907 = vpack.c.b16 %v884, %v883
      %v908 = vpack.c.b16 %v886, %v885
      %v909 = vpack.c.b16 %v888, %v887
      %v910 = vpack.c.b16 %v890, %v889
      %v911 = vpack.c.b16 %v892, %v891
      %v912 = vpack.c.b16 %v894, %v893
      %v913 = vpack.c.b16 %v896, %v895
      %v914 = vpack.c.b16 %v898, %v897
      %v915 = vpack.c.b16 %v900, %v899
      %v916 = vpack.c.b16 %v902, %v901
      %v917 = vpack.c.b16 %v904, %v903
      %v918 = vpack.c.b16 %v906, %v905
      %v932 = vsel %vm513, %v857, 0
      %934 = vmatprep.subr.bf16.mxu0 0
      %935 = vmatpush1.bf16.msra.mxu0 %v907
      %936 = vmatprep.subr.bf16.mxu0 0
      %937 = vmatpush1.bf16.msra.mxu0 %v908
      %938 = vmatprep.subr.bf16.mxu0 0
      %939 = vmatpush1.bf16.msra.mxu0 %v909
      %940 = vmatprep.subr.bf16.mxu0 0
      %941 = vmatpush1.bf16.msra.mxu0 %v910
      %942 = vmatprep.subr.bf16.mxu0 0
      %943 = vmatpush1.bf16.msra.mxu0 %v911
      %944 = vmatprep.subr.bf16.mxu0 0
      %945 = vmatpush1.bf16.msra.mxu0 %v912
      %946 = vmatprep.subr.bf16.mxu0 0
      %947 = vmatpush1.bf16.msra.mxu0 %v913
      %948 = vmatprep.subr.bf16.mxu0 0
      %949 = vmatpush1.bf16.msra.mxu0 %v914
      %950 = vmatprep.subr.bf16.mxu0 0
      %951 = vmatpush1.bf16.msra.mxu0 %v915
      %952 = vmatprep.subr.bf16.mxu0 0
      %953 = vmatpush1.bf16.msra.mxu0 %v916
      %954 = vmatprep.subr.bf16.mxu0 0
      %955 = vmatpush1.bf16.msra.mxu0 %v917
      %956 = vmatprep.subr.bf16.mxu0 0
      %957 = vmatpush1.bf16.msra.mxu0 %v918
      %958 = vmatprep.subr.bf16.mxu0 0
      %959 = vmatpush1.bf16.msra.mxu0 0
      %960 = vmatprep.subr.bf16.mxu0 0
      %961 = vmatpush1.bf16.msra.mxu0 0
      %962 = vmatprep.subr.bf16.mxu0 0
      %963 = vmatpush1.bf16.msra.mxu0 0
      %964 = vmatprep.subr.bf16.mxu0 0
      %965 = vmatpush1.bf16.msra.mxu0 0
      %966 = vmatprep.mubr.bf16.mxu0 %v932
      %967 = vmatmul.mubr.bf16.gmra.mrb[0].mxu0 %v856
      %v968 = vpop.f32.mrb[0].mxu0
      %v969 = vadd.f32 0.0, %v968
      %v970 = vpop.f32.mrb[0].mxu0
      %v971 = vpop.f32.mrb[0].mxu0
      %v972 = vadd.f32 0.0, %v971
      %v973 = vpop.f32.mrb[0].mxu0
      %974 = vdwg.mxu0
      %v975 = vadd.f32 %v823, %v969
      %v976 = vadd.f32 %v824, %v972
      %s977 = scalar_lea.vmem %s3, 384
      %v978 = vld [vmem:[%s977] sm:$0xf]
      %v979 = vld [vmem:[%s977 + $0x4] sm:$0xf]
      %v980 = vld [vmem:[%s977 + $0x8] sm:$0xf]
      %v981 = vld [vmem:[%s977 + $0xc] sm:$0xf]
      %v982 = vld [vmem:[%s977 + $0x10] sm:$0xf]
      %v983 = vld [vmem:[%s977 + $0x14] sm:$0xf]
      %v984 = vld [vmem:[%s977 + $0x18] sm:$0xf]
      %v985 = vld [vmem:[%s977 + $0x1c] sm:$0xf]
      %v986 = vld [vmem:[%s977 + $0x20] sm:$0xf]
      %v987 = vld [vmem:[%s977 + $0x24] sm:$0xf]
      %v988 = vld [vmem:[%s977 + $0x28] sm:$0xf]
      %v989 = vld [vmem:[%s977 + $0x2c] sm:$0xf]
      %v990 = vld [vmem:[%s977 + $0x30] sm:$0xf]
      %v991 = vld [vmem:[%s977 + $0x34] sm:$0xf]
      %v992 = vld [vmem:[%s977 + $0x38] sm:$0xf]
      %v993 = vld [vmem:[%s977 + $0x3c] sm:$0xf]
      %v994 = vld [vmem:[%s977 + $0x40] sm:$0xf]
      %v995 = vld [vmem:[%s977 + $0x44] sm:$0xf]
      %v996 = vld [vmem:[%s977 + $0x48] sm:$0xf]
      %v997 = vld [vmem:[%s977 + $0x4c] sm:$0xf]
      %v998 = vld [vmem:[%s977 + $0x50] sm:$0xf]
      %v999 = vld [vmem:[%s977 + $0x54] sm:$0xf]
      %v1000 = vld [vmem:[%s977 + $0x58] sm:$0xf]
      %v1001 = vld [vmem:[%s977 + $0x5c] sm:$0xf]
      %v1003 = vunpack.c.l.b16 %v349
      %v1004 = vunpack.c.h.b16 %v349
      %v1005 = vpack.c.b16 %v1003, %v1003
      %v1006 = vpack.c.b16 %v1004, %v1004
      %v1008 = vshrl.u32 %v856, 16
      %v1010 = vshll.u32 %v856, 16
      %v1012 = vrot.slane %v1010, 1
      %v1013 = vor.u32 %v1008, %v1012
      %v1015 = vshll.u32 %v1005, 16
      %v1017 = vrot.slane %v1015, 1
      %v1018 = vsel %vm415, %v1013, %v1017
      %v1019 = vshrl.u32 %v857, 16
      %v1021 = vshll.u32 %v857, 16
      %v1023 = vrot.slane %v1021, 1
      %v1024 = vor.u32 %v1019, %v1023
      %v1026 = vshll.u32 %v1006, 16
      %v1028 = vrot.slane %v1026, 1
      %v1029 = vsel %vm415, %v1024, %v1028
      %v1055 = vunpack.c.l.b16 %v978
      %v1056 = vunpack.c.l.b16 %v979
      %v1057 = vunpack.c.l.b16 %v980
      %v1058 = vunpack.c.l.b16 %v981
      %v1059 = vunpack.c.l.b16 %v982
      %v1060 = vunpack.c.l.b16 %v983
      %v1061 = vunpack.c.l.b16 %v984
      %v1062 = vunpack.c.l.b16 %v985
      %v1063 = vunpack.c.l.b16 %v986
      %v1064 = vunpack.c.l.b16 %v987
      %v1065 = vunpack.c.l.b16 %v988
      %v1066 = vunpack.c.l.b16 %v989
      %v1067 = vunpack.c.l.b16 %v990
      %v1068 = vunpack.c.l.b16 %v991
      %v1069 = vunpack.c.l.b16 %v992
      %v1070 = vunpack.c.l.b16 %v993
      %v1071 = vunpack.c.l.b16 %v994
      %v1072 = vunpack.c.l.b16 %v995
      %v1073 = vunpack.c.l.b16 %v996
      %v1074 = vunpack.c.l.b16 %v997
      %v1075 = vunpack.c.l.b16 %v998
      %v1076 = vunpack.c.l.b16 %v999
      %v1077 = vunpack.c.l.b16 %v1000
      %v1078 = vunpack.c.l.b16 %v1001
      %v1079 = vpack.c.b16 %v1056, %v1055
      %v1080 = vpack.c.b16 %v1058, %v1057
      %v1081 = vpack.c.b16 %v1060, %v1059
      %v1082 = vpack.c.b16 %v1062, %v1061
      %v1083 = vpack.c.b16 %v1064, %v1063
      %v1084 = vpack.c.b16 %v1066, %v1065
      %v1085 = vpack.c.b16 %v1068, %v1067
      %v1086 = vpack.c.b16 %v1070, %v1069
      %v1087 = vpack.c.b16 %v1072, %v1071
      %v1088 = vpack.c.b16 %v1074, %v1073
      %v1089 = vpack.c.b16 %v1076, %v1075
      %v1090 = vpack.c.b16 %v1078, %v1077
      %v1104 = vsel %vm513, %v1029, 0
      %1106 = vmatprep.subr.bf16.mxu0 0
      %1107 = vmatpush1.bf16.msra.mxu0 %v1079
      %1108 = vmatprep.subr.bf16.mxu0 0
      %1109 = vmatpush1.bf16.msra.mxu0 %v1080
      %1110 = vmatprep.subr.bf16.mxu0 0
      %1111 = vmatpush1.bf16.msra.mxu0 %v1081
      %1112 = vmatprep.subr.bf16.mxu0 0
      %1113 = vmatpush1.bf16.msra.mxu0 %v1082
      %1114 = vmatprep.subr.bf16.mxu0 0
      %1115 = vmatpush1.bf16.msra.mxu0 %v1083
      %1116 = vmatprep.subr.bf16.mxu0 0
      %1117 = vmatpush1.bf16.msra.mxu0 %v1084
      %1118 = vmatprep.subr.bf16.mxu0 0
      %1119 = vmatpush1.bf16.msra.mxu0 %v1085
      %1120 = vmatprep.subr.bf16.mxu0 0
      %1121 = vmatpush1.bf16.msra.mxu0 %v1086
      %1122 = vmatprep.subr.bf16.mxu0 0
      %1123 = vmatpush1.bf16.msra.mxu0 %v1087
      %1124 = vmatprep.subr.bf16.mxu0 0
      %1125 = vmatpush1.bf16.msra.mxu0 %v1088
      %1126 = vmatprep.subr.bf16.mxu0 0
      %1127 = vmatpush1.bf16.msra.mxu0 %v1089
      %1128 = vmatprep.subr.bf16.mxu0 0
      %1129 = vmatpush1.bf16.msra.mxu0 %v1090
      %1130 = vmatprep.subr.bf16.mxu0 0
      %1131 = vmatpush1.bf16.msra.mxu0 0
      %1132 = vmatprep.subr.bf16.mxu0 0
      %1133 = vmatpush1.bf16.msra.mxu0 0
      %1134 = vmatprep.subr.bf16.mxu0 0
      %1135 = vmatpush1.bf16.msra.mxu0 0
      %1136 = vmatprep.subr.bf16.mxu0 0
      %1137 = vmatpush1.bf16.msra.mxu0 0
      %1138 = vmatprep.mubr.bf16.mxu0 %v1104
      %1139 = vmatmul.mubr.bf16.gmra.mrb[0].mxu0 %v1018
      %v1140 = vpop.f32.mrb[0].mxu0
      %v1141 = vadd.f32 0.0, %v1140
      %v1142 = vpop.f32.mrb[0].mxu0
      %v1143 = vpop.f32.mrb[0].mxu0
      %v1144 = vadd.f32 0.0, %v1143
      %v1145 = vpop.f32.mrb[0].mxu0
      %1146 = vdwg.mxu0
      %v1147 = vadd.f32 %v975, %v1141
      %v1148 = vadd.f32 %v976, %v1144
      %s1149 = scalar_lea.vmem %s3, 480
      %v1150 = vld [vmem:[%s1149] sm:$0xf]
      %v1151 = vld [vmem:[%s1149 + $0x4] sm:$0xf]
      %v1152 = vld [vmem:[%s1149 + $0x8] sm:$0xf]
      %v1153 = vld [vmem:[%s1149 + $0xc] sm:$0xf]
      %v1154 = vld [vmem:[%s1149 + $0x10] sm:$0xf]
      %v1155 = vld [vmem:[%s1149 + $0x14] sm:$0xf]
      %v1156 = vld [vmem:[%s1149 + $0x18] sm:$0xf]
      %v1157 = vld [vmem:[%s1149 + $0x1c] sm:$0xf]
      %v1158 = vld [vmem:[%s1149 + $0x20] sm:$0xf]
      %v1159 = vld [vmem:[%s1149 + $0x24] sm:$0xf]
      %v1160 = vld [vmem:[%s1149 + $0x28] sm:$0xf]
      %v1161 = vld [vmem:[%s1149 + $0x2c] sm:$0xf]
      %v1162 = vld [vmem:[%s1149 + $0x30] sm:$0xf]
      %v1163 = vld [vmem:[%s1149 + $0x34] sm:$0xf]
      %v1164 = vld [vmem:[%s1149 + $0x38] sm:$0xf]
      %v1165 = vld [vmem:[%s1149 + $0x3c] sm:$0xf]
      %v1166 = vld [vmem:[%s1149 + $0x40] sm:$0xf]
      %v1167 = vld [vmem:[%s1149 + $0x44] sm:$0xf]
      %v1168 = vld [vmem:[%s1149 + $0x48] sm:$0xf]
      %v1169 = vld [vmem:[%s1149 + $0x4c] sm:$0xf]
      %v1170 = vld [vmem:[%s1149 + $0x50] sm:$0xf]
      %v1171 = vld [vmem:[%s1149 + $0x54] sm:$0xf]
      %v1172 = vld [vmem:[%s1149 + $0x58] sm:$0xf]
      %v1173 = vld [vmem:[%s1149 + $0x5c] sm:$0xf]
      %v1174 = vrot.slane %v856, 1
      %v1175 = vrot.slane %v1005, 1
      %v1176 = vsel %vm699, %v1174, %v1175
      %v1177 = vrot.slane %v857, 1
      %v1178 = vrot.slane %v1006, 1
      %v1179 = vsel %vm699, %v1177, %v1178
      %v1205 = vunpack.c.l.b16 %v1150
      %v1206 = vunpack.c.l.b16 %v1151
      %v1207 = vunpack.c.l.b16 %v1152
      %v1208 = vunpack.c.l.b16 %v1153
      %v1209 = vunpack.c.l.b16 %v1154
      %v1210 = vunpack.c.l.b16 %v1155
      %v1211 = vunpack.c.l.b16 %v1156
      %v1212 = vunpack.c.l.b16 %v1157
      %v1213 = vunpack.c.l.b16 %v1158
      %v1214 = vunpack.c.l.b16 %v1159
      %v1215 = vunpack.c.l.b16 %v1160
      %v1216 = vunpack.c.l.b16 %v1161
      %v1217 = vunpack.c.l.b16 %v1162
      %v1218 = vunpack.c.l.b16 %v1163
      %v1219 = vunpack.c.l.b16 %v1164
      %v1220 = vunpack.c.l.b16 %v1165
      %v1221 = vunpack.c.l.b16 %v1166
      %v1222 = vunpack.c.l.b16 %v1167
      %v1223 = vunpack.c.l.b16 %v1168
      %v1224 = vunpack.c.l.b16 %v1169
      %v1225 = vunpack.c.l.b16 %v1170
      %v1226 = vunpack.c.l.b16 %v1171
      %v1227 = vunpack.c.l.b16 %v1172
      %v1228 = vunpack.c.l.b16 %v1173
      %v1229 = vpack.c.b16 %v1206, %v1205
      %v1230 = vpack.c.b16 %v1208, %v1207
      %v1231 = vpack.c.b16 %v1210, %v1209
      %v1232 = vpack.c.b16 %v1212, %v1211
      %v1233 = vpack.c.b16 %v1214, %v1213
      %v1234 = vpack.c.b16 %v1216, %v1215
      %v1235 = vpack.c.b16 %v1218, %v1217
      %v1236 = vpack.c.b16 %v1220, %v1219
      %v1237 = vpack.c.b16 %v1222, %v1221
      %v1238 = vpack.c.b16 %v1224, %v1223
      %v1239 = vpack.c.b16 %v1226, %v1225
      %v1240 = vpack.c.b16 %v1228, %v1227
      %v1254 = vsel %vm513, %v1179, 0
      %1256 = vmatprep.subr.bf16.mxu0 0
      %1257 = vmatpush1.bf16.msra.mxu0 %v1229
      %1258 = vmatprep.subr.bf16.mxu0 0
      %1259 = vmatpush1.bf16.msra.mxu0 %v1230
      %1260 = vmatprep.subr.bf16.mxu0 0
      %1261 = vmatpush1.bf16.msra.mxu0 %v1231
      %1262 = vmatprep.subr.bf16.mxu0 0
      %1263 = vmatpush1.bf16.msra.mxu0 %v1232
      %1264 = vmatprep.subr.bf16.mxu0 0
      %1265 = vmatpush1.bf16.msra.mxu0 %v1233
      %1266 = vmatprep.subr.bf16.mxu0 0
      %1267 = vmatpush1.bf16.msra.mxu0 %v1234
      %1268 = vmatprep.subr.bf16.mxu0 0
      %1269 = vmatpush1.bf16.msra.mxu0 %v1235
      %1270 = vmatprep.subr.bf16.mxu0 0
      %1271 = vmatpush1.bf16.msra.mxu0 %v1236
      %1272 = vmatprep.subr.bf16.mxu0 0
      %1273 = vmatpush1.bf16.msra.mxu0 %v1237
      %1274 = vmatprep.subr.bf16.mxu0 0
      %1275 = vmatpush1.bf16.msra.mxu0 %v1238
      %1276 = vmatprep.subr.bf16.mxu0 0
      %1277 = vmatpush1.bf16.msra.mxu0 %v1239
      %1278 = vmatprep.subr.bf16.mxu0 0
      %1279 = vmatpush1.bf16.msra.mxu0 %v1240
      %1280 = vmatprep.subr.bf16.mxu0 0
      %1281 = vmatpush1.bf16.msra.mxu0 0
      %1282 = vmatprep.subr.bf16.mxu0 0
      %1283 = vmatpush1.bf16.msra.mxu0 0
      %1284 = vmatprep.subr.bf16.mxu0 0
      %1285 = vmatpush1.bf16.msra.mxu0 0
      %1286 = vmatprep.subr.bf16.mxu0 0
      %1287 = vmatpush1.bf16.msra.mxu0 0
      %1288 = vmatprep.mubr.bf16.mxu0 %v1254
      %1289 = vmatmul.mubr.bf16.gmra.mrb[0].mxu0 %v1176
      %v1290 = vpop.f32.mrb[0].mxu0
      %v1291 = vadd.f32 0.0, %v1290
      %v1292 = vpop.f32.mrb[0].mxu0
      %v1293 = vpop.f32.mrb[0].mxu0
      %v1294 = vadd.f32 0.0, %v1293
      %v1295 = vpop.f32.mrb[0].mxu0
      %1296 = vdwg.mxu0
      %v1297 = vadd.f32 %v1147, %v1291
      %v1298 = vadd.f32 %v1148, %v1294
      %s1299 = scalar_lea.vmem %s3, 576
      %v1300 = vld [vmem:[%s1299] sm:$0xf]
      %v1301 = vld [vmem:[%s1299 + $0x4] sm:$0xf]
      %v1302 = vld [vmem:[%s1299 + $0x8] sm:$0xf]
      %v1303 = vld [vmem:[%s1299 + $0xc] sm:$0xf]
      %v1304 = vld [vmem:[%s1299 + $0x10] sm:$0xf]
      %v1305 = vld [vmem:[%s1299 + $0x14] sm:$0xf]
      %v1306 = vld [vmem:[%s1299 + $0x18] sm:$0xf]
      %v1307 = vld [vmem:[%s1299 + $0x1c] sm:$0xf]
      %v1308 = vld [vmem:[%s1299 + $0x20] sm:$0xf]
      %v1309 = vld [vmem:[%s1299 + $0x24] sm:$0xf]
      %v1310 = vld [vmem:[%s1299 + $0x28] sm:$0xf]
      %v1311 = vld [vmem:[%s1299 + $0x2c] sm:$0xf]
      %v1312 = vld [vmem:[%s1299 + $0x30] sm:$0xf]
      %v1313 = vld [vmem:[%s1299 + $0x34] sm:$0xf]
      %v1314 = vld [vmem:[%s1299 + $0x38] sm:$0xf]
      %v1315 = vld [vmem:[%s1299 + $0x3c] sm:$0xf]
      %v1316 = vld [vmem:[%s1299 + $0x40] sm:$0xf]
      %v1317 = vld [vmem:[%s1299 + $0x44] sm:$0xf]
      %v1318 = vld [vmem:[%s1299 + $0x48] sm:$0xf]
      %v1319 = vld [vmem:[%s1299 + $0x4c] sm:$0xf]
      %v1320 = vld [vmem:[%s1299 + $0x50] sm:$0xf]
      %v1321 = vld [vmem:[%s1299 + $0x54] sm:$0xf]
      %v1322 = vld [vmem:[%s1299 + $0x58] sm:$0xf]
      %v1323 = vld [vmem:[%s1299 + $0x5c] sm:$0xf]
      %v1326 = vunpack.c.l.b16 %v350
      %v1327 = vunpack.c.h.b16 %v350
      %v1328 = vunpack.c.l.b16 %v351
      %v1329 = vunpack.c.h.b16 %v351
      %v1330 = vpack.c.b16 %v1328, %v1326
      %v1331 = vpack.c.b16 %v1329, %v1327
      %v1357 = vunpack.c.l.b16 %v1300
      %v1358 = vunpack.c.l.b16 %v1301
      %v1359 = vunpack.c.l.b16 %v1302
      %v1360 = vunpack.c.l.b16 %v1303
      %v1361 = vunpack.c.l.b16 %v1304
      %v1362 = vunpack.c.l.b16 %v1305
      %v1363 = vunpack.c.l.b16 %v1306
      %v1364 = vunpack.c.l.b16 %v1307
      %v1365 = vunpack.c.l.b16 %v1308
      %v1366 = vunpack.c.l.b16 %v1309
      %v1367 = vunpack.c.l.b16 %v1310
      %v1368 = vunpack.c.l.b16 %v1311
      %v1369 = vunpack.c.l.b16 %v1312
      %v1370 = vunpack.c.l.b16 %v1313
      %v1371 = vunpack.c.l.b16 %v1314
      %v1372 = vunpack.c.l.b16 %v1315
      %v1373 = vunpack.c.l.b16 %v1316
      %v1374 = vunpack.c.l.b16 %v1317
      %v1375 = vunpack.c.l.b16 %v1318
      %v1376 = vunpack.c.l.b16 %v1319
      %v1377 = vunpack.c.l.b16 %v1320
      %v1378 = vunpack.c.l.b16 %v1321
      %v1379 = vunpack.c.l.b16 %v1322
      %v1380 = vunpack.c.l.b16 %v1323
      %v1381 = vpack.c.b16 %v1358, %v1357
      %v1382 = vpack.c.b16 %v1360, %v1359
      %v1383 = vpack.c.b16 %v1362, %v1361
      %v1384 = vpack.c.b16 %v1364, %v1363
      %v1385 = vpack.c.b16 %v1366, %v1365
      %v1386 = vpack.c.b16 %v1368, %v1367
      %v1387 = vpack.c.b16 %v1370, %v1369
      %v1388 = vpack.c.b16 %v1372, %v1371
      %v1389 = vpack.c.b16 %v1374, %v1373
      %v1390 = vpack.c.b16 %v1376, %v1375
      %v1391 = vpack.c.b16 %v1378, %v1377
      %v1392 = vpack.c.b16 %v1380, %v1379
      %v1406 = vsel %vm513, %v1331, 0
      %1408 = vmatprep.subr.bf16.mxu0 0
      %1409 = vmatpush1.bf16.msra.mxu0 %v1381
      %1410 = vmatprep.subr.bf16.mxu0 0
      %1411 = vmatpush1.bf16.msra.mxu0 %v1382
      %1412 = vmatprep.subr.bf16.mxu0 0
      %1413 = vmatpush1.bf16.msra.mxu0 %v1383
      %1414 = vmatprep.subr.bf16.mxu0 0
      %1415 = vmatpush1.bf16.msra.mxu0 %v1384
      %1416 = vmatprep.subr.bf16.mxu0 0
      %1417 = vmatpush1.bf16.msra.mxu0 %v1385
      %1418 = vmatprep.subr.bf16.mxu0 0
      %1419 = vmatpush1.bf16.msra.mxu0 %v1386
      %1420 = vmatprep.subr.bf16.mxu0 0
      %1421 = vmatpush1.bf16.msra.mxu0 %v1387
      %1422 = vmatprep.subr.bf16.mxu0 0
      %1423 = vmatpush1.bf16.msra.mxu0 %v1388
      %1424 = vmatprep.subr.bf16.mxu0 0
      %1425 = vmatpush1.bf16.msra.mxu0 %v1389
      %1426 = vmatprep.subr.bf16.mxu0 0
      %1427 = vmatpush1.bf16.msra.mxu0 %v1390
      %1428 = vmatprep.subr.bf16.mxu0 0
      %1429 = vmatpush1.bf16.msra.mxu0 %v1391
      %1430 = vmatprep.subr.bf16.mxu0 0
      %1431 = vmatpush1.bf16.msra.mxu0 %v1392
      %1432 = vmatprep.subr.bf16.mxu0 0
      %1433 = vmatpush1.bf16.msra.mxu0 0
      %1434 = vmatprep.subr.bf16.mxu0 0
      %1435 = vmatpush1.bf16.msra.mxu0 0
      %1436 = vmatprep.subr.bf16.mxu0 0
      %1437 = vmatpush1.bf16.msra.mxu0 0
      %1438 = vmatprep.subr.bf16.mxu0 0
      %1439 = vmatpush1.bf16.msra.mxu0 0
      %1440 = vmatprep.mubr.bf16.mxu0 %v1406
      %1441 = vmatmul.mubr.bf16.gmra.mrb[0].mxu0 %v1330
      %v1442 = vpop.f32.mrb[0].mxu0
      %v1443 = vadd.f32 0.0, %v1442
      %v1444 = vpop.f32.mrb[0].mxu0
      %v1445 = vpop.f32.mrb[0].mxu0
      %v1446 = vadd.f32 0.0, %v1445
      %v1447 = vpop.f32.mrb[0].mxu0
      %1448 = vdwg.mxu0
      %v1449 = vadd.f32 %v1297, %v1443
      %v1450 = vadd.f32 %v1298, %v1446
      %s1451 = scalar_lea.vmem %s3, 672
      %v1452 = vld [vmem:[%s1451] sm:$0xf]
      %v1453 = vld [vmem:[%s1451 + $0x4] sm:$0xf]
      %v1454 = vld [vmem:[%s1451 + $0x8] sm:$0xf]
      %v1455 = vld [vmem:[%s1451 + $0xc] sm:$0xf]
      %v1456 = vld [vmem:[%s1451 + $0x10] sm:$0xf]
      %v1457 = vld [vmem:[%s1451 + $0x14] sm:$0xf]
      %v1458 = vld [vmem:[%s1451 + $0x18] sm:$0xf]
      %v1459 = vld [vmem:[%s1451 + $0x1c] sm:$0xf]
      %v1460 = vld [vmem:[%s1451 + $0x20] sm:$0xf]
      %v1461 = vld [vmem:[%s1451 + $0x24] sm:$0xf]
      %v1462 = vld [vmem:[%s1451 + $0x28] sm:$0xf]
      %v1463 = vld [vmem:[%s1451 + $0x2c] sm:$0xf]
      %v1464 = vld [vmem:[%s1451 + $0x30] sm:$0xf]
      %v1465 = vld [vmem:[%s1451 + $0x34] sm:$0xf]
      %v1466 = vld [vmem:[%s1451 + $0x38] sm:$0xf]
      %v1467 = vld [vmem:[%s1451 + $0x3c] sm:$0xf]
      %v1468 = vld [vmem:[%s1451 + $0x40] sm:$0xf]
      %v1469 = vld [vmem:[%s1451 + $0x44] sm:$0xf]
      %v1470 = vld [vmem:[%s1451 + $0x48] sm:$0xf]
      %v1471 = vld [vmem:[%s1451 + $0x4c] sm:$0xf]
      %v1472 = vld [vmem:[%s1451 + $0x50] sm:$0xf]
      %v1473 = vld [vmem:[%s1451 + $0x54] sm:$0xf]
      %v1474 = vld [vmem:[%s1451 + $0x58] sm:$0xf]
      %v1475 = vld [vmem:[%s1451 + $0x5c] sm:$0xf]
      %v1477 = vunpack.c.l.b16 %v352
      %v1478 = vunpack.c.h.b16 %v352
      %v1479 = vpack.c.b16 %v1477, %v1477
      %v1480 = vpack.c.b16 %v1478, %v1478
      %v1482 = vshrl.u32 %v1330, 16
      %v1484 = vshll.u32 %v1330, 16
      %v1486 = vrot.slane %v1484, 1
      %v1487 = vor.u32 %v1482, %v1486
      %v1489 = vshll.u32 %v1479, 16
      %v1491 = vrot.slane %v1489, 1
      %v1492 = vsel %vm415, %v1487, %v1491
      %v1493 = vshrl.u32 %v1331, 16
      %v1495 = vshll.u32 %v1331, 16
      %v1497 = vrot.slane %v1495, 1
      %v1498 = vor.u32 %v1493, %v1497
      %v1500 = vshll.u32 %v1480, 16
      %v1502 = vrot.slane %v1500, 1
      %v1503 = vsel %vm415, %v1498, %v1502
      %v1529 = vunpack.c.l.b16 %v1452
      %v1530 = vunpack.c.l.b16 %v1453
      %v1531 = vunpack.c.l.b16 %v1454
      %v1532 = vunpack.c.l.b16 %v1455
      %v1533 = vunpack.c.l.b16 %v1456
      %v1534 = vunpack.c.l.b16 %v1457
      %v1535 = vunpack.c.l.b16 %v1458
      %v1536 = vunpack.c.l.b16 %v1459
      %v1537 = vunpack.c.l.b16 %v1460
      %v1538 = vunpack.c.l.b16 %v1461
      %v1539 = vunpack.c.l.b16 %v1462
      %v1540 = vunpack.c.l.b16 %v1463
      %v1541 = vunpack.c.l.b16 %v1464
      %v1542 = vunpack.c.l.b16 %v1465
      %v1543 = vunpack.c.l.b16 %v1466
      %v1544 = vunpack.c.l.b16 %v1467
      %v1545 = vunpack.c.l.b16 %v1468
      %v1546 = vunpack.c.l.b16 %v1469
      %v1547 = vunpack.c.l.b16 %v1470
      %v1548 = vunpack.c.l.b16 %v1471
      %v1549 = vunpack.c.l.b16 %v1472
      %v1550 = vunpack.c.l.b16 %v1473
      %v1551 = vunpack.c.l.b16 %v1474
      %v1552 = vunpack.c.l.b16 %v1475
      %v1553 = vpack.c.b16 %v1530, %v1529
      %v1554 = vpack.c.b16 %v1532, %v1531
      %v1555 = vpack.c.b16 %v1534, %v1533
      %v1556 = vpack.c.b16 %v1536, %v1535
      %v1557 = vpack.c.b16 %v1538, %v1537
      %v1558 = vpack.c.b16 %v1540, %v1539
      %v1559 = vpack.c.b16 %v1542, %v1541
      %v1560 = vpack.c.b16 %v1544, %v1543
      %v1561 = vpack.c.b16 %v1546, %v1545
      %v1562 = vpack.c.b16 %v1548, %v1547
      %v1563 = vpack.c.b16 %v1550, %v1549
      %v1564 = vpack.c.b16 %v1552, %v1551
      %v1578 = vsel %vm513, %v1503, 0
      %1580 = vmatprep.subr.bf16.mxu0 0
      %1581 = vmatpush1.bf16.msra.mxu0 %v1553
      %1582 = vmatprep.subr.bf16.mxu0 0
      %1583 = vmatpush1.bf16.msra.mxu0 %v1554
      %1584 = vmatprep.subr.bf16.mxu0 0
      %1585 = vmatpush1.bf16.msra.mxu0 %v1555
      %1586 = vmatprep.subr.bf16.mxu0 0
      %1587 = vmatpush1.bf16.msra.mxu0 %v1556
      %1588 = vmatprep.subr.bf16.mxu0 0
      %1589 = vmatpush1.bf16.msra.mxu0 %v1557
      %1590 = vmatprep.subr.bf16.mxu0 0
      %1591 = vmatpush1.bf16.msra.mxu0 %v1558
      %1592 = vmatprep.subr.bf16.mxu0 0
      %1593 = vmatpush1.bf16.msra.mxu0 %v1559
      %1594 = vmatprep.subr.bf16.mxu0 0
      %1595 = vmatpush1.bf16.msra.mxu0 %v1560
      %1596 = vmatprep.subr.bf16.mxu0 0
      %1597 = vmatpush1.bf16.msra.mxu0 %v1561
      %1598 = vmatprep.subr.bf16.mxu0 0
      %1599 = vmatpush1.bf16.msra.mxu0 %v1562
      %1600 = vmatprep.subr.bf16.mxu0 0
      %1601 = vmatpush1.bf16.msra.mxu0 %v1563
      %1602 = vmatprep.subr.bf16.mxu0 0
      %1603 = vmatpush1.bf16.msra.mxu0 %v1564
      %1604 = vmatprep.subr.bf16.mxu0 0
      %1605 = vmatpush1.bf16.msra.mxu0 0
      %1606 = vmatprep.subr.bf16.mxu0 0
      %1607 = vmatpush1.bf16.msra.mxu0 0
      %1608 = vmatprep.subr.bf16.mxu0 0
      %1609 = vmatpush1.bf16.msra.mxu0 0
      %1610 = vmatprep.subr.bf16.mxu0 0
      %1611 = vmatpush1.bf16.msra.mxu0 0
      %1612 = vmatprep.mubr.bf16.mxu0 %v1578
      %1613 = vmatmul.mubr.bf16.gmra.mrb[0].mxu0 %v1492
      %v1614 = vpop.f32.mrb[0].mxu0
      %v1615 = vadd.f32 0.0, %v1614
      %v1616 = vpop.f32.mrb[0].mxu0
      %v1617 = vpop.f32.mrb[0].mxu0
      %v1618 = vadd.f32 0.0, %v1617
      %v1619 = vpop.f32.mrb[0].mxu0
      %1620 = vdwg.mxu0
      %v1621 = vadd.f32 %v1449, %v1615
      %v1622 = vadd.f32 %v1450, %v1618
      %s1623 = scalar_lea.vmem %s3, 768
      %v1624 = vld [vmem:[%s1623] sm:$0xf]
      %v1625 = vld [vmem:[%s1623 + $0x4] sm:$0xf]
      %v1626 = vld [vmem:[%s1623 + $0x8] sm:$0xf]
      %v1627 = vld [vmem:[%s1623 + $0xc] sm:$0xf]
      %v1628 = vld [vmem:[%s1623 + $0x10] sm:$0xf]
      %v1629 = vld [vmem:[%s1623 + $0x14] sm:$0xf]
      %v1630 = vld [vmem:[%s1623 + $0x18] sm:$0xf]
      %v1631 = vld [vmem:[%s1623 + $0x1c] sm:$0xf]
      %v1632 = vld [vmem:[%s1623 + $0x20] sm:$0xf]
      %v1633 = vld [vmem:[%s1623 + $0x24] sm:$0xf]
      %v1634 = vld [vmem:[%s1623 + $0x28] sm:$0xf]
      %v1635 = vld [vmem:[%s1623 + $0x2c] sm:$0xf]
      %v1636 = vld [vmem:[%s1623 + $0x30] sm:$0xf]
      %v1637 = vld [vmem:[%s1623 + $0x34] sm:$0xf]
      %v1638 = vld [vmem:[%s1623 + $0x38] sm:$0xf]
      %v1639 = vld [vmem:[%s1623 + $0x3c] sm:$0xf]
      %v1640 = vld [vmem:[%s1623 + $0x40] sm:$0xf]
      %v1641 = vld [vmem:[%s1623 + $0x44] sm:$0xf]
      %v1642 = vld [vmem:[%s1623 + $0x48] sm:$0xf]
      %v1643 = vld [vmem:[%s1623 + $0x4c] sm:$0xf]
      %v1644 = vld [vmem:[%s1623 + $0x50] sm:$0xf]
      %v1645 = vld [vmem:[%s1623 + $0x54] sm:$0xf]
      %v1646 = vld [vmem:[%s1623 + $0x58] sm:$0xf]
      %v1647 = vld [vmem:[%s1623 + $0x5c] sm:$0xf]
      %v1648 = vrot.slane %v1330, 1
      %v1649 = vrot.slane %v1479, 1
      %v1650 = vsel %vm699, %v1648, %v1649
      %v1651 = vrot.slane %v1331, 1
      %v1652 = vrot.slane %v1480, 1
      %v1653 = vsel %vm699, %v1651, %v1652
      %v1679 = vunpack.c.l.b16 %v1624
      %v1680 = vunpack.c.l.b16 %v1625
      %v1681 = vunpack.c.l.b16 %v1626
      %v1682 = vunpack.c.l.b16 %v1627
      %v1683 = vunpack.c.l.b16 %v1628
      %v1684 = vunpack.c.l.b16 %v1629
      %v1685 = vunpack.c.l.b16 %v1630
      %v1686 = vunpack.c.l.b16 %v1631
      %v1687 = vunpack.c.l.b16 %v1632
      %v1688 = vunpack.c.l.b16 %v1633
      %v1689 = vunpack.c.l.b16 %v1634
      %v1690 = vunpack.c.l.b16 %v1635
      %v1691 = vunpack.c.l.b16 %v1636
      %v1692 = vunpack.c.l.b16 %v1637
      %v1693 = vunpack.c.l.b16 %v1638
      %v1694 = vunpack.c.l.b16 %v1639
      %v1695 = vunpack.c.l.b16 %v1640
      %v1696 = vunpack.c.l.b16 %v1641
      %v1697 = vunpack.c.l.b16 %v1642
      %v1698 = vunpack.c.l.b16 %v1643
      %v1699 = vunpack.c.l.b16 %v1644
      %v1700 = vunpack.c.l.b16 %v1645
      %v1701 = vunpack.c.l.b16 %v1646
      %v1702 = vunpack.c.l.b16 %v1647
      %v1703 = vpack.c.b16 %v1680, %v1679
      %v1704 = vpack.c.b16 %v1682, %v1681
      %v1705 = vpack.c.b16 %v1684, %v1683
      %v1706 = vpack.c.b16 %v1686, %v1685
      %v1707 = vpack.c.b16 %v1688, %v1687
      %v1708 = vpack.c.b16 %v1690, %v1689
      %v1709 = vpack.c.b16 %v1692, %v1691
      %v1710 = vpack.c.b16 %v1694, %v1693
      %v1711 = vpack.c.b16 %v1696, %v1695
      %v1712 = vpack.c.b16 %v1698, %v1697
      %v1713 = vpack.c.b16 %v1700, %v1699
      %v1714 = vpack.c.b16 %v1702, %v1701
      %v1728 = vsel %vm513, %v1653, 0
      %1730 = vmatprep.subr.bf16.mxu0 0
      %1731 = vmatpush1.bf16.msra.mxu0 %v1703
      %1732 = vmatprep.subr.bf16.mxu0 0
      %1733 = vmatpush1.bf16.msra.mxu0 %v1704
      %1734 = vmatprep.subr.bf16.mxu0 0
      %1735 = vmatpush1.bf16.msra.mxu0 %v1705
      %1736 = vmatprep.subr.bf16.mxu0 0
      %1737 = vmatpush1.bf16.msra.mxu0 %v1706
      %1738 = vmatprep.subr.bf16.mxu0 0
      %1739 = vmatpush1.bf16.msra.mxu0 %v1707
      %1740 = vmatprep.subr.bf16.mxu0 0
      %1741 = vmatpush1.bf16.msra.mxu0 %v1708
      %1742 = vmatprep.subr.bf16.mxu0 0
      %1743 = vmatpush1.bf16.msra.mxu0 %v1709
      %1744 = vmatprep.subr.bf16.mxu0 0
      %1745 = vmatpush1.bf16.msra.mxu0 %v1710
      %1746 = vmatprep.subr.bf16.mxu0 0
      %1747 = vmatpush1.bf16.msra.mxu0 %v1711
      %1748 = vmatprep.subr.bf16.mxu0 0
      %1749 = vmatpush1.bf16.msra.mxu0 %v1712
      %1750 = vmatprep.subr.bf16.mxu0 0
      %1751 = vmatpush1.bf16.msra.mxu0 %v1713
      %1752 = vmatprep.subr.bf16.mxu0 0
      %1753 = vmatpush1.bf16.msra.mxu0 %v1714
      %1754 = vmatprep.subr.bf16.mxu0 0
      %1755 = vmatpush1.bf16.msra.mxu0 0
      %1756 = vmatprep.subr.bf16.mxu0 0
      %1757 = vmatpush1.bf16.msra.mxu0 0
      %1758 = vmatprep.subr.bf16.mxu0 0
      %1759 = vmatpush1.bf16.msra.mxu0 0
      %1760 = vmatprep.subr.bf16.mxu0 0
      %1761 = vmatpush1.bf16.msra.mxu0 0
      %1762 = vmatprep.mubr.bf16.mxu0 %v1728
      %1763 = vmatmul.mubr.bf16.gmra.mrb[0].mxu0 %v1650
      %v1764 = vpop.f32.mrb[0].mxu0
      %v1765 = vadd.f32 0.0, %v1764
      %v1766 = vpop.f32.mrb[0].mxu0
      %v1767 = vpop.f32.mrb[0].mxu0
      %v1768 = vadd.f32 0.0, %v1767
      %v1769 = vpop.f32.mrb[0].mxu0
      %1770 = vdwg.mxu0
      %v1771 = vadd.f32 %v1621, %v1765
      %v1772 = vadd.f32 %v1622, %v1768
      %v1773 = vld [vmem:[%s4] sm:$0x1]
      %v1775 = vlaneseq
      %v1776 = vshrl.u32 %v1775, 7
      %v1777 = vsub.s32 0, %v1776
      %v1778 = vrot.slane %v1773, %v1777
      %v1780 = vadd.f32 %v1771, %v1778
      %v1781 = vadd.f32 %v1772, %v1778
      %1782 = vst [vmem:[%s342] sm:$0xff] %v1780
      %1783 = vst [vmem:[%s342 + $0x8] sm:$0xff] %v1781
      %p1784 = scmp.lt.s32.totalorder %s20, 1
      %s1785 = scalar_select %p1784, %s20, 1
      %p1786 = scmp.lt.s32.totalorder %s21, 15
      %s1787 = scalar_select %p1786, %s21, 15
      %s1788 = smul.addr %s1787, 2
      %s1789 = smul.addr %s1785, 32
      %s1790 = sadd.s32 %s1788, %s1789
      %s1791 = smul.addr %s1790, 8
      %s1792 = scalar_lea.vmem %s5, %s1791
      // Predicated region
      $region41: #{shadow_removal_forward.19} parent=39 // pred_check
        %p1793 = pneg %p178
      $region42: #{shadow_removal_forward.19} parent=39 // pred_check_branch
        %1795 = sbr.rel (%p1793) target = $region44
      $region43: #{shadow_removal_forward.19} parent=39 // pred_region
        _
      $region44: #{shadow_removal_forward.19} parent=39 // pred_fallthru
        _
    $region40: #{shadow_removal_forward.19} parent=5 // pred_fallthru
      _
    %p1796 = scmp.le.s32.totalorder 2, %s11
    // Predicated region
    $region45: #{shadow_removal_forward.19} parent=5 // pred_check
      %p1797 = pneg %p1796
    $region46: #{shadow_removal_forward.19} parent=5 // pred_check_branch
      %1799 = sbr.rel (%p1797) target = $region48
    $region47: #{shadow_removal_forward.19} parent=5 // pred_region
      %s1800 = ssub.s32 %s11, 2
      // Predicated region
      $region49: #{shadow_removal_forward.19} parent=47 // pred_check
        %p1801 = pneg %p184
      $region50: #{shadow_removal_forward.19} parent=47 // pred_check_branch
        %1803 = sbr.rel (%p1801) target = $region52
      $region51: #{shadow_removal_forward.19} parent=47 // pred_region
        %p1804 = scmp.lt.s32.totalorder %s22, 1
        %s1805 = scalar_select %p1804, %s22, 1
        %p1806 = scmp.lt.s32.totalorder %s23, 15
        %s1807 = scalar_select %p1806, %s23, 15
        %s1808 = smul.addr %s1807, 2
        %s1809 = smul.addr %s1805, 32
        %s1810 = sadd.s32 %s1808, %s1809
        %s1811 = smul.addr %s1810, 8
        %s1812 = scalar_lea.vmem %s5, %s1811
      $region52: #{shadow_removal_forward.19} parent=47 // pred_fallthru
        _
    $region48: #{shadow_removal_forward.19} parent=5 // pred_fallthru
      _
  $region6: #{shadow_removal_forward.19} parent=0 // loop_footer
    %s15 = sadd.s32 1, %s11
  $region7: #{shadow_removal_forward.19} parent=0 // loop_footer_branch
    %10 = sbr.rel target = $region3
  $region8: #{shadow_removal_forward.19} parent=0 // loop_exit
    _

</llo_original>
